<compile_context>
chip_gen: v7x
topology: tpu7x:2x2x1
jax: 0.10.0
libtpu: 0.0.40
codegen_flags: <defaults>
</compile_context>

<pallas_src>
import functools
import math

import numpy as np

import jax
import jax.numpy as jnp
from jax import lax
from jax.experimental import pallas as pl
from jax.experimental.pallas import tpu as pltpu


# BatchNorm constants implied by RepVGG.init_weights() in eval mode:
# gamma=1, beta=1e-4, running_mean=0, running_var=1, eps=1e-5.
_BN_EPS = 1e-5
_BN_SCALE = 1.0 / math.sqrt(1.0 + _BN_EPS)
_BN_SHIFT = 1e-4

_K0_PAD = 32  # stage0 im2col contraction dim (9 * 3 = 27) zero-padded to 32


# ----------------------------- parameter build ------------------------------

def _make_block(key, cin, cout, stride):
    """One RepVGGConvModule folded to its equivalent 3x3 kernel + scalar bias."""
    k3, k1 = jax.random.split(key)
    # nn.init.normal_(conv.weight, std=0.001); BN scale folded into weights.
    w3 = jax.random.normal(k3, (3, 3, cin, cout), jnp.float32) * 0.001 * _BN_SCALE
    w1 = jax.random.normal(k1, (cin, cout), jnp.float32) * 0.001 * _BN_SCALE
    w_eq = w3.at[1, 1].add(w1)                       # 1x1 branch -> center tap
    has_id = (cin == cout and stride == 1)
    if has_id:                                       # identity-BN branch
        w_eq = w_eq.at[1, 1].add(jnp.eye(cin, dtype=jnp.float32) * _BN_SCALE)
    n_branch = 3 if has_id else 2
    bias = float(n_branch) * _BN_SHIFT               # same for every channel
    return {"w_eq": w_eq, "bias": bias, "stride": stride,
            "cin": cin, "cout": cout}


def build_repvgg_a0(key):
    """RepVGG_A0: num_blocks=[2,4,14,1], width=[0.75,0.75,0.75,2.5], groups=1."""
    num_blocks = [2, 4, 14, 1]
    wm = [0.75, 0.75, 0.75, 2.5]
    in_planes = min(64, int(64 * wm[0]))                       # 48
    stage_planes = [int(64 * wm[0]), int(128 * wm[1]),
                    int(256 * wm[2]), 512]

    blocks = []
    key, k0 = jax.random.split(key)
    blocks.append(_make_block(k0, 3, in_planes, 2))            # stage0
    stage_last = [0]
    cin = in_planes
    for si in range(4):
        planes = stage_planes[si]
        for s in [2] + [1] * (num_blocks[si] - 1):
            key, kb = jax.random.split(key)
            blocks.append(_make_block(kb, cin, planes, s))
            cin = planes
        stage_last.append(len(blocks) - 1)
    return blocks, stage_last   # stage_last[i] = index of the last block of stage i


# -------------------------- fused-kernel planning ---------------------------

def _conv_geometry(h, w, stride):
    """Used taps + combined 0/1 gather/sum matrix for one spatial 3x3 block.

    sel has shape (Ho*Wo, n_taps*H*W) with sel[o, t*H*W + i] = 1 iff flat input
    position i feeds tap t of flat output o (zero columns encode the conv's
    zero padding).  Taps with no valid input anywhere are dropped.
    """
    ho = (h - 1) // stride + 1
    wo = (w - 1) // stride + 1
    taps = []
    for ky in range(3):
        for kx in range(3):
            used = any(0 <= oy * stride + ky - 1 < h and 0 <= ox * stride + kx - 1 < w
                       for oy in range(ho) for ox in range(wo))
            if used:
                taps.append((ky, kx))
    nt = len(taps)
    sel = np.zeros((ho * wo, nt * h * w), np.float32)
    for t, (ky, kx) in enumerate(taps):
        for oy in range(ho):
            for ox in range(wo):
                iy, ix = oy * stride + ky - 1, ox * stride + kx - 1
                if 0 <= iy < h and 0 <= ix < w:
                    sel[oy * wo + ox, t * h * w + iy * w + ix] = 1.0
    return taps, sel, ho, wo


class _Packer:
    """Row-stacks same-width operands into one packed array per column width."""

    def __init__(self):
        self._groups = {}   # width -> [arrays]
        self._rows = {}     # width -> rows so far

    def add(self, arr):
        arr = jnp.asarray(arr, jnp.float32)
        width = int(arr.shape[1])
        off = self._rows.get(width, 0)
        self._groups.setdefault(width, []).append(arr)
        self._rows[width] = off + int(arr.shape[0])
        return (width, off, int(arr.shape[0]))

    def finalize(self):
        widths = sorted(self._groups)
        arrays = [jnp.concatenate(self._groups[w], axis=0) for w in widths]
        pos = {w: i for i, w in enumerate(widths)}
        return arrays, pos


def _plan_network(blocks, input_hw, out_ids):
    """Lower the block list to a flat op plan + a few packed kernel operands.

    ops: ("matmul", wslot, bias) | ("conv", wslot, sslot, n_taps, cout, bias)
         | ("out", out_index)
         where each slot is (packed_array_index, row_offset, rows).
    """
    ops, out_info = [], []
    pack = _Packer()
    sel_cache = {}                       # (h, w, stride) -> (taps, slot, ho, wo)
    h = w = input_hw
    for idx, blk in enumerate(blocks):
        stride, cin, cout = blk["stride"], blk["cin"], blk["cout"]
        w_eq, bias = blk["w_eq"], blk["bias"]

        if idx == 0:
            # stage0: one (M, 32) x (32, Cout) matmul on wrapper-built patches.
            ho = (h - 1) // stride + 1
            wo = (w - 1) // stride + 1
            w_im = jnp.pad(w_eq.reshape(9 * cin, cout),
                           ((0, _K0_PAD - 9 * cin), (0, 0)))
            ops.append(("matmul", pack.add(w_im), bias))
        elif h == 1 and w == 1:
            # 1x1 spatial input: only the center tap of the padded window sees
            # data, so the whole block folds to a single (Cin, Cout) matmul.
            ho = wo = 1
            ops.append(("matmul", pack.add(w_eq[1, 1]), bias))
        else:
            key = (h, w, stride)
            if key in sel_cache:
                taps, sel_slot, ho, wo = sel_cache[key]
            else:
                taps, sel, ho, wo = _conv_geometry(h, w, stride)
                sel_slot = pack.add(sel)
                sel_cache[key] = (taps, sel_slot, ho, wo)
            # Tap weights concatenated along columns: (Cin, n_taps*Cout).
            w_wide = jnp.concatenate([w_eq[ky, kx] for ky, kx in taps], axis=1)
            ops.append(("conv", pack.add(w_wide), sel_slot, len(taps), cout, bias))

        h, w = ho, wo
        if idx in out_ids:
            ops.append(("out", len(out_info)))
            out_info.append((ho * wo, cout, ho, wo))

    operands, pos = pack.finalize()

    def _resolve(slot):
        width, off, rows = slot
        return (pos[width], off, rows)

    resolved = []
    for op in ops:
        if op[0] == "matmul":
            resolved.append(("matmul", _resolve(op[1]), op[2]))
        elif op[0] == "conv":
            resolved.append(("conv", _resolve(op[1]), _resolve(op[2]),
                             op[3], op[4], op[5]))
        else:
            resolved.append(op)
    return resolved, operands, out_info


# --------------------------------- kernel -----------------------------------

def _fused_kernel(ops, n_out, x_ref, *refs):
    """Whole-network forward for one image; activations stay in VMEM."""
    packs = refs[:len(refs) - n_out]
    out_refs = refs[len(refs) - n_out:]

    a = x_ref[...]                               # (64, 32) stage0 im2col patches
    for op in ops:
        kind = op[0]
        if kind == "matmul":                     # stage0 + all 1x1-spatial blocks
            (pi, off, rows), bias = op[1], op[2]
            w = packs[pi][off:off + rows, :]     # static ref slice: free
            a = jnp.maximum(
                jnp.dot(a, w, preferred_element_type=jnp.float32) + bias, 0.0)
        elif kind == "conv":                     # spatial 3x3 block: 2 matmuls
            (wpi, woff, wrows), (spi, soff, srows), nt, cout, bias = op[1:]
            w_wide = packs[wpi][woff:woff + wrows, :]      # (Cin, nt*Cout)
            sel = packs[spi][soff:soff + srows, :]         # (M, nt*H*W)
            # 1) all taps' channel mixes at once.
            aw = jnp.dot(a, w_wide, preferred_element_type=jnp.float32)
            # 2) stack the per-tap column blocks along rows (slices + concat
            #    only -- no lane/sublane reshape needed).
            patches = jnp.concatenate(
                [aw[:, t * cout:(t + 1) * cout] for t in range(nt)], axis=0)
            # 3) constant 0/1 gather+sum over (tap, input position).
            a = jnp.maximum(
                jnp.dot(sel, patches, preferred_element_type=jnp.float32) + bias,
                0.0)
        else:                                    # ("out", slot)
            out_refs[op[1]][...] = a


# --------------------------------- wrapper ----------------------------------

def make_repvgg_forward(blocks, stage_last, out_stages=(2, 3, 4), input_hw=16):
    out_ids = [stage_last[s] for s in out_stages]
    ops, operands, out_info = _plan_network(blocks, input_hw, out_ids)
    n_out = len(out_info)

    s0 = blocks[0]["stride"]
    cin0 = blocks[0]["cin"]
    ho0 = (input_hw - 1) // s0 + 1
    wo0 = ho0

    kernel = functools.partial(_fused_kernel, ops, n_out)

    def forward(x):                               # x: (N, H, W, 3) NHWC float32
        n = x.shape[0]
        assert x.shape == (n, input_hw, input_hw, cin0)

        # stage0 im2col in the wrapper (plain XLA): K = 9*Cin = 27, padded to 32.
        xp = jnp.pad(x, ((0, 0), (1, 1), (1, 1), (0, 0)))
        cols = []
        for ky in range(3):
            for kx in range(3):
                cols.append(xp[:, ky:ky + s0 * (ho0 - 1) + 1:s0,
                               kx:kx + s0 * (wo0 - 1) + 1:s0, :])
        patches = jnp.concatenate(cols, axis=-1)            # (N, ho0, wo0, 27)
        patches = patches.reshape(n, ho0 * wo0, 9 * cin0)
        patches = jnp.pad(patches, ((0, 0), (0, 0), (0, _K0_PAD - 9 * cin0)))

        in_specs = [pl.BlockSpec((None,) + patches.shape[1:],
                                 lambda i: (i, 0, 0))]
        # Packed operands: full-array blocks, constant index map -> DMA'd once.
        in_specs += [pl.BlockSpec(arr.shape, lambda i: (0, 0))
                     for arr in operands]
        out_specs = [pl.BlockSpec((None, rows, ch), lambda i: (i, 0, 0))
                     for rows, ch, _, _ in out_info]
        out_shape = [jax.ShapeDtypeStruct((n, rows, ch), jnp.float32)
                     for rows, ch, _, _ in out_info]

        outs = pl.pallas_call(
            kernel,
            grid=(n,),
            in_specs=in_specs,
            out_specs=out_specs,
            out_shape=out_shape,
            compiler_params=pltpu.CompilerParams(
                dimension_semantics=("parallel",),   # v7x: one image per core
                vmem_limit_bytes=32 * 1024 * 1024),
        )(patches, *operands)

        return tuple(o.reshape(n, ho, wo, ch)
                     for o, (_, ch, ho, wo) in zip(outs, out_info))

    return forward


# ---------------------- pure-JAX reference (validation) ---------------------

def reference_forward(x, blocks, stage_last, out_stages=(2, 3, 4)):
    """XLA-conv reference using the same eval-mode folded parameters."""
    out_ids = {stage_last[s] for s in out_stages}
    outs, a = [], x
    for idx, blk in enumerate(blocks):
        s = blk["stride"]
        a = lax.conv_general_dilated(
            a, blk["w_eq"], window_strides=(s, s), padding=((1, 1), (1, 1)),
            dimension_numbers=("NHWC", "HWIO", "NHWC"))
        a = jnp.maximum(a + blk["bias"], 0.0)
        if idx in out_ids:
            outs.append(a)
    return tuple(outs)


if __name__ == "__main__":
    key = jax.random.PRNGKey(0)
    kparam, kx = jax.random.split(key)
    blocks, stage_last = build_repvgg_a0(kparam)

    # NHWC input; corresponds to a PyTorch NCHW tensor of shape (2, 3, 16, 16).
    x = jax.random.normal(kx, (2, 16, 16, 3), jnp.float32)

    fwd = jax.jit(make_repvgg_forward(blocks, stage_last))
    outs = jax.block_until_ready(fwd(x))

    # A0 feature-pyramid widths for out_stages (2, 3, 4): 96 / 192 / 512.
    assert outs[0].shape == (2, 2, 2, 96)
    assert outs[1].shape == (2, 1, 1, 192)
    assert outs[2].shape == (2, 1, 1, 512)

    refs = reference_forward(x, blocks, stage_last)
    for o, r in zip(outs, refs):
        assert bool(jnp.all(jnp.isfinite(o)))
        assert bool(jnp.allclose(o, r, rtol=5e-3, atol=1e-6)), \
            float(jnp.max(jnp.abs(o - r)))

    print("KERNEL_OK")
</pallas_src>

<mosaic_0001>
module attributes {stable_mosaic.version = 11 : i64} {
  func.func @_fused_kernel(%arg0: i32, %arg1: memref<1x64x32xf32, #tpu.memory_space<vmem>>, %arg2: memref<1x16xf32, #tpu.memory_space<vmem>>, %arg3: memref<4x36xf32, #tpu.memory_space<vmem>>, %arg4: memref<32x48xf32, #tpu.memory_space<vmem>>, %arg5: memref<20x144xf32, #tpu.memory_space<vmem>>, %arg6: memref<2496x192xf32, #tpu.memory_space<vmem>>, %arg7: memref<96x432xf32, #tpu.memory_space<vmem>>, %arg8: memref<192x512xf32, #tpu.memory_space<vmem>>, %arg9: memref<16x576xf32, #tpu.memory_space<vmem>>, %arg10: memref<96x768xf32, #tpu.memory_space<vmem>>, %arg11: memref<336x864xf32, #tpu.memory_space<vmem>>, %arg12: memref<1x4x96xf32, #tpu.memory_space<vmem>>, %arg13: memref<1x1x192xf32, #tpu.memory_space<vmem>>, %arg14: memref<1x1x512xf32, #tpu.memory_space<vmem>>) attributes {dimension_semantics = [#tpu.dimension_semantics<parallel>], iteration_bounds = array<i64: 2>, scalar_prefetch = 0 : i64, scratch_operands = 0 : i64, tpu.core_type = #tpu.core_type<tc>, window_params = [{transform_indices = @transform_0, window_bounds = array<i64: 1, 64, 32>}, {pipeline_mode = #tpu.pipeline_mode<synchronous>, transform_indices = @transform_1, window_bounds = array<i64: 1, 16>}, {pipeline_mode = #tpu.pipeline_mode<synchronous>, transform_indices = @transform_2, window_bounds = array<i64: 4, 36>}, {pipeline_mode = #tpu.pipeline_mode<synchronous>, transform_indices = @transform_3, window_bounds = array<i64: 32, 48>}, {pipeline_mode = #tpu.pipeline_mode<synchronous>, transform_indices = @transform_4, window_bounds = array<i64: 20, 144>}, {pipeline_mode = #tpu.pipeline_mode<synchronous>, transform_indices = @transform_5, window_bounds = array<i64: 2496, 192>}, {pipeline_mode = #tpu.pipeline_mode<synchronous>, transform_indices = @transform_6, window_bounds = array<i64: 96, 432>}, {pipeline_mode = #tpu.pipeline_mode<synchronous>, transform_indices = @transform_7, window_bounds = array<i64: 192, 512>}, {pipeline_mode = #tpu.pipeline_mode<synchronous>, transform_indices = @transform_8, window_bounds = array<i64: 16, 576>}, {pipeline_mode = #tpu.pipeline_mode<synchronous>, transform_indices = @transform_9, window_bounds = array<i64: 96, 768>}, {pipeline_mode = #tpu.pipeline_mode<synchronous>, transform_indices = @transform_10, window_bounds = array<i64: 336, 864>}, {transform_indices = @transform_11, window_bounds = array<i64: 1, 4, 96>}, {transform_indices = @transform_12, window_bounds = array<i64: 1, 1, 192>}, {transform_indices = @transform_13, window_bounds = array<i64: 1, 1, 512>}]} {
    %c0 = arith.constant 0 : index
    %c0_0 = arith.constant 0 : index
    %c0_1 = arith.constant 0 : index
    %0 = vector.load %arg1[%c0, %c0_0, %c0_1] : memref<1x64x32xf32, #tpu.memory_space<vmem>>, vector<1x64x32xf32>
    %1 = vector.shape_cast %0 : vector<1x64x32xf32> to vector<64x32xf32>
    %c0_2 = arith.constant 0 : index
    %c0_3 = arith.constant 0 : index
    %2 = vector.load %arg4[%c0_2, %c0_3] : memref<32x48xf32, #tpu.memory_space<vmem>>, vector<32x48xf32>
    %cst = arith.constant dense<0.000000e+00> : vector<64x48xf32>
    %3 = tpu.matmul %1, %2, %cst {dimension_numbers = #tpu.dot_dimension_numbers<[1], [0], [0], [1], [0, 0, 1, 1], [], []>} : vector<64x32xf32>, vector<32x48xf32>, vector<64x48xf32> -> vector<64x48xf32>
    %cst_4 = arith.constant 2.000000e-04 : f32
    %4 = vector.broadcast %cst_4 : f32 to vector<64x48xf32>
    %5 = arith.addf %3, %4 : vector<64x48xf32>
    %cst_5 = arith.constant 0.000000e+00 : f32
    %6 = vector.broadcast %cst_5 : f32 to vector<64x48xf32>
    %7 = arith.maximumf %5, %6 : vector<64x48xf32>
    %c0_6 = arith.constant 0 : index
    %c0_7 = arith.constant 0 : index
    %8 = vector.load %arg7[%c0_6, %c0_7] : memref<96x432xf32, #tpu.memory_space<vmem>>, vector<48x432xf32>
    %c0_8 = arith.constant 0 : index
    %c0_9 = arith.constant 0 : index
    %9 = vector.load %arg9[%c0_8, %c0_9] : memref<16x576xf32, #tpu.memory_space<vmem>>, vector<16x576xf32>
    %cst_10 = arith.constant dense<0.000000e+00> : vector<64x432xf32>
    %10 = tpu.matmul %7, %8, %cst_10 {dimension_numbers = #tpu.dot_dimension_numbers<[1], [0], [0], [1], [0, 0, 1, 1], [], []>} : vector<64x48xf32>, vector<48x432xf32>, vector<64x432xf32> -> vector<64x432xf32>
    %11 = vector.extract_strided_slice %10 {offsets = [0, 0], sizes = [64, 48], strides = [1, 1]} : vector<64x432xf32> to vector<64x48xf32>
    %12 = vector.extract_strided_slice %10 {offsets = [0, 48], sizes = [64, 48], strides = [1, 1]} : vector<64x432xf32> to vector<64x48xf32>
    %13 = vector.extract_strided_slice %10 {offsets = [0, 96], sizes = [64, 48], strides = [1, 1]} : vector<64x432xf32> to vector<64x48xf32>
    %14 = vector.extract_strided_slice %10 {offsets = [0, 144], sizes = [64, 48], strides = [1, 1]} : vector<64x432xf32> to vector<64x48xf32>
    %15 = vector.extract_strided_slice %10 {offsets = [0, 192], sizes = [64, 48], strides = [1, 1]} : vector<64x432xf32> to vector<64x48xf32>
    %16 = vector.extract_strided_slice %10 {offsets = [0, 240], sizes = [64, 48], strides = [1, 1]} : vector<64x432xf32> to vector<64x48xf32>
    %17 = vector.extract_strided_slice %10 {offsets = [0, 288], sizes = [64, 48], strides = [1, 1]} : vector<64x432xf32> to vector<64x48xf32>
    %18 = vector.extract_strided_slice %10 {offsets = [0, 336], sizes = [64, 48], strides = [1, 1]} : vector<64x432xf32> to vector<64x48xf32>
    %19 = vector.extract_strided_slice %10 {offsets = [0, 384], sizes = [64, 48], strides = [1, 1]} : vector<64x432xf32> to vector<64x48xf32>
    %20 = tpu.concatenate %11, %12, %13, %14, %15, %16, %17, %18, %19 in 0 : vector<64x48xf32>, vector<64x48xf32>, vector<64x48xf32>, vector<64x48xf32>, vector<64x48xf32>, vector<64x48xf32>, vector<64x48xf32>, vector<64x48xf32>, vector<64x48xf32> -> vector<576x48xf32>
    %cst_11 = arith.constant dense<0.000000e+00> : vector<16x48xf32>
    %21 = tpu.matmul %9, %20, %cst_11 {dimension_numbers = #tpu.dot_dimension_numbers<[1], [0], [0], [1], [0, 0, 1, 1], [], []>} : vector<16x576xf32>, vector<576x48xf32>, vector<16x48xf32> -> vector<16x48xf32>
    %cst_12 = arith.constant 2.000000e-04 : f32
    %22 = vector.broadcast %cst_12 : f32 to vector<16x48xf32>
    %23 = arith.addf %21, %22 : vector<16x48xf32>
    %cst_13 = arith.constant 0.000000e+00 : f32
    %24 = vector.broadcast %cst_13 : f32 to vector<16x48xf32>
    %25 = arith.maximumf %23, %24 : vector<16x48xf32>
    %c48 = arith.constant 48 : index
    %c0_14 = arith.constant 0 : index
    %26 = vector.load %arg7[%c48, %c0_14] : memref<96x432xf32, #tpu.memory_space<vmem>>, vector<48x432xf32>
    %c0_15 = arith.constant 0 : index
    %c0_16 = arith.constant 0 : index
    %27 = vector.load %arg5[%c0_15, %c0_16] : memref<20x144xf32, #tpu.memory_space<vmem>>, vector<16x144xf32>
    %cst_17 = arith.constant dense<0.000000e+00> : vector<16x432xf32>
    %28 = tpu.matmul %25, %26, %cst_17 {dimension_numbers = #tpu.dot_dimension_numbers<[1], [0], [0], [1], [0, 0, 1, 1], [], []>} : vector<16x48xf32>, vector<48x432xf32>, vector<16x432xf32> -> vector<16x432xf32>
    %29 = vector.extract_strided_slice %28 {offsets = [0, 0], sizes = [16, 48], strides = [1, 1]} : vector<16x432xf32> to vector<16x48xf32>
    %30 = vector.extract_strided_slice %28 {offsets = [0, 48], sizes = [16, 48], strides = [1, 1]} : vector<16x432xf32> to vector<16x48xf32>
    %31 = vector.extract_strided_slice %28 {offsets = [0, 96], sizes = [16, 48], strides = [1, 1]} : vector<16x432xf32> to vector<16x48xf32>
    %32 = vector.extract_strided_slice %28 {offsets = [0, 144], sizes = [16, 48], strides = [1, 1]} : vector<16x432xf32> to vector<16x48xf32>
    %33 = vector.extract_strided_slice %28 {offsets = [0, 192], sizes = [16, 48], strides = [1, 1]} : vector<16x432xf32> to vector<16x48xf32>
    %34 = vector.extract_strided_slice %28 {offsets = [0, 240], sizes = [16, 48], strides = [1, 1]} : vector<16x432xf32> to vector<16x48xf32>
    %35 = vector.extract_strided_slice %28 {offsets = [0, 288], sizes = [16, 48], strides = [1, 1]} : vector<16x432xf32> to vector<16x48xf32>
    %36 = vector.extract_strided_slice %28 {offsets = [0, 336], sizes = [16, 48], strides = [1, 1]} : vector<16x432xf32> to vector<16x48xf32>
    %37 = vector.extract_strided_slice %28 {offsets = [0, 384], sizes = [16, 48], strides = [1, 1]} : vector<16x432xf32> to vector<16x48xf32>
    %38 = tpu.concatenate %29, %30, %31, %32, %33, %34, %35, %36, %37 in 0 : vector<16x48xf32>, vector<16x48xf32>, vector<16x48xf32>, vector<16x48xf32>, vector<16x48xf32>, vector<16x48xf32>, vector<16x48xf32>, vector<16x48xf32>, vector<16x48xf32> -> vector<144x48xf32>
    %cst_18 = arith.constant dense<0.000000e+00> : vector<16x48xf32>
    %39 = tpu.matmul %27, %38, %cst_18 {dimension_numbers = #tpu.dot_dimension_numbers<[1], [0], [0], [1], [0, 0, 1, 1], [], []>} : vector<16x144xf32>, vector<144x48xf32>, vector<16x48xf32> -> vector<16x48xf32>
    %cst_19 = arith.constant 3.000000e-04 : f32
    %40 = vector.broadcast %cst_19 : f32 to vector<16x48xf32>
    %41 = arith.addf %39, %40 : vector<16x48xf32>
    %cst_20 = arith.constant 0.000000e+00 : f32
    %42 = vector.broadcast %cst_20 : f32 to vector<16x48xf32>
    %43 = arith.maximumf %41, %42 : vector<16x48xf32>
    %c0_21 = arith.constant 0 : index
    %c0_22 = arith.constant 0 : index
    %44 = vector.load %arg11[%c0_21, %c0_22] : memref<336x864xf32, #tpu.memory_space<vmem>>, vector<48x864xf32>
    %c16 = arith.constant 16 : index
    %c0_23 = arith.constant 0 : index
    %45 = vector.load %arg5[%c16, %c0_23] : memref<20x144xf32, #tpu.memory_space<vmem>>, vector<4x144xf32>
    %cst_24 = arith.constant dense<0.000000e+00> : vector<16x864xf32>
    %46 = tpu.matmul %43, %44, %cst_24 {dimension_numbers = #tpu.dot_dimension_numbers<[1], [0], [0], [1], [0, 0, 1, 1], [], []>} : vector<16x48xf32>, vector<48x864xf32>, vector<16x864xf32> -> vector<16x864xf32>
    %47 = vector.extract_strided_slice %46 {offsets = [0, 0], sizes = [16, 96], strides = [1, 1]} : vector<16x864xf32> to vector<16x96xf32>
    %48 = vector.extract_strided_slice %46 {offsets = [0, 96], sizes = [16, 96], strides = [1, 1]} : vector<16x864xf32> to vector<16x96xf32>
    %49 = vector.extract_strided_slice %46 {offsets = [0, 192], sizes = [16, 96], strides = [1, 1]} : vector<16x864xf32> to vector<16x96xf32>
    %50 = vector.extract_strided_slice %46 {offsets = [0, 288], sizes = [16, 96], strides = [1, 1]} : vector<16x864xf32> to vector<16x96xf32>
    %51 = vector.extract_strided_slice %46 {offsets = [0, 384], sizes = [16, 96], strides = [1, 1]} : vector<16x864xf32> to vector<16x96xf32>
    %52 = vector.extract_strided_slice %46 {offsets = [0, 480], sizes = [16, 96], strides = [1, 1]} : vector<16x864xf32> to vector<16x96xf32>
    %53 = vector.extract_strided_slice %46 {offsets = [0, 576], sizes = [16, 96], strides = [1, 1]} : vector<16x864xf32> to vector<16x96xf32>
    %54 = vector.extract_strided_slice %46 {offsets = [0, 672], sizes = [16, 96], strides = [1, 1]} : vector<16x864xf32> to vector<16x96xf32>
    %55 = vector.extract_strided_slice %46 {offsets = [0, 768], sizes = [16, 96], strides = [1, 1]} : vector<16x864xf32> to vector<16x96xf32>
    %56 = tpu.concatenate %47, %48, %49, %50, %51, %52, %53, %54, %55 in 0 : vector<16x96xf32>, vector<16x96xf32>, vector<16x96xf32>, vector<16x96xf32>, vector<16x96xf32>, vector<16x96xf32>, vector<16x96xf32>, vector<16x96xf32>, vector<16x96xf32> -> vector<144x96xf32>
    %cst_25 = arith.constant dense<0.000000e+00> : vector<4x96xf32>
    %57 = tpu.matmul %45, %56, %cst_25 {dimension_numbers = #tpu.dot_dimension_numbers<[1], [0], [0], [1], [0, 0, 1, 1], [], []>} : vector<4x144xf32>, vector<144x96xf32>, vector<4x96xf32> -> vector<4x96xf32>
    %cst_26 = arith.constant 2.000000e-04 : f32
    %58 = vector.broadcast %cst_26 : f32 to vector<4x96xf32>
    %59 = arith.addf %57, %58 : vector<4x96xf32>
    %cst_27 = arith.constant 0.000000e+00 : f32
    %60 = vector.broadcast %cst_27 : f32 to vector<4x96xf32>
    %61 = arith.maximumf %59, %60 : vector<4x96xf32>
    %c48_28 = arith.constant 48 : index
    %c0_29 = arith.constant 0 : index
    %62 = vector.load %arg11[%c48_28, %c0_29] : memref<336x864xf32, #tpu.memory_space<vmem>>, vector<96x864xf32>
    %c0_30 = arith.constant 0 : index
    %c0_31 = arith.constant 0 : index
    %63 = vector.load %arg3[%c0_30, %c0_31] : memref<4x36xf32, #tpu.memory_space<vmem>>, vector<4x36xf32>
    %cst_32 = arith.constant dense<0.000000e+00> : vector<4x864xf32>
    %64 = tpu.matmul %61, %62, %cst_32 {dimension_numbers = #tpu.dot_dimension_numbers<[1], [0], [0], [1], [0, 0, 1, 1], [], []>} : vector<4x96xf32>, vector<96x864xf32>, vector<4x864xf32> -> vector<4x864xf32>
    %65 = vector.extract_strided_slice %64 {offsets = [0, 0], sizes = [4, 96], strides = [1, 1]} : vector<4x864xf32> to vector<4x96xf32>
    %66 = vector.extract_strided_slice %64 {offsets = [0, 96], sizes = [4, 96], strides = [1, 1]} : vector<4x864xf32> to vector<4x96xf32>
    %67 = vector.extract_strided_slice %64 {offsets = [0, 192], sizes = [4, 96], strides = [1, 1]} : vector<4x864xf32> to vector<4x96xf32>
    %68 = vector.extract_strided_slice %64 {offsets = [0, 288], sizes = [4, 96], strides = [1, 1]} : vector<4x864xf32> to vector<4x96xf32>
    %69 = vector.extract_strided_slice %64 {offsets = [0, 384], sizes = [4, 96], strides = [1, 1]} : vector<4x864xf32> to vector<4x96xf32>
    %70 = vector.extract_strided_slice %64 {offsets = [0, 480], sizes = [4, 96], strides = [1, 1]} : vector<4x864xf32> to vector<4x96xf32>
    %71 = vector.extract_strided_slice %64 {offsets = [0, 576], sizes = [4, 96], strides = [1, 1]} : vector<4x864xf32> to vector<4x96xf32>
    %72 = vector.extract_strided_slice %64 {offsets = [0, 672], sizes = [4, 96], strides = [1, 1]} : vector<4x864xf32> to vector<4x96xf32>
    %73 = vector.extract_strided_slice %64 {offsets = [0, 768], sizes = [4, 96], strides = [1, 1]} : vector<4x864xf32> to vector<4x96xf32>
    %74 = tpu.concatenate %65, %66, %67, %68, %69, %70, %71, %72, %73 in 0 : vector<4x96xf32>, vector<4x96xf32>, vector<4x96xf32>, vector<4x96xf32>, vector<4x96xf32>, vector<4x96xf32>, vector<4x96xf32>, vector<4x96xf32>, vector<4x96xf32> -> vector<36x96xf32>
    %cst_33 = arith.constant dense<0.000000e+00> : vector<4x96xf32>
    %75 = tpu.matmul %63, %74, %cst_33 {dimension_numbers = #tpu.dot_dimension_numbers<[1], [0], [0], [1], [0, 0, 1, 1], [], []>} : vector<4x36xf32>, vector<36x96xf32>, vector<4x96xf32> -> vector<4x96xf32>
    %cst_34 = arith.constant 3.000000e-04 : f32
    %76 = vector.broadcast %cst_34 : f32 to vector<4x96xf32>
    %77 = arith.addf %75, %76 : vector<4x96xf32>
    %cst_35 = arith.constant 0.000000e+00 : f32
    %78 = vector.broadcast %cst_35 : f32 to vector<4x96xf32>
    %79 = arith.maximumf %77, %78 : vector<4x96xf32>
    %c144 = arith.constant 144 : index
    %c0_36 = arith.constant 0 : index
    %80 = vector.load %arg11[%c144, %c0_36] : memref<336x864xf32, #tpu.memory_space<vmem>>, vector<96x864xf32>
    %c0_37 = arith.constant 0 : index
    %c0_38 = arith.constant 0 : index
    %81 = vector.load %arg3[%c0_37, %c0_38] : memref<4x36xf32, #tpu.memory_space<vmem>>, vector<4x36xf32>
    %cst_39 = arith.constant dense<0.000000e+00> : vector<4x864xf32>
    %82 = tpu.matmul %79, %80, %cst_39 {dimension_numbers = #tpu.dot_dimension_numbers<[1], [0], [0], [1], [0, 0, 1, 1], [], []>} : vector<4x96xf32>, vector<96x864xf32>, vector<4x864xf32> -> vector<4x864xf32>
    %83 = vector.extract_strided_slice %82 {offsets = [0, 0], sizes = [4, 96], strides = [1, 1]} : vector<4x864xf32> to vector<4x96xf32>
    %84 = vector.extract_strided_slice %82 {offsets = [0, 96], sizes = [4, 96], strides = [1, 1]} : vector<4x864xf32> to vector<4x96xf32>
    %85 = vector.extract_strided_slice %82 {offsets = [0, 192], sizes = [4, 96], strides = [1, 1]} : vector<4x864xf32> to vector<4x96xf32>
    %86 = vector.extract_strided_slice %82 {offsets = [0, 288], sizes = [4, 96], strides = [1, 1]} : vector<4x864xf32> to vector<4x96xf32>
    %87 = vector.extract_strided_slice %82 {offsets = [0, 384], sizes = [4, 96], strides = [1, 1]} : vector<4x864xf32> to vector<4x96xf32>
    %88 = vector.extract_strided_slice %82 {offsets = [0, 480], sizes = [4, 96], strides = [1, 1]} : vector<4x864xf32> to vector<4x96xf32>
    %89 = vector.extract_strided_slice %82 {offsets = [0, 576], sizes = [4, 96], strides = [1, 1]} : vector<4x864xf32> to vector<4x96xf32>
    %90 = vector.extract_strided_slice %82 {offsets = [0, 672], sizes = [4, 96], strides = [1, 1]} : vector<4x864xf32> to vector<4x96xf32>
    %91 = vector.extract_strided_slice %82 {offsets = [0, 768], sizes = [4, 96], strides = [1, 1]} : vector<4x864xf32> to vector<4x96xf32>
    %92 = tpu.concatenate %83, %84, %85, %86, %87, %88, %89, %90, %91 in 0 : vector<4x96xf32>, vector<4x96xf32>, vector<4x96xf32>, vector<4x96xf32>, vector<4x96xf32>, vector<4x96xf32>, vector<4x96xf32>, vector<4x96xf32>, vector<4x96xf32> -> vector<36x96xf32>
    %cst_40 = arith.constant dense<0.000000e+00> : vector<4x96xf32>
    %93 = tpu.matmul %81, %92, %cst_40 {dimension_numbers = #tpu.dot_dimension_numbers<[1], [0], [0], [1], [0, 0, 1, 1], [], []>} : vector<4x36xf32>, vector<36x96xf32>, vector<4x96xf32> -> vector<4x96xf32>
    %cst_41 = arith.constant 3.000000e-04 : f32
    %94 = vector.broadcast %cst_41 : f32 to vector<4x96xf32>
    %95 = arith.addf %93, %94 : vector<4x96xf32>
    %cst_42 = arith.constant 0.000000e+00 : f32
    %96 = vector.broadcast %cst_42 : f32 to vector<4x96xf32>
    %97 = arith.maximumf %95, %96 : vector<4x96xf32>
    %c240 = arith.constant 240 : index
    %c0_43 = arith.constant 0 : index
    %98 = vector.load %arg11[%c240, %c0_43] : memref<336x864xf32, #tpu.memory_space<vmem>>, vector<96x864xf32>
    %c0_44 = arith.constant 0 : index
    %c0_45 = arith.constant 0 : index
    %99 = vector.load %arg3[%c0_44, %c0_45] : memref<4x36xf32, #tpu.memory_space<vmem>>, vector<4x36xf32>
    %cst_46 = arith.constant dense<0.000000e+00> : vector<4x864xf32>
    %100 = tpu.matmul %97, %98, %cst_46 {dimension_numbers = #tpu.dot_dimension_numbers<[1], [0], [0], [1], [0, 0, 1, 1], [], []>} : vector<4x96xf32>, vector<96x864xf32>, vector<4x864xf32> -> vector<4x864xf32>
    %101 = vector.extract_strided_slice %100 {offsets = [0, 0], sizes = [4, 96], strides = [1, 1]} : vector<4x864xf32> to vector<4x96xf32>
    %102 = vector.extract_strided_slice %100 {offsets = [0, 96], sizes = [4, 96], strides = [1, 1]} : vector<4x864xf32> to vector<4x96xf32>
    %103 = vector.extract_strided_slice %100 {offsets = [0, 192], sizes = [4, 96], strides = [1, 1]} : vector<4x864xf32> to vector<4x96xf32>
    %104 = vector.extract_strided_slice %100 {offsets = [0, 288], sizes = [4, 96], strides = [1, 1]} : vector<4x864xf32> to vector<4x96xf32>
    %105 = vector.extract_strided_slice %100 {offsets = [0, 384], sizes = [4, 96], strides = [1, 1]} : vector<4x864xf32> to vector<4x96xf32>
    %106 = vector.extract_strided_slice %100 {offsets = [0, 480], sizes = [4, 96], strides = [1, 1]} : vector<4x864xf32> to vector<4x96xf32>
    %107 = vector.extract_strided_slice %100 {offsets = [0, 576], sizes = [4, 96], strides = [1, 1]} : vector<4x864xf32> to vector<4x96xf32>
    %108 = vector.extract_strided_slice %100 {offsets = [0, 672], sizes = [4, 96], strides = [1, 1]} : vector<4x864xf32> to vector<4x96xf32>
    %109 = vector.extract_strided_slice %100 {offsets = [0, 768], sizes = [4, 96], strides = [1, 1]} : vector<4x864xf32> to vector<4x96xf32>
    %110 = tpu.concatenate %101, %102, %103, %104, %105, %106, %107, %108, %109 in 0 : vector<4x96xf32>, vector<4x96xf32>, vector<4x96xf32>, vector<4x96xf32>, vector<4x96xf32>, vector<4x96xf32>, vector<4x96xf32>, vector<4x96xf32>, vector<4x96xf32> -> vector<36x96xf32>
    %cst_47 = arith.constant dense<0.000000e+00> : vector<4x96xf32>
    %111 = tpu.matmul %99, %110, %cst_47 {dimension_numbers = #tpu.dot_dimension_numbers<[1], [0], [0], [1], [0, 0, 1, 1], [], []>} : vector<4x36xf32>, vector<36x96xf32>, vector<4x96xf32> -> vector<4x96xf32>
    %cst_48 = arith.constant 3.000000e-04 : f32
    %112 = vector.broadcast %cst_48 : f32 to vector<4x96xf32>
    %113 = arith.addf %111, %112 : vector<4x96xf32>
    %cst_49 = arith.constant 0.000000e+00 : f32
    %114 = vector.broadcast %cst_49 : f32 to vector<4x96xf32>
    %115 = arith.maximumf %113, %114 : vector<4x96xf32>
    %c0_50 = arith.constant 0 : index
    %c0_51 = arith.constant 0 : index
    %c0_52 = arith.constant 0 : index
    %116 = vector.load %arg12[%c0_50, %c0_51, %c0_52] : memref<1x4x96xf32, #tpu.memory_space<vmem>>, vector<1x4x96xf32>
    %117 = vector.shape_cast %116 : vector<1x4x96xf32> to vector<4x96xf32>
    %118 = vector.shape_cast %115 : vector<4x96xf32> to vector<1x4x96xf32>
    tpu.vector_store %arg12[%c0_50, %c0_51, %c0_52], %118 {strides = array<i32>} : memref<1x4x96xf32, #tpu.memory_space<vmem>>, vector<1x4x96xf32>,
    %c0_53 = arith.constant 0 : index
    %c0_54 = arith.constant 0 : index
    %119 = vector.load %arg10[%c0_53, %c0_54] : memref<96x768xf32, #tpu.memory_space<vmem>>, vector<96x768xf32>
    %c0_55 = arith.constant 0 : index
    %c0_56 = arith.constant 0 : index
    %120 = vector.load %arg2[%c0_55, %c0_56] : memref<1x16xf32, #tpu.memory_space<vmem>>, vector<1x16xf32>
    %cst_57 = arith.constant dense<0.000000e+00> : vector<4x768xf32>
    %121 = tpu.matmul %115, %119, %cst_57 {dimension_numbers = #tpu.dot_dimension_numbers<[1], [0], [0], [1], [0, 0, 1, 1], [], []>} : vector<4x96xf32>, vector<96x768xf32>, vector<4x768xf32> -> vector<4x768xf32>
    %122 = vector.extract_strided_slice %121 {offsets = [0, 0], sizes = [4, 192], strides = [1, 1]} : vector<4x768xf32> to vector<4x192xf32>
    %123 = vector.extract_strided_slice %121 {offsets = [0, 192], sizes = [4, 192], strides = [1, 1]} : vector<4x768xf32> to vector<4x192xf32>
    %124 = vector.extract_strided_slice %121 {offsets = [0, 384], sizes = [4, 192], strides = [1, 1]} : vector<4x768xf32> to vector<4x192xf32>
    %125 = vector.extract_strided_slice %121 {offsets = [0, 576], sizes = [4, 192], strides = [1, 1]} : vector<4x768xf32> to vector<4x192xf32>
    %126 = tpu.concatenate %122, %123, %124, %125 in 0 : vector<4x192xf32>, vector<4x192xf32>, vector<4x192xf32>, vector<4x192xf32> -> vector<16x192xf32>
    %cst_58 = arith.constant dense<0.000000e+00> : vector<1x192xf32>
    %127 = tpu.matmul %120, %126, %cst_58 {dimension_numbers = #tpu.dot_dimension_numbers<[1], [0], [0], [1], [0, 0, 1, 1], [], []>} : vector<1x16xf32>, vector<16x192xf32>, vector<1x192xf32> -> vector<1x192xf32>
    %cst_59 = arith.constant 2.000000e-04 : f32
    %128 = vector.broadcast %cst_59 : f32 to vector<1x192xf32>
    %129 = arith.addf %127, %128 : vector<1x192xf32>
    %cst_60 = arith.constant 0.000000e+00 : f32
    %130 = vector.broadcast %cst_60 : f32 to vector<1x192xf32>
    %131 = arith.maximumf %129, %130 : vector<1x192xf32>
    %c0_61 = arith.constant 0 : index
    %c0_62 = arith.constant 0 : index
    %132 = vector.load %arg6[%c0_61, %c0_62] : memref<2496x192xf32, #tpu.memory_space<vmem>>, vector<192x192xf32>
    %cst_63 = arith.constant dense<0.000000e+00> : vector<1x192xf32>
    %133 = tpu.matmul %131, %132, %cst_63 {dimension_numbers = #tpu.dot_dimension_numbers<[1], [0], [0], [1], [0, 0, 1, 1], [], []>} : vector<1x192xf32>, vector<192x192xf32>, vector<1x192xf32> -> vector<1x192xf32>
    %cst_64 = arith.constant 3.000000e-04 : f32
    %134 = vector.broadcast %cst_64 : f32 to vector<1x192xf32>
    %135 = arith.addf %133, %134 : vector<1x192xf32>
    %cst_65 = arith.constant 0.000000e+00 : f32
    %136 = vector.broadcast %cst_65 : f32 to vector<1x192xf32>
    %137 = arith.maximumf %135, %136 : vector<1x192xf32>
    %c192 = arith.constant 192 : index
    %c0_66 = arith.constant 0 : index
    %138 = vector.load %arg6[%c192, %c0_66] : memref<2496x192xf32, #tpu.memory_space<vmem>>, vector<192x192xf32>
    %cst_67 = arith.constant dense<0.000000e+00> : vector<1x192xf32>
    %139 = tpu.matmul %137, %138, %cst_67 {dimension_numbers = #tpu.dot_dimension_numbers<[1], [0], [0], [1], [0, 0, 1, 1], [], []>} : vector<1x192xf32>, vector<192x192xf32>, vector<1x192xf32> -> vector<1x192xf32>
    %cst_68 = arith.constant 3.000000e-04 : f32
    %140 = vector.broadcast %cst_68 : f32 to vector<1x192xf32>
    %141 = arith.addf %139, %140 : vector<1x192xf32>
    %cst_69 = arith.constant 0.000000e+00 : f32
    %142 = vector.broadcast %cst_69 : f32 to vector<1x192xf32>
    %143 = arith.maximumf %141, %142 : vector<1x192xf32>
    %c384 = arith.constant 384 : index
    %c0_70 = arith.constant 0 : index
    %144 = vector.load %arg6[%c384, %c0_70] : memref<2496x192xf32, #tpu.memory_space<vmem>>, vector<192x192xf32>
    %cst_71 = arith.constant dense<0.000000e+00> : vector<1x192xf32>
    %145 = tpu.matmul %143, %144, %cst_71 {dimension_numbers = #tpu.dot_dimension_numbers<[1], [0], [0], [1], [0, 0, 1, 1], [], []>} : vector<1x192xf32>, vector<192x192xf32>, vector<1x192xf32> -> vector<1x192xf32>
    %cst_72 = arith.constant 3.000000e-04 : f32
    %146 = vector.broadcast %cst_72 : f32 to vector<1x192xf32>
    %147 = arith.addf %145, %146 : vector<1x192xf32>
    %cst_73 = arith.constant 0.000000e+00 : f32
    %148 = vector.broadcast %cst_73 : f32 to vector<1x192xf32>
    %149 = arith.maximumf %147, %148 : vector<1x192xf32>
    %c576 = arith.constant 576 : index
    %c0_74 = arith.constant 0 : index
    %150 = vector.load %arg6[%c576, %c0_74] : memref<2496x192xf32, #tpu.memory_space<vmem>>, vector<192x192xf32>
    %cst_75 = arith.constant dense<0.000000e+00> : vector<1x192xf32>
    %151 = tpu.matmul %149, %150, %cst_75 {dimension_numbers = #tpu.dot_dimension_numbers<[1], [0], [0], [1], [0, 0, 1, 1], [], []>} : vector<1x192xf32>, vector<192x192xf32>, vector<1x192xf32> -> vector<1x192xf32>
    %cst_76 = arith.constant 3.000000e-04 : f32
    %152 = vector.broadcast %cst_76 : f32 to vector<1x192xf32>
    %153 = arith.addf %151, %152 : vector<1x192xf32>
    %cst_77 = arith.constant 0.000000e+00 : f32
    %154 = vector.broadcast %cst_77 : f32 to vector<1x192xf32>
    %155 = arith.maximumf %153, %154 : vector<1x192xf32>
    %c768 = arith.constant 768 : index
    %c0_78 = arith.constant 0 : index
    %156 = vector.load %arg6[%c768, %c0_78] : memref<2496x192xf32, #tpu.memory_space<vmem>>, vector<192x192xf32>
    %cst_79 = arith.constant dense<0.000000e+00> : vector<1x192xf32>
    %157 = tpu.matmul %155, %156, %cst_79 {dimension_numbers = #tpu.dot_dimension_numbers<[1], [0], [0], [1], [0, 0, 1, 1], [], []>} : vector<1x192xf32>, vector<192x192xf32>, vector<1x192xf32> -> vector<1x192xf32>
    %cst_80 = arith.constant 3.000000e-04 : f32
    %158 = vector.broadcast %cst_80 : f32 to vector<1x192xf32>
    %159 = arith.addf %157, %158 : vector<1x192xf32>
    %cst_81 = arith.constant 0.000000e+00 : f32
    %160 = vector.broadcast %cst_81 : f32 to vector<1x192xf32>
    %161 = arith.maximumf %159, %160 : vector<1x192xf32>
    %c960 = arith.constant 960 : index
    %c0_82 = arith.constant 0 : index
    %162 = vector.load %arg6[%c960, %c0_82] : memref<2496x192xf32, #tpu.memory_space<vmem>>, vector<192x192xf32>
    %cst_83 = arith.constant dense<0.000000e+00> : vector<1x192xf32>
    %163 = tpu.matmul %161, %162, %cst_83 {dimension_numbers = #tpu.dot_dimension_numbers<[1], [0], [0], [1], [0, 0, 1, 1], [], []>} : vector<1x192xf32>, vector<192x192xf32>, vector<1x192xf32> -> vector<1x192xf32>
    %cst_84 = arith.constant 3.000000e-04 : f32
    %164 = vector.broadcast %cst_84 : f32 to vector<1x192xf32>
    %165 = arith.addf %163, %164 : vector<1x192xf32>
    %cst_85 = arith.constant 0.000000e+00 : f32
    %166 = vector.broadcast %cst_85 : f32 to vector<1x192xf32>
    %167 = arith.maximumf %165, %166 : vector<1x192xf32>
    %c1152 = arith.constant 1152 : index
    %c0_86 = arith.constant 0 : index
    %168 = vector.load %arg6[%c1152, %c0_86] : memref<2496x192xf32, #tpu.memory_space<vmem>>, vector<192x192xf32>
    %cst_87 = arith.constant dense<0.000000e+00> : vector<1x192xf32>
    %169 = tpu.matmul %167, %168, %cst_87 {dimension_numbers = #tpu.dot_dimension_numbers<[1], [0], [0], [1], [0, 0, 1, 1], [], []>} : vector<1x192xf32>, vector<192x192xf32>, vector<1x192xf32> -> vector<1x192xf32>
    %cst_88 = arith.constant 3.000000e-04 : f32
    %170 = vector.broadcast %cst_88 : f32 to vector<1x192xf32>
    %171 = arith.addf %169, %170 : vector<1x192xf32>
    %cst_89 = arith.constant 0.000000e+00 : f32
    %172 = vector.broadcast %cst_89 : f32 to vector<1x192xf32>
    %173 = arith.maximumf %171, %172 : vector<1x192xf32>
    %c1344 = arith.constant 1344 : index
    %c0_90 = arith.constant 0 : index
    %174 = vector.load %arg6[%c1344, %c0_90] : memref<2496x192xf32, #tpu.memory_space<vmem>>, vector<192x192xf32>
    %cst_91 = arith.constant dense<0.000000e+00> : vector<1x192xf32>
    %175 = tpu.matmul %173, %174, %cst_91 {dimension_numbers = #tpu.dot_dimension_numbers<[1], [0], [0], [1], [0, 0, 1, 1], [], []>} : vector<1x192xf32>, vector<192x192xf32>, vector<1x192xf32> -> vector<1x192xf32>
    %cst_92 = arith.constant 3.000000e-04 : f32
    %176 = vector.broadcast %cst_92 : f32 to vector<1x192xf32>
    %177 = arith.addf %175, %176 : vector<1x192xf32>
    %cst_93 = arith.constant 0.000000e+00 : f32
    %178 = vector.broadcast %cst_93 : f32 to vector<1x192xf32>
    %179 = arith.maximumf %177, %178 : vector<1x192xf32>
    %c1536 = arith.constant 1536 : index
    %c0_94 = arith.constant 0 : index
    %180 = vector.load %arg6[%c1536, %c0_94] : memref<2496x192xf32, #tpu.memory_space<vmem>>, vector<192x192xf32>
    %cst_95 = arith.constant dense<0.000000e+00> : vector<1x192xf32>
    %181 = tpu.matmul %179, %180, %cst_95 {dimension_numbers = #tpu.dot_dimension_numbers<[1], [0], [0], [1], [0, 0, 1, 1], [], []>} : vector<1x192xf32>, vector<192x192xf32>, vector<1x192xf32> -> vector<1x192xf32>
    %cst_96 = arith.constant 3.000000e-04 : f32
    %182 = vector.broadcast %cst_96 : f32 to vector<1x192xf32>
    %183 = arith.addf %181, %182 : vector<1x192xf32>
    %cst_97 = arith.constant 0.000000e+00 : f32
    %184 = vector.broadcast %cst_97 : f32 to vector<1x192xf32>
    %185 = arith.maximumf %183, %184 : vector<1x192xf32>
    %c1728 = arith.constant 1728 : index
    %c0_98 = arith.constant 0 : index
    %186 = vector.load %arg6[%c1728, %c0_98] : memref<2496x192xf32, #tpu.memory_space<vmem>>, vector<192x192xf32>
    %cst_99 = arith.constant dense<0.000000e+00> : vector<1x192xf32>
    %187 = tpu.matmul %185, %186, %cst_99 {dimension_numbers = #tpu.dot_dimension_numbers<[1], [0], [0], [1], [0, 0, 1, 1], [], []>} : vector<1x192xf32>, vector<192x192xf32>, vector<1x192xf32> -> vector<1x192xf32>
    %cst_100 = arith.constant 3.000000e-04 : f32
    %188 = vector.broadcast %cst_100 : f32 to vector<1x192xf32>
    %189 = arith.addf %187, %188 : vector<1x192xf32>
    %cst_101 = arith.constant 0.000000e+00 : f32
    %190 = vector.broadcast %cst_101 : f32 to vector<1x192xf32>
    %191 = arith.maximumf %189, %190 : vector<1x192xf32>
    %c1920 = arith.constant 1920 : index
    %c0_102 = arith.constant 0 : index
    %192 = vector.load %arg6[%c1920, %c0_102] : memref<2496x192xf32, #tpu.memory_space<vmem>>, vector<192x192xf32>
    %cst_103 = arith.constant dense<0.000000e+00> : vector<1x192xf32>
    %193 = tpu.matmul %191, %192, %cst_103 {dimension_numbers = #tpu.dot_dimension_numbers<[1], [0], [0], [1], [0, 0, 1, 1], [], []>} : vector<1x192xf32>, vector<192x192xf32>, vector<1x192xf32> -> vector<1x192xf32>
    %cst_104 = arith.constant 3.000000e-04 : f32
    %194 = vector.broadcast %cst_104 : f32 to vector<1x192xf32>
    %195 = arith.addf %193, %194 : vector<1x192xf32>
    %cst_105 = arith.constant 0.000000e+00 : f32
    %196 = vector.broadcast %cst_105 : f32 to vector<1x192xf32>
    %197 = arith.maximumf %195, %196 : vector<1x192xf32>
    %c2112 = arith.constant 2112 : index
    %c0_106 = arith.constant 0 : index
    %198 = vector.load %arg6[%c2112, %c0_106] : memref<2496x192xf32, #tpu.memory_space<vmem>>, vector<192x192xf32>
    %cst_107 = arith.constant dense<0.000000e+00> : vector<1x192xf32>
    %199 = tpu.matmul %197, %198, %cst_107 {dimension_numbers = #tpu.dot_dimension_numbers<[1], [0], [0], [1], [0, 0, 1, 1], [], []>} : vector<1x192xf32>, vector<192x192xf32>, vector<1x192xf32> -> vector<1x192xf32>
    %cst_108 = arith.constant 3.000000e-04 : f32
    %200 = vector.broadcast %cst_108 : f32 to vector<1x192xf32>
    %201 = arith.addf %199, %200 : vector<1x192xf32>
    %cst_109 = arith.constant 0.000000e+00 : f32
    %202 = vector.broadcast %cst_109 : f32 to vector<1x192xf32>
    %203 = arith.maximumf %201, %202 : vector<1x192xf32>
    %c2304 = arith.constant 2304 : index
    %c0_110 = arith.constant 0 : index
    %204 = vector.load %arg6[%c2304, %c0_110] : memref<2496x192xf32, #tpu.memory_space<vmem>>, vector<192x192xf32>
    %cst_111 = arith.constant dense<0.000000e+00> : vector<1x192xf32>
    %205 = tpu.matmul %203, %204, %cst_111 {dimension_numbers = #tpu.dot_dimension_numbers<[1], [0], [0], [1], [0, 0, 1, 1], [], []>} : vector<1x192xf32>, vector<192x192xf32>, vector<1x192xf32> -> vector<1x192xf32>
    %cst_112 = arith.constant 3.000000e-04 : f32
    %206 = vector.broadcast %cst_112 : f32 to vector<1x192xf32>
    %207 = arith.addf %205, %206 : vector<1x192xf32>
    %cst_113 = arith.constant 0.000000e+00 : f32
    %208 = vector.broadcast %cst_113 : f32 to vector<1x192xf32>
    %209 = arith.maximumf %207, %208 : vector<1x192xf32>
    %c0_114 = arith.constant 0 : index
    %c0_115 = arith.constant 0 : index
    %c0_116 = arith.constant 0 : index
    %210 = vector.load %arg13[%c0_114, %c0_115, %c0_116] : memref<1x1x192xf32, #tpu.memory_space<vmem>>, vector<1x1x192xf32>
    %211 = vector.shape_cast %210 : vector<1x1x192xf32> to vector<1x192xf32>
    %212 = vector.shape_cast %209 : vector<1x192xf32> to vector<1x1x192xf32>
    tpu.vector_store %arg13[%c0_114, %c0_115, %c0_116], %212 {strides = array<i32>} : memref<1x1x192xf32, #tpu.memory_space<vmem>>, vector<1x1x192xf32>,
    %c0_117 = arith.constant 0 : index
    %c0_118 = arith.constant 0 : index
    %213 = vector.load %arg8[%c0_117, %c0_118] : memref<192x512xf32, #tpu.memory_space<vmem>>, vector<192x512xf32>
    %cst_119 = arith.constant dense<0.000000e+00> : vector<1x512xf32>
    %214 = tpu.matmul %209, %213, %cst_119 {dimension_numbers = #tpu.dot_dimension_numbers<[1], [0], [0], [1], [0, 0, 1, 1], [], []>} : vector<1x192xf32>, vector<192x512xf32>, vector<1x512xf32> -> vector<1x512xf32>
    %cst_120 = arith.constant 2.000000e-04 : f32
    %215 = vector.broadcast %cst_120 : f32 to vector<1x512xf32>
    %216 = arith.addf %214, %215 : vector<1x512xf32>
    %cst_121 = arith.constant 0.000000e+00 : f32
    %217 = vector.broadcast %cst_121 : f32 to vector<1x512xf32>
    %218 = arith.maximumf %216, %217 : vector<1x512xf32>
    %c0_122 = arith.constant 0 : index
    %c0_123 = arith.constant 0 : index
    %c0_124 = arith.constant 0 : index
    %219 = vector.load %arg14[%c0_122, %c0_123, %c0_124] : memref<1x1x512xf32, #tpu.memory_space<vmem>>, vector<1x1x512xf32>
    %220 = vector.shape_cast %219 : vector<1x1x512xf32> to vector<1x512xf32>
    %221 = vector.shape_cast %218 : vector<1x512xf32> to vector<1x1x512xf32>
    tpu.vector_store %arg14[%c0_122, %c0_123, %c0_124], %221 {strides = array<i32>} : memref<1x1x512xf32, #tpu.memory_space<vmem>>, vector<1x1x512xf32>,
    return
  }
  func.func @transform_0(%arg0: i32) -> (i32, i32, i32) {
    %c0_i32 = arith.constant 0 : i32
    %c0_i32_0 = arith.constant 0 : i32
    %c0_i32_1 = arith.constant 0 : i32
    return %arg0, %c0_i32, %c0_i32_0 : i32, i32, i32
  }
  func.func @transform_1(%arg0: i32) -> (i32, i32) {
    %c0_i32 = arith.constant 0 : i32
    %c0_i32_0 = arith.constant 0 : i32
    %c0_i32_1 = arith.constant 0 : i32
    return %c0_i32, %c0_i32_0 : i32, i32
  }
  func.func @transform_2(%arg0: i32) -> (i32, i32) {
    %c0_i32 = arith.constant 0 : i32
    %c0_i32_0 = arith.constant 0 : i32
    %c0_i32_1 = arith.constant 0 : i32
    return %c0_i32, %c0_i32_0 : i32, i32
  }
  func.func @transform_3(%arg0: i32) -> (i32, i32) {
    %c0_i32 = arith.constant 0 : i32
    %c0_i32_0 = arith.constant 0 : i32
    %c0_i32_1 = arith.constant 0 : i32
    return %c0_i32, %c0_i32_0 : i32, i32
  }
  func.func @transform_4(%arg0: i32) -> (i32, i32) {
    %c0_i32 = arith.constant 0 : i32
    %c0_i32_0 = arith.constant 0 : i32
    %c0_i32_1 = arith.constant 0 : i32
    return %c0_i32, %c0_i32_0 : i32, i32
  }
  func.func @transform_5(%arg0: i32) -> (i32, i32) {
    %c0_i32 = arith.constant 0 : i32
    %c0_i32_0 = arith.constant 0 : i32
    %c0_i32_1 = arith.constant 0 : i32
    return %c0_i32, %c0_i32_0 : i32, i32
  }
  func.func @transform_6(%arg0: i32) -> (i32, i32) {
    %c0_i32 = arith.constant 0 : i32
    %c0_i32_0 = arith.constant 0 : i32
    %c0_i32_1 = arith.constant 0 : i32
    return %c0_i32, %c0_i32_0 : i32, i32
  }
  func.func @transform_7(%arg0: i32) -> (i32, i32) {
    %c0_i32 = arith.constant 0 : i32
    %c0_i32_0 = arith.constant 0 : i32
    %c0_i32_1 = arith.constant 0 : i32
    return %c0_i32, %c0_i32_0 : i32, i32
  }
  func.func @transform_8(%arg0: i32) -> (i32, i32) {
    %c0_i32 = arith.constant 0 : i32
    %c0_i32_0 = arith.constant 0 : i32
    %c0_i32_1 = arith.constant 0 : i32
    return %c0_i32, %c0_i32_0 : i32, i32
  }
  func.func @transform_9(%arg0: i32) -> (i32, i32) {
    %c0_i32 = arith.constant 0 : i32
    %c0_i32_0 = arith.constant 0 : i32
    %c0_i32_1 = arith.constant 0 : i32
    return %c0_i32, %c0_i32_0 : i32, i32
  }
  func.func @transform_10(%arg0: i32) -> (i32, i32) {
    %c0_i32 = arith.constant 0 : i32
    %c0_i32_0 = arith.constant 0 : i32
    %c0_i32_1 = arith.constant 0 : i32
    return %c0_i32, %c0_i32_0 : i32, i32
  }
  func.func @transform_11(%arg0: i32) -> (i32, i32, i32) {
    %c0_i32 = arith.constant 0 : i32
    %c0_i32_0 = arith.constant 0 : i32
    %c0_i32_1 = arith.constant 0 : i32
    return %arg0, %c0_i32, %c0_i32_0 : i32, i32, i32
  }
  func.func @transform_12(%arg0: i32) -> (i32, i32, i32) {
    %c0_i32 = arith.constant 0 : i32
    %c0_i32_0 = arith.constant 0 : i32
    %c0_i32_1 = arith.constant 0 : i32
    return %arg0, %c0_i32, %c0_i32_0 : i32, i32, i32
  }
  func.func @transform_13(%arg0: i32) -> (i32, i32, i32) {
    %c0_i32 = arith.constant 0 : i32
    %c0_i32_0 = arith.constant 0 : i32
    %c0_i32_1 = arith.constant 0 : i32
    return %arg0, %c0_i32, %c0_i32_0 : i32, i32, i32
  }
}

</mosaic_0001>

<llo_original>
// kernel: forward.1
$region0: #{forward.1}
  #allocation0 [shape = 'u32[]', space=smem, size = 0x4, offset = 0x4, fixed_abs, tag = 'smem constant byte address 0x4 - core index']
  #allocation1 [shape = 'u32[144,128]{1,0:T(1,128)}', space=vmem, size = 0x12000, scoped, tag = 'internal scratch']
  %s0 = inlined_call_operand.vmem [shape: f32[2,64,32], index: 0, kind: input, shape index: {}]
  %s1 = inlined_call_operand.vmem [shape: f32[1,16], index: 1, kind: input, shape index: {}]
  %s2 = inlined_call_operand.vmem [shape: f32[4,36], index: 2, kind: input, shape index: {}]
  %s3 = inlined_call_operand.hbm [shape: f32[32,48], index: 3, kind: input, shape index: {}]
  %s4 = inlined_call_operand.hbm [shape: f32[20,144], index: 4, kind: input, shape index: {}]
  %s5 = inlined_call_operand.vmem [shape: f32[2496,192], index: 5, kind: input, shape index: {}]
  %s6 = inlined_call_operand.hbm [shape: f32[96,432], index: 6, kind: input, shape index: {}]
  %s7 = inlined_call_operand.vmem [shape: f32[192,512], index: 7, kind: input, shape index: {}]
  %s8 = inlined_call_operand.vmem [shape: f32[16,576], index: 8, kind: input, shape index: {}]
  %s9 = inlined_call_operand.hbm [shape: f32[96,768], index: 9, kind: input, shape index: {}]
  %s10 = inlined_call_operand.hbm [shape: f32[336,864], index: 10, kind: input, shape index: {}]
  %s11 = inlined_call_operand.hbm [shape: f32[2,4,96], index: 11, kind: output, shape index: {0}]
  %s12 = inlined_call_operand.hbm [shape: f32[2,1,192], index: 12, kind: output, shape index: {1}]
  %s13 = inlined_call_operand.hbm [shape: f32[2,1,512], index: 13, kind: output, shape index: {2}]
  %14 = xla_tuple %s11, %s12, %s13
  %s15 = sld [smem:[#allocation0]]
  $region113: #{forward.1} parent=0
    _
  %s17 = ssub.s32 1, %s15
  %s18 = scalar_select 0, %s17, %s15
  $region1: #{forward.1} parent=0
    #allocation2 [shape = 'u8[16384]{0}', space=vmem, size = 0x4000, scoped, tag = 'input window, operand 3, single buffered']
    #allocation3 [shape = 's32[2]{0}', space=sflag, size = 0x8, scoped, tag = 'scoped memory for forward.1']
    #allocation4 [shape = 's32[2]{0}', space=sflag, size = 0x8, scoped, tag = 'scoped memory for forward.1']
    #allocation5 [shape = 'u8[24576]{0}', space=vmem, size = 0x6000, scoped, tag = 'input window, operand 4, single buffered']
    #allocation6 [shape = 's32[1]{0}', space=sflag, size = 0x4, scoped, tag = 'scoped memory for forward.1']
    #allocation7 [shape = 'u8[196608]{0}', space=vmem, size = 0x30000, scoped, tag = 'input window, operand 6, single buffered']
    #allocation8 [shape = 'u8[294912]{0}', space=vmem, size = 0x48000, scoped, tag = 'input window, operand 9, single buffered']
    #allocation9 [shape = 's32[1]{0}', space=sflag, size = 0x4, scoped, tag = 'scoped memory for forward.1']
    #allocation10 [shape = 'u8[1204224]{0}', space=vmem, size = 0x126000, scoped, tag = 'input window, operand 10, single buffered']
    #allocation11 [shape = 'u8[4096]{0}', space=vmem, size = 0x1000, scoped, tag = 'output window, operand 0']
    #allocation12 [shape = 'u8[2048]{0}', space=vmem, size = 0x800, scoped, tag = 'output window, operand 1']
    #allocation13 [shape = 's32[2]{0}', space=sflag, size = 0x8, scoped, tag = 'scoped memory for forward.1']
    #allocation14 [shape = 'u8[4096]{0}', space=vmem, size = 0x1000, scoped, tag = 'output window, operand 2']
    %19 = vsyncpa [#allocation3], 0
    %20 = vsyncpa [#allocation6], 0
    %21 = vsyncpa [#allocation9], 0
    %22 = vsyncpa [#allocation4], 0
    %s23 = scalar_lea.sflag [#allocation4], 1
    %24 = vsyncpa %s23, 0
    %25 = vsyncpa [#allocation13], 0
    %s26 = scalar_lea.sflag [#allocation13], 1
    %27 = vsyncpa %s26, 0
    loop: start=0, step=1, limit=4
    $region2: #{forward.1} parent=1 // loop_pre_header
      _
    $region3: #{forward.1} parent=1 // loop_header
      %s29 = sphi 0, %s33
      %p30 = scmp.ge.s32.totalorder %s29, 4
      %s39 = sphi 0, %s41
      %s42 = sphi 0, %s39
      %s43 = sphi 0, %s42
      %s59 = sphi 0, %s43
      %s63 = sphi 0, %s63
      %s65 = sphi 0, %s63
      %s66 = sphi 0, %s65
      %s80 = sphi 0, %s66
      %s84 = sphi 0, %s84
      %s86 = sphi 0, %s84
      %s87 = sphi 0, %s86
      %s101 = sphi 0, %s87
      %s105 = sphi 0, %s105
      %s107 = sphi 0, %s105
      %s108 = sphi 0, %s107
      %s122 = sphi 0, %s108
      %s126 = sphi 0, %s126
      %s128 = sphi 0, %s126
      %s129 = sphi 0, %s128
      %s143 = sphi 0, %s129
      %s147 = sphi 0, %s147
      %s149 = sphi 0, %s147
      %s150 = sphi 0, %s149
      %s164 = sphi 0, %s150
      %s168 = sphi 0, %s168
      %s170 = sphi 0, %s168
      %s171 = sphi 0, %s170
      %s185 = sphi 0, %s171
      %s189 = sphi 0, %s189
      %s191 = sphi 0, %s189
      %s192 = sphi 0, %s191
      %s206 = sphi 0, %s192
      %s210 = sphi 0, %s210
      %s212 = sphi 0, %s210
      %s213 = sphi 0, %s212
      %s227 = sphi 0, %s213
      %s231 = sphi 0, %s231
      %s233 = sphi 0, %s231
      %s234 = sphi 0, %s233
      %s248 = sphi 0, %s234
      %s252 = sphi 0, %s252
      %s254 = sphi 0, %s252
      %s255 = sphi 0, %s254
      %s269 = sphi 0, %s255
      %s275 = sphi 0, %s277
      %s278 = sphi 0, %s275
      %s279 = sphi 0, %s278
      %s295 = sphi 0, %s279
      %s301 = sphi 0, %s303
      %s304 = sphi 0, %s301
      %s305 = sphi 0, %s304
      %s321 = sphi 0, %s305
      %s327 = sphi 0, %s329
      %s330 = sphi 0, %s327
      %s331 = sphi 0, %s330
      %s347 = sphi 0, %s331
    $region4: #{forward.1} parent=1 // loop_header_branch
      %32 = sbr.rel (%p30) target = $region8
    $region5: #{forward.1} parent=1 // loop_body
      %s34 = ssub.s32 %s29, 1
      %s35 = ssub.s32 %s29, 2
      %s36 = sadd.s32 %s29, 1
      %s37 = ssub.s32 %s29, %s36
      %p38 = scmp.eq.s32.totalorder %s37, 0
      %s40 = sadd.s32 %s39, 1
      %s41 = scalar_select %p38, %s39, %s40
      %p44 = pneg %p38
      %p45 = scmp.eq.s32.totalorder %s29, 1
      %p46 = por %p44, %p45
      %p47 = scmp.ne.s32.totalorder %s39, %s42
      %p48 = scmp.eq.s32.totalorder %s29, 0
      %p49 = por %p47, %p48
      %p50 = scmp.ne.s32.totalorder %s39, %s42
      %p51 = scmp.eq.s32.totalorder %s34, 1
      %p52 = por %p50, %p51
      %p53 = scmp.ne.s32.totalorder %s42, %s43
      %p54 = scmp.eq.s32.totalorder %s34, 0
      %p55 = por %p53, %p54
      %p56 = scmp.ne.s32.totalorder %s42, %s43
      %p57 = scmp.eq.s32.totalorder %s35, 1
      %p58 = por %p56, %p57
      %p60 = scmp.ne.s32.totalorder %s43, %s59
      %p61 = scmp.eq.s32.totalorder %s35, 0
      %p62 = por %p60, %p61
      %s64 = sadd.s32 %s63, 1
      %p67 = scmp.eq.s32.totalorder %s29, 1
      %p68 = scmp.ne.s32.totalorder %s63, %s65
      %p69 = scmp.eq.s32.totalorder %s29, 0
      %p70 = por %p68, %p69
      %p71 = scmp.ne.s32.totalorder %s63, %s65
      %p72 = scmp.eq.s32.totalorder %s34, 1
      %p73 = por %p71, %p72
      %p74 = scmp.ne.s32.totalorder %s65, %s66
      %p75 = scmp.eq.s32.totalorder %s34, 0
      %p76 = por %p74, %p75
      %p77 = scmp.ne.s32.totalorder %s65, %s66
      %p78 = scmp.eq.s32.totalorder %s35, 1
      %p79 = por %p77, %p78
      %p81 = scmp.ne.s32.totalorder %s66, %s80
      %p82 = scmp.eq.s32.totalorder %s35, 0
      %p83 = por %p81, %p82
      %s85 = sadd.s32 %s84, 1
      %p88 = scmp.eq.s32.totalorder %s29, 1
      %p89 = scmp.ne.s32.totalorder %s84, %s86
      %p90 = scmp.eq.s32.totalorder %s29, 0
      %p91 = por %p89, %p90
      %p92 = scmp.ne.s32.totalorder %s84, %s86
      %p93 = scmp.eq.s32.totalorder %s34, 1
      %p94 = por %p92, %p93
      %p95 = scmp.ne.s32.totalorder %s86, %s87
      %p96 = scmp.eq.s32.totalorder %s34, 0
      %p97 = por %p95, %p96
      %p98 = scmp.ne.s32.totalorder %s86, %s87
      %p99 = scmp.eq.s32.totalorder %s35, 1
      %p100 = por %p98, %p99
      %p102 = scmp.ne.s32.totalorder %s87, %s101
      %p103 = scmp.eq.s32.totalorder %s35, 0
      %p104 = por %p102, %p103
      %s106 = sadd.s32 %s105, 1
      %p109 = scmp.eq.s32.totalorder %s29, 1
      %p110 = scmp.ne.s32.totalorder %s105, %s107
      %p111 = scmp.eq.s32.totalorder %s29, 0
      %p112 = por %p110, %p111
      %p113 = scmp.ne.s32.totalorder %s105, %s107
      %p114 = scmp.eq.s32.totalorder %s34, 1
      %p115 = por %p113, %p114
      %p116 = scmp.ne.s32.totalorder %s107, %s108
      %p117 = scmp.eq.s32.totalorder %s34, 0
      %p118 = por %p116, %p117
      %p119 = scmp.ne.s32.totalorder %s107, %s108
      %p120 = scmp.eq.s32.totalorder %s35, 1
      %p121 = por %p119, %p120
      %p123 = scmp.ne.s32.totalorder %s108, %s122
      %p124 = scmp.eq.s32.totalorder %s35, 0
      %p125 = por %p123, %p124
      %s127 = sadd.s32 %s126, 1
      %p130 = scmp.eq.s32.totalorder %s29, 1
      %p131 = scmp.ne.s32.totalorder %s126, %s128
      %p132 = scmp.eq.s32.totalorder %s29, 0
      %p133 = por %p131, %p132
      %p134 = scmp.ne.s32.totalorder %s126, %s128
      %p135 = scmp.eq.s32.totalorder %s34, 1
      %p136 = por %p134, %p135
      %p137 = scmp.ne.s32.totalorder %s128, %s129
      %p138 = scmp.eq.s32.totalorder %s34, 0
      %p139 = por %p137, %p138
      %p140 = scmp.ne.s32.totalorder %s128, %s129
      %p141 = scmp.eq.s32.totalorder %s35, 1
      %p142 = por %p140, %p141
      %p144 = scmp.ne.s32.totalorder %s129, %s143
      %p145 = scmp.eq.s32.totalorder %s35, 0
      %p146 = por %p144, %p145
      %s148 = sadd.s32 %s147, 1
      %p151 = scmp.eq.s32.totalorder %s29, 1
      %p152 = scmp.ne.s32.totalorder %s147, %s149
      %p153 = scmp.eq.s32.totalorder %s29, 0
      %p154 = por %p152, %p153
      %p155 = scmp.ne.s32.totalorder %s147, %s149
      %p156 = scmp.eq.s32.totalorder %s34, 1
      %p157 = por %p155, %p156
      %p158 = scmp.ne.s32.totalorder %s149, %s150
      %p159 = scmp.eq.s32.totalorder %s34, 0
      %p160 = por %p158, %p159
      %p161 = scmp.ne.s32.totalorder %s149, %s150
      %p162 = scmp.eq.s32.totalorder %s35, 1
      %p163 = por %p161, %p162
      %p165 = scmp.ne.s32.totalorder %s150, %s164
      %p166 = scmp.eq.s32.totalorder %s35, 0
      %p167 = por %p165, %p166
      %s169 = sadd.s32 %s168, 1
      %p172 = scmp.eq.s32.totalorder %s29, 1
      %p173 = scmp.ne.s32.totalorder %s168, %s170
      %p174 = scmp.eq.s32.totalorder %s29, 0
      %p175 = por %p173, %p174
      %p176 = scmp.ne.s32.totalorder %s168, %s170
      %p177 = scmp.eq.s32.totalorder %s34, 1
      %p178 = por %p176, %p177
      %p179 = scmp.ne.s32.totalorder %s170, %s171
      %p180 = scmp.eq.s32.totalorder %s34, 0
      %p181 = por %p179, %p180
      %p182 = scmp.ne.s32.totalorder %s170, %s171
      %p183 = scmp.eq.s32.totalorder %s35, 1
      %p184 = por %p182, %p183
      %p186 = scmp.ne.s32.totalorder %s171, %s185
      %p187 = scmp.eq.s32.totalorder %s35, 0
      %p188 = por %p186, %p187
      %s190 = sadd.s32 %s189, 1
      %p193 = scmp.eq.s32.totalorder %s29, 1
      %p194 = scmp.ne.s32.totalorder %s189, %s191
      %p195 = scmp.eq.s32.totalorder %s29, 0
      %p196 = por %p194, %p195
      %p197 = scmp.ne.s32.totalorder %s189, %s191
      %p198 = scmp.eq.s32.totalorder %s34, 1
      %p199 = por %p197, %p198
      %p200 = scmp.ne.s32.totalorder %s191, %s192
      %p201 = scmp.eq.s32.totalorder %s34, 0
      %p202 = por %p200, %p201
      %p203 = scmp.ne.s32.totalorder %s191, %s192
      %p204 = scmp.eq.s32.totalorder %s35, 1
      %p205 = por %p203, %p204
      %p207 = scmp.ne.s32.totalorder %s192, %s206
      %p208 = scmp.eq.s32.totalorder %s35, 0
      %p209 = por %p207, %p208
      %s211 = sadd.s32 %s210, 1
      %p214 = scmp.eq.s32.totalorder %s29, 1
      %p215 = scmp.ne.s32.totalorder %s210, %s212
      %p216 = scmp.eq.s32.totalorder %s29, 0
      %p217 = por %p215, %p216
      %p218 = scmp.ne.s32.totalorder %s210, %s212
      %p219 = scmp.eq.s32.totalorder %s34, 1
      %p220 = por %p218, %p219
      %p221 = scmp.ne.s32.totalorder %s212, %s213
      %p222 = scmp.eq.s32.totalorder %s34, 0
      %p223 = por %p221, %p222
      %p224 = scmp.ne.s32.totalorder %s212, %s213
      %p225 = scmp.eq.s32.totalorder %s35, 1
      %p226 = por %p224, %p225
      %p228 = scmp.ne.s32.totalorder %s213, %s227
      %p229 = scmp.eq.s32.totalorder %s35, 0
      %p230 = por %p228, %p229
      %s232 = sadd.s32 %s231, 1
      %p235 = scmp.eq.s32.totalorder %s29, 1
      %p236 = scmp.ne.s32.totalorder %s231, %s233
      %p237 = scmp.eq.s32.totalorder %s29, 0
      %p238 = por %p236, %p237
      %p239 = scmp.ne.s32.totalorder %s231, %s233
      %p240 = scmp.eq.s32.totalorder %s34, 1
      %p241 = por %p239, %p240
      %p242 = scmp.ne.s32.totalorder %s233, %s234
      %p243 = scmp.eq.s32.totalorder %s34, 0
      %p244 = por %p242, %p243
      %p245 = scmp.ne.s32.totalorder %s233, %s234
      %p246 = scmp.eq.s32.totalorder %s35, 1
      %p247 = por %p245, %p246
      %p249 = scmp.ne.s32.totalorder %s234, %s248
      %p250 = scmp.eq.s32.totalorder %s35, 0
      %p251 = por %p249, %p250
      %s253 = sadd.s32 %s252, 1
      %p256 = scmp.eq.s32.totalorder %s29, 1
      %p257 = scmp.ne.s32.totalorder %s252, %s254
      %p258 = scmp.eq.s32.totalorder %s29, 0
      %p259 = por %p257, %p258
      %p260 = scmp.ne.s32.totalorder %s252, %s254
      %p261 = scmp.eq.s32.totalorder %s34, 1
      %p262 = por %p260, %p261
      %p263 = scmp.ne.s32.totalorder %s254, %s255
      %p264 = scmp.eq.s32.totalorder %s34, 0
      %p265 = por %p263, %p264
      %p266 = scmp.ne.s32.totalorder %s254, %s255
      %p267 = scmp.eq.s32.totalorder %s35, 1
      %p268 = por %p266, %p267
      %p270 = scmp.ne.s32.totalorder %s255, %s269
      %p271 = scmp.eq.s32.totalorder %s35, 0
      %p272 = por %p270, %p271
      %s273 = ssub.s32 %s29, %s36
      %p274 = scmp.eq.s32.totalorder %s273, 0
      %s276 = sadd.s32 %s275, 1
      %s277 = scalar_select %p274, %s275, %s276
      %p280 = pneg %p274
      %p281 = scmp.eq.s32.totalorder %s29, 1
      %p282 = por %p280, %p281
      %p283 = scmp.ne.s32.totalorder %s275, %s278
      %p284 = scmp.eq.s32.totalorder %s29, 0
      %p285 = por %p283, %p284
      %p286 = scmp.ne.s32.totalorder %s275, %s278
      %p287 = scmp.eq.s32.totalorder %s34, 1
      %p288 = por %p286, %p287
      %p289 = scmp.ne.s32.totalorder %s278, %s279
      %p290 = scmp.eq.s32.totalorder %s34, 0
      %p291 = por %p289, %p290
      %p292 = scmp.ne.s32.totalorder %s278, %s279
      %p293 = scmp.eq.s32.totalorder %s35, 1
      %p294 = por %p292, %p293
      %p296 = scmp.ne.s32.totalorder %s279, %s295
      %p297 = scmp.eq.s32.totalorder %s35, 0
      %p298 = por %p296, %p297
      %s299 = ssub.s32 %s29, %s36
      %p300 = scmp.eq.s32.totalorder %s299, 0
      %s302 = sadd.s32 %s301, 1
      %s303 = scalar_select %p300, %s301, %s302
      %p306 = pneg %p300
      %p307 = scmp.eq.s32.totalorder %s29, 1
      %p308 = por %p306, %p307
      %p309 = scmp.ne.s32.totalorder %s301, %s304
      %p310 = scmp.eq.s32.totalorder %s29, 0
      %p311 = por %p309, %p310
      %p312 = scmp.ne.s32.totalorder %s301, %s304
      %p313 = scmp.eq.s32.totalorder %s34, 1
      %p314 = por %p312, %p313
      %p315 = scmp.ne.s32.totalorder %s304, %s305
      %p316 = scmp.eq.s32.totalorder %s34, 0
      %p317 = por %p315, %p316
      %p318 = scmp.ne.s32.totalorder %s304, %s305
      %p319 = scmp.eq.s32.totalorder %s35, 1
      %p320 = por %p318, %p319
      %p322 = scmp.ne.s32.totalorder %s305, %s321
      %p323 = scmp.eq.s32.totalorder %s35, 0
      %p324 = por %p322, %p323
      %s325 = ssub.s32 %s29, %s36
      %p326 = scmp.eq.s32.totalorder %s325, 0
      %s328 = sadd.s32 %s327, 1
      %s329 = scalar_select %p326, %s327, %s328
      %p332 = pneg %p326
      %p333 = scmp.eq.s32.totalorder %s29, 1
      %p334 = por %p332, %p333
      %p335 = scmp.ne.s32.totalorder %s327, %s330
      %p336 = scmp.eq.s32.totalorder %s29, 0
      %p337 = por %p335, %p336
      %p338 = scmp.ne.s32.totalorder %s327, %s330
      %p339 = scmp.eq.s32.totalorder %s34, 1
      %p340 = por %p338, %p339
      %p341 = scmp.ne.s32.totalorder %s330, %s331
      %p342 = scmp.eq.s32.totalorder %s34, 0
      %p343 = por %p341, %p342
      %p344 = scmp.ne.s32.totalorder %s330, %s331
      %p345 = scmp.eq.s32.totalorder %s35, 1
      %p346 = por %p344, %p345
      %p348 = scmp.ne.s32.totalorder %s331, %s347
      %p349 = scmp.eq.s32.totalorder %s35, 0
      %p350 = por %p348, %p349
      %p351 = scmp.le.s32.totalorder 1, %s29
      %p352 = scmp.lt.s32.totalorder %s29, 3
      %p353 = pnand %p351, %p352
      %p354 = pneg %p353
      // Predicated region
      $region9: #{forward.1} parent=5 // pred_check
        _
      $region10: #{forward.1} parent=5 // pred_check_branch
        %356 = sbr.rel (%p353) target = $region12
      $region11: #{forward.1} parent=5 // pred_region
        %s357 = ssub.s32 %s29, 1
        // Predicated region
        $region13: #{forward.1} parent=11 // pred_check
          %p358 = pneg %p76
        $region14: #{forward.1} parent=11 // pred_check_branch
          %360 = sbr.rel (%p358) target = $region16
        $region15: #{forward.1} parent=11 // pred_region
          _
        $region16: #{forward.1} parent=11 // pred_fallthru
          _
        // Predicated region
        $region17: #{forward.1} parent=11 // pred_check
          %p361 = pneg %p97
        $region18: #{forward.1} parent=11 // pred_check_branch
          %363 = sbr.rel (%p361) target = $region20
        $region19: #{forward.1} parent=11 // pred_region
          _
        $region20: #{forward.1} parent=11 // pred_fallthru
          _
        // Predicated region
        $region21: #{forward.1} parent=11 // pred_check
          %p364 = pneg %p118
        $region22: #{forward.1} parent=11 // pred_check_branch
          %366 = sbr.rel (%p364) target = $region24
        $region23: #{forward.1} parent=11 // pred_region
          %s368 = ssub.s32 512, 512
          %369 = vsyncadd [#allocation3], %s368
          %s370 = sshll.u32 [#allocation2], 4
          %s371 = int_to_ptr.vmem [resolvable:$true] %s370
          %376 = dma.hbm_to_vmem [thread:$0]  %s3, 512, %s371, [#allocation3], 128, 128, 8
        $region24: #{forward.1} parent=11 // pred_fallthru
          _
        // Predicated region
        $region25: #{forward.1} parent=11 // pred_check
          %p377 = pneg %p139
        $region26: #{forward.1} parent=11 // pred_check_branch
          %379 = sbr.rel (%p377) target = $region28
        $region27: #{forward.1} parent=11 // pred_region
          %s381 = ssub.s32 768, 768
          %382 = vsyncadd [#allocation6], %s381
          %s383 = sshll.u32 [#allocation5], 4
          %s384 = int_to_ptr.vmem [resolvable:$true] %s383
          %389 = dma.hbm_to_vmem [thread:$0]  %s4, 768, %s384, [#allocation6], 256, 256, 16
        $region28: #{forward.1} parent=11 // pred_fallthru
          _
        // Predicated region
        $region29: #{forward.1} parent=11 // pred_check
          %p390 = pneg %p160
        $region30: #{forward.1} parent=11 // pred_check_branch
          %392 = sbr.rel (%p390) target = $region32
        $region31: #{forward.1} parent=11 // pred_region
          _
        $region32: #{forward.1} parent=11 // pred_fallthru
          _
        // Predicated region
        $region33: #{forward.1} parent=11 // pred_check
          %p393 = pneg %p181
        $region34: #{forward.1} parent=11 // pred_check_branch
          %395 = sbr.rel (%p393) target = $region36
        $region35: #{forward.1} parent=11 // pred_region
          %s397 = ssub.s32 6144, 6144
          %398 = vsyncadd [#allocation6], %s397
          %s399 = sshll.u32 [#allocation7], 4
          %s400 = int_to_ptr.vmem [resolvable:$true] %s399
          %405 = dma.hbm_to_vmem [thread:$0]  %s6, 6144, %s400, [#allocation6], 512, 512, 32
        $region36: #{forward.1} parent=11 // pred_fallthru
          _
        // Predicated region
        $region37: #{forward.1} parent=11 // pred_check
          %p406 = pneg %p202
        $region38: #{forward.1} parent=11 // pred_check_branch
          %408 = sbr.rel (%p406) target = $region40
        $region39: #{forward.1} parent=11 // pred_region
          _
        $region40: #{forward.1} parent=11 // pred_fallthru
          _
        // Predicated region
        $region41: #{forward.1} parent=11 // pred_check
          %p409 = pneg %p223
        $region42: #{forward.1} parent=11 // pred_check_branch
          %411 = sbr.rel (%p409) target = $region44
        $region43: #{forward.1} parent=11 // pred_region
          _
        $region44: #{forward.1} parent=11 // pred_fallthru
          _
        // Predicated region
        $region45: #{forward.1} parent=11 // pred_check
          %p412 = pneg %p244
        $region46: #{forward.1} parent=11 // pred_check_branch
          %414 = sbr.rel (%p412) target = $region48
        $region47: #{forward.1} parent=11 // pred_region
          %s416 = ssub.s32 9216, 9216
          %417 = vsyncadd [#allocation9], %s416
          %s418 = sshll.u32 [#allocation8], 4
          %s419 = int_to_ptr.vmem [resolvable:$true] %s418
          %424 = dma.hbm_to_vmem [thread:$0]  %s9, 9216, %s419, [#allocation9], 768, 768, 48
        $region48: #{forward.1} parent=11 // pred_fallthru
          _
        // Predicated region
        $region49: #{forward.1} parent=11 // pred_check
          %p425 = pneg %p265
        $region50: #{forward.1} parent=11 // pred_check_branch
          %427 = sbr.rel (%p425) target = $region52
        $region51: #{forward.1} parent=11 // pred_region
          %s429 = ssub.s32 37632, 37632
          %430 = vsyncadd [#allocation9], %s429
          %s431 = sshll.u32 [#allocation10], 4
          %s432 = int_to_ptr.vmem [resolvable:$true] %s431
          %437 = dma.hbm_to_vmem [thread:$0]  %s10, 37632, %s432, [#allocation9], 896, 896, 56
        $region52: #{forward.1} parent=11 // pred_fallthru
          _
      $region12: #{forward.1} parent=5 // pred_fallthru
        _
      %p438 = scmp.lt.s32.totalorder %s29, 2
      // Predicated region
      $region53: #{forward.1} parent=5 // pred_check
        %p439 = pneg %p438
      $region54: #{forward.1} parent=5 // pred_check_branch
        %441 = sbr.rel (%p439) target = $region56
      $region55: #{forward.1} parent=5 // pred_region
        // Predicated region
        $region57: #{forward.1} parent=55 // pred_check
          %p442 = pneg %p49
        $region58: #{forward.1} parent=55 // pred_check_branch
          %444 = sbr.rel (%p442) target = $region60
        $region59: #{forward.1} parent=55 // pred_region
          %p445 = scmp.lt.s32.totalorder %s29, 1
          %s446 = scalar_select %p445, %s29, 1
          %s447 = smul.addr %s446, 8
          %s448 = smul.addr %s447, 8
          %s449 = scalar_lea.vmem %s0, %s448
        $region60: #{forward.1} parent=55 // pred_fallthru
          _
      $region56: #{forward.1} parent=5 // pred_fallthru
        _
      %p450 = scmp.le.s32.totalorder 1, %s29
      %p451 = scmp.lt.s32.totalorder %s29, 3
      %p452 = pnand %p450, %p451
      %p453 = pneg %p452
      // Predicated region
      $region61: #{forward.1} parent=5 // pred_check
        _
      $region62: #{forward.1} parent=5 // pred_check_branch
        %455 = sbr.rel (%p452) target = $region64
      $region63: #{forward.1} parent=5 // pred_region
        %s456 = ssub.s32 %s29, 1
        // Predicated region
        $region65: #{forward.1} parent=63 // pred_check
          %p457 = pneg %p118
        $region66: #{forward.1} parent=63 // pred_check_branch
          %459 = sbr.rel (%p457) target = $region68
        $region67: #{forward.1} parent=63 // pred_region
          %460 = dma.done [#allocation3], 512
        $region68: #{forward.1} parent=63 // pred_fallthru
          _
        // Predicated region
        $region69: #{forward.1} parent=63 // pred_check
          %p461 = pneg %p139
        $region70: #{forward.1} parent=63 // pred_check_branch
          %463 = sbr.rel (%p461) target = $region72
        $region71: #{forward.1} parent=63 // pred_region
          %464 = dma.done [#allocation6], 768
        $region72: #{forward.1} parent=63 // pred_fallthru
          _
        // Predicated region
        $region73: #{forward.1} parent=63 // pred_check
          %p465 = pneg %p181
        $region74: #{forward.1} parent=63 // pred_check_branch
          %467 = sbr.rel (%p465) target = $region76
        $region75: #{forward.1} parent=63 // pred_region
          %468 = dma.done [#allocation6], 6144
        $region76: #{forward.1} parent=63 // pred_fallthru
          _
        // Predicated region
        $region77: #{forward.1} parent=63 // pred_check
          %p469 = pneg %p244
        $region78: #{forward.1} parent=63 // pred_check_branch
          %471 = sbr.rel (%p469) target = $region80
        $region79: #{forward.1} parent=63 // pred_region
          %472 = dma.done [#allocation9], 9216
        $region80: #{forward.1} parent=63 // pred_fallthru
          _
        // Predicated region
        $region81: #{forward.1} parent=63 // pred_check
          %p473 = pneg %p265
        $region82: #{forward.1} parent=63 // pred_check_branch
          %475 = sbr.rel (%p473) target = $region84
        $region83: #{forward.1} parent=63 // pred_region
          %476 = dma.done [#allocation9], 37632
        $region84: #{forward.1} parent=63 // pred_fallthru
          _
        %p477 = scmp.lt.s32.totalorder %s34, 1
        %s478 = scalar_select %p477, %s34, 1
        %s479 = smul.addr %s478, 8
        %s480 = smul.addr %s479, 8
        %s481 = scalar_lea.vmem %s0, %s480
        %p482 = pneg %p55
        %p483 = pneg %p52
        %p484 = pneg %p76
        %p485 = pneg %p73
        %p486 = pneg %p97
        %p487 = pneg %p94
        %p488 = pneg %p118
        %p489 = pneg %p115
        %p490 = pneg %p139
        %p491 = pneg %p136
        %p492 = pneg %p160
        %p493 = pneg %p157
        %p494 = pneg %p181
        %p495 = pneg %p178
        %p496 = pneg %p202
        %p497 = pneg %p199
        %p498 = pneg %p223
        %p499 = pneg %p220
        %p500 = pneg %p244
        %p501 = pneg %p241
        %p502 = pneg %p265
        %p503 = pneg %p262
        %p504 = pneg %p291
        %p505 = pneg %p288
        %s506 = sand.u32 %s278, 1
        %s507 = scalar_lea.sflag [#allocation4], %s506
        %s508 = sand.u32 %s278, 1
        %s509 = smul.addr %s508, 4
        %s510 = scalar_lea.vmem [#allocation11], %s509
        %p511 = pneg %p317
        %p512 = pneg %p314
        %s513 = sand.u32 %s34, 1
        %s514 = scalar_lea.sflag [#allocation13], %s513
        %s515 = sand.u32 %s304, 1
        %s516 = smul.addr %s515, 2
        %s517 = scalar_lea.vmem [#allocation12], %s516
        %p518 = pneg %p343
        %p519 = pneg %p340
        %s520 = sand.u32 %s34, 1
        %s521 = scalar_lea.sflag [#allocation13], %s520
        %s522 = sand.u32 %s330, 1
        %s523 = smul.addr %s522, 4
        %s524 = scalar_lea.vmem [#allocation14], %s523
        %p525 = scmp.lt.s32.totalorder %s34, 1
        %s526 = scalar_select %p525, %s34, 1
        %s527 = smul.addr %s526, 8
        %s528 = smul.addr %s527, 8
        %s529 = scalar_lea.vmem %s0, %s528
        %v530 = vld [vmem:[%s529] sm:$0xff]
        %v531 = vld [vmem:[%s529 + $0x8] sm:$0xff]
        %v532 = vld [vmem:[%s529 + $0x10] sm:$0xff]
        %v533 = vld [vmem:[%s529 + $0x18] sm:$0xff]
        %v534 = vld [vmem:[%s529 + $0x20] sm:$0xff]
        %v535 = vld [vmem:[%s529 + $0x28] sm:$0xff]
        %v536 = vld [vmem:[%s529 + $0x30] sm:$0xff]
        %v537 = vld [vmem:[%s529 + $0x38] sm:$0xff]
        %v538 = vld [vmem:[#allocation2] sm:$0xff]
        %v539 = vld [vmem:[#allocation2 + $0x8] sm:$0xff]
        %v540 = vld [vmem:[#allocation2 + $0x10] sm:$0xff]
        %v541 = vld [vmem:[#allocation2 + $0x18] sm:$0xff]
        %vm542 = vcmask 261120
        %v544 = vsel %vm542, %v530, 0
        %v547 = vsel %vm542, %v531, 0
        %v550 = vsel %vm542, %v532, 0
        %v553 = vsel %vm542, %v533, 0
        %v556 = vsel %vm542, %v534, 0
        %v559 = vsel %vm542, %v535, 0
        %v562 = vsel %vm542, %v536, 0
        %v565 = vsel %vm542, %v537, 0
        %567 = vmatprep.subr.mxu0 0.0
        %568 = vmatpush1.msra.mxu0 %v538
        %569 = vmatprep.subr.mxu0 0.0
        %570 = vmatpush1.msra.mxu0 %v539
        %571 = vmatprep.subr.mxu0 0.0
        %572 = vmatpush1.msra.mxu0 %v540
        %573 = vmatprep.subr.mxu0 0.0
        %574 = vmatpush1.msra.mxu0 %v541
        %575 = vmatprep.subr.mxu0 0.0
        %576 = vmatpush1.msra.mxu0 0.0
        %577 = vmatprep.subr.mxu0 0.0
        %578 = vmatpush1.msra.mxu0 0.0
        %579 = vmatprep.subr.mxu0 0.0
        %580 = vmatpush1.msra.mxu0 0.0
        %581 = vmatprep.subr.mxu0 0.0
        %582 = vmatpush1.msra.mxu0 0.0
        %583 = vmatprep.subr.mxu0 0.0
        %584 = vmatpush1.msra.mxu0 0.0
        %585 = vmatprep.subr.mxu0 0.0
        %586 = vmatpush1.msra.mxu0 0.0
        %587 = vmatprep.subr.mxu0 0.0
        %588 = vmatpush1.msra.mxu0 0.0
        %589 = vmatprep.subr.mxu0 0.0
        %590 = vmatpush1.msra.mxu0 0.0
        %591 = vmatprep.subr.mxu0 0.0
        %592 = vmatpush1.msra.mxu0 0.0
        %593 = vmatprep.subr.mxu0 0.0
        %594 = vmatpush1.msra.mxu0 0.0
        %595 = vmatprep.subr.mxu0 0.0
        %596 = vmatpush1.msra.mxu0 0.0
        %597 = vmatprep.subr.mxu0 0.0
        %598 = vmatpush1.msra.mxu0 0.0
        %599 = vmatprep.subr.mxu0 0.0
        %600 = vmatpush1.msra.mxu0 0.0
        %601 = vmatprep.subr.mxu0 0.0
        %602 = vmatpush1.msra.mxu0 0.0
        %603 = vmatprep.subr.mxu0 0.0
        %604 = vmatpush1.msra.mxu0 0.0
        %605 = vmatprep.subr.mxu0 0.0
        %606 = vmatpush1.msra.mxu0 0.0
        %607 = vmatprep.subr.mxu0 0.0
        %608 = vmatpush1.msra.mxu0 0.0
        %609 = vmatprep.subr.mxu0 0.0
        %610 = vmatpush1.msra.mxu0 0.0
        %611 = vmatprep.subr.mxu0 0.0
        %612 = vmatpush1.msra.mxu0 0.0
        %613 = vmatprep.subr.mxu0 0.0
        %614 = vmatpush1.msra.mxu0 0.0
        %615 = vmatprep.subr.mxu0 0.0
        %616 = vmatpush1.msra.mxu0 0.0
        %617 = vmatprep.subr.mxu0 0.0
        %618 = vmatpush1.msra.mxu0 0.0
        %619 = vmatprep.subr.mxu0 0.0
        %620 = vmatpush1.msra.mxu0 0.0
        %621 = vmatprep.subr.mxu0 0.0
        %622 = vmatpush1.msra.mxu0 0.0
        %623 = vmatprep.subr.mxu0 0.0
        %624 = vmatpush1.msra.mxu0 0.0
        %625 = vmatprep.subr.mxu0 0.0
        %626 = vmatpush1.msra.mxu0 0.0
        %627 = vmatprep.subr.mxu0 0.0
        %628 = vmatpush1.msra.mxu0 0.0
        %629 = vmatprep.subr.mxu0 0.0
        %630 = vmatpush1.msra.mxu0 0.0
        %631 = vmatprep.mubr.f32.mxu0 0.0
        %632 = vmatmul.mubr.f32.gmra.mrb[0].mxu0 %v544
        %v633 = vpop.f32.mrb[0].mxu0
        %v634 = vadd.f32 0.0002, %v633
        %v635 = vpop.f32.mrb[0].mxu0
        %636 = vmatprep.mubr.f32.mxu0 0.0
        %637 = vmatmul.mubr.f32.gmra.mrb[0].mxu0 %v547
        %v638 = vpop.f32.mrb[0].mxu0
        %v639 = vadd.f32 0.0002, %v638
        %v640 = vpop.f32.mrb[0].mxu0
        %641 = vmatprep.mubr.f32.mxu0 0.0
        %642 = vmatmul.mubr.f32.gmra.mrb[0].mxu0 %v550
        %v643 = vpop.f32.mrb[0].mxu0
        %v644 = vadd.f32 0.0002, %v643
        %v645 = vpop.f32.mrb[0].mxu0
        %646 = vmatprep.mubr.f32.mxu0 0.0
        %647 = vmatmul.mubr.f32.gmra.mrb[0].mxu0 %v553
        %v648 = vpop.f32.mrb[0].mxu0
        %v649 = vadd.f32 0.0002, %v648
        %v650 = vpop.f32.mrb[0].mxu0
        %651 = vmatprep.mubr.f32.mxu0 0.0
        %652 = vmatmul.mubr.f32.gmra.mrb[0].mxu0 %v556
        %v653 = vpop.f32.mrb[0].mxu0
        %v654 = vadd.f32 0.0002, %v653
        %v655 = vpop.f32.mrb[0].mxu0
        %656 = vmatprep.mubr.f32.mxu0 0.0
        %657 = vmatmul.mubr.f32.gmra.mrb[0].mxu0 %v559
        %v658 = vpop.f32.mrb[0].mxu0
        %v659 = vadd.f32 0.0002, %v658
        %v660 = vpop.f32.mrb[0].mxu0
        %661 = vmatprep.mubr.f32.mxu0 0.0
        %662 = vmatmul.mubr.f32.gmra.mrb[0].mxu0 %v562
        %v663 = vpop.f32.mrb[0].mxu0
        %v664 = vadd.f32 0.0002, %v663
        %v665 = vpop.f32.mrb[0].mxu0
        %666 = vmatprep.mubr.f32.mxu0 0.0
        %667 = vmatmul.mubr.f32.gmra.mrb[0].mxu0 %v565
        %v668 = vpop.f32.mrb[0].mxu0
        %v669 = vadd.f32 0.0002, %v668
        %v670 = vpop.f32.mrb[0].mxu0
        %671 = vdwg.mxu0
        %v672 = vmax.f32 %v634, 0.0
        %v673 = vmax.f32 %v639, 0.0
        %v674 = vmax.f32 %v644, 0.0
        %v675 = vmax.f32 %v649, 0.0
        %v676 = vmax.f32 %v654, 0.0
        %v677 = vmax.f32 %v659, 0.0
        %v678 = vmax.f32 %v664, 0.0
        %v679 = vmax.f32 %v669, 0.0
        %v680 = vld [vmem:[#allocation7] sm:$0xff]
        %v681 = vld [vmem:[#allocation7 + $0x8] sm:$0xff]
        %v682 = vld [vmem:[#allocation7 + $0x10] sm:$0xff]
        %v683 = vld [vmem:[#allocation7 + $0x18] sm:$0xff]
        %v684 = vld [vmem:[#allocation7 + $0x20] sm:$0xff]
        %v685 = vld [vmem:[#allocation7 + $0x28] sm:$0xff]
        %v686 = vld [vmem:[#allocation7 + $0x30] sm:$0xff]
        %v687 = vld [vmem:[#allocation7 + $0x38] sm:$0xff]
        %v688 = vld [vmem:[#allocation7 + $0x40] sm:$0xff]
        %v689 = vld [vmem:[#allocation7 + $0x48] sm:$0xff]
        %v690 = vld [vmem:[#allocation7 + $0x50] sm:$0xff]
        %v691 = vld [vmem:[#allocation7 + $0x58] sm:$0xff]
        %v692 = vld [vmem:[#allocation7 + $0x60] sm:$0xff]
        %v693 = vld [vmem:[#allocation7 + $0x68] sm:$0xff]
        %v694 = vld [vmem:[#allocation7 + $0x70] sm:$0xff]
        %v695 = vld [vmem:[#allocation7 + $0x78] sm:$0xff]
        %v696 = vld [vmem:[#allocation7 + $0x80] sm:$0xff]
        %v697 = vld [vmem:[#allocation7 + $0x88] sm:$0xff]
        %v698 = vld [vmem:[#allocation7 + $0x90] sm:$0xff]
        %v699 = vld [vmem:[#allocation7 + $0x98] sm:$0xff]
        %v700 = vld [vmem:[#allocation7 + $0xa0] sm:$0xff]
        %v701 = vld [vmem:[#allocation7 + $0xa8] sm:$0xff]
        %v702 = vld [vmem:[#allocation7 + $0xb0] sm:$0xff]
        %v703 = vld [vmem:[#allocation7 + $0xb8] sm:$0xff]
        %v704 = vld [vmem:[%s8] sm:$0xff]
        %v705 = vld [vmem:[%s8 + $0x8] sm:$0xff]
        %v706 = vld [vmem:[%s8 + $0x10] sm:$0xff]
        %v707 = vld [vmem:[%s8 + $0x18] sm:$0xff]
        %v708 = vld [vmem:[%s8 + $0x20] sm:$0xff]
        %v709 = vld [vmem:[%s8 + $0x28] sm:$0xff]
        %v710 = vld [vmem:[%s8 + $0x30] sm:$0xff]
        %v711 = vld [vmem:[%s8 + $0x38] sm:$0xff]
        %v712 = vld [vmem:[%s8 + $0x40] sm:$0xff]
        %v713 = vld [vmem:[%s8 + $0x48] sm:$0xff]
        %vm714 = vcmask 392192
        %v716 = vsel %vm714, %v672, 0
        %v719 = vsel %vm714, %v673, 0
        %v722 = vsel %vm714, %v674, 0
        %v725 = vsel %vm714, %v675, 0
        %v728 = vsel %vm714, %v676, 0
        %v731 = vsel %vm714, %v677, 0
        %v734 = vsel %vm714, %v678, 0
        %v737 = vsel %vm714, %v679, 0
        %739 = vmatprep.subr.mxu0 %v681
        %740 = vmatpush1.msra.mxu0 %v680
        %741 = vmatprep.subr.mxu0 %v685
        %742 = vmatpush1.msra.mxu0 %v684
        %743 = vmatprep.subr.mxu0 %v689
        %744 = vmatpush1.msra.mxu0 %v688
        %745 = vmatprep.subr.mxu0 %v693
        %746 = vmatpush1.msra.mxu0 %v692
        %747 = vmatprep.subr.mxu0 %v697
        %748 = vmatpush1.msra.mxu0 %v696
        %749 = vmatprep.subr.mxu0 %v701
        %750 = vmatpush1.msra.mxu0 %v700
        %751 = vmatprep.subr.mxu0 0.0
        %752 = vmatpush1.msra.mxu0 0.0
        %753 = vmatprep.subr.mxu0 0.0
        %754 = vmatpush1.msra.mxu0 0.0
        %755 = vmatprep.subr.mxu0 0.0
        %756 = vmatpush1.msra.mxu0 0.0
        %757 = vmatprep.subr.mxu0 0.0
        %758 = vmatpush1.msra.mxu0 0.0
        %759 = vmatprep.subr.mxu0 0.0
        %760 = vmatpush1.msra.mxu0 0.0
        %761 = vmatprep.subr.mxu0 0.0
        %762 = vmatpush1.msra.mxu0 0.0
        %763 = vmatprep.subr.mxu0 0.0
        %764 = vmatpush1.msra.mxu0 0.0
        %765 = vmatprep.subr.mxu0 0.0
        %766 = vmatpush1.msra.mxu0 0.0
        %767 = vmatprep.subr.mxu0 0.0
        %768 = vmatpush1.msra.mxu0 0.0
        %769 = vmatprep.subr.mxu0 0.0
        %770 = vmatpush1.msra.mxu0 0.0
        %771 = vmatprep.subr.mxu0 0.0
        %772 = vmatpush1.msra.mxu0 0.0
        %773 = vmatprep.subr.mxu0 0.0
        %774 = vmatpush1.msra.mxu0 0.0
        %775 = vmatprep.subr.mxu0 0.0
        %776 = vmatpush1.msra.mxu0 0.0
        %777 = vmatprep.subr.mxu0 0.0
        %778 = vmatpush1.msra.mxu0 0.0
        %779 = vmatprep.subr.mxu0 0.0
        %780 = vmatpush1.msra.mxu0 0.0
        %781 = vmatprep.subr.mxu0 0.0
        %782 = vmatpush1.msra.mxu0 0.0
        %783 = vmatprep.subr.mxu0 0.0
        %784 = vmatpush1.msra.mxu0 0.0
        %785 = vmatprep.subr.mxu0 0.0
        %786 = vmatpush1.msra.mxu0 0.0
        %787 = vmatprep.subr.mxu0 0.0
        %788 = vmatpush1.msra.mxu0 0.0
        %789 = vmatprep.subr.mxu0 0.0
        %790 = vmatpush1.msra.mxu0 0.0
        %791 = vmatprep.subr.mxu0 0.0
        %792 = vmatpush1.msra.mxu0 0.0
        %793 = vmatprep.subr.mxu0 0.0
        %794 = vmatpush1.msra.mxu0 0.0
        %795 = vmatprep.subr.mxu0 0.0
        %796 = vmatpush1.msra.mxu0 0.0
        %797 = vmatprep.subr.mxu0 0.0
        %798 = vmatpush1.msra.mxu0 0.0
        %799 = vmatprep.subr.mxu0 0.0
        %800 = vmatpush1.msra.mxu0 0.0
        %801 = vmatprep.subr.mxu0 0.0
        %802 = vmatpush1.msra.mxu0 0.0
        %803 = vmatprep.mubr.f32.mxu0 0.0
        %804 = vmatmul.mubr.f32.gmra.mrb[0].mxu0 %v716
        %v805 = vpop.f32.mrb[0].mxu0
        %v806 = vadd.f32 0.0, %v805
        %v807 = vpop.f32.mrb[0].mxu0
        %v808 = vadd.f32 0.0, %v807
        %809 = vmatprep.mubr.f32.mxu0 0.0
        %810 = vmatmul.mubr.f32.gmra.mrb[0].mxu0 %v719
        %v811 = vpop.f32.mrb[0].mxu0
        %v812 = vadd.f32 0.0, %v811
        %v813 = vpop.f32.mrb[0].mxu0
        %v814 = vadd.f32 0.0, %v813
        %815 = vmatprep.mubr.f32.mxu0 0.0
        %816 = vmatmul.mubr.f32.gmra.mrb[0].mxu0 %v722
        %v817 = vpop.f32.mrb[0].mxu0
        %v818 = vadd.f32 0.0, %v817
        %v819 = vpop.f32.mrb[0].mxu0
        %v820 = vadd.f32 0.0, %v819
        %821 = vmatprep.mubr.f32.mxu0 0.0
        %822 = vmatmul.mubr.f32.gmra.mrb[0].mxu0 %v725
        %v823 = vpop.f32.mrb[0].mxu0
        %v824 = vadd.f32 0.0, %v823
        %v825 = vpop.f32.mrb[0].mxu0
        %v826 = vadd.f32 0.0, %v825
        %827 = vmatprep.mubr.f32.mxu0 0.0
        %828 = vmatmul.mubr.f32.gmra.mrb[0].mxu0 %v728
        %v829 = vpop.f32.mrb[0].mxu0
        %v830 = vadd.f32 0.0, %v829
        %v831 = vpop.f32.mrb[0].mxu0
        %v832 = vadd.f32 0.0, %v831
        %833 = vmatprep.mubr.f32.mxu0 0.0
        %834 = vmatmul.mubr.f32.gmra.mrb[0].mxu0 %v731
        %v835 = vpop.f32.mrb[0].mxu0
        %v836 = vadd.f32 0.0, %v835
        %v837 = vpop.f32.mrb[0].mxu0
        %v838 = vadd.f32 0.0, %v837
        %839 = vmatprep.mubr.f32.mxu0 0.0
        %840 = vmatmul.mubr.f32.gmra.mrb[0].mxu0 %v734
        %v841 = vpop.f32.mrb[0].mxu0
        %v842 = vadd.f32 0.0, %v841
        %v843 = vpop.f32.mrb[0].mxu0
        %v844 = vadd.f32 0.0, %v843
        %845 = vmatprep.mubr.f32.mxu0 0.0
        %846 = vmatmul.mubr.f32.gmra.mrb[0].mxu0 %v737
        %v847 = vpop.f32.mrb[0].mxu0
        %v848 = vadd.f32 0.0, %v847
        %v849 = vpop.f32.mrb[0].mxu0
        %v850 = vadd.f32 0.0, %v849
        %851 = vdwg.mxu0
        %852 = vmatprep.subr.mxu0 %v683
        %853 = vmatpush1.msra.mxu0 %v682
        %854 = vmatprep.subr.mxu0 %v687
        %855 = vmatpush1.msra.mxu0 %v686
        %856 = vmatprep.subr.mxu0 %v691
        %857 = vmatpush1.msra.mxu0 %v690
        %858 = vmatprep.subr.mxu0 %v695
        %859 = vmatpush1.msra.mxu0 %v694
        %860 = vmatprep.subr.mxu0 %v699
        %861 = vmatpush1.msra.mxu0 %v698
        %862 = vmatprep.subr.mxu0 %v703
        %863 = vmatpush1.msra.mxu0 %v702
        %864 = vmatprep.subr.mxu0 0.0
        %865 = vmatpush1.msra.mxu0 0.0
        %866 = vmatprep.subr.mxu0 0.0
        %867 = vmatpush1.msra.mxu0 0.0
        %868 = vmatprep.subr.mxu0 0.0
        %869 = vmatpush1.msra.mxu0 0.0
        %870 = vmatprep.subr.mxu0 0.0
        %871 = vmatpush1.msra.mxu0 0.0
        %872 = vmatprep.subr.mxu0 0.0
        %873 = vmatpush1.msra.mxu0 0.0
        %874 = vmatprep.subr.mxu0 0.0
        %875 = vmatpush1.msra.mxu0 0.0
        %876 = vmatprep.subr.mxu0 0.0
        %877 = vmatpush1.msra.mxu0 0.0
        %878 = vmatprep.subr.mxu0 0.0
        %879 = vmatpush1.msra.mxu0 0.0
        %880 = vmatprep.subr.mxu0 0.0
        %881 = vmatpush1.msra.mxu0 0.0
        %882 = vmatprep.subr.mxu0 0.0
        %883 = vmatpush1.msra.mxu0 0.0
        %884 = vmatprep.subr.mxu0 0.0
        %885 = vmatpush1.msra.mxu0 0.0
        %886 = vmatprep.subr.mxu0 0.0
        %887 = vmatpush1.msra.mxu0 0.0
        %888 = vmatprep.subr.mxu0 0.0
        %889 = vmatpush1.msra.mxu0 0.0
        %890 = vmatprep.subr.mxu0 0.0
        %891 = vmatpush1.msra.mxu0 0.0
        %892 = vmatprep.subr.mxu0 0.0
        %893 = vmatpush1.msra.mxu0 0.0
        %894 = vmatprep.subr.mxu0 0.0
        %895 = vmatpush1.msra.mxu0 0.0
        %896 = vmatprep.subr.mxu0 0.0
        %897 = vmatpush1.msra.mxu0 0.0
        %898 = vmatprep.subr.mxu0 0.0
        %899 = vmatpush1.msra.mxu0 0.0
        %900 = vmatprep.subr.mxu0 0.0
        %901 = vmatpush1.msra.mxu0 0.0
        %902 = vmatprep.subr.mxu0 0.0
        %903 = vmatpush1.msra.mxu0 0.0
        %904 = vmatprep.subr.mxu0 0.0
        %905 = vmatpush1.msra.mxu0 0.0
        %906 = vmatprep.subr.mxu0 0.0
        %907 = vmatpush1.msra.mxu0 0.0
        %908 = vmatprep.subr.mxu0 0.0
        %909 = vmatpush1.msra.mxu0 0.0
        %910 = vmatprep.subr.mxu0 0.0
        %911 = vmatpush1.msra.mxu0 0.0
        %912 = vmatprep.subr.mxu0 0.0
        %913 = vmatpush1.msra.mxu0 0.0
        %914 = vmatprep.subr.mxu0 0.0
        %915 = vmatpush1.msra.mxu0 0.0
        %916 = vmatprep.mubr.f32.mxu0 0.0
        %917 = vmatmul.mubr.f32.gmra.mrb[0].mxu0 %v716
        %v918 = vpop.f32.mrb[0].mxu0
        %v919 = vadd.f32 0.0, %v918
        %v920 = vpop.f32.mrb[0].mxu0
        %v921 = vadd.f32 0.0, %v920
        %922 = vmatprep.mubr.f32.mxu0 0.0
        %923 = vmatmul.mubr.f32.gmra.mrb[0].mxu0 %v719
        %v924 = vpop.f32.mrb[0].mxu0
        %v925 = vadd.f32 0.0, %v924
        %v926 = vpop.f32.mrb[0].mxu0
        %v927 = vadd.f32 0.0, %v926
        %928 = vmatprep.mubr.f32.mxu0 0.0
        %929 = vmatmul.mubr.f32.gmra.mrb[0].mxu0 %v722
        %v930 = vpop.f32.mrb[0].mxu0
        %v931 = vadd.f32 0.0, %v930
        %v932 = vpop.f32.mrb[0].mxu0
        %v933 = vadd.f32 0.0, %v932
        %934 = vmatprep.mubr.f32.mxu0 0.0
        %935 = vmatmul.mubr.f32.gmra.mrb[0].mxu0 %v725
        %v936 = vpop.f32.mrb[0].mxu0
        %v937 = vadd.f32 0.0, %v936
        %v938 = vpop.f32.mrb[0].mxu0
        %v939 = vadd.f32 0.0, %v938
        %940 = vmatprep.mubr.f32.mxu0 0.0
        %941 = vmatmul.mubr.f32.gmra.mrb[0].mxu0 %v728
        %v942 = vpop.f32.mrb[0].mxu0
        %v943 = vadd.f32 0.0, %v942
        %v944 = vpop.f32.mrb[0].mxu0
        %v945 = vadd.f32 0.0, %v944
        %946 = vmatprep.mubr.f32.mxu0 0.0
        %947 = vmatmul.mubr.f32.gmra.mrb[0].mxu0 %v731
        %v948 = vpop.f32.mrb[0].mxu0
        %v949 = vadd.f32 0.0, %v948
        %v950 = vpop.f32.mrb[0].mxu0
        %v951 = vadd.f32 0.0, %v950
        %952 = vmatprep.mubr.f32.mxu0 0.0
        %953 = vmatmul.mubr.f32.gmra.mrb[0].mxu0 %v734
        %v954 = vpop.f32.mrb[0].mxu0
        %v955 = vadd.f32 0.0, %v954
        %v956 = vpop.f32.mrb[0].mxu0
        %v957 = vadd.f32 0.0, %v956
        %958 = vmatprep.mubr.f32.mxu0 0.0
        %959 = vmatmul.mubr.f32.gmra.mrb[0].mxu0 %v737
        %v960 = vpop.f32.mrb[0].mxu0
        %v961 = vadd.f32 0.0, %v960
        %v962 = vpop.f32.mrb[0].mxu0
        %v963 = vadd.f32 0.0, %v962
        %964 = vdwg.mxu0
        %973 = vrot.lane.b32.xlu0 %v806, 80
        %v974 = vpop.permute.xlu0 %973
        %975 = vrot.lane.b32.xlu0 %v812, 80
        %v976 = vpop.permute.xlu0 %975
        %977 = vrot.lane.b32.xlu0 %v818, 80
        %v978 = vpop.permute.xlu0 %977
        %979 = vrot.lane.b32.xlu0 %v824, 80
        %v980 = vpop.permute.xlu0 %979
        %981 = vrot.lane.b32.xlu0 %v830, 80
        %v982 = vpop.permute.xlu0 %981
        %983 = vrot.lane.b32.xlu0 %v836, 80
        %v984 = vpop.permute.xlu0 %983
        %985 = vrot.lane.b32.xlu0 %v842, 80
        %v986 = vpop.permute.xlu0 %985
        %987 = vrot.lane.b32.xlu0 %v848, 80
        %v988 = vpop.permute.xlu0 %987
        %1005 = vrot.lane.b32.xlu0 %v806, 32
        %v1006 = vpop.permute.xlu0 %1005
        %1007 = vrot.lane.b32.xlu0 %v808, 32
        %v1008 = vpop.permute.xlu0 %1007
        %1009 = vrot.lane.b32.xlu0 %v812, 32
        %v1010 = vpop.permute.xlu0 %1009
        %1011 = vrot.lane.b32.xlu0 %v814, 32
        %v1012 = vpop.permute.xlu0 %1011
        %1013 = vrot.lane.b32.xlu0 %v818, 32
        %v1014 = vpop.permute.xlu0 %1013
        %1015 = vrot.lane.b32.xlu0 %v820, 32
        %v1016 = vpop.permute.xlu0 %1015
        %1017 = vrot.lane.b32.xlu0 %v824, 32
        %v1018 = vpop.permute.xlu0 %1017
        %1019 = vrot.lane.b32.xlu0 %v826, 32
        %v1020 = vpop.permute.xlu0 %1019
        %1021 = vrot.lane.b32.xlu0 %v830, 32
        %v1022 = vpop.permute.xlu0 %1021
        %1023 = vrot.lane.b32.xlu0 %v832, 32
        %v1024 = vpop.permute.xlu0 %1023
        %1025 = vrot.lane.b32.xlu0 %v836, 32
        %v1026 = vpop.permute.xlu0 %1025
        %1027 = vrot.lane.b32.xlu0 %v838, 32
        %v1028 = vpop.permute.xlu0 %1027
        %1029 = vrot.lane.b32.xlu0 %v842, 32
        %v1030 = vpop.permute.xlu0 %1029
        %1031 = vrot.lane.b32.xlu0 %v844, 32
        %v1032 = vpop.permute.xlu0 %1031
        %1033 = vrot.lane.b32.xlu0 %v848, 32
        %v1034 = vpop.permute.xlu0 %1033
        %1035 = vrot.lane.b32.xlu0 %v850, 32
        %v1036 = vpop.permute.xlu0 %1035
        %v1037 = vsel %vm542, %v1006, %v1008
        %v1038 = vsel %vm542, %v1010, %v1012
        %v1039 = vsel %vm542, %v1014, %v1016
        %v1040 = vsel %vm542, %v1018, %v1020
        %v1041 = vsel %vm542, %v1022, %v1024
        %v1042 = vsel %vm542, %v1026, %v1028
        %v1043 = vsel %vm542, %v1030, %v1032
        %v1044 = vsel %vm542, %v1034, %v1036
        %1053 = vrot.lane.b32.xlu0 %v808, 112
        %v1054 = vpop.permute.xlu0 %1053
        %1055 = vrot.lane.b32.xlu0 %v814, 112
        %v1056 = vpop.permute.xlu0 %1055
        %1057 = vrot.lane.b32.xlu0 %v820, 112
        %v1058 = vpop.permute.xlu0 %1057
        %1059 = vrot.lane.b32.xlu0 %v826, 112
        %v1060 = vpop.permute.xlu0 %1059
        %1061 = vrot.lane.b32.xlu0 %v832, 112
        %v1062 = vpop.permute.xlu0 %1061
        %1063 = vrot.lane.b32.xlu0 %v838, 112
        %v1064 = vpop.permute.xlu0 %1063
        %1065 = vrot.lane.b32.xlu0 %v844, 112
        %v1066 = vpop.permute.xlu0 %1065
        %1067 = vrot.lane.b32.xlu0 %v850, 112
        %v1068 = vpop.permute.xlu0 %1067
        %1077 = vrot.lane.b32.xlu0 %v808, 64
        %v1078 = vpop.permute.xlu0 %1077
        %1079 = vrot.lane.b32.xlu0 %v814, 64
        %v1080 = vpop.permute.xlu0 %1079
        %1081 = vrot.lane.b32.xlu0 %v820, 64
        %v1082 = vpop.permute.xlu0 %1081
        %1083 = vrot.lane.b32.xlu0 %v826, 64
        %v1084 = vpop.permute.xlu0 %1083
        %1085 = vrot.lane.b32.xlu0 %v832, 64
        %v1086 = vpop.permute.xlu0 %1085
        %1087 = vrot.lane.b32.xlu0 %v838, 64
        %v1088 = vpop.permute.xlu0 %1087
        %1089 = vrot.lane.b32.xlu0 %v844, 64
        %v1090 = vpop.permute.xlu0 %1089
        %1091 = vrot.lane.b32.xlu0 %v850, 64
        %v1092 = vpop.permute.xlu0 %1091
        %1109 = vrot.lane.b32.xlu0 %v808, 16
        %v1110 = vpop.permute.xlu0 %1109
        %1111 = vrot.lane.b32.xlu0 %v919, 16
        %v1112 = vpop.permute.xlu0 %1111
        %1113 = vrot.lane.b32.xlu0 %v814, 16
        %v1114 = vpop.permute.xlu0 %1113
        %1115 = vrot.lane.b32.xlu0 %v925, 16
        %v1116 = vpop.permute.xlu0 %1115
        %1117 = vrot.lane.b32.xlu0 %v820, 16
        %v1118 = vpop.permute.xlu0 %1117
        %1119 = vrot.lane.b32.xlu0 %v931, 16
        %v1120 = vpop.permute.xlu0 %1119
        %1121 = vrot.lane.b32.xlu0 %v826, 16
        %v1122 = vpop.permute.xlu0 %1121
        %1123 = vrot.lane.b32.xlu0 %v937, 16
        %v1124 = vpop.permute.xlu0 %1123
        %1125 = vrot.lane.b32.xlu0 %v832, 16
        %v1126 = vpop.permute.xlu0 %1125
        %1127 = vrot.lane.b32.xlu0 %v943, 16
        %v1128 = vpop.permute.xlu0 %1127
        %1129 = vrot.lane.b32.xlu0 %v838, 16
        %v1130 = vpop.permute.xlu0 %1129
        %1131 = vrot.lane.b32.xlu0 %v949, 16
        %v1132 = vpop.permute.xlu0 %1131
        %1133 = vrot.lane.b32.xlu0 %v844, 16
        %v1134 = vpop.permute.xlu0 %1133
        %1135 = vrot.lane.b32.xlu0 %v955, 16
        %v1136 = vpop.permute.xlu0 %1135
        %1137 = vrot.lane.b32.xlu0 %v850, 16
        %v1138 = vpop.permute.xlu0 %1137
        %1139 = vrot.lane.b32.xlu0 %v961, 16
        %v1140 = vpop.permute.xlu0 %1139
        %vm1141 = vcmask 130048
        %v1142 = vsel %vm1141, %v1110, %v1112
        %v1143 = vsel %vm1141, %v1114, %v1116
        %v1144 = vsel %vm1141, %v1118, %v1120
        %v1145 = vsel %vm1141, %v1122, %v1124
        %v1146 = vsel %vm1141, %v1126, %v1128
        %v1147 = vsel %vm1141, %v1130, %v1132
        %v1148 = vsel %vm1141, %v1134, %v1136
        %v1149 = vsel %vm1141, %v1138, %v1140
        %1158 = vrot.lane.b32.xlu0 %v919, 96
        %v1159 = vpop.permute.xlu0 %1158
        %1160 = vrot.lane.b32.xlu0 %v925, 96
        %v1161 = vpop.permute.xlu0 %1160
        %1162 = vrot.lane.b32.xlu0 %v931, 96
        %v1163 = vpop.permute.xlu0 %1162
        %1164 = vrot.lane.b32.xlu0 %v937, 96
        %v1165 = vpop.permute.xlu0 %1164
        %1166 = vrot.lane.b32.xlu0 %v943, 96
        %v1167 = vpop.permute.xlu0 %1166
        %1168 = vrot.lane.b32.xlu0 %v949, 96
        %v1169 = vpop.permute.xlu0 %1168
        %1170 = vrot.lane.b32.xlu0 %v955, 96
        %v1171 = vpop.permute.xlu0 %1170
        %1172 = vrot.lane.b32.xlu0 %v961, 96
        %v1173 = vpop.permute.xlu0 %1172
        %1182 = vrot.lane.b32.xlu0 %v919, 48
        %v1183 = vpop.permute.xlu0 %1182
        %1184 = vrot.lane.b32.xlu0 %v925, 48
        %v1185 = vpop.permute.xlu0 %1184
        %1186 = vrot.lane.b32.xlu0 %v931, 48
        %v1187 = vpop.permute.xlu0 %1186
        %1188 = vrot.lane.b32.xlu0 %v937, 48
        %v1189 = vpop.permute.xlu0 %1188
        %1190 = vrot.lane.b32.xlu0 %v943, 48
        %v1191 = vpop.permute.xlu0 %1190
        %1192 = vrot.lane.b32.xlu0 %v949, 48
        %v1193 = vpop.permute.xlu0 %1192
        %1194 = vrot.lane.b32.xlu0 %v955, 48
        %v1195 = vpop.permute.xlu0 %1194
        %1196 = vrot.lane.b32.xlu0 %v961, 48
        %v1197 = vpop.permute.xlu0 %1196
        %vm1206 = vcmask 523264
        %v1208 = vsel %vm1206, %v708, 0
        %v1211 = vsel %vm1206, %v713, 0
        %1213 = vmatprep.subr.mxu0 0.0
        %1214 = vmatpush1.msra.mxu0 %v806
        %1215 = vmatprep.subr.mxu0 0.0
        %1216 = vmatpush1.msra.mxu0 %v812
        %1217 = vmatprep.subr.mxu0 0.0
        %1218 = vmatpush1.msra.mxu0 %v818
        %1219 = vmatprep.subr.mxu0 0.0
        %1220 = vmatpush1.msra.mxu0 %v824
        %1221 = vmatprep.subr.mxu0 0.0
        %1222 = vmatpush1.msra.mxu0 %v830
        %1223 = vmatprep.subr.mxu0 0.0
        %1224 = vmatpush1.msra.mxu0 %v836
        %1225 = vmatprep.subr.mxu0 0.0
        %1226 = vmatpush1.msra.mxu0 %v842
        %1227 = vmatprep.subr.mxu0 0.0
        %1228 = vmatpush1.msra.mxu0 %v848
        %1229 = vmatprep.subr.mxu0 0.0
        %1230 = vmatpush1.msra.mxu0 %v974
        %1231 = vmatprep.subr.mxu0 0.0
        %1232 = vmatpush1.msra.mxu0 %v976
        %1233 = vmatprep.subr.mxu0 0.0
        %1234 = vmatpush1.msra.mxu0 %v978
        %1235 = vmatprep.subr.mxu0 0.0
        %1236 = vmatpush1.msra.mxu0 %v980
        %1237 = vmatprep.subr.mxu0 0.0
        %1238 = vmatpush1.msra.mxu0 %v982
        %1239 = vmatprep.subr.mxu0 0.0
        %1240 = vmatpush1.msra.mxu0 %v984
        %1241 = vmatprep.subr.mxu0 0.0
        %1242 = vmatpush1.msra.mxu0 %v986
        %1243 = vmatprep.subr.mxu0 0.0
        %1244 = vmatpush1.msra.mxu0 %v988
        %1245 = vmatprep.subr.mxu0 0.0
        %1246 = vmatpush1.msra.mxu0 %v1037
        %1247 = vmatprep.subr.mxu0 0.0
        %1248 = vmatpush1.msra.mxu0 %v1038
        %1249 = vmatprep.subr.mxu0 0.0
        %1250 = vmatpush1.msra.mxu0 %v1039
        %1251 = vmatprep.subr.mxu0 0.0
        %1252 = vmatpush1.msra.mxu0 %v1040
        %1253 = vmatprep.subr.mxu0 0.0
        %1254 = vmatpush1.msra.mxu0 %v1041
        %1255 = vmatprep.subr.mxu0 0.0
        %1256 = vmatpush1.msra.mxu0 %v1042
        %1257 = vmatprep.subr.mxu0 0.0
        %1258 = vmatpush1.msra.mxu0 %v1043
        %1259 = vmatprep.subr.mxu0 0.0
        %1260 = vmatpush1.msra.mxu0 %v1044
        %1261 = vmatprep.subr.mxu0 0.0
        %1262 = vmatpush1.msra.mxu0 %v1054
        %1263 = vmatprep.subr.mxu0 0.0
        %1264 = vmatpush1.msra.mxu0 %v1056
        %1265 = vmatprep.subr.mxu0 0.0
        %1266 = vmatpush1.msra.mxu0 %v1058
        %1267 = vmatprep.subr.mxu0 0.0
        %1268 = vmatpush1.msra.mxu0 %v1060
        %1269 = vmatprep.subr.mxu0 0.0
        %1270 = vmatpush1.msra.mxu0 %v1062
        %1271 = vmatprep.subr.mxu0 0.0
        %1272 = vmatpush1.msra.mxu0 %v1064
        %1273 = vmatprep.subr.mxu0 0.0
        %1274 = vmatpush1.msra.mxu0 %v1066
        %1275 = vmatprep.subr.mxu0 0.0
        %1276 = vmatpush1.msra.mxu0 %v1068
        %1277 = vmatprep.mubr.f32.mxu0 %v705
        %1278 = vmatmul.mubr.f32.gmra.mrb[0].mxu0 %v704
        %v1279 = vpop.f32.mrb[0].mxu0
        %v1280 = vadd.f32 0.0002, %v1279
        %v1281 = vpop.f32.mrb[0].mxu0
        %1282 = vmatprep.mubr.f32.mxu0 %v710
        %1283 = vmatmul.mubr.f32.gmra.mrb[0].mxu0 %v709
        %v1284 = vpop.f32.mrb[0].mxu0
        %v1285 = vadd.f32 0.0002, %v1284
        %v1286 = vpop.f32.mrb[0].mxu0
        %1287 = vdwg.mxu0
        %1288 = vmatprep.subr.mxu0 0.0
        %1289 = vmatpush1.msra.mxu0 %v1078
        %1290 = vmatprep.subr.mxu0 0.0
        %1291 = vmatpush1.msra.mxu0 %v1080
        %1292 = vmatprep.subr.mxu0 0.0
        %1293 = vmatpush1.msra.mxu0 %v1082
        %1294 = vmatprep.subr.mxu0 0.0
        %1295 = vmatpush1.msra.mxu0 %v1084
        %1296 = vmatprep.subr.mxu0 0.0
        %1297 = vmatpush1.msra.mxu0 %v1086
        %1298 = vmatprep.subr.mxu0 0.0
        %1299 = vmatpush1.msra.mxu0 %v1088
        %1300 = vmatprep.subr.mxu0 0.0
        %1301 = vmatpush1.msra.mxu0 %v1090
        %1302 = vmatprep.subr.mxu0 0.0
        %1303 = vmatpush1.msra.mxu0 %v1092
        %1304 = vmatprep.subr.mxu0 0.0
        %1305 = vmatpush1.msra.mxu0 %v1142
        %1306 = vmatprep.subr.mxu0 0.0
        %1307 = vmatpush1.msra.mxu0 %v1143
        %1308 = vmatprep.subr.mxu0 0.0
        %1309 = vmatpush1.msra.mxu0 %v1144
        %1310 = vmatprep.subr.mxu0 0.0
        %1311 = vmatpush1.msra.mxu0 %v1145
        %1312 = vmatprep.subr.mxu0 0.0
        %1313 = vmatpush1.msra.mxu0 %v1146
        %1314 = vmatprep.subr.mxu0 0.0
        %1315 = vmatpush1.msra.mxu0 %v1147
        %1316 = vmatprep.subr.mxu0 0.0
        %1317 = vmatpush1.msra.mxu0 %v1148
        %1318 = vmatprep.subr.mxu0 0.0
        %1319 = vmatpush1.msra.mxu0 %v1149
        %1320 = vmatprep.subr.mxu0 0.0
        %1321 = vmatpush1.msra.mxu0 %v1159
        %1322 = vmatprep.subr.mxu0 0.0
        %1323 = vmatpush1.msra.mxu0 %v1161
        %1324 = vmatprep.subr.mxu0 0.0
        %1325 = vmatpush1.msra.mxu0 %v1163
        %1326 = vmatprep.subr.mxu0 0.0
        %1327 = vmatpush1.msra.mxu0 %v1165
        %1328 = vmatprep.subr.mxu0 0.0
        %1329 = vmatpush1.msra.mxu0 %v1167
        %1330 = vmatprep.subr.mxu0 0.0
        %1331 = vmatpush1.msra.mxu0 %v1169
        %1332 = vmatprep.subr.mxu0 0.0
        %1333 = vmatpush1.msra.mxu0 %v1171
        %1334 = vmatprep.subr.mxu0 0.0
        %1335 = vmatpush1.msra.mxu0 %v1173
        %1336 = vmatprep.subr.mxu0 0.0
        %1337 = vmatpush1.msra.mxu0 %v1183
        %1338 = vmatprep.subr.mxu0 0.0
        %1339 = vmatpush1.msra.mxu0 %v1185
        %1340 = vmatprep.subr.mxu0 0.0
        %1341 = vmatpush1.msra.mxu0 %v1187
        %1342 = vmatprep.subr.mxu0 0.0
        %1343 = vmatpush1.msra.mxu0 %v1189
        %1344 = vmatprep.subr.mxu0 0.0
        %1345 = vmatpush1.msra.mxu0 %v1191
        %1346 = vmatprep.subr.mxu0 0.0
        %1347 = vmatpush1.msra.mxu0 %v1193
        %1348 = vmatprep.subr.mxu0 0.0
        %1349 = vmatpush1.msra.mxu0 %v1195
        %1350 = vmatprep.subr.mxu0 0.0
        %1351 = vmatpush1.msra.mxu0 %v1197
        %1352 = vmatprep.mubr.f32.mxu0 %v707
        %1353 = vmatmul.mubr.f32.gmra.mrb[0].mxu0 %v706
        %v1354 = vpop.f32.mrb[0].mxu0
        %v1355 = vadd.f32 %v1280, %v1354
        %v1356 = vpop.f32.mrb[0].mxu0
        %1357 = vmatprep.mubr.f32.mxu0 %v712
        %1358 = vmatmul.mubr.f32.gmra.mrb[0].mxu0 %v711
        %v1359 = vpop.f32.mrb[0].mxu0
        %v1360 = vadd.f32 %v1285, %v1359
        %v1361 = vpop.f32.mrb[0].mxu0
        %1362 = vdwg.mxu0
        %1363 = vmatprep.subr.mxu0 0.0
        %1364 = vmatpush1.msra.mxu0 %v921
        %1365 = vmatprep.subr.mxu0 0.0
        %1366 = vmatpush1.msra.mxu0 %v927
        %1367 = vmatprep.subr.mxu0 0.0
        %1368 = vmatpush1.msra.mxu0 %v933
        %1369 = vmatprep.subr.mxu0 0.0
        %1370 = vmatpush1.msra.mxu0 %v939
        %1371 = vmatprep.subr.mxu0 0.0
        %1372 = vmatpush1.msra.mxu0 %v945
        %1373 = vmatprep.subr.mxu0 0.0
        %1374 = vmatpush1.msra.mxu0 %v951
        %1375 = vmatprep.subr.mxu0 0.0
        %1376 = vmatpush1.msra.mxu0 %v957
        %1377 = vmatprep.subr.mxu0 0.0
        %1378 = vmatpush1.msra.mxu0 %v963
        %1379 = vmatprep.subr.mxu0 0.0
        %1380 = vmatpush1.msra.mxu0 0.0
        %1381 = vmatprep.subr.mxu0 0.0
        %1382 = vmatpush1.msra.mxu0 0.0
        %1383 = vmatprep.subr.mxu0 0.0
        %1384 = vmatpush1.msra.mxu0 0.0
        %1385 = vmatprep.subr.mxu0 0.0
        %1386 = vmatpush1.msra.mxu0 0.0
        %1387 = vmatprep.subr.mxu0 0.0
        %1388 = vmatpush1.msra.mxu0 0.0
        %1389 = vmatprep.subr.mxu0 0.0
        %1390 = vmatpush1.msra.mxu0 0.0
        %1391 = vmatprep.subr.mxu0 0.0
        %1392 = vmatpush1.msra.mxu0 0.0
        %1393 = vmatprep.subr.mxu0 0.0
        %1394 = vmatpush1.msra.mxu0 0.0
        %1395 = vmatprep.subr.mxu0 0.0
        %1396 = vmatpush1.msra.mxu0 0.0
        %1397 = vmatprep.subr.mxu0 0.0
        %1398 = vmatpush1.msra.mxu0 0.0
        %1399 = vmatprep.subr.mxu0 0.0
        %1400 = vmatpush1.msra.mxu0 0.0
        %1401 = vmatprep.subr.mxu0 0.0
        %1402 = vmatpush1.msra.mxu0 0.0
        %1403 = vmatprep.subr.mxu0 0.0
        %1404 = vmatpush1.msra.mxu0 0.0
        %1405 = vmatprep.subr.mxu0 0.0
        %1406 = vmatpush1.msra.mxu0 0.0
        %1407 = vmatprep.subr.mxu0 0.0
        %1408 = vmatpush1.msra.mxu0 0.0
        %1409 = vmatprep.subr.mxu0 0.0
        %1410 = vmatpush1.msra.mxu0 0.0
        %1411 = vmatprep.subr.mxu0 0.0
        %1412 = vmatpush1.msra.mxu0 0.0
        %1413 = vmatprep.subr.mxu0 0.0
        %1414 = vmatpush1.msra.mxu0 0.0
        %1415 = vmatprep.subr.mxu0 0.0
        %1416 = vmatpush1.msra.mxu0 0.0
        %1417 = vmatprep.subr.mxu0 0.0
        %1418 = vmatpush1.msra.mxu0 0.0
        %1419 = vmatprep.subr.mxu0 0.0
        %1420 = vmatpush1.msra.mxu0 0.0
        %1421 = vmatprep.subr.mxu0 0.0
        %1422 = vmatpush1.msra.mxu0 0.0
        %1423 = vmatprep.subr.mxu0 0.0
        %1424 = vmatpush1.msra.mxu0 0.0
        %1425 = vmatprep.subr.mxu0 0.0
        %1426 = vmatpush1.msra.mxu0 0.0
        %1427 = vmatprep.mubr.f32.mxu0 0.0
        %1428 = vmatmul.mubr.f32.gmra.mrb[0].mxu0 %v1208
        %v1429 = vpop.f32.mrb[0].mxu0
        %v1430 = vadd.f32 %v1355, %v1429
        %v1431 = vpop.f32.mrb[0].mxu0
        %1432 = vmatprep.mubr.f32.mxu0 0.0
        %1433 = vmatmul.mubr.f32.gmra.mrb[0].mxu0 %v1211
        %v1434 = vpop.f32.mrb[0].mxu0
        %v1435 = vadd.f32 %v1360, %v1434
        %v1436 = vpop.f32.mrb[0].mxu0
        %1437 = vdwg.mxu0
        %v1438 = vmax.f32 %v1430, 0.0
        %v1439 = vmax.f32 %v1435, 0.0
        %v1440 = vld [vmem:[#allocation7 + $0xc0] sm:$0xff]
        %v1441 = vld [vmem:[#allocation7 + $0xc8] sm:$0xff]
        %v1442 = vld [vmem:[#allocation7 + $0xd0] sm:$0xff]
        %v1443 = vld [vmem:[#allocation7 + $0xd8] sm:$0xff]
        %v1444 = vld [vmem:[#allocation7 + $0xe0] sm:$0xff]
        %v1445 = vld [vmem:[#allocation7 + $0xe8] sm:$0xff]
        %v1446 = vld [vmem:[#allocation7 + $0xf0] sm:$0xff]
        %v1447 = vld [vmem:[#allocation7 + $0xf8] sm:$0xff]
        %v1448 = vld [vmem:[#allocation7 + $0x100] sm:$0xff]
        %v1449 = vld [vmem:[#allocation7 + $0x108] sm:$0xff]
        %v1450 = vld [vmem:[#allocation7 + $0x110] sm:$0xff]
        %v1451 = vld [vmem:[#allocation7 + $0x118] sm:$0xff]
        %v1452 = vld [vmem:[#allocation7 + $0x120] sm:$0xff]
        %v1453 = vld [vmem:[#allocation7 + $0x128] sm:$0xff]
        %v1454 = vld [vmem:[#allocation7 + $0x130] sm:$0xff]
        %v1455 = vld [vmem:[#allocation7 + $0x138] sm:$0xff]
        %v1456 = vld [vmem:[#allocation7 + $0x140] sm:$0xff]
        %v1457 = vld [vmem:[#allocation7 + $0x148] sm:$0xff]
        %v1458 = vld [vmem:[#allocation7 + $0x150] sm:$0xff]
        %v1459 = vld [vmem:[#allocation7 + $0x158] sm:$0xff]
        %v1460 = vld [vmem:[#allocation7 + $0x160] sm:$0xff]
        %v1461 = vld [vmem:[#allocation7 + $0x168] sm:$0xff]
        %v1462 = vld [vmem:[#allocation7 + $0x170] sm:$0xff]
        %v1463 = vld [vmem:[#allocation7 + $0x178] sm:$0xff]
        %v1464 = vld [vmem:[#allocation5] sm:$0xff]
        %v1465 = vld [vmem:[#allocation5 + $0x8] sm:$0xff]
        %v1466 = vld [vmem:[#allocation5 + $0x10] sm:$0xff]
        %v1467 = vld [vmem:[#allocation5 + $0x18] sm:$0xff]
        %v1469 = vsel %vm714, %v1438, 0
        %v1472 = vsel %vm714, %v1439, 0
        %1474 = vmatprep.subr.mxu0 %v1441
        %1475 = vmatpush1.msra.mxu0 %v1440
        %1476 = vmatprep.subr.mxu0 %v1445
        %1477 = vmatpush1.msra.mxu0 %v1444
        %1478 = vmatprep.subr.mxu0 %v1449
        %1479 = vmatpush1.msra.mxu0 %v1448
        %1480 = vmatprep.subr.mxu0 %v1453
        %1481 = vmatpush1.msra.mxu0 %v1452
        %1482 = vmatprep.subr.mxu0 %v1457
        %1483 = vmatpush1.msra.mxu0 %v1456
        %1484 = vmatprep.subr.mxu0 %v1461
        %1485 = vmatpush1.msra.mxu0 %v1460
        %1486 = vmatprep.subr.mxu0 0.0
        %1487 = vmatpush1.msra.mxu0 0.0
        %1488 = vmatprep.subr.mxu0 0.0
        %1489 = vmatpush1.msra.mxu0 0.0
        %1490 = vmatprep.subr.mxu0 0.0
        %1491 = vmatpush1.msra.mxu0 0.0
        %1492 = vmatprep.subr.mxu0 0.0
        %1493 = vmatpush1.msra.mxu0 0.0
        %1494 = vmatprep.subr.mxu0 0.0
        %1495 = vmatpush1.msra.mxu0 0.0
        %1496 = vmatprep.subr.mxu0 0.0
        %1497 = vmatpush1.msra.mxu0 0.0
        %1498 = vmatprep.subr.mxu0 0.0
        %1499 = vmatpush1.msra.mxu0 0.0
        %1500 = vmatprep.subr.mxu0 0.0
        %1501 = vmatpush1.msra.mxu0 0.0
        %1502 = vmatprep.subr.mxu0 0.0
        %1503 = vmatpush1.msra.mxu0 0.0
        %1504 = vmatprep.subr.mxu0 0.0
        %1505 = vmatpush1.msra.mxu0 0.0
        %1506 = vmatprep.subr.mxu0 0.0
        %1507 = vmatpush1.msra.mxu0 0.0
        %1508 = vmatprep.subr.mxu0 0.0
        %1509 = vmatpush1.msra.mxu0 0.0
        %1510 = vmatprep.subr.mxu0 0.0
        %1511 = vmatpush1.msra.mxu0 0.0
        %1512 = vmatprep.subr.mxu0 0.0
        %1513 = vmatpush1.msra.mxu0 0.0
        %1514 = vmatprep.subr.mxu0 0.0
        %1515 = vmatpush1.msra.mxu0 0.0
        %1516 = vmatprep.subr.mxu0 0.0
        %1517 = vmatpush1.msra.mxu0 0.0
        %1518 = vmatprep.subr.mxu0 0.0
        %1519 = vmatpush1.msra.mxu0 0.0
        %1520 = vmatprep.subr.mxu0 0.0
        %1521 = vmatpush1.msra.mxu0 0.0
        %1522 = vmatprep.subr.mxu0 0.0
        %1523 = vmatpush1.msra.mxu0 0.0
        %1524 = vmatprep.subr.mxu0 0.0
        %1525 = vmatpush1.msra.mxu0 0.0
        %1526 = vmatprep.subr.mxu0 0.0
        %1527 = vmatpush1.msra.mxu0 0.0
        %1528 = vmatprep.subr.mxu0 0.0
        %1529 = vmatpush1.msra.mxu0 0.0
        %1530 = vmatprep.subr.mxu0 0.0
        %1531 = vmatpush1.msra.mxu0 0.0
        %1532 = vmatprep.subr.mxu0 0.0
        %1533 = vmatpush1.msra.mxu0 0.0
        %1534 = vmatprep.subr.mxu0 0.0
        %1535 = vmatpush1.msra.mxu0 0.0
        %1536 = vmatprep.subr.mxu0 0.0
        %1537 = vmatpush1.msra.mxu0 0.0
        %1538 = vmatprep.mubr.f32.mxu0 0.0
        %1539 = vmatmul.mubr.f32.gmra.mrb[0].mxu0 %v1469
        %v1540 = vpop.f32.mrb[0].mxu0
        %v1541 = vadd.f32 0.0, %v1540
        %v1542 = vpop.f32.mrb[0].mxu0
        %v1543 = vadd.f32 0.0, %v1542
        %1544 = vmatprep.mubr.f32.mxu0 0.0
        %1545 = vmatmul.mubr.f32.gmra.mrb[0].mxu0 %v1472
        %v1546 = vpop.f32.mrb[0].mxu0
        %v1547 = vadd.f32 0.0, %v1546
        %v1548 = vpop.f32.mrb[0].mxu0
        %v1549 = vadd.f32 0.0, %v1548
        %1550 = vdwg.mxu0
        %1551 = vmatprep.subr.mxu0 %v1443
        %1552 = vmatpush1.msra.mxu0 %v1442
        %1553 = vmatprep.subr.mxu0 %v1447
        %1554 = vmatpush1.msra.mxu0 %v1446
        %1555 = vmatprep.subr.mxu0 %v1451
        %1556 = vmatpush1.msra.mxu0 %v1450
        %1557 = vmatprep.subr.mxu0 %v1455
        %1558 = vmatpush1.msra.mxu0 %v1454
        %1559 = vmatprep.subr.mxu0 %v1459
        %1560 = vmatpush1.msra.mxu0 %v1458
        %1561 = vmatprep.subr.mxu0 %v1463
        %1562 = vmatpush1.msra.mxu0 %v1462
        %1563 = vmatprep.subr.mxu0 0.0
        %1564 = vmatpush1.msra.mxu0 0.0
        %1565 = vmatprep.subr.mxu0 0.0
        %1566 = vmatpush1.msra.mxu0 0.0
        %1567 = vmatprep.subr.mxu0 0.0
        %1568 = vmatpush1.msra.mxu0 0.0
        %1569 = vmatprep.subr.mxu0 0.0
        %1570 = vmatpush1.msra.mxu0 0.0
        %1571 = vmatprep.subr.mxu0 0.0
        %1572 = vmatpush1.msra.mxu0 0.0
        %1573 = vmatprep.subr.mxu0 0.0
        %1574 = vmatpush1.msra.mxu0 0.0
        %1575 = vmatprep.subr.mxu0 0.0
        %1576 = vmatpush1.msra.mxu0 0.0
        %1577 = vmatprep.subr.mxu0 0.0
        %1578 = vmatpush1.msra.mxu0 0.0
        %1579 = vmatprep.subr.mxu0 0.0
        %1580 = vmatpush1.msra.mxu0 0.0
        %1581 = vmatprep.subr.mxu0 0.0
        %1582 = vmatpush1.msra.mxu0 0.0
        %1583 = vmatprep.subr.mxu0 0.0
        %1584 = vmatpush1.msra.mxu0 0.0
        %1585 = vmatprep.subr.mxu0 0.0
        %1586 = vmatpush1.msra.mxu0 0.0
        %1587 = vmatprep.subr.mxu0 0.0
        %1588 = vmatpush1.msra.mxu0 0.0
        %1589 = vmatprep.subr.mxu0 0.0
        %1590 = vmatpush1.msra.mxu0 0.0
        %1591 = vmatprep.subr.mxu0 0.0
        %1592 = vmatpush1.msra.mxu0 0.0
        %1593 = vmatprep.subr.mxu0 0.0
        %1594 = vmatpush1.msra.mxu0 0.0
        %1595 = vmatprep.subr.mxu0 0.0
        %1596 = vmatpush1.msra.mxu0 0.0
        %1597 = vmatprep.subr.mxu0 0.0
        %1598 = vmatpush1.msra.mxu0 0.0
        %1599 = vmatprep.subr.mxu0 0.0
        %1600 = vmatpush1.msra.mxu0 0.0
        %1601 = vmatprep.subr.mxu0 0.0
        %1602 = vmatpush1.msra.mxu0 0.0
        %1603 = vmatprep.subr.mxu0 0.0
        %1604 = vmatpush1.msra.mxu0 0.0
        %1605 = vmatprep.subr.mxu0 0.0
        %1606 = vmatpush1.msra.mxu0 0.0
        %1607 = vmatprep.subr.mxu0 0.0
        %1608 = vmatpush1.msra.mxu0 0.0
        %1609 = vmatprep.subr.mxu0 0.0
        %1610 = vmatpush1.msra.mxu0 0.0
        %1611 = vmatprep.subr.mxu0 0.0
        %1612 = vmatpush1.msra.mxu0 0.0
        %1613 = vmatprep.subr.mxu0 0.0
        %1614 = vmatpush1.msra.mxu0 0.0
        %1615 = vmatprep.mubr.f32.mxu0 0.0
        %1616 = vmatmul.mubr.f32.gmra.mrb[0].mxu0 %v1469
        %v1617 = vpop.f32.mrb[0].mxu0
        %v1618 = vadd.f32 0.0, %v1617
        %v1619 = vpop.f32.mrb[0].mxu0
        %v1620 = vadd.f32 0.0, %v1619
        %1621 = vmatprep.mubr.f32.mxu0 0.0
        %1622 = vmatmul.mubr.f32.gmra.mrb[0].mxu0 %v1472
        %v1623 = vpop.f32.mrb[0].mxu0
        %v1624 = vadd.f32 0.0, %v1623
        %v1625 = vpop.f32.mrb[0].mxu0
        %v1626 = vadd.f32 0.0, %v1625
        %1627 = vdwg.mxu0
        %1630 = vrot.lane.b32.xlu0 %v1541, 80
        %v1631 = vpop.permute.xlu0 %1630
        %1632 = vrot.lane.b32.xlu0 %v1547, 80
        %v1633 = vpop.permute.xlu0 %1632
        %1638 = vrot.lane.b32.xlu0 %v1541, 32
        %v1639 = vpop.permute.xlu0 %1638
        %1640 = vrot.lane.b32.xlu0 %v1543, 32
        %v1641 = vpop.permute.xlu0 %1640
        %1642 = vrot.lane.b32.xlu0 %v1547, 32
        %v1643 = vpop.permute.xlu0 %1642
        %1644 = vrot.lane.b32.xlu0 %v1549, 32
        %v1645 = vpop.permute.xlu0 %1644
        %v1646 = vsel %vm542, %v1639, %v1641
        %v1647 = vsel %vm542, %v1643, %v1645
        %1650 = vrot.lane.b32.xlu0 %v1543, 112
        %v1651 = vpop.permute.xlu0 %1650
        %1652 = vrot.lane.b32.xlu0 %v1549, 112
        %v1653 = vpop.permute.xlu0 %1652
        %1656 = vrot.lane.b32.xlu0 %v1543, 64
        %v1657 = vpop.permute.xlu0 %1656
        %1658 = vrot.lane.b32.xlu0 %v1549, 64
        %v1659 = vpop.permute.xlu0 %1658
        %1664 = vrot.lane.b32.xlu0 %v1543, 16
        %v1665 = vpop.permute.xlu0 %1664
        %1666 = vrot.lane.b32.xlu0 %v1618, 16
        %v1667 = vpop.permute.xlu0 %1666
        %1668 = vrot.lane.b32.xlu0 %v1549, 16
        %v1669 = vpop.permute.xlu0 %1668
        %1670 = vrot.lane.b32.xlu0 %v1624, 16
        %v1671 = vpop.permute.xlu0 %1670
        %v1672 = vsel %vm1141, %v1665, %v1667
        %v1673 = vsel %vm1141, %v1669, %v1671
        %1676 = vrot.lane.b32.xlu0 %v1618, 96
        %v1677 = vpop.permute.xlu0 %1676
        %1678 = vrot.lane.b32.xlu0 %v1624, 96
        %v1679 = vpop.permute.xlu0 %1678
        %1682 = vrot.lane.b32.xlu0 %v1618, 48
        %v1683 = vpop.permute.xlu0 %1682
        %1684 = vrot.lane.b32.xlu0 %v1624, 48
        %v1685 = vpop.permute.xlu0 %1684
        %v1689 = vsel %vm1141, %v1465, 0
        %v1692 = vsel %vm1141, %v1467, 0
        %1694 = vmatprep.subr.mxu0 0.0
        %1695 = vmatpush1.msra.mxu0 %v1541
        %1696 = vmatprep.subr.mxu0 0.0
        %1697 = vmatpush1.msra.mxu0 %v1547
        %1698 = vmatprep.subr.mxu0 0.0
        %1699 = vmatpush1.msra.mxu0 %v1631
        %1700 = vmatprep.subr.mxu0 0.0
        %1701 = vmatpush1.msra.mxu0 %v1633
        %1702 = vmatprep.subr.mxu0 0.0
        %1703 = vmatpush1.msra.mxu0 %v1646
        %1704 = vmatprep.subr.mxu0 0.0
        %1705 = vmatpush1.msra.mxu0 %v1647
        %1706 = vmatprep.subr.mxu0 0.0
        %1707 = vmatpush1.msra.mxu0 %v1651
        %1708 = vmatprep.subr.mxu0 0.0
        %1709 = vmatpush1.msra.mxu0 %v1653
        %1710 = vmatprep.subr.mxu0 0.0
        %1711 = vmatpush1.msra.mxu0 %v1657
        %1712 = vmatprep.subr.mxu0 0.0
        %1713 = vmatpush1.msra.mxu0 %v1659
        %1714 = vmatprep.subr.mxu0 0.0
        %1715 = vmatpush1.msra.mxu0 %v1672
        %1716 = vmatprep.subr.mxu0 0.0
        %1717 = vmatpush1.msra.mxu0 %v1673
        %1718 = vmatprep.subr.mxu0 0.0
        %1719 = vmatpush1.msra.mxu0 %v1677
        %1720 = vmatprep.subr.mxu0 0.0
        %1721 = vmatpush1.msra.mxu0 %v1679
        %1722 = vmatprep.subr.mxu0 0.0
        %1723 = vmatpush1.msra.mxu0 %v1683
        %1724 = vmatprep.subr.mxu0 0.0
        %1725 = vmatpush1.msra.mxu0 %v1685
        %1726 = vmatprep.subr.mxu0 0.0
        %1727 = vmatpush1.msra.mxu0 %v1620
        %1728 = vmatprep.subr.mxu0 0.0
        %1729 = vmatpush1.msra.mxu0 %v1626
        %1730 = vmatprep.subr.mxu0 0.0
        %1731 = vmatpush1.msra.mxu0 0.0
        %1732 = vmatprep.subr.mxu0 0.0
        %1733 = vmatpush1.msra.mxu0 0.0
        %1734 = vmatprep.subr.mxu0 0.0
        %1735 = vmatpush1.msra.mxu0 0.0
        %1736 = vmatprep.subr.mxu0 0.0
        %1737 = vmatpush1.msra.mxu0 0.0
        %1738 = vmatprep.subr.mxu0 0.0
        %1739 = vmatpush1.msra.mxu0 0.0
        %1740 = vmatprep.subr.mxu0 0.0
        %1741 = vmatpush1.msra.mxu0 0.0
        %1742 = vmatprep.subr.mxu0 0.0
        %1743 = vmatpush1.msra.mxu0 0.0
        %1744 = vmatprep.subr.mxu0 0.0
        %1745 = vmatpush1.msra.mxu0 0.0
        %1746 = vmatprep.subr.mxu0 0.0
        %1747 = vmatpush1.msra.mxu0 0.0
        %1748 = vmatprep.subr.mxu0 0.0
        %1749 = vmatpush1.msra.mxu0 0.0
        %1750 = vmatprep.subr.mxu0 0.0
        %1751 = vmatpush1.msra.mxu0 0.0
        %1752 = vmatprep.subr.mxu0 0.0
        %1753 = vmatpush1.msra.mxu0 0.0
        %1754 = vmatprep.subr.mxu0 0.0
        %1755 = vmatpush1.msra.mxu0 0.0
        %1756 = vmatprep.subr.mxu0 0.0
        %1757 = vmatpush1.msra.mxu0 0.0
        %1758 = vmatprep.mubr.f32.mxu0 %v1689
        %1759 = vmatmul.mubr.f32.gmra.mrb[0].mxu0 %v1464
        %v1760 = vpop.f32.mrb[0].mxu0
        %v1761 = vadd.f32 0.0003, %v1760
        %v1762 = vpop.f32.mrb[0].mxu0
        %1763 = vmatprep.mubr.f32.mxu0 %v1692
        %1764 = vmatmul.mubr.f32.gmra.mrb[0].mxu0 %v1466
        %v1765 = vpop.f32.mrb[0].mxu0
        %v1766 = vadd.f32 0.0003, %v1765
        %v1767 = vpop.f32.mrb[0].mxu0
        %1768 = vdwg.mxu0
        %v1769 = vmax.f32 %v1761, 0.0
        %v1770 = vmax.f32 %v1766, 0.0
        %v1771 = vld [vmem:[#allocation10] sm:$0xff]
        %v1772 = vld [vmem:[#allocation10 + $0x8] sm:$0xff]
        %v1773 = vld [vmem:[#allocation10 + $0x10] sm:$0xff]
        %v1774 = vld [vmem:[#allocation10 + $0x18] sm:$0xff]
        %v1775 = vld [vmem:[#allocation10 + $0x20] sm:$0xff]
        %v1776 = vld [vmem:[#allocation10 + $0x28] sm:$0xff]
        %v1777 = vld [vmem:[#allocation10 + $0x30] sm:$0xff]
        %v1778 = vld [vmem:[#allocation10 + $0x38] sm:$0xff]
        %v1779 = vld [vmem:[#allocation10 + $0x40] sm:$0xff]
        %v1780 = vld [vmem:[#allocation10 + $0x48] sm:$0xff]
        %v1781 = vld [vmem:[#allocation10 + $0x50] sm:$0xff]
        %v1782 = vld [vmem:[#allocation10 + $0x58] sm:$0xff]
        %v1783 = vld [vmem:[#allocation10 + $0x60] sm:$0xff]
        %v1784 = vld [vmem:[#allocation10 + $0x68] sm:$0xff]
        %v1785 = vld [vmem:[#allocation10 + $0x70] sm:$0xff]
        %v1786 = vld [vmem:[#allocation10 + $0x78] sm:$0xff]
        %v1787 = vld [vmem:[#allocation10 + $0x80] sm:$0xff]
        %v1788 = vld [vmem:[#allocation10 + $0x88] sm:$0xff]
        %v1789 = vld [vmem:[#allocation10 + $0x90] sm:$0xff]
        %v1790 = vld [vmem:[#allocation10 + $0x98] sm:$0xff]
        %v1791 = vld [vmem:[#allocation10 + $0xa0] sm:$0xff]
        %v1792 = vld [vmem:[#allocation10 + $0xa8] sm:$0xff]
        %v1793 = vld [vmem:[#allocation10 + $0xb0] sm:$0xff]
        %v1794 = vld [vmem:[#allocation10 + $0xb8] sm:$0xff]
        %v1795 = vld [vmem:[#allocation10 + $0xc0] sm:$0xff]
        %v1796 = vld [vmem:[#allocation10 + $0xc8] sm:$0xff]
        %v1797 = vld [vmem:[#allocation10 + $0xd0] sm:$0xff]
        %v1798 = vld [vmem:[#allocation10 + $0xd8] sm:$0xff]
        %v1799 = vld [vmem:[#allocation10 + $0xe0] sm:$0xff]
        %v1800 = vld [vmem:[#allocation10 + $0xe8] sm:$0xff]
        %v1801 = vld [vmem:[#allocation10 + $0xf0] sm:$0xff]
        %v1802 = vld [vmem:[#allocation10 + $0xf8] sm:$0xff]
        %v1803 = vld [vmem:[#allocation10 + $0x100] sm:$0xff]
        %v1804 = vld [vmem:[#allocation10 + $0x108] sm:$0xff]
        %v1805 = vld [vmem:[#allocation10 + $0x110] sm:$0xff]
        %v1806 = vld [vmem:[#allocation10 + $0x118] sm:$0xff]
        %v1807 = vld [vmem:[#allocation10 + $0x120] sm:$0xff]
        %v1808 = vld [vmem:[#allocation10 + $0x128] sm:$0xff]
        %v1809 = vld [vmem:[#allocation10 + $0x130] sm:$0xff]
        %v1810 = vld [vmem:[#allocation10 + $0x138] sm:$0xff]
        %v1811 = vld [vmem:[#allocation10 + $0x140] sm:$0xff]
        %v1812 = vld [vmem:[#allocation10 + $0x148] sm:$0xff]
        %v1813 = vld [vmem:[#allocation5 + $0x20] sm:$0xf]
        %v1814 = vld [vmem:[#allocation5 + $0x28] sm:$0xf]
        %v1816 = vsel %vm714, %v1769, 0
        %v1819 = vsel %vm714, %v1770, 0
        %1821 = vmatprep.subr.mxu0 %v1772
        %1822 = vmatpush1.msra.mxu0 %v1771
        %1823 = vmatprep.subr.mxu0 %v1779
        %1824 = vmatpush1.msra.mxu0 %v1778
        %1825 = vmatprep.subr.mxu0 %v1786
        %1826 = vmatpush1.msra.mxu0 %v1785
        %1827 = vmatprep.subr.mxu0 %v1793
        %1828 = vmatpush1.msra.mxu0 %v1792
        %1829 = vmatprep.subr.mxu0 %v1800
        %1830 = vmatpush1.msra.mxu0 %v1799
        %1831 = vmatprep.subr.mxu0 %v1807
        %1832 = vmatpush1.msra.mxu0 %v1806
        %1833 = vmatprep.subr.mxu0 0.0
        %1834 = vmatpush1.msra.mxu0 0.0
        %1835 = vmatprep.subr.mxu0 0.0
        %1836 = vmatpush1.msra.mxu0 0.0
        %1837 = vmatprep.subr.mxu0 0.0
        %1838 = vmatpush1.msra.mxu0 0.0
        %1839 = vmatprep.subr.mxu0 0.0
        %1840 = vmatpush1.msra.mxu0 0.0
        %1841 = vmatprep.subr.mxu0 0.0
        %1842 = vmatpush1.msra.mxu0 0.0
        %1843 = vmatprep.subr.mxu0 0.0
        %1844 = vmatpush1.msra.mxu0 0.0
        %1845 = vmatprep.subr.mxu0 0.0
        %1846 = vmatpush1.msra.mxu0 0.0
        %1847 = vmatprep.subr.mxu0 0.0
        %1848 = vmatpush1.msra.mxu0 0.0
        %1849 = vmatprep.subr.mxu0 0.0
        %1850 = vmatpush1.msra.mxu0 0.0
        %1851 = vmatprep.subr.mxu0 0.0
        %1852 = vmatpush1.msra.mxu0 0.0
        %1853 = vmatprep.subr.mxu0 0.0
        %1854 = vmatpush1.msra.mxu0 0.0
        %1855 = vmatprep.subr.mxu0 0.0
        %1856 = vmatpush1.msra.mxu0 0.0
        %1857 = vmatprep.subr.mxu0 0.0
        %1858 = vmatpush1.msra.mxu0 0.0
        %1859 = vmatprep.subr.mxu0 0.0
        %1860 = vmatpush1.msra.mxu0 0.0
        %1861 = vmatprep.subr.mxu0 0.0
        %1862 = vmatpush1.msra.mxu0 0.0
        %1863 = vmatprep.subr.mxu0 0.0
        %1864 = vmatpush1.msra.mxu0 0.0
        %1865 = vmatprep.subr.mxu0 0.0
        %1866 = vmatpush1.msra.mxu0 0.0
        %1867 = vmatprep.subr.mxu0 0.0
        %1868 = vmatpush1.msra.mxu0 0.0
        %1869 = vmatprep.subr.mxu0 0.0
        %1870 = vmatpush1.msra.mxu0 0.0
        %1871 = vmatprep.subr.mxu0 0.0
        %1872 = vmatpush1.msra.mxu0 0.0
        %1873 = vmatprep.subr.mxu0 0.0
        %1874 = vmatpush1.msra.mxu0 0.0
        %1875 = vmatprep.subr.mxu0 0.0
        %1876 = vmatpush1.msra.mxu0 0.0
        %1877 = vmatprep.subr.mxu0 0.0
        %1878 = vmatpush1.msra.mxu0 0.0
        %1879 = vmatprep.subr.mxu0 0.0
        %1880 = vmatpush1.msra.mxu0 0.0
        %1881 = vmatprep.subr.mxu0 0.0
        %1882 = vmatpush1.msra.mxu0 0.0
        %1883 = vmatprep.subr.mxu0 0.0
        %1884 = vmatpush1.msra.mxu0 0.0
        %1885 = vmatprep.mubr.f32.mxu0 0.0
        %1886 = vmatmul.mubr.f32.gmra.mrb[0].mxu0 %v1816
        %v1887 = vpop.f32.mrb[0].mxu0
        %v1888 = vadd.f32 0.0, %v1887
        %v1889 = vpop.f32.mrb[0].mxu0
        %v1890 = vadd.f32 0.0, %v1889
        %1891 = vmatprep.mubr.f32.mxu0 0.0
        %1892 = vmatmul.mubr.f32.gmra.mrb[0].mxu0 %v1819
        %v1893 = vpop.f32.mrb[0].mxu0
        %v1894 = vadd.f32 0.0, %v1893
        %v1895 = vpop.f32.mrb[0].mxu0
        %v1896 = vadd.f32 0.0, %v1895
        %1897 = vdwg.mxu0
        %1898 = vmatprep.subr.mxu0 %v1774
        %1899 = vmatpush1.msra.mxu0 %v1773
        %1900 = vmatprep.subr.mxu0 %v1781
        %1901 = vmatpush1.msra.mxu0 %v1780
        %1902 = vmatprep.subr.mxu0 %v1788
        %1903 = vmatpush1.msra.mxu0 %v1787
        %1904 = vmatprep.subr.mxu0 %v1795
        %1905 = vmatpush1.msra.mxu0 %v1794
        %1906 = vmatprep.subr.mxu0 %v1802
        %1907 = vmatpush1.msra.mxu0 %v1801
        %1908 = vmatprep.subr.mxu0 %v1809
        %1909 = vmatpush1.msra.mxu0 %v1808
        %1910 = vmatprep.subr.mxu0 0.0
        %1911 = vmatpush1.msra.mxu0 0.0
        %1912 = vmatprep.subr.mxu0 0.0
        %1913 = vmatpush1.msra.mxu0 0.0
        %1914 = vmatprep.subr.mxu0 0.0
        %1915 = vmatpush1.msra.mxu0 0.0
        %1916 = vmatprep.subr.mxu0 0.0
        %1917 = vmatpush1.msra.mxu0 0.0
        %1918 = vmatprep.subr.mxu0 0.0
        %1919 = vmatpush1.msra.mxu0 0.0
        %1920 = vmatprep.subr.mxu0 0.0
        %1921 = vmatpush1.msra.mxu0 0.0
        %1922 = vmatprep.subr.mxu0 0.0
        %1923 = vmatpush1.msra.mxu0 0.0
        %1924 = vmatprep.subr.mxu0 0.0
        %1925 = vmatpush1.msra.mxu0 0.0
        %1926 = vmatprep.subr.mxu0 0.0
        %1927 = vmatpush1.msra.mxu0 0.0
        %1928 = vmatprep.subr.mxu0 0.0
        %1929 = vmatpush1.msra.mxu0 0.0
        %1930 = vmatprep.subr.mxu0 0.0
        %1931 = vmatpush1.msra.mxu0 0.0
        %1932 = vmatprep.subr.mxu0 0.0
        %1933 = vmatpush1.msra.mxu0 0.0
        %1934 = vmatprep.subr.mxu0 0.0
        %1935 = vmatpush1.msra.mxu0 0.0
        %1936 = vmatprep.subr.mxu0 0.0
        %1937 = vmatpush1.msra.mxu0 0.0
        %1938 = vmatprep.subr.mxu0 0.0
        %1939 = vmatpush1.msra.mxu0 0.0
        %1940 = vmatprep.subr.mxu0 0.0
        %1941 = vmatpush1.msra.mxu0 0.0
        %1942 = vmatprep.subr.mxu0 0.0
        %1943 = vmatpush1.msra.mxu0 0.0
        %1944 = vmatprep.subr.mxu0 0.0
        %1945 = vmatpush1.msra.mxu0 0.0
        %1946 = vmatprep.subr.mxu0 0.0
        %1947 = vmatpush1.msra.mxu0 0.0
        %1948 = vmatprep.subr.mxu0 0.0
        %1949 = vmatpush1.msra.mxu0 0.0
        %1950 = vmatprep.subr.mxu0 0.0
        %1951 = vmatpush1.msra.mxu0 0.0
        %1952 = vmatprep.subr.mxu0 0.0
        %1953 = vmatpush1.msra.mxu0 0.0
        %1954 = vmatprep.subr.mxu0 0.0
        %1955 = vmatpush1.msra.mxu0 0.0
        %1956 = vmatprep.subr.mxu0 0.0
        %1957 = vmatpush1.msra.mxu0 0.0
        %1958 = vmatprep.subr.mxu0 0.0
        %1959 = vmatpush1.msra.mxu0 0.0
        %1960 = vmatprep.subr.mxu0 0.0
        %1961 = vmatpush1.msra.mxu0 0.0
        %1962 = vmatprep.mubr.f32.mxu0 0.0
        %1963 = vmatmul.mubr.f32.gmra.mrb[0].mxu0 %v1816
        %v1964 = vpop.f32.mrb[0].mxu0
        %v1965 = vadd.f32 0.0, %v1964
        %v1966 = vpop.f32.mrb[0].mxu0
        %v1967 = vadd.f32 0.0, %v1966
        %1968 = vmatprep.mubr.f32.mxu0 0.0
        %1969 = vmatmul.mubr.f32.gmra.mrb[0].mxu0 %v1819
        %v1970 = vpop.f32.mrb[0].mxu0
        %v1971 = vadd.f32 0.0, %v1970
        %v1972 = vpop.f32.mrb[0].mxu0
        %v1973 = vadd.f32 0.0, %v1972
        %1974 = vdwg.mxu0
        %1975 = vmatprep.subr.mxu0 %v1776
        %1976 = vmatpush1.msra.mxu0 %v1775
        %1977 = vmatprep.subr.mxu0 %v1783
        %1978 = vmatpush1.msra.mxu0 %v1782
        %1979 = vmatprep.subr.mxu0 %v1790
        %1980 = vmatpush1.msra.mxu0 %v1789
        %1981 = vmatprep.subr.mxu0 %v1797
        %1982 = vmatpush1.msra.mxu0 %v1796
        %1983 = vmatprep.subr.mxu0 %v1804
        %1984 = vmatpush1.msra.mxu0 %v1803
        %1985 = vmatprep.subr.mxu0 %v1811
        %1986 = vmatpush1.msra.mxu0 %v1810
        %1987 = vmatprep.subr.mxu0 0.0
        %1988 = vmatpush1.msra.mxu0 0.0
        %1989 = vmatprep.subr.mxu0 0.0
        %1990 = vmatpush1.msra.mxu0 0.0
        %1991 = vmatprep.subr.mxu0 0.0
        %1992 = vmatpush1.msra.mxu0 0.0
        %1993 = vmatprep.subr.mxu0 0.0
        %1994 = vmatpush1.msra.mxu0 0.0
        %1995 = vmatprep.subr.mxu0 0.0
        %1996 = vmatpush1.msra.mxu0 0.0
        %1997 = vmatprep.subr.mxu0 0.0
        %1998 = vmatpush1.msra.mxu0 0.0
        %1999 = vmatprep.subr.mxu0 0.0
        %2000 = vmatpush1.msra.mxu0 0.0
        %2001 = vmatprep.subr.mxu0 0.0
        %2002 = vmatpush1.msra.mxu0 0.0
        %2003 = vmatprep.subr.mxu0 0.0
        %2004 = vmatpush1.msra.mxu0 0.0
        %2005 = vmatprep.subr.mxu0 0.0
        %2006 = vmatpush1.msra.mxu0 0.0
        %2007 = vmatprep.subr.mxu0 0.0
        %2008 = vmatpush1.msra.mxu0 0.0
        %2009 = vmatprep.subr.mxu0 0.0
        %2010 = vmatpush1.msra.mxu0 0.0
        %2011 = vmatprep.subr.mxu0 0.0
        %2012 = vmatpush1.msra.mxu0 0.0
        %2013 = vmatprep.subr.mxu0 0.0
        %2014 = vmatpush1.msra.mxu0 0.0
        %2015 = vmatprep.subr.mxu0 0.0
        %2016 = vmatpush1.msra.mxu0 0.0
        %2017 = vmatprep.subr.mxu0 0.0
        %2018 = vmatpush1.msra.mxu0 0.0
        %2019 = vmatprep.subr.mxu0 0.0
        %2020 = vmatpush1.msra.mxu0 0.0
        %2021 = vmatprep.subr.mxu0 0.0
        %2022 = vmatpush1.msra.mxu0 0.0
        %2023 = vmatprep.subr.mxu0 0.0
        %2024 = vmatpush1.msra.mxu0 0.0
        %2025 = vmatprep.subr.mxu0 0.0
        %2026 = vmatpush1.msra.mxu0 0.0
        %2027 = vmatprep.subr.mxu0 0.0
        %2028 = vmatpush1.msra.mxu0 0.0
        %2029 = vmatprep.subr.mxu0 0.0
        %2030 = vmatpush1.msra.mxu0 0.0
        %2031 = vmatprep.subr.mxu0 0.0
        %2032 = vmatpush1.msra.mxu0 0.0
        %2033 = vmatprep.subr.mxu0 0.0
        %2034 = vmatpush1.msra.mxu0 0.0
        %2035 = vmatprep.subr.mxu0 0.0
        %2036 = vmatpush1.msra.mxu0 0.0
        %2037 = vmatprep.subr.mxu0 0.0
        %2038 = vmatpush1.msra.mxu0 0.0
        %2039 = vmatprep.mubr.f32.mxu0 0.0
        %2040 = vmatmul.mubr.f32.gmra.mrb[0].mxu0 %v1816
        %v2041 = vpop.f32.mrb[0].mxu0
        %v2042 = vadd.f32 0.0, %v2041
        %v2043 = vpop.f32.mrb[0].mxu0
        %v2044 = vadd.f32 0.0, %v2043
        %2045 = vmatprep.mubr.f32.mxu0 0.0
        %2046 = vmatmul.mubr.f32.gmra.mrb[0].mxu0 %v1819
        %v2047 = vpop.f32.mrb[0].mxu0
        %v2048 = vadd.f32 0.0, %v2047
        %v2049 = vpop.f32.mrb[0].mxu0
        %v2050 = vadd.f32 0.0, %v2049
        %2051 = vdwg.mxu0
        %2052 = vmatprep.subr.mxu0 0.0
        %2053 = vmatpush1.msra.mxu0 %v1777
        %2054 = vmatprep.subr.mxu0 0.0
        %2055 = vmatpush1.msra.mxu0 %v1784
        %2056 = vmatprep.subr.mxu0 0.0
        %2057 = vmatpush1.msra.mxu0 %v1791
        %2058 = vmatprep.subr.mxu0 0.0
        %2059 = vmatpush1.msra.mxu0 %v1798
        %2060 = vmatprep.subr.mxu0 0.0
        %2061 = vmatpush1.msra.mxu0 %v1805
        %2062 = vmatprep.subr.mxu0 0.0
        %2063 = vmatpush1.msra.mxu0 %v1812
        %2064 = vmatprep.subr.mxu0 0.0
        %2065 = vmatpush1.msra.mxu0 0.0
        %2066 = vmatprep.subr.mxu0 0.0
        %2067 = vmatpush1.msra.mxu0 0.0
        %2068 = vmatprep.subr.mxu0 0.0
        %2069 = vmatpush1.msra.mxu0 0.0
        %2070 = vmatprep.subr.mxu0 0.0
        %2071 = vmatpush1.msra.mxu0 0.0
        %2072 = vmatprep.subr.mxu0 0.0
        %2073 = vmatpush1.msra.mxu0 0.0
        %2074 = vmatprep.subr.mxu0 0.0
        %2075 = vmatpush1.msra.mxu0 0.0
        %2076 = vmatprep.subr.mxu0 0.0
        %2077 = vmatpush1.msra.mxu0 0.0
        %2078 = vmatprep.subr.mxu0 0.0
        %2079 = vmatpush1.msra.mxu0 0.0
        %2080 = vmatprep.subr.mxu0 0.0
        %2081 = vmatpush1.msra.mxu0 0.0
        %2082 = vmatprep.subr.mxu0 0.0
        %2083 = vmatpush1.msra.mxu0 0.0
        %2084 = vmatprep.subr.mxu0 0.0
        %2085 = vmatpush1.msra.mxu0 0.0
        %2086 = vmatprep.subr.mxu0 0.0
        %2087 = vmatpush1.msra.mxu0 0.0
        %2088 = vmatprep.subr.mxu0 0.0
        %2089 = vmatpush1.msra.mxu0 0.0
        %2090 = vmatprep.subr.mxu0 0.0
        %2091 = vmatpush1.msra.mxu0 0.0
        %2092 = vmatprep.subr.mxu0 0.0
        %2093 = vmatpush1.msra.mxu0 0.0
        %2094 = vmatprep.subr.mxu0 0.0
        %2095 = vmatpush1.msra.mxu0 0.0
        %2096 = vmatprep.subr.mxu0 0.0
        %2097 = vmatpush1.msra.mxu0 0.0
        %2098 = vmatprep.subr.mxu0 0.0
        %2099 = vmatpush1.msra.mxu0 0.0
        %2100 = vmatprep.subr.mxu0 0.0
        %2101 = vmatpush1.msra.mxu0 0.0
        %2102 = vmatprep.subr.mxu0 0.0
        %2103 = vmatpush1.msra.mxu0 0.0
        %2104 = vmatprep.subr.mxu0 0.0
        %2105 = vmatpush1.msra.mxu0 0.0
        %2106 = vmatprep.subr.mxu0 0.0
        %2107 = vmatpush1.msra.mxu0 0.0
        %2108 = vmatprep.subr.mxu0 0.0
        %2109 = vmatpush1.msra.mxu0 0.0
        %2110 = vmatprep.subr.mxu0 0.0
        %2111 = vmatpush1.msra.mxu0 0.0
        %2112 = vmatprep.subr.mxu0 0.0
        %2113 = vmatpush1.msra.mxu0 0.0
        %2114 = vmatprep.subr.mxu0 0.0
        %2115 = vmatpush1.msra.mxu0 0.0
        %2116 = vmatprep.mubr.f32.mxu0 0.0
        %2117 = vmatmul.mubr.f32.gmra.mrb[0].mxu0 %v1816
        %v2118 = vpop.f32.mrb[0].mxu0
        %v2119 = vadd.f32 0.0, %v2118
        %v2120 = vpop.f32.mrb[0].mxu0
        %2121 = vmatprep.mubr.f32.mxu0 0.0
        %2122 = vmatmul.mubr.f32.gmra.mrb[0].mxu0 %v1819
        %v2123 = vpop.f32.mrb[0].mxu0
        %v2124 = vadd.f32 0.0, %v2123
        %v2125 = vpop.f32.mrb[0].mxu0
        %2126 = vdwg.mxu0
        %2131 = vrot.lane.b32.xlu0 %v1888, 32
        %v2132 = vpop.permute.xlu0 %2131
        %2133 = vrot.lane.b32.xlu0 %v1890, 32
        %v2134 = vpop.permute.xlu0 %2133
        %2135 = vrot.lane.b32.xlu0 %v1894, 32
        %v2136 = vpop.permute.xlu0 %2135
        %2137 = vrot.lane.b32.xlu0 %v1896, 32
        %v2138 = vpop.permute.xlu0 %2137
        %v2139 = vsel %vm542, %v2132, %v2134
        %v2140 = vsel %vm542, %v2136, %v2138
        %2145 = vrot.lane.b32.xlu0 %v1890, 64
        %v2146 = vpop.permute.xlu0 %2145
        %2147 = vrot.lane.b32.xlu0 %v1965, 64
        %v2148 = vpop.permute.xlu0 %2147
        %2149 = vrot.lane.b32.xlu0 %v1896, 64
        %v2150 = vpop.permute.xlu0 %2149
        %2151 = vrot.lane.b32.xlu0 %v1971, 64
        %v2152 = vpop.permute.xlu0 %2151
        %v2153 = vsel %vm1206, %v2146, %v2148
        %v2154 = vsel %vm1206, %v2150, %v2152
        %2157 = vrot.lane.b32.xlu0 %v1965, 96
        %v2158 = vpop.permute.xlu0 %2157
        %2159 = vrot.lane.b32.xlu0 %v1971, 96
        %v2160 = vpop.permute.xlu0 %2159
        %2167 = vrot.lane.b32.xlu0 %v1967, 32
        %v2168 = vpop.permute.xlu0 %2167
        %2169 = vrot.lane.b32.xlu0 %v2042, 32
        %v2170 = vpop.permute.xlu0 %2169
        %2171 = vrot.lane.b32.xlu0 %v1973, 32
        %v2172 = vpop.permute.xlu0 %2171
        %2173 = vrot.lane.b32.xlu0 %v2048, 32
        %v2174 = vpop.permute.xlu0 %2173
        %v2175 = vsel %vm542, %v2168, %v2170
        %v2176 = vsel %vm542, %v2172, %v2174
        %2181 = vrot.lane.b32.xlu0 %v2042, 64
        %v2182 = vpop.permute.xlu0 %2181
        %2183 = vrot.lane.b32.xlu0 %v2044, 64
        %v2184 = vpop.permute.xlu0 %2183
        %2185 = vrot.lane.b32.xlu0 %v2048, 64
        %v2186 = vpop.permute.xlu0 %2185
        %2187 = vrot.lane.b32.xlu0 %v2050, 64
        %v2188 = vpop.permute.xlu0 %2187
        %v2189 = vsel %vm1206, %v2182, %v2184
        %v2190 = vsel %vm1206, %v2186, %v2188
        %2193 = vrot.lane.b32.xlu0 %v2044, 96
        %v2194 = vpop.permute.xlu0 %2193
        %2195 = vrot.lane.b32.xlu0 %v2050, 96
        %v2196 = vpop.permute.xlu0 %2195
        %v2200 = vsel %vm1141, %v1814, 0
        %2202 = vmatprep.subr.mxu0 0.0
        %2203 = vmatpush1.msra.mxu0 %v1888
        %2204 = vmatprep.subr.mxu0 0.0
        %2205 = vmatpush1.msra.mxu0 %v1894
        %2206 = vmatprep.subr.mxu0 0.0
        %2207 = vmatpush1.msra.mxu0 %v2139
        %2208 = vmatprep.subr.mxu0 0.0
        %2209 = vmatpush1.msra.mxu0 %v2140
        %2210 = vmatprep.subr.mxu0 0.0
        %2211 = vmatpush1.msra.mxu0 %v2153
        %2212 = vmatprep.subr.mxu0 0.0
        %2213 = vmatpush1.msra.mxu0 %v2154
        %2214 = vmatprep.subr.mxu0 0.0
        %2215 = vmatpush1.msra.mxu0 %v2158
        %2216 = vmatprep.subr.mxu0 0.0
        %2217 = vmatpush1.msra.mxu0 %v2160
        %2218 = vmatprep.subr.mxu0 0.0
        %2219 = vmatpush1.msra.mxu0 %v1967
        %2220 = vmatprep.subr.mxu0 0.0
        %2221 = vmatpush1.msra.mxu0 %v1973
        %2222 = vmatprep.subr.mxu0 0.0
        %2223 = vmatpush1.msra.mxu0 %v2175
        %2224 = vmatprep.subr.mxu0 0.0
        %2225 = vmatpush1.msra.mxu0 %v2176
        %2226 = vmatprep.subr.mxu0 0.0
        %2227 = vmatpush1.msra.mxu0 %v2189
        %2228 = vmatprep.subr.mxu0 0.0
        %2229 = vmatpush1.msra.mxu0 %v2190
        %2230 = vmatprep.subr.mxu0 0.0
        %2231 = vmatpush1.msra.mxu0 %v2194
        %2232 = vmatprep.subr.mxu0 0.0
        %2233 = vmatpush1.msra.mxu0 %v2196
        %2234 = vmatprep.subr.mxu0 0.0
        %2235 = vmatpush1.msra.mxu0 %v2119
        %2236 = vmatprep.subr.mxu0 0.0
        %2237 = vmatpush1.msra.mxu0 %v2124
        %2238 = vmatprep.subr.mxu0 0.0
        %2239 = vmatpush1.msra.mxu0 0.0
        %2240 = vmatprep.subr.mxu0 0.0
        %2241 = vmatpush1.msra.mxu0 0.0
        %2242 = vmatprep.subr.mxu0 0.0
        %2243 = vmatpush1.msra.mxu0 0.0
        %2244 = vmatprep.subr.mxu0 0.0
        %2245 = vmatpush1.msra.mxu0 0.0
        %2246 = vmatprep.subr.mxu0 0.0
        %2247 = vmatpush1.msra.mxu0 0.0
        %2248 = vmatprep.subr.mxu0 0.0
        %2249 = vmatpush1.msra.mxu0 0.0
        %2250 = vmatprep.subr.mxu0 0.0
        %2251 = vmatpush1.msra.mxu0 0.0
        %2252 = vmatprep.subr.mxu0 0.0
        %2253 = vmatpush1.msra.mxu0 0.0
        %2254 = vmatprep.subr.mxu0 0.0
        %2255 = vmatpush1.msra.mxu0 0.0
        %2256 = vmatprep.subr.mxu0 0.0
        %2257 = vmatpush1.msra.mxu0 0.0
        %2258 = vmatprep.subr.mxu0 0.0
        %2259 = vmatpush1.msra.mxu0 0.0
        %2260 = vmatprep.subr.mxu0 0.0
        %2261 = vmatpush1.msra.mxu0 0.0
        %2262 = vmatprep.subr.mxu0 0.0
        %2263 = vmatpush1.msra.mxu0 0.0
        %2264 = vmatprep.subr.mxu0 0.0
        %2265 = vmatpush1.msra.mxu0 0.0
        %2266 = vmatprep.mubr.f32.mxu0 %v2200
        %2267 = vmatmul.mubr.f32.gmra.mrb[0].mxu0 %v1813
        %v2268 = vpop.f32.mrb[0].mxu0
        %v2269 = vadd.f32 0.0002, %v2268
        %v2270 = vpop.f32.mrb[0].mxu0
        %2271 = vdwg.mxu0
        %v2272 = vmax.f32 %v2269, 0.0
        %v2273 = vld [vmem:[#allocation10 + $0x150] sm:$0xff]
        %v2274 = vld [vmem:[#allocation10 + $0x158] sm:$0xff]
        %v2275 = vld [vmem:[#allocation10 + $0x160] sm:$0xff]
        %v2276 = vld [vmem:[#allocation10 + $0x168] sm:$0xff]
        %v2277 = vld [vmem:[#allocation10 + $0x170] sm:$0xff]
        %v2278 = vld [vmem:[#allocation10 + $0x178] sm:$0xff]
        %v2279 = vld [vmem:[#allocation10 + $0x180] sm:$0xff]
        %v2280 = vld [vmem:[#allocation10 + $0x188] sm:$0xff]
        %v2281 = vld [vmem:[#allocation10 + $0x190] sm:$0xff]
        %v2282 = vld [vmem:[#allocation10 + $0x198] sm:$0xff]
        %v2283 = vld [vmem:[#allocation10 + $0x1a0] sm:$0xff]
        %v2284 = vld [vmem:[#allocation10 + $0x1a8] sm:$0xff]
        %v2285 = vld [vmem:[#allocation10 + $0x1b0] sm:$0xff]
        %v2286 = vld [vmem:[#allocation10 + $0x1b8] sm:$0xff]
        %v2287 = vld [vmem:[#allocation10 + $0x1c0] sm:$0xff]
        %v2288 = vld [vmem:[#allocation10 + $0x1c8] sm:$0xff]
        %v2289 = vld [vmem:[#allocation10 + $0x1d0] sm:$0xff]
        %v2290 = vld [vmem:[#allocation10 + $0x1d8] sm:$0xff]
        %v2291 = vld [vmem:[#allocation10 + $0x1e0] sm:$0xff]
        %v2292 = vld [vmem:[#allocation10 + $0x1e8] sm:$0xff]
        %v2293 = vld [vmem:[#allocation10 + $0x1f0] sm:$0xff]
        %v2294 = vld [vmem:[#allocation10 + $0x1f8] sm:$0xff]
        %v2295 = vld [vmem:[#allocation10 + $0x200] sm:$0xff]
        %v2296 = vld [vmem:[#allocation10 + $0x208] sm:$0xff]
        %v2297 = vld [vmem:[#allocation10 + $0x210] sm:$0xff]
        %v2298 = vld [vmem:[#allocation10 + $0x218] sm:$0xff]
        %v2299 = vld [vmem:[#allocation10 + $0x220] sm:$0xff]
        %v2300 = vld [vmem:[#allocation10 + $0x228] sm:$0xff]
        %v2301 = vld [vmem:[#allocation10 + $0x230] sm:$0xff]
        %v2302 = vld [vmem:[#allocation10 + $0x238] sm:$0xff]
        %v2303 = vld [vmem:[#allocation10 + $0x240] sm:$0xff]
        %v2304 = vld [vmem:[#allocation10 + $0x248] sm:$0xff]
        %v2305 = vld [vmem:[#allocation10 + $0x250] sm:$0xff]
        %v2306 = vld [vmem:[#allocation10 + $0x258] sm:$0xff]
        %v2307 = vld [vmem:[#allocation10 + $0x260] sm:$0xff]
        %v2308 = vld [vmem:[#allocation10 + $0x268] sm:$0xff]
        %v2309 = vld [vmem:[#allocation10 + $0x270] sm:$0xff]
        %v2310 = vld [vmem:[#allocation10 + $0x278] sm:$0xff]
        %v2311 = vld [vmem:[#allocation10 + $0x280] sm:$0xff]
        %v2312 = vld [vmem:[#allocation10 + $0x288] sm:$0xff]
        %v2313 = vld [vmem:[#allocation10 + $0x290] sm:$0xff]
        %v2314 = vld [vmem:[#allocation10 + $0x298] sm:$0xff]
        %v2315 = vld [vmem:[#allocation10 + $0x2a0] sm:$0xff]
        %v2316 = vld [vmem:[#allocation10 + $0x2a8] sm:$0xff]
        %v2317 = vld [vmem:[#allocation10 + $0x2b0] sm:$0xff]
        %v2318 = vld [vmem:[#allocation10 + $0x2b8] sm:$0xff]
        %v2319 = vld [vmem:[#allocation10 + $0x2c0] sm:$0xff]
        %v2320 = vld [vmem:[#allocation10 + $0x2c8] sm:$0xff]
        %v2321 = vld [vmem:[#allocation10 + $0x2d0] sm:$0xff]
        %v2322 = vld [vmem:[#allocation10 + $0x2d8] sm:$0xff]
        %v2323 = vld [vmem:[#allocation10 + $0x2e0] sm:$0xff]
        %v2324 = vld [vmem:[#allocation10 + $0x2e8] sm:$0xff]
        %v2325 = vld [vmem:[#allocation10 + $0x2f0] sm:$0xff]
        %v2326 = vld [vmem:[#allocation10 + $0x2f8] sm:$0xff]
        %v2327 = vld [vmem:[#allocation10 + $0x300] sm:$0xff]
        %v2328 = vld [vmem:[#allocation10 + $0x308] sm:$0xff]
        %v2329 = vld [vmem:[#allocation10 + $0x310] sm:$0xff]
        %v2330 = vld [vmem:[#allocation10 + $0x318] sm:$0xff]
        %v2331 = vld [vmem:[#allocation10 + $0x320] sm:$0xff]
        %v2332 = vld [vmem:[#allocation10 + $0x328] sm:$0xff]
        %v2333 = vld [vmem:[#allocation10 + $0x330] sm:$0xff]
        %v2334 = vld [vmem:[#allocation10 + $0x338] sm:$0xff]
        %v2335 = vld [vmem:[#allocation10 + $0x340] sm:$0xff]
        %v2336 = vld [vmem:[#allocation10 + $0x348] sm:$0xff]
        %v2337 = vld [vmem:[#allocation10 + $0x350] sm:$0xff]
        %v2338 = vld [vmem:[#allocation10 + $0x358] sm:$0xff]
        %v2339 = vld [vmem:[#allocation10 + $0x360] sm:$0xff]
        %v2340 = vld [vmem:[#allocation10 + $0x368] sm:$0xff]
        %v2341 = vld [vmem:[#allocation10 + $0x370] sm:$0xff]
        %v2342 = vld [vmem:[#allocation10 + $0x378] sm:$0xff]
        %v2343 = vld [vmem:[#allocation10 + $0x380] sm:$0xff]
        %v2344 = vld [vmem:[#allocation10 + $0x388] sm:$0xff]
        %v2345 = vld [vmem:[#allocation10 + $0x390] sm:$0xff]
        %v2346 = vld [vmem:[#allocation10 + $0x398] sm:$0xff]
        %v2347 = vld [vmem:[#allocation10 + $0x3a0] sm:$0xff]
        %v2348 = vld [vmem:[#allocation10 + $0x3a8] sm:$0xff]
        %v2349 = vld [vmem:[#allocation10 + $0x3b0] sm:$0xff]
        %v2350 = vld [vmem:[#allocation10 + $0x3b8] sm:$0xff]
        %v2351 = vld [vmem:[#allocation10 + $0x3c0] sm:$0xff]
        %v2352 = vld [vmem:[#allocation10 + $0x3c8] sm:$0xff]
        %v2353 = vld [vmem:[#allocation10 + $0x3d0] sm:$0xff]
        %v2354 = vld [vmem:[#allocation10 + $0x3d8] sm:$0xff]
        %v2355 = vld [vmem:[#allocation10 + $0x3e0] sm:$0xff]
        %v2356 = vld [vmem:[#allocation10 + $0x3e8] sm:$0xff]
        %v2357 = vld [vmem:[%s2] sm:$0xf]
        %vm2358 = vcmask 785408
        %v2360 = vsel %vm2358, %v2272, 0
        %2362 = vmatprep.subr.mxu0 %v2274
        %2363 = vmatpush1.msra.mxu0 %v2273
        %2364 = vmatprep.subr.mxu0 %v2281
        %2365 = vmatpush1.msra.mxu0 %v2280
        %2366 = vmatprep.subr.mxu0 %v2288
        %2367 = vmatpush1.msra.mxu0 %v2287
        %2368 = vmatprep.subr.mxu0 %v2295
        %2369 = vmatpush1.msra.mxu0 %v2294
        %2370 = vmatprep.subr.mxu0 %v2302
        %2371 = vmatpush1.msra.mxu0 %v2301
        %2372 = vmatprep.subr.mxu0 %v2309
        %2373 = vmatpush1.msra.mxu0 %v2308
        %2374 = vmatprep.subr.mxu0 %v2316
        %2375 = vmatpush1.msra.mxu0 %v2315
        %2376 = vmatprep.subr.mxu0 %v2323
        %2377 = vmatpush1.msra.mxu0 %v2322
        %2378 = vmatprep.subr.mxu0 %v2330
        %2379 = vmatpush1.msra.mxu0 %v2329
        %2380 = vmatprep.subr.mxu0 %v2337
        %2381 = vmatpush1.msra.mxu0 %v2336
        %2382 = vmatprep.subr.mxu0 %v2344
        %2383 = vmatpush1.msra.mxu0 %v2343
        %2384 = vmatprep.subr.mxu0 %v2351
        %2385 = vmatpush1.msra.mxu0 %v2350
        %2386 = vmatprep.subr.mxu0 0.0
        %2387 = vmatpush1.msra.mxu0 0.0
        %2388 = vmatprep.subr.mxu0 0.0
        %2389 = vmatpush1.msra.mxu0 0.0
        %2390 = vmatprep.subr.mxu0 0.0
        %2391 = vmatpush1.msra.mxu0 0.0
        %2392 = vmatprep.subr.mxu0 0.0
        %2393 = vmatpush1.msra.mxu0 0.0
        %2394 = vmatprep.subr.mxu0 0.0
        %2395 = vmatpush1.msra.mxu0 0.0
        %2396 = vmatprep.subr.mxu0 0.0
        %2397 = vmatpush1.msra.mxu0 0.0
        %2398 = vmatprep.subr.mxu0 0.0
        %2399 = vmatpush1.msra.mxu0 0.0
        %2400 = vmatprep.subr.mxu0 0.0
        %2401 = vmatpush1.msra.mxu0 0.0
        %2402 = vmatprep.subr.mxu0 0.0
        %2403 = vmatpush1.msra.mxu0 0.0
        %2404 = vmatprep.subr.mxu0 0.0
        %2405 = vmatpush1.msra.mxu0 0.0
        %2406 = vmatprep.subr.mxu0 0.0
        %2407 = vmatpush1.msra.mxu0 0.0
        %2408 = vmatprep.subr.mxu0 0.0
        %2409 = vmatpush1.msra.mxu0 0.0
        %2410 = vmatprep.subr.mxu0 0.0
        %2411 = vmatpush1.msra.mxu0 0.0
        %2412 = vmatprep.subr.mxu0 0.0
        %2413 = vmatpush1.msra.mxu0 0.0
        %2414 = vmatprep.subr.mxu0 0.0
        %2415 = vmatpush1.msra.mxu0 0.0
        %2416 = vmatprep.subr.mxu0 0.0
        %2417 = vmatpush1.msra.mxu0 0.0
        %2418 = vmatprep.subr.mxu0 0.0
        %2419 = vmatpush1.msra.mxu0 0.0
        %2420 = vmatprep.subr.mxu0 0.0
        %2421 = vmatpush1.msra.mxu0 0.0
        %2422 = vmatprep.subr.mxu0 0.0
        %2423 = vmatpush1.msra.mxu0 0.0
        %2424 = vmatprep.subr.mxu0 0.0
        %2425 = vmatpush1.msra.mxu0 0.0
        %2426 = vmatprep.mubr.f32.mxu0 0.0
        %2427 = vmatmul.mubr.f32.gmra.mrb[0].mxu0 %v2360
        %v2428 = vpop.f32.mrb[0].mxu0
        %v2429 = vadd.f32 0.0, %v2428
        %v2430 = vpop.f32.mrb[0].mxu0
        %v2431 = vadd.f32 0.0, %v2430
        %2432 = vdwg.mxu0
        %2433 = vmatprep.subr.mxu0 %v2276
        %2434 = vmatpush1.msra.mxu0 %v2275
        %2435 = vmatprep.subr.mxu0 %v2283
        %2436 = vmatpush1.msra.mxu0 %v2282
        %2437 = vmatprep.subr.mxu0 %v2290
        %2438 = vmatpush1.msra.mxu0 %v2289
        %2439 = vmatprep.subr.mxu0 %v2297
        %2440 = vmatpush1.msra.mxu0 %v2296
        %2441 = vmatprep.subr.mxu0 %v2304
        %2442 = vmatpush1.msra.mxu0 %v2303
        %2443 = vmatprep.subr.mxu0 %v2311
        %2444 = vmatpush1.msra.mxu0 %v2310
        %2445 = vmatprep.subr.mxu0 %v2318
        %2446 = vmatpush1.msra.mxu0 %v2317
        %2447 = vmatprep.subr.mxu0 %v2325
        %2448 = vmatpush1.msra.mxu0 %v2324
        %2449 = vmatprep.subr.mxu0 %v2332
        %2450 = vmatpush1.msra.mxu0 %v2331
        %2451 = vmatprep.subr.mxu0 %v2339
        %2452 = vmatpush1.msra.mxu0 %v2338
        %2453 = vmatprep.subr.mxu0 %v2346
        %2454 = vmatpush1.msra.mxu0 %v2345
        %2455 = vmatprep.subr.mxu0 %v2353
        %2456 = vmatpush1.msra.mxu0 %v2352
        %2457 = vmatprep.subr.mxu0 0.0
        %2458 = vmatpush1.msra.mxu0 0.0
        %2459 = vmatprep.subr.mxu0 0.0
        %2460 = vmatpush1.msra.mxu0 0.0
        %2461 = vmatprep.subr.mxu0 0.0
        %2462 = vmatpush1.msra.mxu0 0.0
        %2463 = vmatprep.subr.mxu0 0.0
        %2464 = vmatpush1.msra.mxu0 0.0
        %2465 = vmatprep.subr.mxu0 0.0
        %2466 = vmatpush1.msra.mxu0 0.0
        %2467 = vmatprep.subr.mxu0 0.0
        %2468 = vmatpush1.msra.mxu0 0.0
        %2469 = vmatprep.subr.mxu0 0.0
        %2470 = vmatpush1.msra.mxu0 0.0
        %2471 = vmatprep.subr.mxu0 0.0
        %2472 = vmatpush1.msra.mxu0 0.0
        %2473 = vmatprep.subr.mxu0 0.0
        %2474 = vmatpush1.msra.mxu0 0.0
        %2475 = vmatprep.subr.mxu0 0.0
        %2476 = vmatpush1.msra.mxu0 0.0
        %2477 = vmatprep.subr.mxu0 0.0
        %2478 = vmatpush1.msra.mxu0 0.0
        %2479 = vmatprep.subr.mxu0 0.0
        %2480 = vmatpush1.msra.mxu0 0.0
        %2481 = vmatprep.subr.mxu0 0.0
        %2482 = vmatpush1.msra.mxu0 0.0
        %2483 = vmatprep.subr.mxu0 0.0
        %2484 = vmatpush1.msra.mxu0 0.0
        %2485 = vmatprep.subr.mxu0 0.0
        %2486 = vmatpush1.msra.mxu0 0.0
        %2487 = vmatprep.subr.mxu0 0.0
        %2488 = vmatpush1.msra.mxu0 0.0
        %2489 = vmatprep.subr.mxu0 0.0
        %2490 = vmatpush1.msra.mxu0 0.0
        %2491 = vmatprep.subr.mxu0 0.0
        %2492 = vmatpush1.msra.mxu0 0.0
        %2493 = vmatprep.subr.mxu0 0.0
        %2494 = vmatpush1.msra.mxu0 0.0
        %2495 = vmatprep.subr.mxu0 0.0
        %2496 = vmatpush1.msra.mxu0 0.0
        %2497 = vmatprep.mubr.f32.mxu0 0.0
        %2498 = vmatmul.mubr.f32.gmra.mrb[0].mxu0 %v2360
        %v2499 = vpop.f32.mrb[0].mxu0
        %v2500 = vadd.f32 0.0, %v2499
        %v2501 = vpop.f32.mrb[0].mxu0
        %v2502 = vadd.f32 0.0, %v2501
        %2503 = vdwg.mxu0
        %2504 = vmatprep.subr.mxu0 %v2278
        %2505 = vmatpush1.msra.mxu0 %v2277
        %2506 = vmatprep.subr.mxu0 %v2285
        %2507 = vmatpush1.msra.mxu0 %v2284
        %2508 = vmatprep.subr.mxu0 %v2292
        %2509 = vmatpush1.msra.mxu0 %v2291
        %2510 = vmatprep.subr.mxu0 %v2299
        %2511 = vmatpush1.msra.mxu0 %v2298
        %2512 = vmatprep.subr.mxu0 %v2306
        %2513 = vmatpush1.msra.mxu0 %v2305
        %2514 = vmatprep.subr.mxu0 %v2313
        %2515 = vmatpush1.msra.mxu0 %v2312
        %2516 = vmatprep.subr.mxu0 %v2320
        %2517 = vmatpush1.msra.mxu0 %v2319
        %2518 = vmatprep.subr.mxu0 %v2327
        %2519 = vmatpush1.msra.mxu0 %v2326
        %2520 = vmatprep.subr.mxu0 %v2334
        %2521 = vmatpush1.msra.mxu0 %v2333
        %2522 = vmatprep.subr.mxu0 %v2341
        %2523 = vmatpush1.msra.mxu0 %v2340
        %2524 = vmatprep.subr.mxu0 %v2348
        %2525 = vmatpush1.msra.mxu0 %v2347
        %2526 = vmatprep.subr.mxu0 %v2355
        %2527 = vmatpush1.msra.mxu0 %v2354
        %2528 = vmatprep.subr.mxu0 0.0
        %2529 = vmatpush1.msra.mxu0 0.0
        %2530 = vmatprep.subr.mxu0 0.0
        %2531 = vmatpush1.msra.mxu0 0.0
        %2532 = vmatprep.subr.mxu0 0.0
        %2533 = vmatpush1.msra.mxu0 0.0
        %2534 = vmatprep.subr.mxu0 0.0
        %2535 = vmatpush1.msra.mxu0 0.0
        %2536 = vmatprep.subr.mxu0 0.0
        %2537 = vmatpush1.msra.mxu0 0.0
        %2538 = vmatprep.subr.mxu0 0.0
        %2539 = vmatpush1.msra.mxu0 0.0
        %2540 = vmatprep.subr.mxu0 0.0
        %2541 = vmatpush1.msra.mxu0 0.0
        %2542 = vmatprep.subr.mxu0 0.0
        %2543 = vmatpush1.msra.mxu0 0.0
        %2544 = vmatprep.subr.mxu0 0.0
        %2545 = vmatpush1.msra.mxu0 0.0
        %2546 = vmatprep.subr.mxu0 0.0
        %2547 = vmatpush1.msra.mxu0 0.0
        %2548 = vmatprep.subr.mxu0 0.0
        %2549 = vmatpush1.msra.mxu0 0.0
        %2550 = vmatprep.subr.mxu0 0.0
        %2551 = vmatpush1.msra.mxu0 0.0
        %2552 = vmatprep.subr.mxu0 0.0
        %2553 = vmatpush1.msra.mxu0 0.0
        %2554 = vmatprep.subr.mxu0 0.0
        %2555 = vmatpush1.msra.mxu0 0.0
        %2556 = vmatprep.subr.mxu0 0.0
        %2557 = vmatpush1.msra.mxu0 0.0
        %2558 = vmatprep.subr.mxu0 0.0
        %2559 = vmatpush1.msra.mxu0 0.0
        %2560 = vmatprep.subr.mxu0 0.0
        %2561 = vmatpush1.msra.mxu0 0.0
        %2562 = vmatprep.subr.mxu0 0.0
        %2563 = vmatpush1.msra.mxu0 0.0
        %2564 = vmatprep.subr.mxu0 0.0
        %2565 = vmatpush1.msra.mxu0 0.0
        %2566 = vmatprep.subr.mxu0 0.0
        %2567 = vmatpush1.msra.mxu0 0.0
        %2568 = vmatprep.mubr.f32.mxu0 0.0
        %2569 = vmatmul.mubr.f32.gmra.mrb[0].mxu0 %v2360
        %v2570 = vpop.f32.mrb[0].mxu0
        %v2571 = vadd.f32 0.0, %v2570
        %v2572 = vpop.f32.mrb[0].mxu0
        %v2573 = vadd.f32 0.0, %v2572
        %2574 = vdwg.mxu0
        %2575 = vmatprep.subr.mxu0 0.0
        %2576 = vmatpush1.msra.mxu0 %v2279
        %2577 = vmatprep.subr.mxu0 0.0
        %2578 = vmatpush1.msra.mxu0 %v2286
        %2579 = vmatprep.subr.mxu0 0.0
        %2580 = vmatpush1.msra.mxu0 %v2293
        %2581 = vmatprep.subr.mxu0 0.0
        %2582 = vmatpush1.msra.mxu0 %v2300
        %2583 = vmatprep.subr.mxu0 0.0
        %2584 = vmatpush1.msra.mxu0 %v2307
        %2585 = vmatprep.subr.mxu0 0.0
        %2586 = vmatpush1.msra.mxu0 %v2314
        %2587 = vmatprep.subr.mxu0 0.0
        %2588 = vmatpush1.msra.mxu0 %v2321
        %2589 = vmatprep.subr.mxu0 0.0
        %2590 = vmatpush1.msra.mxu0 %v2328
        %2591 = vmatprep.subr.mxu0 0.0
        %2592 = vmatpush1.msra.mxu0 %v2335
        %2593 = vmatprep.subr.mxu0 0.0
        %2594 = vmatpush1.msra.mxu0 %v2342
        %2595 = vmatprep.subr.mxu0 0.0
        %2596 = vmatpush1.msra.mxu0 %v2349
        %2597 = vmatprep.subr.mxu0 0.0
        %2598 = vmatpush1.msra.mxu0 %v2356
        %2599 = vmatprep.subr.mxu0 0.0
        %2600 = vmatpush1.msra.mxu0 0.0
        %2601 = vmatprep.subr.mxu0 0.0
        %2602 = vmatpush1.msra.mxu0 0.0
        %2603 = vmatprep.subr.mxu0 0.0
        %2604 = vmatpush1.msra.mxu0 0.0
        %2605 = vmatprep.subr.mxu0 0.0
        %2606 = vmatpush1.msra.mxu0 0.0
        %2607 = vmatprep.subr.mxu0 0.0
        %2608 = vmatpush1.msra.mxu0 0.0
        %2609 = vmatprep.subr.mxu0 0.0
        %2610 = vmatpush1.msra.mxu0 0.0
        %2611 = vmatprep.subr.mxu0 0.0
        %2612 = vmatpush1.msra.mxu0 0.0
        %2613 = vmatprep.subr.mxu0 0.0
        %2614 = vmatpush1.msra.mxu0 0.0
        %2615 = vmatprep.subr.mxu0 0.0
        %2616 = vmatpush1.msra.mxu0 0.0
        %2617 = vmatprep.subr.mxu0 0.0
        %2618 = vmatpush1.msra.mxu0 0.0
        %2619 = vmatprep.subr.mxu0 0.0
        %2620 = vmatpush1.msra.mxu0 0.0
        %2621 = vmatprep.subr.mxu0 0.0
        %2622 = vmatpush1.msra.mxu0 0.0
        %2623 = vmatprep.subr.mxu0 0.0
        %2624 = vmatpush1.msra.mxu0 0.0
        %2625 = vmatprep.subr.mxu0 0.0
        %2626 = vmatpush1.msra.mxu0 0.0
        %2627 = vmatprep.subr.mxu0 0.0
        %2628 = vmatpush1.msra.mxu0 0.0
        %2629 = vmatprep.subr.mxu0 0.0
        %2630 = vmatpush1.msra.mxu0 0.0
        %2631 = vmatprep.subr.mxu0 0.0
        %2632 = vmatpush1.msra.mxu0 0.0
        %2633 = vmatprep.subr.mxu0 0.0
        %2634 = vmatpush1.msra.mxu0 0.0
        %2635 = vmatprep.subr.mxu0 0.0
        %2636 = vmatpush1.msra.mxu0 0.0
        %2637 = vmatprep.subr.mxu0 0.0
        %2638 = vmatpush1.msra.mxu0 0.0
        %2639 = vmatprep.mubr.f32.mxu0 0.0
        %2640 = vmatmul.mubr.f32.gmra.mrb[0].mxu0 %v2360
        %v2641 = vpop.f32.mrb[0].mxu0
        %v2642 = vadd.f32 0.0, %v2641
        %v2643 = vpop.f32.mrb[0].mxu0
        %2644 = vdwg.mxu0
        %v2647 = vrot.slane %v2429, 4
        %v2648 = vrot.slane %v2431, 4
        %2649 = vrot.lane.b32.xlu0 %v2647, 32
        %v2650 = vpop.permute.xlu0 %2649
        %2651 = vrot.lane.b32.xlu0 %v2648, 32
        %v2652 = vpop.permute.xlu0 %2651
        %v2653 = vsel %vm542, %v2650, %v2652
        %2656 = vrot.lane.b32.xlu0 %v2431, 64
        %v2657 = vpop.permute.xlu0 %2656
        %2658 = vrot.lane.b32.xlu0 %v2500, 64
        %v2659 = vpop.permute.xlu0 %2658
        %v2660 = vsel %vm1206, %v2657, %v2659
        %v2662 = vrot.slane %v2500, 4
        %2663 = vrot.lane.b32.xlu0 %v2662, 96
        %v2664 = vpop.permute.xlu0 %2663
        %v2668 = vrot.slane %v2502, 4
        %v2669 = vrot.slane %v2571, 4
        %2670 = vrot.lane.b32.xlu0 %v2668, 32
        %v2671 = vpop.permute.xlu0 %2670
        %2672 = vrot.lane.b32.xlu0 %v2669, 32
        %v2673 = vpop.permute.xlu0 %2672
        %v2674 = vsel %vm542, %v2671, %v2673
        %2677 = vrot.lane.b32.xlu0 %v2571, 64
        %v2678 = vpop.permute.xlu0 %2677
        %2679 = vrot.lane.b32.xlu0 %v2573, 64
        %v2680 = vpop.permute.xlu0 %2679
        %v2681 = vsel %vm1206, %v2678, %v2680
        %v2683 = vrot.slane %v2573, 4
        %2684 = vrot.lane.b32.xlu0 %v2683, 96
        %v2685 = vpop.permute.xlu0 %2684
        %vm2687 = vcmask 1043456
        %v2688 = vsel %vm2687, %v2429, %v2653
        %v2689 = vsel %vm2687, %v2660, %v2664
        %v2690 = vsel %vm2687, %v2502, %v2674
        %v2691 = vsel %vm2687, %v2681, %v2685
        %vm2692 = vcmask 293888
        %v2694 = vsel %vm2692, %v2357, 0
        %v2697 = vsel %vm2687, %v2642, 0
        %2699 = vmatprep.subr.mxu0 0.0
        %2700 = vmatpush1.msra.mxu0 %v2688
        %2701 = vmatprep.subr.mxu0 0.0
        %2702 = vmatpush1.msra.mxu0 %v2689
        %2703 = vmatprep.subr.mxu0 0.0
        %2704 = vmatpush1.msra.mxu0 %v2690
        %2705 = vmatprep.subr.mxu0 0.0
        %2706 = vmatpush1.msra.mxu0 %v2691
        %2707 = vmatprep.subr.mxu0 0.0
        %2708 = vmatpush1.msra.mxu0 %v2697
        %2709 = vmatprep.subr.mxu0 0.0
        %2710 = vmatpush1.msra.mxu0 0.0
        %2711 = vmatprep.subr.mxu0 0.0
        %2712 = vmatpush1.msra.mxu0 0.0
        %2713 = vmatprep.subr.mxu0 0.0
        %2714 = vmatpush1.msra.mxu0 0.0
        %2715 = vmatprep.subr.mxu0 0.0
        %2716 = vmatpush1.msra.mxu0 0.0
        %2717 = vmatprep.subr.mxu0 0.0
        %2718 = vmatpush1.msra.mxu0 0.0
        %2719 = vmatprep.subr.mxu0 0.0
        %2720 = vmatpush1.msra.mxu0 0.0
        %2721 = vmatprep.subr.mxu0 0.0
        %2722 = vmatpush1.msra.mxu0 0.0
        %2723 = vmatprep.subr.mxu0 0.0
        %2724 = vmatpush1.msra.mxu0 0.0
        %2725 = vmatprep.subr.mxu0 0.0
        %2726 = vmatpush1.msra.mxu0 0.0
        %2727 = vmatprep.subr.mxu0 0.0
        %2728 = vmatpush1.msra.mxu0 0.0
        %2729 = vmatprep.subr.mxu0 0.0
        %2730 = vmatpush1.msra.mxu0 0.0
        %2731 = vmatprep.subr.mxu0 0.0
        %2732 = vmatpush1.msra.mxu0 0.0
        %2733 = vmatprep.subr.mxu0 0.0
        %2734 = vmatpush1.msra.mxu0 0.0
        %2735 = vmatprep.subr.mxu0 0.0
        %2736 = vmatpush1.msra.mxu0 0.0
        %2737 = vmatprep.subr.mxu0 0.0
        %2738 = vmatpush1.msra.mxu0 0.0
        %2739 = vmatprep.subr.mxu0 0.0
        %2740 = vmatpush1.msra.mxu0 0.0
        %2741 = vmatprep.subr.mxu0 0.0
        %2742 = vmatpush1.msra.mxu0 0.0
        %2743 = vmatprep.subr.mxu0 0.0
        %2744 = vmatpush1.msra.mxu0 0.0
        %2745 = vmatprep.subr.mxu0 0.0
        %2746 = vmatpush1.msra.mxu0 0.0
        %2747 = vmatprep.subr.mxu0 0.0
        %2748 = vmatpush1.msra.mxu0 0.0
        %2749 = vmatprep.subr.mxu0 0.0
        %2750 = vmatpush1.msra.mxu0 0.0
        %2751 = vmatprep.subr.mxu0 0.0
        %2752 = vmatpush1.msra.mxu0 0.0
        %2753 = vmatprep.subr.mxu0 0.0
        %2754 = vmatpush1.msra.mxu0 0.0
        %2755 = vmatprep.subr.mxu0 0.0
        %2756 = vmatpush1.msra.mxu0 0.0
        %2757 = vmatprep.subr.mxu0 0.0
        %2758 = vmatpush1.msra.mxu0 0.0
        %2759 = vmatprep.subr.mxu0 0.0
        %2760 = vmatpush1.msra.mxu0 0.0
        %2761 = vmatprep.subr.mxu0 0.0
        %2762 = vmatpush1.msra.mxu0 0.0
        %2763 = vmatprep.mubr.f32.mxu0 0.0
        %2764 = vmatmul.mubr.f32.gmra.mrb[0].mxu0 %v2694
        %v2765 = vpop.f32.mrb[0].mxu0
        %v2766 = vadd.f32 0.0003, %v2765
        %v2767 = vpop.f32.mrb[0].mxu0
        %2768 = vdwg.mxu0
        %v2769 = vmax.f32 %v2766, 0.0
        %v2770 = vld [vmem:[#allocation10 + $0x3f0] sm:$0xff]
        %v2771 = vld [vmem:[#allocation10 + $0x3f8] sm:$0xff]
        %v2772 = vld [vmem:[#allocation10 + $0x400] sm:$0xff]
        %v2773 = vld [vmem:[#allocation10 + $0x408] sm:$0xff]
        %v2774 = vld [vmem:[#allocation10 + $0x410] sm:$0xff]
        %v2775 = vld [vmem:[#allocation10 + $0x418] sm:$0xff]
        %v2776 = vld [vmem:[#allocation10 + $0x420] sm:$0xff]
        %v2777 = vld [vmem:[#allocation10 + $0x428] sm:$0xff]
        %v2778 = vld [vmem:[#allocation10 + $0x430] sm:$0xff]
        %v2779 = vld [vmem:[#allocation10 + $0x438] sm:$0xff]
        %v2780 = vld [vmem:[#allocation10 + $0x440] sm:$0xff]
        %v2781 = vld [vmem:[#allocation10 + $0x448] sm:$0xff]
        %v2782 = vld [vmem:[#allocation10 + $0x450] sm:$0xff]
        %v2783 = vld [vmem:[#allocation10 + $0x458] sm:$0xff]
        %v2784 = vld [vmem:[#allocation10 + $0x460] sm:$0xff]
        %v2785 = vld [vmem:[#allocation10 + $0x468] sm:$0xff]
        %v2786 = vld [vmem:[#allocation10 + $0x470] sm:$0xff]
        %v2787 = vld [vmem:[#allocation10 + $0x478] sm:$0xff]
        %v2788 = vld [vmem:[#allocation10 + $0x480] sm:$0xff]
        %v2789 = vld [vmem:[#allocation10 + $0x488] sm:$0xff]
        %v2790 = vld [vmem:[#allocation10 + $0x490] sm:$0xff]
        %v2791 = vld [vmem:[#allocation10 + $0x498] sm:$0xff]
        %v2792 = vld [vmem:[#allocation10 + $0x4a0] sm:$0xff]
        %v2793 = vld [vmem:[#allocation10 + $0x4a8] sm:$0xff]
        %v2794 = vld [vmem:[#allocation10 + $0x4b0] sm:$0xff]
        %v2795 = vld [vmem:[#allocation10 + $0x4b8] sm:$0xff]
        %v2796 = vld [vmem:[#allocation10 + $0x4c0] sm:$0xff]
        %v2797 = vld [vmem:[#allocation10 + $0x4c8] sm:$0xff]
        %v2798 = vld [vmem:[#allocation10 + $0x4d0] sm:$0xff]
        %v2799 = vld [vmem:[#allocation10 + $0x4d8] sm:$0xff]
        %v2800 = vld [vmem:[#allocation10 + $0x4e0] sm:$0xff]
        %v2801 = vld [vmem:[#allocation10 + $0x4e8] sm:$0xff]
        %v2802 = vld [vmem:[#allocation10 + $0x4f0] sm:$0xff]
        %v2803 = vld [vmem:[#allocation10 + $0x4f8] sm:$0xff]
        %v2804 = vld [vmem:[#allocation10 + $0x500] sm:$0xff]
        %v2805 = vld [vmem:[#allocation10 + $0x508] sm:$0xff]
        %v2806 = vld [vmem:[#allocation10 + $0x510] sm:$0xff]
        %v2807 = vld [vmem:[#allocation10 + $0x518] sm:$0xff]
        %v2808 = vld [vmem:[#allocation10 + $0x520] sm:$0xff]
        %v2809 = vld [vmem:[#allocation10 + $0x528] sm:$0xff]
        %v2810 = vld [vmem:[#allocation10 + $0x530] sm:$0xff]
        %v2811 = vld [vmem:[#allocation10 + $0x538] sm:$0xff]
        %v2812 = vld [vmem:[#allocation10 + $0x540] sm:$0xff]
        %v2813 = vld [vmem:[#allocation10 + $0x548] sm:$0xff]
        %v2814 = vld [vmem:[#allocation10 + $0x550] sm:$0xff]
        %v2815 = vld [vmem:[#allocation10 + $0x558] sm:$0xff]
        %v2816 = vld [vmem:[#allocation10 + $0x560] sm:$0xff]
        %v2817 = vld [vmem:[#allocation10 + $0x568] sm:$0xff]
        %v2818 = vld [vmem:[#allocation10 + $0x570] sm:$0xff]
        %v2819 = vld [vmem:[#allocation10 + $0x578] sm:$0xff]
        %v2820 = vld [vmem:[#allocation10 + $0x580] sm:$0xff]
        %v2821 = vld [vmem:[#allocation10 + $0x588] sm:$0xff]
        %v2822 = vld [vmem:[#allocation10 + $0x590] sm:$0xff]
        %v2823 = vld [vmem:[#allocation10 + $0x598] sm:$0xff]
        %v2824 = vld [vmem:[#allocation10 + $0x5a0] sm:$0xff]
        %v2825 = vld [vmem:[#allocation10 + $0x5a8] sm:$0xff]
        %v2826 = vld [vmem:[#allocation10 + $0x5b0] sm:$0xff]
        %v2827 = vld [vmem:[#allocation10 + $0x5b8] sm:$0xff]
        %v2828 = vld [vmem:[#allocation10 + $0x5c0] sm:$0xff]
        %v2829 = vld [vmem:[#allocation10 + $0x5c8] sm:$0xff]
        %v2830 = vld [vmem:[#allocation10 + $0x5d0] sm:$0xff]
        %v2831 = vld [vmem:[#allocation10 + $0x5d8] sm:$0xff]
        %v2832 = vld [vmem:[#allocation10 + $0x5e0] sm:$0xff]
        %v2833 = vld [vmem:[#allocation10 + $0x5e8] sm:$0xff]
        %v2834 = vld [vmem:[#allocation10 + $0x5f0] sm:$0xff]
        %v2835 = vld [vmem:[#allocation10 + $0x5f8] sm:$0xff]
        %v2836 = vld [vmem:[#allocation10 + $0x600] sm:$0xff]
        %v2837 = vld [vmem:[#allocation10 + $0x608] sm:$0xff]
        %v2838 = vld [vmem:[#allocation10 + $0x610] sm:$0xff]
        %v2839 = vld [vmem:[#allocation10 + $0x618] sm:$0xff]
        %v2840 = vld [vmem:[#allocation10 + $0x620] sm:$0xff]
        %v2841 = vld [vmem:[#allocation10 + $0x628] sm:$0xff]
        %v2842 = vld [vmem:[#allocation10 + $0x630] sm:$0xff]
        %v2843 = vld [vmem:[#allocation10 + $0x638] sm:$0xff]
        %v2844 = vld [vmem:[#allocation10 + $0x640] sm:$0xff]
        %v2845 = vld [vmem:[#allocation10 + $0x648] sm:$0xff]
        %v2846 = vld [vmem:[#allocation10 + $0x650] sm:$0xff]
        %v2847 = vld [vmem:[#allocation10 + $0x658] sm:$0xff]
        %v2848 = vld [vmem:[#allocation10 + $0x660] sm:$0xff]
        %v2849 = vld [vmem:[#allocation10 + $0x668] sm:$0xff]
        %v2850 = vld [vmem:[#allocation10 + $0x670] sm:$0xff]
        %v2851 = vld [vmem:[#allocation10 + $0x678] sm:$0xff]
        %v2852 = vld [vmem:[#allocation10 + $0x680] sm:$0xff]
        %v2853 = vld [vmem:[#allocation10 + $0x688] sm:$0xff]
        %v2855 = vsel %vm2358, %v2769, 0
        %2857 = vmatprep.subr.mxu0 %v2771
        %2858 = vmatpush1.msra.mxu0 %v2770
        %2859 = vmatprep.subr.mxu0 %v2778
        %2860 = vmatpush1.msra.mxu0 %v2777
        %2861 = vmatprep.subr.mxu0 %v2785
        %2862 = vmatpush1.msra.mxu0 %v2784
        %2863 = vmatprep.subr.mxu0 %v2792
        %2864 = vmatpush1.msra.mxu0 %v2791
        %2865 = vmatprep.subr.mxu0 %v2799
        %2866 = vmatpush1.msra.mxu0 %v2798
        %2867 = vmatprep.subr.mxu0 %v2806
        %2868 = vmatpush1.msra.mxu0 %v2805
        %2869 = vmatprep.subr.mxu0 %v2813
        %2870 = vmatpush1.msra.mxu0 %v2812
        %2871 = vmatprep.subr.mxu0 %v2820
        %2872 = vmatpush1.msra.mxu0 %v2819
        %2873 = vmatprep.subr.mxu0 %v2827
        %2874 = vmatpush1.msra.mxu0 %v2826
        %2875 = vmatprep.subr.mxu0 %v2834
        %2876 = vmatpush1.msra.mxu0 %v2833
        %2877 = vmatprep.subr.mxu0 %v2841
        %2878 = vmatpush1.msra.mxu0 %v2840
        %2879 = vmatprep.subr.mxu0 %v2848
        %2880 = vmatpush1.msra.mxu0 %v2847
        %2881 = vmatprep.subr.mxu0 0.0
        %2882 = vmatpush1.msra.mxu0 0.0
        %2883 = vmatprep.subr.mxu0 0.0
        %2884 = vmatpush1.msra.mxu0 0.0
        %2885 = vmatprep.subr.mxu0 0.0
        %2886 = vmatpush1.msra.mxu0 0.0
        %2887 = vmatprep.subr.mxu0 0.0
        %2888 = vmatpush1.msra.mxu0 0.0
        %2889 = vmatprep.subr.mxu0 0.0
        %2890 = vmatpush1.msra.mxu0 0.0
        %2891 = vmatprep.subr.mxu0 0.0
        %2892 = vmatpush1.msra.mxu0 0.0
        %2893 = vmatprep.subr.mxu0 0.0
        %2894 = vmatpush1.msra.mxu0 0.0
        %2895 = vmatprep.subr.mxu0 0.0
        %2896 = vmatpush1.msra.mxu0 0.0
        %2897 = vmatprep.subr.mxu0 0.0
        %2898 = vmatpush1.msra.mxu0 0.0
        %2899 = vmatprep.subr.mxu0 0.0
        %2900 = vmatpush1.msra.mxu0 0.0
        %2901 = vmatprep.subr.mxu0 0.0
        %2902 = vmatpush1.msra.mxu0 0.0
        %2903 = vmatprep.subr.mxu0 0.0
        %2904 = vmatpush1.msra.mxu0 0.0
        %2905 = vmatprep.subr.mxu0 0.0
        %2906 = vmatpush1.msra.mxu0 0.0
        %2907 = vmatprep.subr.mxu0 0.0
        %2908 = vmatpush1.msra.mxu0 0.0
        %2909 = vmatprep.subr.mxu0 0.0
        %2910 = vmatpush1.msra.mxu0 0.0
        %2911 = vmatprep.subr.mxu0 0.0
        %2912 = vmatpush1.msra.mxu0 0.0
        %2913 = vmatprep.subr.mxu0 0.0
        %2914 = vmatpush1.msra.mxu0 0.0
        %2915 = vmatprep.subr.mxu0 0.0
        %2916 = vmatpush1.msra.mxu0 0.0
        %2917 = vmatprep.subr.mxu0 0.0
        %2918 = vmatpush1.msra.mxu0 0.0
        %2919 = vmatprep.subr.mxu0 0.0
        %2920 = vmatpush1.msra.mxu0 0.0
        %2921 = vmatprep.mubr.f32.mxu0 0.0
        %2922 = vmatmul.mubr.f32.gmra.mrb[0].mxu0 %v2855
        %v2923 = vpop.f32.mrb[0].mxu0
        %v2924 = vadd.f32 0.0, %v2923
        %v2925 = vpop.f32.mrb[0].mxu0
        %v2926 = vadd.f32 0.0, %v2925
        %2927 = vdwg.mxu0
        %2928 = vmatprep.subr.mxu0 %v2773
        %2929 = vmatpush1.msra.mxu0 %v2772
        %2930 = vmatprep.subr.mxu0 %v2780
        %2931 = vmatpush1.msra.mxu0 %v2779
        %2932 = vmatprep.subr.mxu0 %v2787
        %2933 = vmatpush1.msra.mxu0 %v2786
        %2934 = vmatprep.subr.mxu0 %v2794
        %2935 = vmatpush1.msra.mxu0 %v2793
        %2936 = vmatprep.subr.mxu0 %v2801
        %2937 = vmatpush1.msra.mxu0 %v2800
        %2938 = vmatprep.subr.mxu0 %v2808
        %2939 = vmatpush1.msra.mxu0 %v2807
        %2940 = vmatprep.subr.mxu0 %v2815
        %2941 = vmatpush1.msra.mxu0 %v2814
        %2942 = vmatprep.subr.mxu0 %v2822
        %2943 = vmatpush1.msra.mxu0 %v2821
        %2944 = vmatprep.subr.mxu0 %v2829
        %2945 = vmatpush1.msra.mxu0 %v2828
        %2946 = vmatprep.subr.mxu0 %v2836
        %2947 = vmatpush1.msra.mxu0 %v2835
        %2948 = vmatprep.subr.mxu0 %v2843
        %2949 = vmatpush1.msra.mxu0 %v2842
        %2950 = vmatprep.subr.mxu0 %v2850
        %2951 = vmatpush1.msra.mxu0 %v2849
        %2952 = vmatprep.subr.mxu0 0.0
        %2953 = vmatpush1.msra.mxu0 0.0
        %2954 = vmatprep.subr.mxu0 0.0
        %2955 = vmatpush1.msra.mxu0 0.0
        %2956 = vmatprep.subr.mxu0 0.0
        %2957 = vmatpush1.msra.mxu0 0.0
        %2958 = vmatprep.subr.mxu0 0.0
        %2959 = vmatpush1.msra.mxu0 0.0
        %2960 = vmatprep.subr.mxu0 0.0
        %2961 = vmatpush1.msra.mxu0 0.0
        %2962 = vmatprep.subr.mxu0 0.0
        %2963 = vmatpush1.msra.mxu0 0.0
        %2964 = vmatprep.subr.mxu0 0.0
        %2965 = vmatpush1.msra.mxu0 0.0
        %2966 = vmatprep.subr.mxu0 0.0
        %2967 = vmatpush1.msra.mxu0 0.0
        %2968 = vmatprep.subr.mxu0 0.0
        %2969 = vmatpush1.msra.mxu0 0.0
        %2970 = vmatprep.subr.mxu0 0.0
        %2971 = vmatpush1.msra.mxu0 0.0
        %2972 = vmatprep.subr.mxu0 0.0
        %2973 = vmatpush1.msra.mxu0 0.0
        %2974 = vmatprep.subr.mxu0 0.0
        %2975 = vmatpush1.msra.mxu0 0.0
        %2976 = vmatprep.subr.mxu0 0.0
        %2977 = vmatpush1.msra.mxu0 0.0
        %2978 = vmatprep.subr.mxu0 0.0
        %2979 = vmatpush1.msra.mxu0 0.0
        %2980 = vmatprep.subr.mxu0 0.0
        %2981 = vmatpush1.msra.mxu0 0.0
        %2982 = vmatprep.subr.mxu0 0.0
        %2983 = vmatpush1.msra.mxu0 0.0
        %2984 = vmatprep.subr.mxu0 0.0
        %2985 = vmatpush1.msra.mxu0 0.0
        %2986 = vmatprep.subr.mxu0 0.0
        %2987 = vmatpush1.msra.mxu0 0.0
        %2988 = vmatprep.subr.mxu0 0.0
        %2989 = vmatpush1.msra.mxu0 0.0
        %2990 = vmatprep.subr.mxu0 0.0
        %2991 = vmatpush1.msra.mxu0 0.0
        %2992 = vmatprep.mubr.f32.mxu0 0.0
        %2993 = vmatmul.mubr.f32.gmra.mrb[0].mxu0 %v2855
        %v2994 = vpop.f32.mrb[0].mxu0
        %v2995 = vadd.f32 0.0, %v2994
        %v2996 = vpop.f32.mrb[0].mxu0
        %v2997 = vadd.f32 0.0, %v2996
        %2998 = vdwg.mxu0
        %2999 = vmatprep.subr.mxu0 %v2775
        %3000 = vmatpush1.msra.mxu0 %v2774
        %3001 = vmatprep.subr.mxu0 %v2782
        %3002 = vmatpush1.msra.mxu0 %v2781
        %3003 = vmatprep.subr.mxu0 %v2789
        %3004 = vmatpush1.msra.mxu0 %v2788
        %3005 = vmatprep.subr.mxu0 %v2796
        %3006 = vmatpush1.msra.mxu0 %v2795
        %3007 = vmatprep.subr.mxu0 %v2803
        %3008 = vmatpush1.msra.mxu0 %v2802
        %3009 = vmatprep.subr.mxu0 %v2810
        %3010 = vmatpush1.msra.mxu0 %v2809
        %3011 = vmatprep.subr.mxu0 %v2817
        %3012 = vmatpush1.msra.mxu0 %v2816
        %3013 = vmatprep.subr.mxu0 %v2824
        %3014 = vmatpush1.msra.mxu0 %v2823
        %3015 = vmatprep.subr.mxu0 %v2831
        %3016 = vmatpush1.msra.mxu0 %v2830
        %3017 = vmatprep.subr.mxu0 %v2838
        %3018 = vmatpush1.msra.mxu0 %v2837
        %3019 = vmatprep.subr.mxu0 %v2845
        %3020 = vmatpush1.msra.mxu0 %v2844
        %3021 = vmatprep.subr.mxu0 %v2852
        %3022 = vmatpush1.msra.mxu0 %v2851
        %3023 = vmatprep.subr.mxu0 0.0
        %3024 = vmatpush1.msra.mxu0 0.0
        %3025 = vmatprep.subr.mxu0 0.0
        %3026 = vmatpush1.msra.mxu0 0.0
        %3027 = vmatprep.subr.mxu0 0.0
        %3028 = vmatpush1.msra.mxu0 0.0
        %3029 = vmatprep.subr.mxu0 0.0
        %3030 = vmatpush1.msra.mxu0 0.0
        %3031 = vmatprep.subr.mxu0 0.0
        %3032 = vmatpush1.msra.mxu0 0.0
        %3033 = vmatprep.subr.mxu0 0.0
        %3034 = vmatpush1.msra.mxu0 0.0
        %3035 = vmatprep.subr.mxu0 0.0
        %3036 = vmatpush1.msra.mxu0 0.0
        %3037 = vmatprep.subr.mxu0 0.0
        %3038 = vmatpush1.msra.mxu0 0.0
        %3039 = vmatprep.subr.mxu0 0.0
        %3040 = vmatpush1.msra.mxu0 0.0
        %3041 = vmatprep.subr.mxu0 0.0
        %3042 = vmatpush1.msra.mxu0 0.0
        %3043 = vmatprep.subr.mxu0 0.0
        %3044 = vmatpush1.msra.mxu0 0.0
        %3045 = vmatprep.subr.mxu0 0.0
        %3046 = vmatpush1.msra.mxu0 0.0
        %3047 = vmatprep.subr.mxu0 0.0
        %3048 = vmatpush1.msra.mxu0 0.0
        %3049 = vmatprep.subr.mxu0 0.0
        %3050 = vmatpush1.msra.mxu0 0.0
        %3051 = vmatprep.subr.mxu0 0.0
        %3052 = vmatpush1.msra.mxu0 0.0
        %3053 = vmatprep.subr.mxu0 0.0
        %3054 = vmatpush1.msra.mxu0 0.0
        %3055 = vmatprep.subr.mxu0 0.0
        %3056 = vmatpush1.msra.mxu0 0.0
        %3057 = vmatprep.subr.mxu0 0.0
        %3058 = vmatpush1.msra.mxu0 0.0
        %3059 = vmatprep.subr.mxu0 0.0
        %3060 = vmatpush1.msra.mxu0 0.0
        %3061 = vmatprep.subr.mxu0 0.0
        %3062 = vmatpush1.msra.mxu0 0.0
        %3063 = vmatprep.mubr.f32.mxu0 0.0
        %3064 = vmatmul.mubr.f32.gmra.mrb[0].mxu0 %v2855
        %v3065 = vpop.f32.mrb[0].mxu0
        %v3066 = vadd.f32 0.0, %v3065
        %v3067 = vpop.f32.mrb[0].mxu0
        %v3068 = vadd.f32 0.0, %v3067
        %3069 = vdwg.mxu0
        %3070 = vmatprep.subr.mxu0 0.0
        %3071 = vmatpush1.msra.mxu0 %v2776
        %3072 = vmatprep.subr.mxu0 0.0
        %3073 = vmatpush1.msra.mxu0 %v2783
        %3074 = vmatprep.subr.mxu0 0.0
        %3075 = vmatpush1.msra.mxu0 %v2790
        %3076 = vmatprep.subr.mxu0 0.0
        %3077 = vmatpush1.msra.mxu0 %v2797
        %3078 = vmatprep.subr.mxu0 0.0
        %3079 = vmatpush1.msra.mxu0 %v2804
        %3080 = vmatprep.subr.mxu0 0.0
        %3081 = vmatpush1.msra.mxu0 %v2811
        %3082 = vmatprep.subr.mxu0 0.0
        %3083 = vmatpush1.msra.mxu0 %v2818
        %3084 = vmatprep.subr.mxu0 0.0
        %3085 = vmatpush1.msra.mxu0 %v2825
        %3086 = vmatprep.subr.mxu0 0.0
        %3087 = vmatpush1.msra.mxu0 %v2832
        %3088 = vmatprep.subr.mxu0 0.0
        %3089 = vmatpush1.msra.mxu0 %v2839
        %3090 = vmatprep.subr.mxu0 0.0
        %3091 = vmatpush1.msra.mxu0 %v2846
        %3092 = vmatprep.subr.mxu0 0.0
        %3093 = vmatpush1.msra.mxu0 %v2853
        %3094 = vmatprep.subr.mxu0 0.0
        %3095 = vmatpush1.msra.mxu0 0.0
        %3096 = vmatprep.subr.mxu0 0.0
        %3097 = vmatpush1.msra.mxu0 0.0
        %3098 = vmatprep.subr.mxu0 0.0
        %3099 = vmatpush1.msra.mxu0 0.0
        %3100 = vmatprep.subr.mxu0 0.0
        %3101 = vmatpush1.msra.mxu0 0.0
        %3102 = vmatprep.subr.mxu0 0.0
        %3103 = vmatpush1.msra.mxu0 0.0
        %3104 = vmatprep.subr.mxu0 0.0
        %3105 = vmatpush1.msra.mxu0 0.0
        %3106 = vmatprep.subr.mxu0 0.0
        %3107 = vmatpush1.msra.mxu0 0.0
        %3108 = vmatprep.subr.mxu0 0.0
        %3109 = vmatpush1.msra.mxu0 0.0
        %3110 = vmatprep.subr.mxu0 0.0
        %3111 = vmatpush1.msra.mxu0 0.0
        %3112 = vmatprep.subr.mxu0 0.0
        %3113 = vmatpush1.msra.mxu0 0.0
        %3114 = vmatprep.subr.mxu0 0.0
        %3115 = vmatpush1.msra.mxu0 0.0
        %3116 = vmatprep.subr.mxu0 0.0
        %3117 = vmatpush1.msra.mxu0 0.0
        %3118 = vmatprep.subr.mxu0 0.0
        %3119 = vmatpush1.msra.mxu0 0.0
        %3120 = vmatprep.subr.mxu0 0.0
        %3121 = vmatpush1.msra.mxu0 0.0
        %3122 = vmatprep.subr.mxu0 0.0
        %3123 = vmatpush1.msra.mxu0 0.0
        %3124 = vmatprep.subr.mxu0 0.0
        %3125 = vmatpush1.msra.mxu0 0.0
        %3126 = vmatprep.subr.mxu0 0.0
        %3127 = vmatpush1.msra.mxu0 0.0
        %3128 = vmatprep.subr.mxu0 0.0
        %3129 = vmatpush1.msra.mxu0 0.0
        %3130 = vmatprep.subr.mxu0 0.0
        %3131 = vmatpush1.msra.mxu0 0.0
        %3132 = vmatprep.subr.mxu0 0.0
        %3133 = vmatpush1.msra.mxu0 0.0
        %3134 = vmatprep.mubr.f32.mxu0 0.0
        %3135 = vmatmul.mubr.f32.gmra.mrb[0].mxu0 %v2855
        %v3136 = vpop.f32.mrb[0].mxu0
        %v3137 = vadd.f32 0.0, %v3136
        %v3138 = vpop.f32.mrb[0].mxu0
        %3139 = vdwg.mxu0
        %v3142 = vrot.slane %v2924, 4
        %v3143 = vrot.slane %v2926, 4
        %3144 = vrot.lane.b32.xlu0 %v3142, 32
        %v3145 = vpop.permute.xlu0 %3144
        %3146 = vrot.lane.b32.xlu0 %v3143, 32
        %v3147 = vpop.permute.xlu0 %3146
        %v3148 = vsel %vm542, %v3145, %v3147
        %3151 = vrot.lane.b32.xlu0 %v2926, 64
        %v3152 = vpop.permute.xlu0 %3151
        %3153 = vrot.lane.b32.xlu0 %v2995, 64
        %v3154 = vpop.permute.xlu0 %3153
        %v3155 = vsel %vm1206, %v3152, %v3154
        %v3157 = vrot.slane %v2995, 4
        %3158 = vrot.lane.b32.xlu0 %v3157, 96
        %v3159 = vpop.permute.xlu0 %3158
        %v3163 = vrot.slane %v2997, 4
        %v3164 = vrot.slane %v3066, 4
        %3165 = vrot.lane.b32.xlu0 %v3163, 32
        %v3166 = vpop.permute.xlu0 %3165
        %3167 = vrot.lane.b32.xlu0 %v3164, 32
        %v3168 = vpop.permute.xlu0 %3167
        %v3169 = vsel %vm542, %v3166, %v3168
        %3172 = vrot.lane.b32.xlu0 %v3066, 64
        %v3173 = vpop.permute.xlu0 %3172
        %3174 = vrot.lane.b32.xlu0 %v3068, 64
        %v3175 = vpop.permute.xlu0 %3174
        %v3176 = vsel %vm1206, %v3173, %v3175
        %v3178 = vrot.slane %v3068, 4
        %3179 = vrot.lane.b32.xlu0 %v3178, 96
        %v3180 = vpop.permute.xlu0 %3179
        %v3182 = vsel %vm2687, %v2924, %v3148
        %v3183 = vsel %vm2687, %v3155, %v3159
        %v3184 = vsel %vm2687, %v2997, %v3169
        %v3185 = vsel %vm2687, %v3176, %v3180
        %v3187 = vsel %vm2687, %v3137, 0
        %3189 = vmatprep.subr.mxu0 0.0
        %3190 = vmatpush1.msra.mxu0 %v3182
        %3191 = vmatprep.subr.mxu0 0.0
        %3192 = vmatpush1.msra.mxu0 %v3183
        %3193 = vmatprep.subr.mxu0 0.0
        %3194 = vmatpush1.msra.mxu0 %v3184
        %3195 = vmatprep.subr.mxu0 0.0
        %3196 = vmatpush1.msra.mxu0 %v3185
        %3197 = vmatprep.subr.mxu0 0.0
        %3198 = vmatpush1.msra.mxu0 %v3187
        %3199 = vmatprep.subr.mxu0 0.0
        %3200 = vmatpush1.msra.mxu0 0.0
        %3201 = vmatprep.subr.mxu0 0.0
        %3202 = vmatpush1.msra.mxu0 0.0
        %3203 = vmatprep.subr.mxu0 0.0
        %3204 = vmatpush1.msra.mxu0 0.0
        %3205 = vmatprep.subr.mxu0 0.0
        %3206 = vmatpush1.msra.mxu0 0.0
        %3207 = vmatprep.subr.mxu0 0.0
        %3208 = vmatpush1.msra.mxu0 0.0
        %3209 = vmatprep.subr.mxu0 0.0
        %3210 = vmatpush1.msra.mxu0 0.0
        %3211 = vmatprep.subr.mxu0 0.0
        %3212 = vmatpush1.msra.mxu0 0.0
        %3213 = vmatprep.subr.mxu0 0.0
        %3214 = vmatpush1.msra.mxu0 0.0
        %3215 = vmatprep.subr.mxu0 0.0
        %3216 = vmatpush1.msra.mxu0 0.0
        %3217 = vmatprep.subr.mxu0 0.0
        %3218 = vmatpush1.msra.mxu0 0.0
        %3219 = vmatprep.subr.mxu0 0.0
        %3220 = vmatpush1.msra.mxu0 0.0
        %3221 = vmatprep.subr.mxu0 0.0
        %3222 = vmatpush1.msra.mxu0 0.0
        %3223 = vmatprep.subr.mxu0 0.0
        %3224 = vmatpush1.msra.mxu0 0.0
        %3225 = vmatprep.subr.mxu0 0.0
        %3226 = vmatpush1.msra.mxu0 0.0
        %3227 = vmatprep.subr.mxu0 0.0
        %3228 = vmatpush1.msra.mxu0 0.0
        %3229 = vmatprep.subr.mxu0 0.0
        %3230 = vmatpush1.msra.mxu0 0.0
        %3231 = vmatprep.subr.mxu0 0.0
        %3232 = vmatpush1.msra.mxu0 0.0
        %3233 = vmatprep.subr.mxu0 0.0
        %3234 = vmatpush1.msra.mxu0 0.0
        %3235 = vmatprep.subr.mxu0 0.0
        %3236 = vmatpush1.msra.mxu0 0.0
        %3237 = vmatprep.subr.mxu0 0.0
        %3238 = vmatpush1.msra.mxu0 0.0
        %3239 = vmatprep.subr.mxu0 0.0
        %3240 = vmatpush1.msra.mxu0 0.0
        %3241 = vmatprep.subr.mxu0 0.0
        %3242 = vmatpush1.msra.mxu0 0.0
        %3243 = vmatprep.subr.mxu0 0.0
        %3244 = vmatpush1.msra.mxu0 0.0
        %3245 = vmatprep.subr.mxu0 0.0
        %3246 = vmatpush1.msra.mxu0 0.0
        %3247 = vmatprep.subr.mxu0 0.0
        %3248 = vmatpush1.msra.mxu0 0.0
        %3249 = vmatprep.subr.mxu0 0.0
        %3250 = vmatpush1.msra.mxu0 0.0
        %3251 = vmatprep.subr.mxu0 0.0
        %3252 = vmatpush1.msra.mxu0 0.0
        %3253 = vmatprep.mubr.f32.mxu0 0.0
        %3254 = vmatmul.mubr.f32.gmra.mrb[0].mxu0 %v2694
        %v3255 = vpop.f32.mrb[0].mxu0
        %v3256 = vadd.f32 0.0003, %v3255
        %v3257 = vpop.f32.mrb[0].mxu0
        %3258 = vdwg.mxu0
        %v3259 = vmax.f32 %v3256, 0.0
        %v3260 = vld [vmem:[#allocation10 + $0x690] sm:$0xff]
        %v3261 = vld [vmem:[#allocation10 + $0x698] sm:$0xff]
        %v3262 = vld [vmem:[#allocation10 + $0x6a0] sm:$0xff]
        %v3263 = vld [vmem:[#allocation10 + $0x6a8] sm:$0xff]
        %v3264 = vld [vmem:[#allocation10 + $0x6b0] sm:$0xff]
        %v3265 = vld [vmem:[#allocation10 + $0x6b8] sm:$0xff]
        %v3266 = vld [vmem:[#allocation10 + $0x6c0] sm:$0xff]
        %v3267 = vld [vmem:[#allocation10 + $0x6c8] sm:$0xff]
        %v3268 = vld [vmem:[#allocation10 + $0x6d0] sm:$0xff]
        %v3269 = vld [vmem:[#allocation10 + $0x6d8] sm:$0xff]
        %v3270 = vld [vmem:[#allocation10 + $0x6e0] sm:$0xff]
        %v3271 = vld [vmem:[#allocation10 + $0x6e8] sm:$0xff]
        %v3272 = vld [vmem:[#allocation10 + $0x6f0] sm:$0xff]
        %v3273 = vld [vmem:[#allocation10 + $0x6f8] sm:$0xff]
        %v3274 = vld [vmem:[#allocation10 + $0x700] sm:$0xff]
        %v3275 = vld [vmem:[#allocation10 + $0x708] sm:$0xff]
        %v3276 = vld [vmem:[#allocation10 + $0x710] sm:$0xff]
        %v3277 = vld [vmem:[#allocation10 + $0x718] sm:$0xff]
        %v3278 = vld [vmem:[#allocation10 + $0x720] sm:$0xff]
        %v3279 = vld [vmem:[#allocation10 + $0x728] sm:$0xff]
        %v3280 = vld [vmem:[#allocation10 + $0x730] sm:$0xff]
        %v3281 = vld [vmem:[#allocation10 + $0x738] sm:$0xff]
        %v3282 = vld [vmem:[#allocation10 + $0x740] sm:$0xff]
        %v3283 = vld [vmem:[#allocation10 + $0x748] sm:$0xff]
        %v3284 = vld [vmem:[#allocation10 + $0x750] sm:$0xff]
        %v3285 = vld [vmem:[#allocation10 + $0x758] sm:$0xff]
        %v3286 = vld [vmem:[#allocation10 + $0x760] sm:$0xff]
        %v3287 = vld [vmem:[#allocation10 + $0x768] sm:$0xff]
        %v3288 = vld [vmem:[#allocation10 + $0x770] sm:$0xff]
        %v3289 = vld [vmem:[#allocation10 + $0x778] sm:$0xff]
        %v3290 = vld [vmem:[#allocation10 + $0x780] sm:$0xff]
        %v3291 = vld [vmem:[#allocation10 + $0x788] sm:$0xff]
        %v3292 = vld [vmem:[#allocation10 + $0x790] sm:$0xff]
        %v3293 = vld [vmem:[#allocation10 + $0x798] sm:$0xff]
        %v3294 = vld [vmem:[#allocation10 + $0x7a0] sm:$0xff]
        %v3295 = vld [vmem:[#allocation10 + $0x7a8] sm:$0xff]
        %v3296 = vld [vmem:[#allocation10 + $0x7b0] sm:$0xff]
        %v3297 = vld [vmem:[#allocation10 + $0x7b8] sm:$0xff]
        %v3298 = vld [vmem:[#allocation10 + $0x7c0] sm:$0xff]
        %v3299 = vld [vmem:[#allocation10 + $0x7c8] sm:$0xff]
        %v3300 = vld [vmem:[#allocation10 + $0x7d0] sm:$0xff]
        %v3301 = vld [vmem:[#allocation10 + $0x7d8] sm:$0xff]
        %v3302 = vld [vmem:[#allocation10 + $0x7e0] sm:$0xff]
        %v3303 = vld [vmem:[#allocation10 + $0x7e8] sm:$0xff]
        %v3304 = vld [vmem:[#allocation10 + $0x7f0] sm:$0xff]
        %v3305 = vld [vmem:[#allocation10 + $0x7f8] sm:$0xff]
        %v3306 = vld [vmem:[#allocation10 + $0x800] sm:$0xff]
        %v3307 = vld [vmem:[#allocation10 + $0x808] sm:$0xff]
        %v3308 = vld [vmem:[#allocation10 + $0x810] sm:$0xff]
        %v3309 = vld [vmem:[#allocation10 + $0x818] sm:$0xff]
        %v3310 = vld [vmem:[#allocation10 + $0x820] sm:$0xff]
        %v3311 = vld [vmem:[#allocation10 + $0x828] sm:$0xff]
        %v3312 = vld [vmem:[#allocation10 + $0x830] sm:$0xff]
        %v3313 = vld [vmem:[#allocation10 + $0x838] sm:$0xff]
        %v3314 = vld [vmem:[#allocation10 + $0x840] sm:$0xff]
        %v3315 = vld [vmem:[#allocation10 + $0x848] sm:$0xff]
        %v3316 = vld [vmem:[#allocation10 + $0x850] sm:$0xff]
        %v3317 = vld [vmem:[#allocation10 + $0x858] sm:$0xff]
        %v3318 = vld [vmem:[#allocation10 + $0x860] sm:$0xff]
        %v3319 = vld [vmem:[#allocation10 + $0x868] sm:$0xff]
        %v3320 = vld [vmem:[#allocation10 + $0x870] sm:$0xff]
        %v3321 = vld [vmem:[#allocation10 + $0x878] sm:$0xff]
        %v3322 = vld [vmem:[#allocation10 + $0x880] sm:$0xff]
        %v3323 = vld [vmem:[#allocation10 + $0x888] sm:$0xff]
        %v3324 = vld [vmem:[#allocation10 + $0x890] sm:$0xff]
        %v3325 = vld [vmem:[#allocation10 + $0x898] sm:$0xff]
        %v3326 = vld [vmem:[#allocation10 + $0x8a0] sm:$0xff]
        %v3327 = vld [vmem:[#allocation10 + $0x8a8] sm:$0xff]
        %v3328 = vld [vmem:[#allocation10 + $0x8b0] sm:$0xff]
        %v3329 = vld [vmem:[#allocation10 + $0x8b8] sm:$0xff]
        %v3330 = vld [vmem:[#allocation10 + $0x8c0] sm:$0xff]
        %v3331 = vld [vmem:[#allocation10 + $0x8c8] sm:$0xff]
        %v3332 = vld [vmem:[#allocation10 + $0x8d0] sm:$0xff]
        %v3333 = vld [vmem:[#allocation10 + $0x8d8] sm:$0xff]
        %v3334 = vld [vmem:[#allocation10 + $0x8e0] sm:$0xff]
        %v3335 = vld [vmem:[#allocation10 + $0x8e8] sm:$0xff]
        %v3336 = vld [vmem:[#allocation10 + $0x8f0] sm:$0xff]
        %v3337 = vld [vmem:[#allocation10 + $0x8f8] sm:$0xff]
        %v3338 = vld [vmem:[#allocation10 + $0x900] sm:$0xff]
        %v3339 = vld [vmem:[#allocation10 + $0x908] sm:$0xff]
        %v3340 = vld [vmem:[#allocation10 + $0x910] sm:$0xff]
        %v3341 = vld [vmem:[#allocation10 + $0x918] sm:$0xff]
        %v3342 = vld [vmem:[#allocation10 + $0x920] sm:$0xff]
        %v3343 = vld [vmem:[#allocation10 + $0x928] sm:$0xff]
        %v3345 = vsel %vm2358, %v3259, 0
        %3347 = vmatprep.subr.mxu0 %v3261
        %3348 = vmatpush1.msra.mxu0 %v3260
        %3349 = vmatprep.subr.mxu0 %v3268
        %3350 = vmatpush1.msra.mxu0 %v3267
        %3351 = vmatprep.subr.mxu0 %v3275
        %3352 = vmatpush1.msra.mxu0 %v3274
        %3353 = vmatprep.subr.mxu0 %v3282
        %3354 = vmatpush1.msra.mxu0 %v3281
        %3355 = vmatprep.subr.mxu0 %v3289
        %3356 = vmatpush1.msra.mxu0 %v3288
        %3357 = vmatprep.subr.mxu0 %v3296
        %3358 = vmatpush1.msra.mxu0 %v3295
        %3359 = vmatprep.subr.mxu0 %v3303
        %3360 = vmatpush1.msra.mxu0 %v3302
        %3361 = vmatprep.subr.mxu0 %v3310
        %3362 = vmatpush1.msra.mxu0 %v3309
        %3363 = vmatprep.subr.mxu0 %v3317
        %3364 = vmatpush1.msra.mxu0 %v3316
        %3365 = vmatprep.subr.mxu0 %v3324
        %3366 = vmatpush1.msra.mxu0 %v3323
        %3367 = vmatprep.subr.mxu0 %v3331
        %3368 = vmatpush1.msra.mxu0 %v3330
        %3369 = vmatprep.subr.mxu0 %v3338
        %3370 = vmatpush1.msra.mxu0 %v3337
        %3371 = vmatprep.subr.mxu0 0.0
        %3372 = vmatpush1.msra.mxu0 0.0
        %3373 = vmatprep.subr.mxu0 0.0
        %3374 = vmatpush1.msra.mxu0 0.0
        %3375 = vmatprep.subr.mxu0 0.0
        %3376 = vmatpush1.msra.mxu0 0.0
        %3377 = vmatprep.subr.mxu0 0.0
        %3378 = vmatpush1.msra.mxu0 0.0
        %3379 = vmatprep.subr.mxu0 0.0
        %3380 = vmatpush1.msra.mxu0 0.0
        %3381 = vmatprep.subr.mxu0 0.0
        %3382 = vmatpush1.msra.mxu0 0.0
        %3383 = vmatprep.subr.mxu0 0.0
        %3384 = vmatpush1.msra.mxu0 0.0
        %3385 = vmatprep.subr.mxu0 0.0
        %3386 = vmatpush1.msra.mxu0 0.0
        %3387 = vmatprep.subr.mxu0 0.0
        %3388 = vmatpush1.msra.mxu0 0.0
        %3389 = vmatprep.subr.mxu0 0.0
        %3390 = vmatpush1.msra.mxu0 0.0
        %3391 = vmatprep.subr.mxu0 0.0
        %3392 = vmatpush1.msra.mxu0 0.0
        %3393 = vmatprep.subr.mxu0 0.0
        %3394 = vmatpush1.msra.mxu0 0.0
        %3395 = vmatprep.subr.mxu0 0.0
        %3396 = vmatpush1.msra.mxu0 0.0
        %3397 = vmatprep.subr.mxu0 0.0
        %3398 = vmatpush1.msra.mxu0 0.0
        %3399 = vmatprep.subr.mxu0 0.0
        %3400 = vmatpush1.msra.mxu0 0.0
        %3401 = vmatprep.subr.mxu0 0.0
        %3402 = vmatpush1.msra.mxu0 0.0
        %3403 = vmatprep.subr.mxu0 0.0
        %3404 = vmatpush1.msra.mxu0 0.0
        %3405 = vmatprep.subr.mxu0 0.0
        %3406 = vmatpush1.msra.mxu0 0.0
        %3407 = vmatprep.subr.mxu0 0.0
        %3408 = vmatpush1.msra.mxu0 0.0
        %3409 = vmatprep.subr.mxu0 0.0
        %3410 = vmatpush1.msra.mxu0 0.0
        %3411 = vmatprep.mubr.f32.mxu0 0.0
        %3412 = vmatmul.mubr.f32.gmra.mrb[0].mxu0 %v3345
        %v3413 = vpop.f32.mrb[0].mxu0
        %v3414 = vadd.f32 0.0, %v3413
        %v3415 = vpop.f32.mrb[0].mxu0
        %v3416 = vadd.f32 0.0, %v3415
        %3417 = vdwg.mxu0
        %3418 = vmatprep.subr.mxu0 %v3263
        %3419 = vmatpush1.msra.mxu0 %v3262
        %3420 = vmatprep.subr.mxu0 %v3270
        %3421 = vmatpush1.msra.mxu0 %v3269
        %3422 = vmatprep.subr.mxu0 %v3277
        %3423 = vmatpush1.msra.mxu0 %v3276
        %3424 = vmatprep.subr.mxu0 %v3284
        %3425 = vmatpush1.msra.mxu0 %v3283
        %3426 = vmatprep.subr.mxu0 %v3291
        %3427 = vmatpush1.msra.mxu0 %v3290
        %3428 = vmatprep.subr.mxu0 %v3298
        %3429 = vmatpush1.msra.mxu0 %v3297
        %3430 = vmatprep.subr.mxu0 %v3305
        %3431 = vmatpush1.msra.mxu0 %v3304
        %3432 = vmatprep.subr.mxu0 %v3312
        %3433 = vmatpush1.msra.mxu0 %v3311
        %3434 = vmatprep.subr.mxu0 %v3319
        %3435 = vmatpush1.msra.mxu0 %v3318
        %3436 = vmatprep.subr.mxu0 %v3326
        %3437 = vmatpush1.msra.mxu0 %v3325
        %3438 = vmatprep.subr.mxu0 %v3333
        %3439 = vmatpush1.msra.mxu0 %v3332
        %3440 = vmatprep.subr.mxu0 %v3340
        %3441 = vmatpush1.msra.mxu0 %v3339
        %3442 = vmatprep.subr.mxu0 0.0
        %3443 = vmatpush1.msra.mxu0 0.0
        %3444 = vmatprep.subr.mxu0 0.0
        %3445 = vmatpush1.msra.mxu0 0.0
        %3446 = vmatprep.subr.mxu0 0.0
        %3447 = vmatpush1.msra.mxu0 0.0
        %3448 = vmatprep.subr.mxu0 0.0
        %3449 = vmatpush1.msra.mxu0 0.0
        %3450 = vmatprep.subr.mxu0 0.0
        %3451 = vmatpush1.msra.mxu0 0.0
        %3452 = vmatprep.subr.mxu0 0.0
        %3453 = vmatpush1.msra.mxu0 0.0
        %3454 = vmatprep.subr.mxu0 0.0
        %3455 = vmatpush1.msra.mxu0 0.0
        %3456 = vmatprep.subr.mxu0 0.0
        %3457 = vmatpush1.msra.mxu0 0.0
        %3458 = vmatprep.subr.mxu0 0.0
        %3459 = vmatpush1.msra.mxu0 0.0
        %3460 = vmatprep.subr.mxu0 0.0
        %3461 = vmatpush1.msra.mxu0 0.0
        %3462 = vmatprep.subr.mxu0 0.0
        %3463 = vmatpush1.msra.mxu0 0.0
        %3464 = vmatprep.subr.mxu0 0.0
        %3465 = vmatpush1.msra.mxu0 0.0
        %3466 = vmatprep.subr.mxu0 0.0
        %3467 = vmatpush1.msra.mxu0 0.0
        %3468 = vmatprep.subr.mxu0 0.0
        %3469 = vmatpush1.msra.mxu0 0.0
        %3470 = vmatprep.subr.mxu0 0.0
        %3471 = vmatpush1.msra.mxu0 0.0
        %3472 = vmatprep.subr.mxu0 0.0
        %3473 = vmatpush1.msra.mxu0 0.0
        %3474 = vmatprep.subr.mxu0 0.0
        %3475 = vmatpush1.msra.mxu0 0.0
        %3476 = vmatprep.subr.mxu0 0.0
        %3477 = vmatpush1.msra.mxu0 0.0
        %3478 = vmatprep.subr.mxu0 0.0
        %3479 = vmatpush1.msra.mxu0 0.0
        %3480 = vmatprep.subr.mxu0 0.0
        %3481 = vmatpush1.msra.mxu0 0.0
        %3482 = vmatprep.mubr.f32.mxu0 0.0
        %3483 = vmatmul.mubr.f32.gmra.mrb[0].mxu0 %v3345
        %v3484 = vpop.f32.mrb[0].mxu0
        %v3485 = vadd.f32 0.0, %v3484
        %v3486 = vpop.f32.mrb[0].mxu0
        %v3487 = vadd.f32 0.0, %v3486
        %3488 = vdwg.mxu0
        %3489 = vmatprep.subr.mxu0 %v3265
        %3490 = vmatpush1.msra.mxu0 %v3264
        %3491 = vmatprep.subr.mxu0 %v3272
        %3492 = vmatpush1.msra.mxu0 %v3271
        %3493 = vmatprep.subr.mxu0 %v3279
        %3494 = vmatpush1.msra.mxu0 %v3278
        %3495 = vmatprep.subr.mxu0 %v3286
        %3496 = vmatpush1.msra.mxu0 %v3285
        %3497 = vmatprep.subr.mxu0 %v3293
        %3498 = vmatpush1.msra.mxu0 %v3292
        %3499 = vmatprep.subr.mxu0 %v3300
        %3500 = vmatpush1.msra.mxu0 %v3299
        %3501 = vmatprep.subr.mxu0 %v3307
        %3502 = vmatpush1.msra.mxu0 %v3306
        %3503 = vmatprep.subr.mxu0 %v3314
        %3504 = vmatpush1.msra.mxu0 %v3313
        %3505 = vmatprep.subr.mxu0 %v3321
        %3506 = vmatpush1.msra.mxu0 %v3320
        %3507 = vmatprep.subr.mxu0 %v3328
        %3508 = vmatpush1.msra.mxu0 %v3327
        %3509 = vmatprep.subr.mxu0 %v3335
        %3510 = vmatpush1.msra.mxu0 %v3334
        %3511 = vmatprep.subr.mxu0 %v3342
        %3512 = vmatpush1.msra.mxu0 %v3341
        %3513 = vmatprep.subr.mxu0 0.0
        %3514 = vmatpush1.msra.mxu0 0.0
        %3515 = vmatprep.subr.mxu0 0.0
        %3516 = vmatpush1.msra.mxu0 0.0
        %3517 = vmatprep.subr.mxu0 0.0
        %3518 = vmatpush1.msra.mxu0 0.0
        %3519 = vmatprep.subr.mxu0 0.0
        %3520 = vmatpush1.msra.mxu0 0.0
        %3521 = vmatprep.subr.mxu0 0.0
        %3522 = vmatpush1.msra.mxu0 0.0
        %3523 = vmatprep.subr.mxu0 0.0
        %3524 = vmatpush1.msra.mxu0 0.0
        %3525 = vmatprep.subr.mxu0 0.0
        %3526 = vmatpush1.msra.mxu0 0.0
        %3527 = vmatprep.subr.mxu0 0.0
        %3528 = vmatpush1.msra.mxu0 0.0
        %3529 = vmatprep.subr.mxu0 0.0
        %3530 = vmatpush1.msra.mxu0 0.0
        %3531 = vmatprep.subr.mxu0 0.0
        %3532 = vmatpush1.msra.mxu0 0.0
        %3533 = vmatprep.subr.mxu0 0.0
        %3534 = vmatpush1.msra.mxu0 0.0
        %3535 = vmatprep.subr.mxu0 0.0
        %3536 = vmatpush1.msra.mxu0 0.0
        %3537 = vmatprep.subr.mxu0 0.0
        %3538 = vmatpush1.msra.mxu0 0.0
        %3539 = vmatprep.subr.mxu0 0.0
        %3540 = vmatpush1.msra.mxu0 0.0
        %3541 = vmatprep.subr.mxu0 0.0
        %3542 = vmatpush1.msra.mxu0 0.0
        %3543 = vmatprep.subr.mxu0 0.0
        %3544 = vmatpush1.msra.mxu0 0.0
        %3545 = vmatprep.subr.mxu0 0.0
        %3546 = vmatpush1.msra.mxu0 0.0
        %3547 = vmatprep.subr.mxu0 0.0
        %3548 = vmatpush1.msra.mxu0 0.0
        %3549 = vmatprep.subr.mxu0 0.0
        %3550 = vmatpush1.msra.mxu0 0.0
        %3551 = vmatprep.subr.mxu0 0.0
        %3552 = vmatpush1.msra.mxu0 0.0
        %3553 = vmatprep.mubr.f32.mxu0 0.0
        %3554 = vmatmul.mubr.f32.gmra.mrb[0].mxu0 %v3345
        %v3555 = vpop.f32.mrb[0].mxu0
        %v3556 = vadd.f32 0.0, %v3555
        %v3557 = vpop.f32.mrb[0].mxu0
        %v3558 = vadd.f32 0.0, %v3557
        %3559 = vdwg.mxu0
        %3560 = vmatprep.subr.mxu0 0.0
        %3561 = vmatpush1.msra.mxu0 %v3266
        %3562 = vmatprep.subr.mxu0 0.0
        %3563 = vmatpush1.msra.mxu0 %v3273
        %3564 = vmatprep.subr.mxu0 0.0
        %3565 = vmatpush1.msra.mxu0 %v3280
        %3566 = vmatprep.subr.mxu0 0.0
        %3567 = vmatpush1.msra.mxu0 %v3287
        %3568 = vmatprep.subr.mxu0 0.0
        %3569 = vmatpush1.msra.mxu0 %v3294
        %3570 = vmatprep.subr.mxu0 0.0
        %3571 = vmatpush1.msra.mxu0 %v3301
        %3572 = vmatprep.subr.mxu0 0.0
        %3573 = vmatpush1.msra.mxu0 %v3308
        %3574 = vmatprep.subr.mxu0 0.0
        %3575 = vmatpush1.msra.mxu0 %v3315
        %3576 = vmatprep.subr.mxu0 0.0
        %3577 = vmatpush1.msra.mxu0 %v3322
        %3578 = vmatprep.subr.mxu0 0.0
        %3579 = vmatpush1.msra.mxu0 %v3329
        %3580 = vmatprep.subr.mxu0 0.0
        %3581 = vmatpush1.msra.mxu0 %v3336
        %3582 = vmatprep.subr.mxu0 0.0
        %3583 = vmatpush1.msra.mxu0 %v3343
        %3584 = vmatprep.subr.mxu0 0.0
        %3585 = vmatpush1.msra.mxu0 0.0
        %3586 = vmatprep.subr.mxu0 0.0
        %3587 = vmatpush1.msra.mxu0 0.0
        %3588 = vmatprep.subr.mxu0 0.0
        %3589 = vmatpush1.msra.mxu0 0.0
        %3590 = vmatprep.subr.mxu0 0.0
        %3591 = vmatpush1.msra.mxu0 0.0
        %3592 = vmatprep.subr.mxu0 0.0
        %3593 = vmatpush1.msra.mxu0 0.0
        %3594 = vmatprep.subr.mxu0 0.0
        %3595 = vmatpush1.msra.mxu0 0.0
        %3596 = vmatprep.subr.mxu0 0.0
        %3597 = vmatpush1.msra.mxu0 0.0
        %3598 = vmatprep.subr.mxu0 0.0
        %3599 = vmatpush1.msra.mxu0 0.0
        %3600 = vmatprep.subr.mxu0 0.0
        %3601 = vmatpush1.msra.mxu0 0.0
        %3602 = vmatprep.subr.mxu0 0.0
        %3603 = vmatpush1.msra.mxu0 0.0
        %3604 = vmatprep.subr.mxu0 0.0
        %3605 = vmatpush1.msra.mxu0 0.0
        %3606 = vmatprep.subr.mxu0 0.0
        %3607 = vmatpush1.msra.mxu0 0.0
        %3608 = vmatprep.subr.mxu0 0.0
        %3609 = vmatpush1.msra.mxu0 0.0
        %3610 = vmatprep.subr.mxu0 0.0
        %3611 = vmatpush1.msra.mxu0 0.0
        %3612 = vmatprep.subr.mxu0 0.0
        %3613 = vmatpush1.msra.mxu0 0.0
        %3614 = vmatprep.subr.mxu0 0.0
        %3615 = vmatpush1.msra.mxu0 0.0
        %3616 = vmatprep.subr.mxu0 0.0
        %3617 = vmatpush1.msra.mxu0 0.0
        %3618 = vmatprep.subr.mxu0 0.0
        %3619 = vmatpush1.msra.mxu0 0.0
        %3620 = vmatprep.subr.mxu0 0.0
        %3621 = vmatpush1.msra.mxu0 0.0
        %3622 = vmatprep.subr.mxu0 0.0
        %3623 = vmatpush1.msra.mxu0 0.0
        %3624 = vmatprep.mubr.f32.mxu0 0.0
        %3625 = vmatmul.mubr.f32.gmra.mrb[0].mxu0 %v3345
        %v3626 = vpop.f32.mrb[0].mxu0
        %v3627 = vadd.f32 0.0, %v3626
        %v3628 = vpop.f32.mrb[0].mxu0
        %3629 = vdwg.mxu0
        %v3632 = vrot.slane %v3414, 4
        %v3633 = vrot.slane %v3416, 4
        %3634 = vrot.lane.b32.xlu0 %v3632, 32
        %v3635 = vpop.permute.xlu0 %3634
        %3636 = vrot.lane.b32.xlu0 %v3633, 32
        %v3637 = vpop.permute.xlu0 %3636
        %v3638 = vsel %vm542, %v3635, %v3637
        %3641 = vrot.lane.b32.xlu0 %v3416, 64
        %v3642 = vpop.permute.xlu0 %3641
        %3643 = vrot.lane.b32.xlu0 %v3485, 64
        %v3644 = vpop.permute.xlu0 %3643
        %v3645 = vsel %vm1206, %v3642, %v3644
        %v3647 = vrot.slane %v3485, 4
        %3648 = vrot.lane.b32.xlu0 %v3647, 96
        %v3649 = vpop.permute.xlu0 %3648
        %v3653 = vrot.slane %v3487, 4
        %v3654 = vrot.slane %v3556, 4
        %3655 = vrot.lane.b32.xlu0 %v3653, 32
        %v3656 = vpop.permute.xlu0 %3655
        %3657 = vrot.lane.b32.xlu0 %v3654, 32
        %v3658 = vpop.permute.xlu0 %3657
        %v3659 = vsel %vm542, %v3656, %v3658
        %3662 = vrot.lane.b32.xlu0 %v3556, 64
        %v3663 = vpop.permute.xlu0 %3662
        %3664 = vrot.lane.b32.xlu0 %v3558, 64
        %v3665 = vpop.permute.xlu0 %3664
        %v3666 = vsel %vm1206, %v3663, %v3665
        %v3668 = vrot.slane %v3558, 4
        %3669 = vrot.lane.b32.xlu0 %v3668, 96
        %v3670 = vpop.permute.xlu0 %3669
        %v3672 = vsel %vm2687, %v3414, %v3638
        %v3673 = vsel %vm2687, %v3645, %v3649
        %v3674 = vsel %vm2687, %v3487, %v3659
        %v3675 = vsel %vm2687, %v3666, %v3670
        %v3677 = vsel %vm2687, %v3627, 0
        %3679 = vmatprep.subr.mxu0 0.0
        %3680 = vmatpush1.msra.mxu0 %v3672
        %3681 = vmatprep.subr.mxu0 0.0
        %3682 = vmatpush1.msra.mxu0 %v3673
        %3683 = vmatprep.subr.mxu0 0.0
        %3684 = vmatpush1.msra.mxu0 %v3674
        %3685 = vmatprep.subr.mxu0 0.0
        %3686 = vmatpush1.msra.mxu0 %v3675
        %3687 = vmatprep.subr.mxu0 0.0
        %3688 = vmatpush1.msra.mxu0 %v3677
        %3689 = vmatprep.subr.mxu0 0.0
        %3690 = vmatpush1.msra.mxu0 0.0
        %3691 = vmatprep.subr.mxu0 0.0
        %3692 = vmatpush1.msra.mxu0 0.0
        %3693 = vmatprep.subr.mxu0 0.0
        %3694 = vmatpush1.msra.mxu0 0.0
        %3695 = vmatprep.subr.mxu0 0.0
        %3696 = vmatpush1.msra.mxu0 0.0
        %3697 = vmatprep.subr.mxu0 0.0
        %3698 = vmatpush1.msra.mxu0 0.0
        %3699 = vmatprep.subr.mxu0 0.0
        %3700 = vmatpush1.msra.mxu0 0.0
        %3701 = vmatprep.subr.mxu0 0.0
        %3702 = vmatpush1.msra.mxu0 0.0
        %3703 = vmatprep.subr.mxu0 0.0
        %3704 = vmatpush1.msra.mxu0 0.0
        %3705 = vmatprep.subr.mxu0 0.0
        %3706 = vmatpush1.msra.mxu0 0.0
        %3707 = vmatprep.subr.mxu0 0.0
        %3708 = vmatpush1.msra.mxu0 0.0
        %3709 = vmatprep.subr.mxu0 0.0
        %3710 = vmatpush1.msra.mxu0 0.0
        %3711 = vmatprep.subr.mxu0 0.0
        %3712 = vmatpush1.msra.mxu0 0.0
        %3713 = vmatprep.subr.mxu0 0.0
        %3714 = vmatpush1.msra.mxu0 0.0
        %3715 = vmatprep.subr.mxu0 0.0
        %3716 = vmatpush1.msra.mxu0 0.0
        %3717 = vmatprep.subr.mxu0 0.0
        %3718 = vmatpush1.msra.mxu0 0.0
        %3719 = vmatprep.subr.mxu0 0.0
        %3720 = vmatpush1.msra.mxu0 0.0
        %3721 = vmatprep.subr.mxu0 0.0
        %3722 = vmatpush1.msra.mxu0 0.0
        %3723 = vmatprep.subr.mxu0 0.0
        %3724 = vmatpush1.msra.mxu0 0.0
        %3725 = vmatprep.subr.mxu0 0.0
        %3726 = vmatpush1.msra.mxu0 0.0
        %3727 = vmatprep.subr.mxu0 0.0
        %3728 = vmatpush1.msra.mxu0 0.0
        %3729 = vmatprep.subr.mxu0 0.0
        %3730 = vmatpush1.msra.mxu0 0.0
        %3731 = vmatprep.subr.mxu0 0.0
        %3732 = vmatpush1.msra.mxu0 0.0
        %3733 = vmatprep.subr.mxu0 0.0
        %3734 = vmatpush1.msra.mxu0 0.0
        %3735 = vmatprep.subr.mxu0 0.0
        %3736 = vmatpush1.msra.mxu0 0.0
        %3737 = vmatprep.subr.mxu0 0.0
        %3738 = vmatpush1.msra.mxu0 0.0
        %3739 = vmatprep.subr.mxu0 0.0
        %3740 = vmatpush1.msra.mxu0 0.0
        %3741 = vmatprep.subr.mxu0 0.0
        %3742 = vmatpush1.msra.mxu0 0.0
        %3743 = vmatprep.mubr.f32.mxu0 0.0
        %3744 = vmatmul.mubr.f32.gmra.mrb[0].mxu0 %v2694
        %v3745 = vpop.f32.mrb[0].mxu0
        %v3746 = vadd.f32 0.0003, %v3745
        %v3747 = vpop.f32.mrb[0].mxu0
        %3748 = vdwg.mxu0
        %v3749 = vmax.f32 %v3746, 0.0
        %vm3750 = vcmask 781312
        %3751 = vst.msk [vmem:[%s510] sm:$0xf] %vm3750, %v3749
        %v3752 = vld [vmem:[#allocation8] sm:$0xff]
        %v3753 = vld [vmem:[#allocation8 + $0x8] sm:$0xff]
        %v3754 = vld [vmem:[#allocation8 + $0x10] sm:$0xff]
        %v3755 = vld [vmem:[#allocation8 + $0x18] sm:$0xff]
        %v3756 = vld [vmem:[#allocation8 + $0x20] sm:$0xff]
        %v3757 = vld [vmem:[#allocation8 + $0x28] sm:$0xff]
        %v3758 = vld [vmem:[#allocation8 + $0x30] sm:$0xff]
        %v3759 = vld [vmem:[#allocation8 + $0x38] sm:$0xff]
        %v3760 = vld [vmem:[#allocation8 + $0x40] sm:$0xff]
        %v3761 = vld [vmem:[#allocation8 + $0x48] sm:$0xff]
        %v3762 = vld [vmem:[#allocation8 + $0x50] sm:$0xff]
        %v3763 = vld [vmem:[#allocation8 + $0x58] sm:$0xff]
        %v3764 = vld [vmem:[#allocation8 + $0x60] sm:$0xff]
        %v3765 = vld [vmem:[#allocation8 + $0x68] sm:$0xff]
        %v3766 = vld [vmem:[#allocation8 + $0x70] sm:$0xff]
        %v3767 = vld [vmem:[#allocation8 + $0x78] sm:$0xff]
        %v3768 = vld [vmem:[#allocation8 + $0x80] sm:$0xff]
        %v3769 = vld [vmem:[#allocation8 + $0x88] sm:$0xff]
        %v3770 = vld [vmem:[#allocation8 + $0x90] sm:$0xff]
        %v3771 = vld [vmem:[#allocation8 + $0x98] sm:$0xff]
        %v3772 = vld [vmem:[#allocation8 + $0xa0] sm:$0xff]
        %v3773 = vld [vmem:[#allocation8 + $0xa8] sm:$0xff]
        %v3774 = vld [vmem:[#allocation8 + $0xb0] sm:$0xff]
        %v3775 = vld [vmem:[#allocation8 + $0xb8] sm:$0xff]
        %v3776 = vld [vmem:[#allocation8 + $0xc0] sm:$0xff]
        %v3777 = vld [vmem:[#allocation8 + $0xc8] sm:$0xff]
        %v3778 = vld [vmem:[#allocation8 + $0xd0] sm:$0xff]
        %v3779 = vld [vmem:[#allocation8 + $0xd8] sm:$0xff]
        %v3780 = vld [vmem:[#allocation8 + $0xe0] sm:$0xff]
        %v3781 = vld [vmem:[#allocation8 + $0xe8] sm:$0xff]
        %v3782 = vld [vmem:[#allocation8 + $0xf0] sm:$0xff]
        %v3783 = vld [vmem:[#allocation8 + $0xf8] sm:$0xff]
        %v3784 = vld [vmem:[#allocation8 + $0x100] sm:$0xff]
        %v3785 = vld [vmem:[#allocation8 + $0x108] sm:$0xff]
        %v3786 = vld [vmem:[#allocation8 + $0x110] sm:$0xff]
        %v3787 = vld [vmem:[#allocation8 + $0x118] sm:$0xff]
        %v3788 = vld [vmem:[#allocation8 + $0x120] sm:$0xff]
        %v3789 = vld [vmem:[#allocation8 + $0x128] sm:$0xff]
        %v3790 = vld [vmem:[#allocation8 + $0x130] sm:$0xff]
        %v3791 = vld [vmem:[#allocation8 + $0x138] sm:$0xff]
        %v3792 = vld [vmem:[#allocation8 + $0x140] sm:$0xff]
        %v3793 = vld [vmem:[#allocation8 + $0x148] sm:$0xff]
        %v3794 = vld [vmem:[#allocation8 + $0x150] sm:$0xff]
        %v3795 = vld [vmem:[#allocation8 + $0x158] sm:$0xff]
        %v3796 = vld [vmem:[#allocation8 + $0x160] sm:$0xff]
        %v3797 = vld [vmem:[#allocation8 + $0x168] sm:$0xff]
        %v3798 = vld [vmem:[#allocation8 + $0x170] sm:$0xff]
        %v3799 = vld [vmem:[#allocation8 + $0x178] sm:$0xff]
        %v3800 = vld [vmem:[#allocation8 + $0x180] sm:$0xff]
        %v3801 = vld [vmem:[#allocation8 + $0x188] sm:$0xff]
        %v3802 = vld [vmem:[#allocation8 + $0x190] sm:$0xff]
        %v3803 = vld [vmem:[#allocation8 + $0x198] sm:$0xff]
        %v3804 = vld [vmem:[#allocation8 + $0x1a0] sm:$0xff]
        %v3805 = vld [vmem:[#allocation8 + $0x1a8] sm:$0xff]
        %v3806 = vld [vmem:[#allocation8 + $0x1b0] sm:$0xff]
        %v3807 = vld [vmem:[#allocation8 + $0x1b8] sm:$0xff]
        %v3808 = vld [vmem:[#allocation8 + $0x1c0] sm:$0xff]
        %v3809 = vld [vmem:[#allocation8 + $0x1c8] sm:$0xff]
        %v3810 = vld [vmem:[#allocation8 + $0x1d0] sm:$0xff]
        %v3811 = vld [vmem:[#allocation8 + $0x1d8] sm:$0xff]
        %v3812 = vld [vmem:[#allocation8 + $0x1e0] sm:$0xff]
        %v3813 = vld [vmem:[#allocation8 + $0x1e8] sm:$0xff]
        %v3814 = vld [vmem:[#allocation8 + $0x1f0] sm:$0xff]
        %v3815 = vld [vmem:[#allocation8 + $0x1f8] sm:$0xff]
        %v3816 = vld [vmem:[#allocation8 + $0x200] sm:$0xff]
        %v3817 = vld [vmem:[#allocation8 + $0x208] sm:$0xff]
        %v3818 = vld [vmem:[#allocation8 + $0x210] sm:$0xff]
        %v3819 = vld [vmem:[#allocation8 + $0x218] sm:$0xff]
        %v3820 = vld [vmem:[#allocation8 + $0x220] sm:$0xff]
        %v3821 = vld [vmem:[#allocation8 + $0x228] sm:$0xff]
        %v3822 = vld [vmem:[#allocation8 + $0x230] sm:$0xff]
        %v3823 = vld [vmem:[#allocation8 + $0x238] sm:$0xff]
        %v3824 = vld [vmem:[%s1] sm:$0x1]
        %v3826 = vsel %vm2358, %v3749, 0
        %3828 = vmatprep.subr.mxu0 %v3753
        %3829 = vmatpush1.msra.mxu0 %v3752
        %3830 = vmatprep.subr.mxu0 %v3759
        %3831 = vmatpush1.msra.mxu0 %v3758
        %3832 = vmatprep.subr.mxu0 %v3765
        %3833 = vmatpush1.msra.mxu0 %v3764
        %3834 = vmatprep.subr.mxu0 %v3771
        %3835 = vmatpush1.msra.mxu0 %v3770
        %3836 = vmatprep.subr.mxu0 %v3777
        %3837 = vmatpush1.msra.mxu0 %v3776
        %3838 = vmatprep.subr.mxu0 %v3783
        %3839 = vmatpush1.msra.mxu0 %v3782
        %3840 = vmatprep.subr.mxu0 %v3789
        %3841 = vmatpush1.msra.mxu0 %v3788
        %3842 = vmatprep.subr.mxu0 %v3795
        %3843 = vmatpush1.msra.mxu0 %v3794
        %3844 = vmatprep.subr.mxu0 %v3801
        %3845 = vmatpush1.msra.mxu0 %v3800
        %3846 = vmatprep.subr.mxu0 %v3807
        %3847 = vmatpush1.msra.mxu0 %v3806
        %3848 = vmatprep.subr.mxu0 %v3813
        %3849 = vmatpush1.msra.mxu0 %v3812
        %3850 = vmatprep.subr.mxu0 %v3819
        %3851 = vmatpush1.msra.mxu0 %v3818
        %3852 = vmatprep.subr.mxu0 0.0
        %3853 = vmatpush1.msra.mxu0 0.0
        %3854 = vmatprep.subr.mxu0 0.0
        %3855 = vmatpush1.msra.mxu0 0.0
        %3856 = vmatprep.subr.mxu0 0.0
        %3857 = vmatpush1.msra.mxu0 0.0
        %3858 = vmatprep.subr.mxu0 0.0
        %3859 = vmatpush1.msra.mxu0 0.0
        %3860 = vmatprep.subr.mxu0 0.0
        %3861 = vmatpush1.msra.mxu0 0.0
        %3862 = vmatprep.subr.mxu0 0.0
        %3863 = vmatpush1.msra.mxu0 0.0
        %3864 = vmatprep.subr.mxu0 0.0
        %3865 = vmatpush1.msra.mxu0 0.0
        %3866 = vmatprep.subr.mxu0 0.0
        %3867 = vmatpush1.msra.mxu0 0.0
        %3868 = vmatprep.subr.mxu0 0.0
        %3869 = vmatpush1.msra.mxu0 0.0
        %3870 = vmatprep.subr.mxu0 0.0
        %3871 = vmatpush1.msra.mxu0 0.0
        %3872 = vmatprep.subr.mxu0 0.0
        %3873 = vmatpush1.msra.mxu0 0.0
        %3874 = vmatprep.subr.mxu0 0.0
        %3875 = vmatpush1.msra.mxu0 0.0
        %3876 = vmatprep.subr.mxu0 0.0
        %3877 = vmatpush1.msra.mxu0 0.0
        %3878 = vmatprep.subr.mxu0 0.0
        %3879 = vmatpush1.msra.mxu0 0.0
        %3880 = vmatprep.subr.mxu0 0.0
        %3881 = vmatpush1.msra.mxu0 0.0
        %3882 = vmatprep.subr.mxu0 0.0
        %3883 = vmatpush1.msra.mxu0 0.0
        %3884 = vmatprep.subr.mxu0 0.0
        %3885 = vmatpush1.msra.mxu0 0.0
        %3886 = vmatprep.subr.mxu0 0.0
        %3887 = vmatpush1.msra.mxu0 0.0
        %3888 = vmatprep.subr.mxu0 0.0
        %3889 = vmatpush1.msra.mxu0 0.0
        %3890 = vmatprep.subr.mxu0 0.0
        %3891 = vmatpush1.msra.mxu0 0.0
        %3892 = vmatprep.mubr.f32.mxu0 0.0
        %3893 = vmatmul.mubr.f32.gmra.mrb[0].mxu0 %v3826
        %v3894 = vpop.f32.mrb[0].mxu0
        %v3895 = vadd.f32 0.0, %v3894
        %v3896 = vpop.f32.mrb[0].mxu0
        %v3897 = vadd.f32 0.0, %v3896
        %3898 = vdwg.mxu0
        %3899 = vmatprep.subr.mxu0 %v3755
        %3900 = vmatpush1.msra.mxu0 %v3754
        %3901 = vmatprep.subr.mxu0 %v3761
        %3902 = vmatpush1.msra.mxu0 %v3760
        %3903 = vmatprep.subr.mxu0 %v3767
        %3904 = vmatpush1.msra.mxu0 %v3766
        %3905 = vmatprep.subr.mxu0 %v3773
        %3906 = vmatpush1.msra.mxu0 %v3772
        %3907 = vmatprep.subr.mxu0 %v3779
        %3908 = vmatpush1.msra.mxu0 %v3778
        %3909 = vmatprep.subr.mxu0 %v3785
        %3910 = vmatpush1.msra.mxu0 %v3784
        %3911 = vmatprep.subr.mxu0 %v3791
        %3912 = vmatpush1.msra.mxu0 %v3790
        %3913 = vmatprep.subr.mxu0 %v3797
        %3914 = vmatpush1.msra.mxu0 %v3796
        %3915 = vmatprep.subr.mxu0 %v3803
        %3916 = vmatpush1.msra.mxu0 %v3802
        %3917 = vmatprep.subr.mxu0 %v3809
        %3918 = vmatpush1.msra.mxu0 %v3808
        %3919 = vmatprep.subr.mxu0 %v3815
        %3920 = vmatpush1.msra.mxu0 %v3814
        %3921 = vmatprep.subr.mxu0 %v3821
        %3922 = vmatpush1.msra.mxu0 %v3820
        %3923 = vmatprep.subr.mxu0 0.0
        %3924 = vmatpush1.msra.mxu0 0.0
        %3925 = vmatprep.subr.mxu0 0.0
        %3926 = vmatpush1.msra.mxu0 0.0
        %3927 = vmatprep.subr.mxu0 0.0
        %3928 = vmatpush1.msra.mxu0 0.0
        %3929 = vmatprep.subr.mxu0 0.0
        %3930 = vmatpush1.msra.mxu0 0.0
        %3931 = vmatprep.subr.mxu0 0.0
        %3932 = vmatpush1.msra.mxu0 0.0
        %3933 = vmatprep.subr.mxu0 0.0
        %3934 = vmatpush1.msra.mxu0 0.0
        %3935 = vmatprep.subr.mxu0 0.0
        %3936 = vmatpush1.msra.mxu0 0.0
        %3937 = vmatprep.subr.mxu0 0.0
        %3938 = vmatpush1.msra.mxu0 0.0
        %3939 = vmatprep.subr.mxu0 0.0
        %3940 = vmatpush1.msra.mxu0 0.0
        %3941 = vmatprep.subr.mxu0 0.0
        %3942 = vmatpush1.msra.mxu0 0.0
        %3943 = vmatprep.subr.mxu0 0.0
        %3944 = vmatpush1.msra.mxu0 0.0
        %3945 = vmatprep.subr.mxu0 0.0
        %3946 = vmatpush1.msra.mxu0 0.0
        %3947 = vmatprep.subr.mxu0 0.0
        %3948 = vmatpush1.msra.mxu0 0.0
        %3949 = vmatprep.subr.mxu0 0.0
        %3950 = vmatpush1.msra.mxu0 0.0
        %3951 = vmatprep.subr.mxu0 0.0
        %3952 = vmatpush1.msra.mxu0 0.0
        %3953 = vmatprep.subr.mxu0 0.0
        %3954 = vmatpush1.msra.mxu0 0.0
        %3955 = vmatprep.subr.mxu0 0.0
        %3956 = vmatpush1.msra.mxu0 0.0
        %3957 = vmatprep.subr.mxu0 0.0
        %3958 = vmatpush1.msra.mxu0 0.0
        %3959 = vmatprep.subr.mxu0 0.0
        %3960 = vmatpush1.msra.mxu0 0.0
        %3961 = vmatprep.subr.mxu0 0.0
        %3962 = vmatpush1.msra.mxu0 0.0
        %3963 = vmatprep.mubr.f32.mxu0 0.0
        %3964 = vmatmul.mubr.f32.gmra.mrb[0].mxu0 %v3826
        %v3965 = vpop.f32.mrb[0].mxu0
        %v3966 = vadd.f32 0.0, %v3965
        %v3967 = vpop.f32.mrb[0].mxu0
        %v3968 = vadd.f32 0.0, %v3967
        %3969 = vdwg.mxu0
        %3970 = vmatprep.subr.mxu0 %v3757
        %3971 = vmatpush1.msra.mxu0 %v3756
        %3972 = vmatprep.subr.mxu0 %v3763
        %3973 = vmatpush1.msra.mxu0 %v3762
        %3974 = vmatprep.subr.mxu0 %v3769
        %3975 = vmatpush1.msra.mxu0 %v3768
        %3976 = vmatprep.subr.mxu0 %v3775
        %3977 = vmatpush1.msra.mxu0 %v3774
        %3978 = vmatprep.subr.mxu0 %v3781
        %3979 = vmatpush1.msra.mxu0 %v3780
        %3980 = vmatprep.subr.mxu0 %v3787
        %3981 = vmatpush1.msra.mxu0 %v3786
        %3982 = vmatprep.subr.mxu0 %v3793
        %3983 = vmatpush1.msra.mxu0 %v3792
        %3984 = vmatprep.subr.mxu0 %v3799
        %3985 = vmatpush1.msra.mxu0 %v3798
        %3986 = vmatprep.subr.mxu0 %v3805
        %3987 = vmatpush1.msra.mxu0 %v3804
        %3988 = vmatprep.subr.mxu0 %v3811
        %3989 = vmatpush1.msra.mxu0 %v3810
        %3990 = vmatprep.subr.mxu0 %v3817
        %3991 = vmatpush1.msra.mxu0 %v3816
        %3992 = vmatprep.subr.mxu0 %v3823
        %3993 = vmatpush1.msra.mxu0 %v3822
        %3994 = vmatprep.subr.mxu0 0.0
        %3995 = vmatpush1.msra.mxu0 0.0
        %3996 = vmatprep.subr.mxu0 0.0
        %3997 = vmatpush1.msra.mxu0 0.0
        %3998 = vmatprep.subr.mxu0 0.0
        %3999 = vmatpush1.msra.mxu0 0.0
        %4000 = vmatprep.subr.mxu0 0.0
        %4001 = vmatpush1.msra.mxu0 0.0
        %4002 = vmatprep.subr.mxu0 0.0
        %4003 = vmatpush1.msra.mxu0 0.0
        %4004 = vmatprep.subr.mxu0 0.0
        %4005 = vmatpush1.msra.mxu0 0.0
        %4006 = vmatprep.subr.mxu0 0.0
        %4007 = vmatpush1.msra.mxu0 0.0
        %4008 = vmatprep.subr.mxu0 0.0
        %4009 = vmatpush1.msra.mxu0 0.0
        %4010 = vmatprep.subr.mxu0 0.0
        %4011 = vmatpush1.msra.mxu0 0.0
        %4012 = vmatprep.subr.mxu0 0.0
        %4013 = vmatpush1.msra.mxu0 0.0
        %4014 = vmatprep.subr.mxu0 0.0
        %4015 = vmatpush1.msra.mxu0 0.0
        %4016 = vmatprep.subr.mxu0 0.0
        %4017 = vmatpush1.msra.mxu0 0.0
        %4018 = vmatprep.subr.mxu0 0.0
        %4019 = vmatpush1.msra.mxu0 0.0
        %4020 = vmatprep.subr.mxu0 0.0
        %4021 = vmatpush1.msra.mxu0 0.0
        %4022 = vmatprep.subr.mxu0 0.0
        %4023 = vmatpush1.msra.mxu0 0.0
        %4024 = vmatprep.subr.mxu0 0.0
        %4025 = vmatpush1.msra.mxu0 0.0
        %4026 = vmatprep.subr.mxu0 0.0
        %4027 = vmatpush1.msra.mxu0 0.0
        %4028 = vmatprep.subr.mxu0 0.0
        %4029 = vmatpush1.msra.mxu0 0.0
        %4030 = vmatprep.subr.mxu0 0.0
        %4031 = vmatpush1.msra.mxu0 0.0
        %4032 = vmatprep.subr.mxu0 0.0
        %4033 = vmatpush1.msra.mxu0 0.0
        %4034 = vmatprep.mubr.f32.mxu0 0.0
        %4035 = vmatmul.mubr.f32.gmra.mrb[0].mxu0 %v3826
        %v4036 = vpop.f32.mrb[0].mxu0
        %v4037 = vadd.f32 0.0, %v4036
        %v4038 = vpop.f32.mrb[0].mxu0
        %v4039 = vadd.f32 0.0, %v4038
        %4040 = vdwg.mxu0
        %v4043 = vrot.slane %v3897, 4
        %v4044 = vrot.slane %v3966, 4
        %4045 = vrot.lane.b32.xlu0 %v4043, 64
        %v4046 = vpop.permute.xlu0 %4045
        %4047 = vrot.lane.b32.xlu0 %v4044, 64
        %v4048 = vpop.permute.xlu0 %4047
        %v4049 = vsel %vm1206, %v4046, %v4048
        %v4054 = vrot.slane %v4037, 4
        %v4055 = vrot.slane %v4039, 4
        %4056 = vrot.lane.b32.xlu0 %v4054, 64
        %v4057 = vpop.permute.xlu0 %4056
        %4058 = vrot.lane.b32.xlu0 %v4055, 64
        %v4059 = vpop.permute.xlu0 %4058
        %v4060 = vsel %vm1206, %v4057, %v4059
        %v4063 = vsel %vm2687, %v3895, %v4049
        %v4064 = vsel %vm2687, %v3897, %v4048
        %v4065 = vsel %vm2687, %v3968, %v4060
        %v4066 = vsel %vm2687, %v4037, %v4059
        %v4068 = vsel %vm1141, %v3824, 0
        %4070 = vmatprep.subr.mxu0 %v4064
        %4071 = vmatpush1.msra.mxu0 %v4063
        %4072 = vmatprep.subr.mxu0 %v4066
        %4073 = vmatpush1.msra.mxu0 %v4065
        %4074 = vmatprep.subr.mxu0 0.0
        %4075 = vmatpush1.msra.mxu0 0.0
        %4076 = vmatprep.subr.mxu0 0.0
        %4077 = vmatpush1.msra.mxu0 0.0
        %4078 = vmatprep.subr.mxu0 0.0
        %4079 = vmatpush1.msra.mxu0 0.0
        %4080 = vmatprep.subr.mxu0 0.0
        %4081 = vmatpush1.msra.mxu0 0.0
        %4082 = vmatprep.subr.mxu0 0.0
        %4083 = vmatpush1.msra.mxu0 0.0
        %4084 = vmatprep.subr.mxu0 0.0
        %4085 = vmatpush1.msra.mxu0 0.0
        %4086 = vmatprep.subr.mxu0 0.0
        %4087 = vmatpush1.msra.mxu0 0.0
        %4088 = vmatprep.subr.mxu0 0.0
        %4089 = vmatpush1.msra.mxu0 0.0
        %4090 = vmatprep.subr.mxu0 0.0
        %4091 = vmatpush1.msra.mxu0 0.0
        %4092 = vmatprep.subr.mxu0 0.0
        %4093 = vmatpush1.msra.mxu0 0.0
        %4094 = vmatprep.subr.mxu0 0.0
        %4095 = vmatpush1.msra.mxu0 0.0
        %4096 = vmatprep.subr.mxu0 0.0
        %4097 = vmatpush1.msra.mxu0 0.0
        %4098 = vmatprep.subr.mxu0 0.0
        %4099 = vmatpush1.msra.mxu0 0.0
        %4100 = vmatprep.subr.mxu0 0.0
        %4101 = vmatpush1.msra.mxu0 0.0
        %4102 = vmatprep.subr.mxu0 0.0
        %4103 = vmatpush1.msra.mxu0 0.0
        %4104 = vmatprep.subr.mxu0 0.0
        %4105 = vmatpush1.msra.mxu0 0.0
        %4106 = vmatprep.subr.mxu0 0.0
        %4107 = vmatpush1.msra.mxu0 0.0
        %4108 = vmatprep.subr.mxu0 0.0
        %4109 = vmatpush1.msra.mxu0 0.0
        %4110 = vmatprep.subr.mxu0 0.0
        %4111 = vmatpush1.msra.mxu0 0.0
        %4112 = vmatprep.subr.mxu0 0.0
        %4113 = vmatpush1.msra.mxu0 0.0
        %4114 = vmatprep.subr.mxu0 0.0
        %4115 = vmatpush1.msra.mxu0 0.0
        %4116 = vmatprep.subr.mxu0 0.0
        %4117 = vmatpush1.msra.mxu0 0.0
        %4118 = vmatprep.subr.mxu0 0.0
        %4119 = vmatpush1.msra.mxu0 0.0
        %4120 = vmatprep.subr.mxu0 0.0
        %4121 = vmatpush1.msra.mxu0 0.0
        %4122 = vmatprep.subr.mxu0 0.0
        %4123 = vmatpush1.msra.mxu0 0.0
        %4124 = vmatprep.subr.mxu0 0.0
        %4125 = vmatpush1.msra.mxu0 0.0
        %4126 = vmatprep.subr.mxu0 0.0
        %4127 = vmatpush1.msra.mxu0 0.0
        %4128 = vmatprep.subr.mxu0 0.0
        %4129 = vmatpush1.msra.mxu0 0.0
        %4130 = vmatprep.subr.mxu0 0.0
        %4131 = vmatpush1.msra.mxu0 0.0
        %4132 = vmatprep.subr.mxu0 0.0
        %4133 = vmatpush1.msra.mxu0 0.0
        %4134 = vmatprep.mubr.f32.mxu0 0.0
        %4135 = vmatmul.mubr.f32.gmra.mrb[0].mxu0 %v4068
        %v4136 = vpop.f32.mrb[0].mxu0
        %v4137 = vadd.f32 0.0002, %v4136
        %v4138 = vpop.f32.mrb[0].mxu0
        %v4139 = vadd.f32 0.0002, %v4138
        %4140 = vdwg.mxu0
        %v4141 = vmax.f32 %v4137, 0.0
        %v4142 = vmax.f32 %v4139, 0.0
        %v4143 = vld [vmem:[%s5] sm:$0xff]
        %v4144 = vld [vmem:[%s5 + $0x8] sm:$0xff]
        %v4145 = vld [vmem:[%s5 + $0x10] sm:$0xff]
        %v4146 = vld [vmem:[%s5 + $0x18] sm:$0xff]
        %v4147 = vld [vmem:[%s5 + $0x20] sm:$0xff]
        %v4148 = vld [vmem:[%s5 + $0x28] sm:$0xff]
        %v4149 = vld [vmem:[%s5 + $0x30] sm:$0xff]
        %v4150 = vld [vmem:[%s5 + $0x38] sm:$0xff]
        %v4151 = vld [vmem:[%s5 + $0x40] sm:$0xff]
        %v4152 = vld [vmem:[%s5 + $0x48] sm:$0xff]
        %v4153 = vld [vmem:[%s5 + $0x50] sm:$0xff]
        %v4154 = vld [vmem:[%s5 + $0x58] sm:$0xff]
        %v4155 = vld [vmem:[%s5 + $0x60] sm:$0xff]
        %v4156 = vld [vmem:[%s5 + $0x68] sm:$0xff]
        %v4157 = vld [vmem:[%s5 + $0x70] sm:$0xff]
        %v4158 = vld [vmem:[%s5 + $0x78] sm:$0xff]
        %v4159 = vld [vmem:[%s5 + $0x80] sm:$0xff]
        %v4160 = vld [vmem:[%s5 + $0x88] sm:$0xff]
        %v4161 = vld [vmem:[%s5 + $0x90] sm:$0xff]
        %v4162 = vld [vmem:[%s5 + $0x98] sm:$0xff]
        %v4163 = vld [vmem:[%s5 + $0xa0] sm:$0xff]
        %v4164 = vld [vmem:[%s5 + $0xa8] sm:$0xff]
        %v4165 = vld [vmem:[%s5 + $0xb0] sm:$0xff]
        %v4166 = vld [vmem:[%s5 + $0xb8] sm:$0xff]
        %v4167 = vld [vmem:[%s5 + $0xc0] sm:$0xff]
        %v4168 = vld [vmem:[%s5 + $0xc8] sm:$0xff]
        %v4169 = vld [vmem:[%s5 + $0xd0] sm:$0xff]
        %v4170 = vld [vmem:[%s5 + $0xd8] sm:$0xff]
        %v4171 = vld [vmem:[%s5 + $0xe0] sm:$0xff]
        %v4172 = vld [vmem:[%s5 + $0xe8] sm:$0xff]
        %v4173 = vld [vmem:[%s5 + $0xf0] sm:$0xff]
        %v4174 = vld [vmem:[%s5 + $0xf8] sm:$0xff]
        %v4175 = vld [vmem:[%s5 + $0x100] sm:$0xff]
        %v4176 = vld [vmem:[%s5 + $0x108] sm:$0xff]
        %v4177 = vld [vmem:[%s5 + $0x110] sm:$0xff]
        %v4178 = vld [vmem:[%s5 + $0x118] sm:$0xff]
        %v4179 = vld [vmem:[%s5 + $0x120] sm:$0xff]
        %v4180 = vld [vmem:[%s5 + $0x128] sm:$0xff]
        %v4181 = vld [vmem:[%s5 + $0x130] sm:$0xff]
        %v4182 = vld [vmem:[%s5 + $0x138] sm:$0xff]
        %v4183 = vld [vmem:[%s5 + $0x140] sm:$0xff]
        %v4184 = vld [vmem:[%s5 + $0x148] sm:$0xff]
        %v4185 = vld [vmem:[%s5 + $0x150] sm:$0xff]
        %v4186 = vld [vmem:[%s5 + $0x158] sm:$0xff]
        %v4187 = vld [vmem:[%s5 + $0x160] sm:$0xff]
        %v4188 = vld [vmem:[%s5 + $0x168] sm:$0xff]
        %v4189 = vld [vmem:[%s5 + $0x170] sm:$0xff]
        %v4190 = vld [vmem:[%s5 + $0x178] sm:$0xff]
        %v4192 = vsel %vm1206, %v4142, 0
        %4194 = vmatprep.subr.mxu0 %v4144
        %4195 = vmatpush1.msra.mxu0 %v4143
        %4196 = vmatprep.subr.mxu0 %v4146
        %4197 = vmatpush1.msra.mxu0 %v4145
        %4198 = vmatprep.subr.mxu0 %v4148
        %4199 = vmatpush1.msra.mxu0 %v4147
        %4200 = vmatprep.subr.mxu0 %v4150
        %4201 = vmatpush1.msra.mxu0 %v4149
        %4202 = vmatprep.subr.mxu0 %v4152
        %4203 = vmatpush1.msra.mxu0 %v4151
        %4204 = vmatprep.subr.mxu0 %v4154
        %4205 = vmatpush1.msra.mxu0 %v4153
        %4206 = vmatprep.subr.mxu0 %v4156
        %4207 = vmatpush1.msra.mxu0 %v4155
        %4208 = vmatprep.subr.mxu0 %v4158
        %4209 = vmatpush1.msra.mxu0 %v4157
        %4210 = vmatprep.subr.mxu0 %v4160
        %4211 = vmatpush1.msra.mxu0 %v4159
        %4212 = vmatprep.subr.mxu0 %v4162
        %4213 = vmatpush1.msra.mxu0 %v4161
        %4214 = vmatprep.subr.mxu0 %v4164
        %4215 = vmatpush1.msra.mxu0 %v4163
        %4216 = vmatprep.subr.mxu0 %v4166
        %4217 = vmatpush1.msra.mxu0 %v4165
        %4218 = vmatprep.subr.mxu0 %v4168
        %4219 = vmatpush1.msra.mxu0 %v4167
        %4220 = vmatprep.subr.mxu0 %v4170
        %4221 = vmatpush1.msra.mxu0 %v4169
        %4222 = vmatprep.subr.mxu0 %v4172
        %4223 = vmatpush1.msra.mxu0 %v4171
        %4224 = vmatprep.subr.mxu0 %v4174
        %4225 = vmatpush1.msra.mxu0 %v4173
        %4226 = vmatprep.subr.mxu0 %v4176
        %4227 = vmatpush1.msra.mxu0 %v4175
        %4228 = vmatprep.subr.mxu0 %v4178
        %4229 = vmatpush1.msra.mxu0 %v4177
        %4230 = vmatprep.subr.mxu0 %v4180
        %4231 = vmatpush1.msra.mxu0 %v4179
        %4232 = vmatprep.subr.mxu0 %v4182
        %4233 = vmatpush1.msra.mxu0 %v4181
        %4234 = vmatprep.subr.mxu0 %v4184
        %4235 = vmatpush1.msra.mxu0 %v4183
        %4236 = vmatprep.subr.mxu0 %v4186
        %4237 = vmatpush1.msra.mxu0 %v4185
        %4238 = vmatprep.subr.mxu0 %v4188
        %4239 = vmatpush1.msra.mxu0 %v4187
        %4240 = vmatprep.subr.mxu0 %v4190
        %4241 = vmatpush1.msra.mxu0 %v4189
        %4242 = vmatprep.subr.mxu0 0.0
        %4243 = vmatpush1.msra.mxu0 0.0
        %4244 = vmatprep.subr.mxu0 0.0
        %4245 = vmatpush1.msra.mxu0 0.0
        %4246 = vmatprep.subr.mxu0 0.0
        %4247 = vmatpush1.msra.mxu0 0.0
        %4248 = vmatprep.subr.mxu0 0.0
        %4249 = vmatpush1.msra.mxu0 0.0
        %4250 = vmatprep.subr.mxu0 0.0
        %4251 = vmatpush1.msra.mxu0 0.0
        %4252 = vmatprep.subr.mxu0 0.0
        %4253 = vmatpush1.msra.mxu0 0.0
        %4254 = vmatprep.subr.mxu0 0.0
        %4255 = vmatpush1.msra.mxu0 0.0
        %4256 = vmatprep.subr.mxu0 0.0
        %4257 = vmatpush1.msra.mxu0 0.0
        %4258 = vmatprep.mubr.f32.mxu0 %v4192
        %4259 = vmatmul.mubr.f32.gmra.mrb[0].mxu0 %v4141
        %v4260 = vpop.f32.mrb[0].mxu0
        %v4261 = vadd.f32 0.0003, %v4260
        %v4262 = vpop.f32.mrb[0].mxu0
        %v4263 = vadd.f32 0.0003, %v4262
        %4264 = vdwg.mxu0
        %v4265 = vmax.f32 %v4261, 0.0
        %v4266 = vmax.f32 %v4263, 0.0
        %v4267 = vld [vmem:[%s5 + $0x180] sm:$0xff]
        %v4268 = vld [vmem:[%s5 + $0x188] sm:$0xff]
        %v4269 = vld [vmem:[%s5 + $0x190] sm:$0xff]
        %v4270 = vld [vmem:[%s5 + $0x198] sm:$0xff]
        %v4271 = vld [vmem:[%s5 + $0x1a0] sm:$0xff]
        %v4272 = vld [vmem:[%s5 + $0x1a8] sm:$0xff]
        %v4273 = vld [vmem:[%s5 + $0x1b0] sm:$0xff]
        %v4274 = vld [vmem:[%s5 + $0x1b8] sm:$0xff]
        %v4275 = vld [vmem:[%s5 + $0x1c0] sm:$0xff]
        %v4276 = vld [vmem:[%s5 + $0x1c8] sm:$0xff]
        %v4277 = vld [vmem:[%s5 + $0x1d0] sm:$0xff]
        %v4278 = vld [vmem:[%s5 + $0x1d8] sm:$0xff]
        %v4279 = vld [vmem:[%s5 + $0x1e0] sm:$0xff]
        %v4280 = vld [vmem:[%s5 + $0x1e8] sm:$0xff]
        %v4281 = vld [vmem:[%s5 + $0x1f0] sm:$0xff]
        %v4282 = vld [vmem:[%s5 + $0x1f8] sm:$0xff]
        %v4283 = vld [vmem:[%s5 + $0x200] sm:$0xff]
        %v4284 = vld [vmem:[%s5 + $0x208] sm:$0xff]
        %v4285 = vld [vmem:[%s5 + $0x210] sm:$0xff]
        %v4286 = vld [vmem:[%s5 + $0x218] sm:$0xff]
        %v4287 = vld [vmem:[%s5 + $0x220] sm:$0xff]
        %v4288 = vld [vmem:[%s5 + $0x228] sm:$0xff]
        %v4289 = vld [vmem:[%s5 + $0x230] sm:$0xff]
        %v4290 = vld [vmem:[%s5 + $0x238] sm:$0xff]
        %v4291 = vld [vmem:[%s5 + $0x240] sm:$0xff]
        %v4292 = vld [vmem:[%s5 + $0x248] sm:$0xff]
        %v4293 = vld [vmem:[%s5 + $0x250] sm:$0xff]
        %v4294 = vld [vmem:[%s5 + $0x258] sm:$0xff]
        %v4295 = vld [vmem:[%s5 + $0x260] sm:$0xff]
        %v4296 = vld [vmem:[%s5 + $0x268] sm:$0xff]
        %v4297 = vld [vmem:[%s5 + $0x270] sm:$0xff]
        %v4298 = vld [vmem:[%s5 + $0x278] sm:$0xff]
        %v4299 = vld [vmem:[%s5 + $0x280] sm:$0xff]
        %v4300 = vld [vmem:[%s5 + $0x288] sm:$0xff]
        %v4301 = vld [vmem:[%s5 + $0x290] sm:$0xff]
        %v4302 = vld [vmem:[%s5 + $0x298] sm:$0xff]
        %v4303 = vld [vmem:[%s5 + $0x2a0] sm:$0xff]
        %v4304 = vld [vmem:[%s5 + $0x2a8] sm:$0xff]
        %v4305 = vld [vmem:[%s5 + $0x2b0] sm:$0xff]
        %v4306 = vld [vmem:[%s5 + $0x2b8] sm:$0xff]
        %v4307 = vld [vmem:[%s5 + $0x2c0] sm:$0xff]
        %v4308 = vld [vmem:[%s5 + $0x2c8] sm:$0xff]
        %v4309 = vld [vmem:[%s5 + $0x2d0] sm:$0xff]
        %v4310 = vld [vmem:[%s5 + $0x2d8] sm:$0xff]
        %v4311 = vld [vmem:[%s5 + $0x2e0] sm:$0xff]
        %v4312 = vld [vmem:[%s5 + $0x2e8] sm:$0xff]
        %v4313 = vld [vmem:[%s5 + $0x2f0] sm:$0xff]
        %v4314 = vld [vmem:[%s5 + $0x2f8] sm:$0xff]
        %v4316 = vsel %vm1206, %v4266, 0
        %4318 = vmatprep.subr.mxu0 %v4268
        %4319 = vmatpush1.msra.mxu0 %v4267
        %4320 = vmatprep.subr.mxu0 %v4270
        %4321 = vmatpush1.msra.mxu0 %v4269
        %4322 = vmatprep.subr.mxu0 %v4272
        %4323 = vmatpush1.msra.mxu0 %v4271
        %4324 = vmatprep.subr.mxu0 %v4274
        %4325 = vmatpush1.msra.mxu0 %v4273
        %4326 = vmatprep.subr.mxu0 %v4276
        %4327 = vmatpush1.msra.mxu0 %v4275
        %4328 = vmatprep.subr.mxu0 %v4278
        %4329 = vmatpush1.msra.mxu0 %v4277
        %4330 = vmatprep.subr.mxu0 %v4280
        %4331 = vmatpush1.msra.mxu0 %v4279
        %4332 = vmatprep.subr.mxu0 %v4282
        %4333 = vmatpush1.msra.mxu0 %v4281
        %4334 = vmatprep.subr.mxu0 %v4284
        %4335 = vmatpush1.msra.mxu0 %v4283
        %4336 = vmatprep.subr.mxu0 %v4286
        %4337 = vmatpush1.msra.mxu0 %v4285
        %4338 = vmatprep.subr.mxu0 %v4288
        %4339 = vmatpush1.msra.mxu0 %v4287
        %4340 = vmatprep.subr.mxu0 %v4290
        %4341 = vmatpush1.msra.mxu0 %v4289
        %4342 = vmatprep.subr.mxu0 %v4292
        %4343 = vmatpush1.msra.mxu0 %v4291
        %4344 = vmatprep.subr.mxu0 %v4294
        %4345 = vmatpush1.msra.mxu0 %v4293
        %4346 = vmatprep.subr.mxu0 %v4296
        %4347 = vmatpush1.msra.mxu0 %v4295
        %4348 = vmatprep.subr.mxu0 %v4298
        %4349 = vmatpush1.msra.mxu0 %v4297
        %4350 = vmatprep.subr.mxu0 %v4300
        %4351 = vmatpush1.msra.mxu0 %v4299
        %4352 = vmatprep.subr.mxu0 %v4302
        %4353 = vmatpush1.msra.mxu0 %v4301
        %4354 = vmatprep.subr.mxu0 %v4304
        %4355 = vmatpush1.msra.mxu0 %v4303
        %4356 = vmatprep.subr.mxu0 %v4306
        %4357 = vmatpush1.msra.mxu0 %v4305
        %4358 = vmatprep.subr.mxu0 %v4308
        %4359 = vmatpush1.msra.mxu0 %v4307
        %4360 = vmatprep.subr.mxu0 %v4310
        %4361 = vmatpush1.msra.mxu0 %v4309
        %4362 = vmatprep.subr.mxu0 %v4312
        %4363 = vmatpush1.msra.mxu0 %v4311
        %4364 = vmatprep.subr.mxu0 %v4314
        %4365 = vmatpush1.msra.mxu0 %v4313
        %4366 = vmatprep.subr.mxu0 0.0
        %4367 = vmatpush1.msra.mxu0 0.0
        %4368 = vmatprep.subr.mxu0 0.0
        %4369 = vmatpush1.msra.mxu0 0.0
        %4370 = vmatprep.subr.mxu0 0.0
        %4371 = vmatpush1.msra.mxu0 0.0
        %4372 = vmatprep.subr.mxu0 0.0
        %4373 = vmatpush1.msra.mxu0 0.0
        %4374 = vmatprep.subr.mxu0 0.0
        %4375 = vmatpush1.msra.mxu0 0.0
        %4376 = vmatprep.subr.mxu0 0.0
        %4377 = vmatpush1.msra.mxu0 0.0
        %4378 = vmatprep.subr.mxu0 0.0
        %4379 = vmatpush1.msra.mxu0 0.0
        %4380 = vmatprep.subr.mxu0 0.0
        %4381 = vmatpush1.msra.mxu0 0.0
        %4382 = vmatprep.mubr.f32.mxu0 %v4316
        %4383 = vmatmul.mubr.f32.gmra.mrb[0].mxu0 %v4265
        %v4384 = vpop.f32.mrb[0].mxu0
        %v4385 = vadd.f32 0.0003, %v4384
        %v4386 = vpop.f32.mrb[0].mxu0
        %v4387 = vadd.f32 0.0003, %v4386
        %4388 = vdwg.mxu0
        %v4389 = vmax.f32 %v4385, 0.0
        %v4390 = vmax.f32 %v4387, 0.0
        %v4391 = vld [vmem:[%s5 + $0x300] sm:$0xff]
        %v4392 = vld [vmem:[%s5 + $0x308] sm:$0xff]
        %v4393 = vld [vmem:[%s5 + $0x310] sm:$0xff]
        %v4394 = vld [vmem:[%s5 + $0x318] sm:$0xff]
        %v4395 = vld [vmem:[%s5 + $0x320] sm:$0xff]
        %v4396 = vld [vmem:[%s5 + $0x328] sm:$0xff]
        %v4397 = vld [vmem:[%s5 + $0x330] sm:$0xff]
        %v4398 = vld [vmem:[%s5 + $0x338] sm:$0xff]
        %v4399 = vld [vmem:[%s5 + $0x340] sm:$0xff]
        %v4400 = vld [vmem:[%s5 + $0x348] sm:$0xff]
        %v4401 = vld [vmem:[%s5 + $0x350] sm:$0xff]
        %v4402 = vld [vmem:[%s5 + $0x358] sm:$0xff]
        %v4403 = vld [vmem:[%s5 + $0x360] sm:$0xff]
        %v4404 = vld [vmem:[%s5 + $0x368] sm:$0xff]
        %v4405 = vld [vmem:[%s5 + $0x370] sm:$0xff]
        %v4406 = vld [vmem:[%s5 + $0x378] sm:$0xff]
        %v4407 = vld [vmem:[%s5 + $0x380] sm:$0xff]
        %v4408 = vld [vmem:[%s5 + $0x388] sm:$0xff]
        %v4409 = vld [vmem:[%s5 + $0x390] sm:$0xff]
        %v4410 = vld [vmem:[%s5 + $0x398] sm:$0xff]
        %v4411 = vld [vmem:[%s5 + $0x3a0] sm:$0xff]
        %v4412 = vld [vmem:[%s5 + $0x3a8] sm:$0xff]
        %v4413 = vld [vmem:[%s5 + $0x3b0] sm:$0xff]
        %v4414 = vld [vmem:[%s5 + $0x3b8] sm:$0xff]
        %v4415 = vld [vmem:[%s5 + $0x3c0] sm:$0xff]
        %v4416 = vld [vmem:[%s5 + $0x3c8] sm:$0xff]
        %v4417 = vld [vmem:[%s5 + $0x3d0] sm:$0xff]
        %v4418 = vld [vmem:[%s5 + $0x3d8] sm:$0xff]
        %v4419 = vld [vmem:[%s5 + $0x3e0] sm:$0xff]
        %v4420 = vld [vmem:[%s5 + $0x3e8] sm:$0xff]
        %v4421 = vld [vmem:[%s5 + $0x3f0] sm:$0xff]
        %v4422 = vld [vmem:[%s5 + $0x3f8] sm:$0xff]
        %v4423 = vld [vmem:[%s5 + $0x400] sm:$0xff]
        %v4424 = vld [vmem:[%s5 + $0x408] sm:$0xff]
        %v4425 = vld [vmem:[%s5 + $0x410] sm:$0xff]
        %v4426 = vld [vmem:[%s5 + $0x418] sm:$0xff]
        %v4427 = vld [vmem:[%s5 + $0x420] sm:$0xff]
        %v4428 = vld [vmem:[%s5 + $0x428] sm:$0xff]
        %v4429 = vld [vmem:[%s5 + $0x430] sm:$0xff]
        %v4430 = vld [vmem:[%s5 + $0x438] sm:$0xff]
        %v4431 = vld [vmem:[%s5 + $0x440] sm:$0xff]
        %v4432 = vld [vmem:[%s5 + $0x448] sm:$0xff]
        %v4433 = vld [vmem:[%s5 + $0x450] sm:$0xff]
        %v4434 = vld [vmem:[%s5 + $0x458] sm:$0xff]
        %v4435 = vld [vmem:[%s5 + $0x460] sm:$0xff]
        %v4436 = vld [vmem:[%s5 + $0x468] sm:$0xff]
        %v4437 = vld [vmem:[%s5 + $0x470] sm:$0xff]
        %v4438 = vld [vmem:[%s5 + $0x478] sm:$0xff]
        %v4440 = vsel %vm1206, %v4390, 0
        %4442 = vmatprep.subr.mxu0 %v4392
        %4443 = vmatpush1.msra.mxu0 %v4391
        %4444 = vmatprep.subr.mxu0 %v4394
        %4445 = vmatpush1.msra.mxu0 %v4393
        %4446 = vmatprep.subr.mxu0 %v4396
        %4447 = vmatpush1.msra.mxu0 %v4395
        %4448 = vmatprep.subr.mxu0 %v4398
        %4449 = vmatpush1.msra.mxu0 %v4397
        %4450 = vmatprep.subr.mxu0 %v4400
        %4451 = vmatpush1.msra.mxu0 %v4399
        %4452 = vmatprep.subr.mxu0 %v4402
        %4453 = vmatpush1.msra.mxu0 %v4401
        %4454 = vmatprep.subr.mxu0 %v4404
        %4455 = vmatpush1.msra.mxu0 %v4403
        %4456 = vmatprep.subr.mxu0 %v4406
        %4457 = vmatpush1.msra.mxu0 %v4405
        %4458 = vmatprep.subr.mxu0 %v4408
        %4459 = vmatpush1.msra.mxu0 %v4407
        %4460 = vmatprep.subr.mxu0 %v4410
        %4461 = vmatpush1.msra.mxu0 %v4409
        %4462 = vmatprep.subr.mxu0 %v4412
        %4463 = vmatpush1.msra.mxu0 %v4411
        %4464 = vmatprep.subr.mxu0 %v4414
        %4465 = vmatpush1.msra.mxu0 %v4413
        %4466 = vmatprep.subr.mxu0 %v4416
        %4467 = vmatpush1.msra.mxu0 %v4415
        %4468 = vmatprep.subr.mxu0 %v4418
        %4469 = vmatpush1.msra.mxu0 %v4417
        %4470 = vmatprep.subr.mxu0 %v4420
        %4471 = vmatpush1.msra.mxu0 %v4419
        %4472 = vmatprep.subr.mxu0 %v4422
        %4473 = vmatpush1.msra.mxu0 %v4421
        %4474 = vmatprep.subr.mxu0 %v4424
        %4475 = vmatpush1.msra.mxu0 %v4423
        %4476 = vmatprep.subr.mxu0 %v4426
        %4477 = vmatpush1.msra.mxu0 %v4425
        %4478 = vmatprep.subr.mxu0 %v4428
        %4479 = vmatpush1.msra.mxu0 %v4427
        %4480 = vmatprep.subr.mxu0 %v4430
        %4481 = vmatpush1.msra.mxu0 %v4429
        %4482 = vmatprep.subr.mxu0 %v4432
        %4483 = vmatpush1.msra.mxu0 %v4431
        %4484 = vmatprep.subr.mxu0 %v4434
        %4485 = vmatpush1.msra.mxu0 %v4433
        %4486 = vmatprep.subr.mxu0 %v4436
        %4487 = vmatpush1.msra.mxu0 %v4435
        %4488 = vmatprep.subr.mxu0 %v4438
        %4489 = vmatpush1.msra.mxu0 %v4437
        %4490 = vmatprep.subr.mxu0 0.0
        %4491 = vmatpush1.msra.mxu0 0.0
        %4492 = vmatprep.subr.mxu0 0.0
        %4493 = vmatpush1.msra.mxu0 0.0
        %4494 = vmatprep.subr.mxu0 0.0
        %4495 = vmatpush1.msra.mxu0 0.0
        %4496 = vmatprep.subr.mxu0 0.0
        %4497 = vmatpush1.msra.mxu0 0.0
        %4498 = vmatprep.subr.mxu0 0.0
        %4499 = vmatpush1.msra.mxu0 0.0
        %4500 = vmatprep.subr.mxu0 0.0
        %4501 = vmatpush1.msra.mxu0 0.0
        %4502 = vmatprep.subr.mxu0 0.0
        %4503 = vmatpush1.msra.mxu0 0.0
        %4504 = vmatprep.subr.mxu0 0.0
        %4505 = vmatpush1.msra.mxu0 0.0
        %4506 = vmatprep.mubr.f32.mxu0 %v4440
        %4507 = vmatmul.mubr.f32.gmra.mrb[0].mxu0 %v4389
        %v4508 = vpop.f32.mrb[0].mxu0
        %v4509 = vadd.f32 0.0003, %v4508
        %v4510 = vpop.f32.mrb[0].mxu0
        %v4511 = vadd.f32 0.0003, %v4510
        %4512 = vdwg.mxu0
        %v4513 = vmax.f32 %v4509, 0.0
        %v4514 = vmax.f32 %v4511, 0.0
        %v4515 = vld [vmem:[%s5 + $0x480] sm:$0xff]
        %v4516 = vld [vmem:[%s5 + $0x488] sm:$0xff]
        %v4517 = vld [vmem:[%s5 + $0x490] sm:$0xff]
        %v4518 = vld [vmem:[%s5 + $0x498] sm:$0xff]
        %v4519 = vld [vmem:[%s5 + $0x4a0] sm:$0xff]
        %v4520 = vld [vmem:[%s5 + $0x4a8] sm:$0xff]
        %v4521 = vld [vmem:[%s5 + $0x4b0] sm:$0xff]
        %v4522 = vld [vmem:[%s5 + $0x4b8] sm:$0xff]
        %v4523 = vld [vmem:[%s5 + $0x4c0] sm:$0xff]
        %v4524 = vld [vmem:[%s5 + $0x4c8] sm:$0xff]
        %v4525 = vld [vmem:[%s5 + $0x4d0] sm:$0xff]
        %v4526 = vld [vmem:[%s5 + $0x4d8] sm:$0xff]
        %v4527 = vld [vmem:[%s5 + $0x4e0] sm:$0xff]
        %v4528 = vld [vmem:[%s5 + $0x4e8] sm:$0xff]
        %v4529 = vld [vmem:[%s5 + $0x4f0] sm:$0xff]
        %v4530 = vld [vmem:[%s5 + $0x4f8] sm:$0xff]
        %v4531 = vld [vmem:[%s5 + $0x500] sm:$0xff]
        %v4532 = vld [vmem:[%s5 + $0x508] sm:$0xff]
        %v4533 = vld [vmem:[%s5 + $0x510] sm:$0xff]
        %v4534 = vld [vmem:[%s5 + $0x518] sm:$0xff]
        %v4535 = vld [vmem:[%s5 + $0x520] sm:$0xff]
        %v4536 = vld [vmem:[%s5 + $0x528] sm:$0xff]
        %v4537 = vld [vmem:[%s5 + $0x530] sm:$0xff]
        %v4538 = vld [vmem:[%s5 + $0x538] sm:$0xff]
        %v4539 = vld [vmem:[%s5 + $0x540] sm:$0xff]
        %v4540 = vld [vmem:[%s5 + $0x548] sm:$0xff]
        %v4541 = vld [vmem:[%s5 + $0x550] sm:$0xff]
        %v4542 = vld [vmem:[%s5 + $0x558] sm:$0xff]
        %v4543 = vld [vmem:[%s5 + $0x560] sm:$0xff]
        %v4544 = vld [vmem:[%s5 + $0x568] sm:$0xff]
        %v4545 = vld [vmem:[%s5 + $0x570] sm:$0xff]
        %v4546 = vld [vmem:[%s5 + $0x578] sm:$0xff]
        %v4547 = vld [vmem:[%s5 + $0x580] sm:$0xff]
        %v4548 = vld [vmem:[%s5 + $0x588] sm:$0xff]
        %v4549 = vld [vmem:[%s5 + $0x590] sm:$0xff]
        %v4550 = vld [vmem:[%s5 + $0x598] sm:$0xff]
        %v4551 = vld [vmem:[%s5 + $0x5a0] sm:$0xff]
        %v4552 = vld [vmem:[%s5 + $0x5a8] sm:$0xff]
        %v4553 = vld [vmem:[%s5 + $0x5b0] sm:$0xff]
        %v4554 = vld [vmem:[%s5 + $0x5b8] sm:$0xff]
        %v4555 = vld [vmem:[%s5 + $0x5c0] sm:$0xff]
        %v4556 = vld [vmem:[%s5 + $0x5c8] sm:$0xff]
        %v4557 = vld [vmem:[%s5 + $0x5d0] sm:$0xff]
        %v4558 = vld [vmem:[%s5 + $0x5d8] sm:$0xff]
        %v4559 = vld [vmem:[%s5 + $0x5e0] sm:$0xff]
        %v4560 = vld [vmem:[%s5 + $0x5e8] sm:$0xff]
        %v4561 = vld [vmem:[%s5 + $0x5f0] sm:$0xff]
        %v4562 = vld [vmem:[%s5 + $0x5f8] sm:$0xff]
        %v4564 = vsel %vm1206, %v4514, 0
        %4566 = vmatprep.subr.mxu0 %v4516
        %4567 = vmatpush1.msra.mxu0 %v4515
        %4568 = vmatprep.subr.mxu0 %v4518
        %4569 = vmatpush1.msra.mxu0 %v4517
        %4570 = vmatprep.subr.mxu0 %v4520
        %4571 = vmatpush1.msra.mxu0 %v4519
        %4572 = vmatprep.subr.mxu0 %v4522
        %4573 = vmatpush1.msra.mxu0 %v4521
        %4574 = vmatprep.subr.mxu0 %v4524
        %4575 = vmatpush1.msra.mxu0 %v4523
        %4576 = vmatprep.subr.mxu0 %v4526
        %4577 = vmatpush1.msra.mxu0 %v4525
        %4578 = vmatprep.subr.mxu0 %v4528
        %4579 = vmatpush1.msra.mxu0 %v4527
        %4580 = vmatprep.subr.mxu0 %v4530
        %4581 = vmatpush1.msra.mxu0 %v4529
        %4582 = vmatprep.subr.mxu0 %v4532
        %4583 = vmatpush1.msra.mxu0 %v4531
        %4584 = vmatprep.subr.mxu0 %v4534
        %4585 = vmatpush1.msra.mxu0 %v4533
        %4586 = vmatprep.subr.mxu0 %v4536
        %4587 = vmatpush1.msra.mxu0 %v4535
        %4588 = vmatprep.subr.mxu0 %v4538
        %4589 = vmatpush1.msra.mxu0 %v4537
        %4590 = vmatprep.subr.mxu0 %v4540
        %4591 = vmatpush1.msra.mxu0 %v4539
        %4592 = vmatprep.subr.mxu0 %v4542
        %4593 = vmatpush1.msra.mxu0 %v4541
        %4594 = vmatprep.subr.mxu0 %v4544
        %4595 = vmatpush1.msra.mxu0 %v4543
        %4596 = vmatprep.subr.mxu0 %v4546
        %4597 = vmatpush1.msra.mxu0 %v4545
        %4598 = vmatprep.subr.mxu0 %v4548
        %4599 = vmatpush1.msra.mxu0 %v4547
        %4600 = vmatprep.subr.mxu0 %v4550
        %4601 = vmatpush1.msra.mxu0 %v4549
        %4602 = vmatprep.subr.mxu0 %v4552
        %4603 = vmatpush1.msra.mxu0 %v4551
        %4604 = vmatprep.subr.mxu0 %v4554
        %4605 = vmatpush1.msra.mxu0 %v4553
        %4606 = vmatprep.subr.mxu0 %v4556
        %4607 = vmatpush1.msra.mxu0 %v4555
        %4608 = vmatprep.subr.mxu0 %v4558
        %4609 = vmatpush1.msra.mxu0 %v4557
        %4610 = vmatprep.subr.mxu0 %v4560
        %4611 = vmatpush1.msra.mxu0 %v4559
        %4612 = vmatprep.subr.mxu0 %v4562
        %4613 = vmatpush1.msra.mxu0 %v4561
        %4614 = vmatprep.subr.mxu0 0.0
        %4615 = vmatpush1.msra.mxu0 0.0
        %4616 = vmatprep.subr.mxu0 0.0
        %4617 = vmatpush1.msra.mxu0 0.0
        %4618 = vmatprep.subr.mxu0 0.0
        %4619 = vmatpush1.msra.mxu0 0.0
        %4620 = vmatprep.subr.mxu0 0.0
        %4621 = vmatpush1.msra.mxu0 0.0
        %4622 = vmatprep.subr.mxu0 0.0
        %4623 = vmatpush1.msra.mxu0 0.0
        %4624 = vmatprep.subr.mxu0 0.0
        %4625 = vmatpush1.msra.mxu0 0.0
        %4626 = vmatprep.subr.mxu0 0.0
        %4627 = vmatpush1.msra.mxu0 0.0
        %4628 = vmatprep.subr.mxu0 0.0
        %4629 = vmatpush1.msra.mxu0 0.0
        %4630 = vmatprep.mubr.f32.mxu0 %v4564
        %4631 = vmatmul.mubr.f32.gmra.mrb[0].mxu0 %v4513
        %v4632 = vpop.f32.mrb[0].mxu0
        %v4633 = vadd.f32 0.0003, %v4632
        %v4634 = vpop.f32.mrb[0].mxu0
        %v4635 = vadd.f32 0.0003, %v4634
        %4636 = vdwg.mxu0
        %v4637 = vmax.f32 %v4633, 0.0
        %v4638 = vmax.f32 %v4635, 0.0
        %v4639 = vld [vmem:[%s5 + $0x600] sm:$0xff]
        %v4640 = vld [vmem:[%s5 + $0x608] sm:$0xff]
        %v4641 = vld [vmem:[%s5 + $0x610] sm:$0xff]
        %v4642 = vld [vmem:[%s5 + $0x618] sm:$0xff]
        %v4643 = vld [vmem:[%s5 + $0x620] sm:$0xff]
        %v4644 = vld [vmem:[%s5 + $0x628] sm:$0xff]
        %v4645 = vld [vmem:[%s5 + $0x630] sm:$0xff]
        %v4646 = vld [vmem:[%s5 + $0x638] sm:$0xff]
        %v4647 = vld [vmem:[%s5 + $0x640] sm:$0xff]
        %v4648 = vld [vmem:[%s5 + $0x648] sm:$0xff]
        %v4649 = vld [vmem:[%s5 + $0x650] sm:$0xff]
        %v4650 = vld [vmem:[%s5 + $0x658] sm:$0xff]
        %v4651 = vld [vmem:[%s5 + $0x660] sm:$0xff]
        %v4652 = vld [vmem:[%s5 + $0x668] sm:$0xff]
        %v4653 = vld [vmem:[%s5 + $0x670] sm:$0xff]
        %v4654 = vld [vmem:[%s5 + $0x678] sm:$0xff]
        %v4655 = vld [vmem:[%s5 + $0x680] sm:$0xff]
        %v4656 = vld [vmem:[%s5 + $0x688] sm:$0xff]
        %v4657 = vld [vmem:[%s5 + $0x690] sm:$0xff]
        %v4658 = vld [vmem:[%s5 + $0x698] sm:$0xff]
        %v4659 = vld [vmem:[%s5 + $0x6a0] sm:$0xff]
        %v4660 = vld [vmem:[%s5 + $0x6a8] sm:$0xff]
        %v4661 = vld [vmem:[%s5 + $0x6b0] sm:$0xff]
        %v4662 = vld [vmem:[%s5 + $0x6b8] sm:$0xff]
        %v4663 = vld [vmem:[%s5 + $0x6c0] sm:$0xff]
        %v4664 = vld [vmem:[%s5 + $0x6c8] sm:$0xff]
        %v4665 = vld [vmem:[%s5 + $0x6d0] sm:$0xff]
        %v4666 = vld [vmem:[%s5 + $0x6d8] sm:$0xff]
        %v4667 = vld [vmem:[%s5 + $0x6e0] sm:$0xff]
        %v4668 = vld [vmem:[%s5 + $0x6e8] sm:$0xff]
        %v4669 = vld [vmem:[%s5 + $0x6f0] sm:$0xff]
        %v4670 = vld [vmem:[%s5 + $0x6f8] sm:$0xff]
        %v4671 = vld [vmem:[%s5 + $0x700] sm:$0xff]
        %v4672 = vld [vmem:[%s5 + $0x708] sm:$0xff]
        %v4673 = vld [vmem:[%s5 + $0x710] sm:$0xff]
        %v4674 = vld [vmem:[%s5 + $0x718] sm:$0xff]
        %v4675 = vld [vmem:[%s5 + $0x720] sm:$0xff]
        %v4676 = vld [vmem:[%s5 + $0x728] sm:$0xff]
        %v4677 = vld [vmem:[%s5 + $0x730] sm:$0xff]
        %v4678 = vld [vmem:[%s5 + $0x738] sm:$0xff]
        %v4679 = vld [vmem:[%s5 + $0x740] sm:$0xff]
        %v4680 = vld [vmem:[%s5 + $0x748] sm:$0xff]
        %v4681 = vld [vmem:[%s5 + $0x750] sm:$0xff]
        %v4682 = vld [vmem:[%s5 + $0x758] sm:$0xff]
        %v4683 = vld [vmem:[%s5 + $0x760] sm:$0xff]
        %v4684 = vld [vmem:[%s5 + $0x768] sm:$0xff]
        %v4685 = vld [vmem:[%s5 + $0x770] sm:$0xff]
        %v4686 = vld [vmem:[%s5 + $0x778] sm:$0xff]
        %v4688 = vsel %vm1206, %v4638, 0
        %4690 = vmatprep.subr.mxu0 %v4640
        %4691 = vmatpush1.msra.mxu0 %v4639
        %4692 = vmatprep.subr.mxu0 %v4642
        %4693 = vmatpush1.msra.mxu0 %v4641
        %4694 = vmatprep.subr.mxu0 %v4644
        %4695 = vmatpush1.msra.mxu0 %v4643
        %4696 = vmatprep.subr.mxu0 %v4646
        %4697 = vmatpush1.msra.mxu0 %v4645
        %4698 = vmatprep.subr.mxu0 %v4648
        %4699 = vmatpush1.msra.mxu0 %v4647
        %4700 = vmatprep.subr.mxu0 %v4650
        %4701 = vmatpush1.msra.mxu0 %v4649
        %4702 = vmatprep.subr.mxu0 %v4652
        %4703 = vmatpush1.msra.mxu0 %v4651
        %4704 = vmatprep.subr.mxu0 %v4654
        %4705 = vmatpush1.msra.mxu0 %v4653
        %4706 = vmatprep.subr.mxu0 %v4656
        %4707 = vmatpush1.msra.mxu0 %v4655
        %4708 = vmatprep.subr.mxu0 %v4658
        %4709 = vmatpush1.msra.mxu0 %v4657
        %4710 = vmatprep.subr.mxu0 %v4660
        %4711 = vmatpush1.msra.mxu0 %v4659
        %4712 = vmatprep.subr.mxu0 %v4662
        %4713 = vmatpush1.msra.mxu0 %v4661
        %4714 = vmatprep.subr.mxu0 %v4664
        %4715 = vmatpush1.msra.mxu0 %v4663
        %4716 = vmatprep.subr.mxu0 %v4666
        %4717 = vmatpush1.msra.mxu0 %v4665
        %4718 = vmatprep.subr.mxu0 %v4668
        %4719 = vmatpush1.msra.mxu0 %v4667
        %4720 = vmatprep.subr.mxu0 %v4670
        %4721 = vmatpush1.msra.mxu0 %v4669
        %4722 = vmatprep.subr.mxu0 %v4672
        %4723 = vmatpush1.msra.mxu0 %v4671
        %4724 = vmatprep.subr.mxu0 %v4674
        %4725 = vmatpush1.msra.mxu0 %v4673
        %4726 = vmatprep.subr.mxu0 %v4676
        %4727 = vmatpush1.msra.mxu0 %v4675
        %4728 = vmatprep.subr.mxu0 %v4678
        %4729 = vmatpush1.msra.mxu0 %v4677
        %4730 = vmatprep.subr.mxu0 %v4680
        %4731 = vmatpush1.msra.mxu0 %v4679
        %4732 = vmatprep.subr.mxu0 %v4682
        %4733 = vmatpush1.msra.mxu0 %v4681
        %4734 = vmatprep.subr.mxu0 %v4684
        %4735 = vmatpush1.msra.mxu0 %v4683
        %4736 = vmatprep.subr.mxu0 %v4686
        %4737 = vmatpush1.msra.mxu0 %v4685
        %4738 = vmatprep.subr.mxu0 0.0
        %4739 = vmatpush1.msra.mxu0 0.0
        %4740 = vmatprep.subr.mxu0 0.0
        %4741 = vmatpush1.msra.mxu0 0.0
        %4742 = vmatprep.subr.mxu0 0.0
        %4743 = vmatpush1.msra.mxu0 0.0
        %4744 = vmatprep.subr.mxu0 0.0
        %4745 = vmatpush1.msra.mxu0 0.0
        %4746 = vmatprep.subr.mxu0 0.0
        %4747 = vmatpush1.msra.mxu0 0.0
        %4748 = vmatprep.subr.mxu0 0.0
        %4749 = vmatpush1.msra.mxu0 0.0
        %4750 = vmatprep.subr.mxu0 0.0
        %4751 = vmatpush1.msra.mxu0 0.0
        %4752 = vmatprep.subr.mxu0 0.0
        %4753 = vmatpush1.msra.mxu0 0.0
        %4754 = vmatprep.mubr.f32.mxu0 %v4688
        %4755 = vmatmul.mubr.f32.gmra.mrb[0].mxu0 %v4637
        %v4756 = vpop.f32.mrb[0].mxu0
        %v4757 = vadd.f32 0.0003, %v4756
        %v4758 = vpop.f32.mrb[0].mxu0
        %v4759 = vadd.f32 0.0003, %v4758
        %4760 = vdwg.mxu0
        %v4761 = vmax.f32 %v4757, 0.0
        %v4762 = vmax.f32 %v4759, 0.0
        %v4763 = vld [vmem:[%s5 + $0x780] sm:$0xff]
        %v4764 = vld [vmem:[%s5 + $0x788] sm:$0xff]
        %v4765 = vld [vmem:[%s5 + $0x790] sm:$0xff]
        %v4766 = vld [vmem:[%s5 + $0x798] sm:$0xff]
        %v4767 = vld [vmem:[%s5 + $0x7a0] sm:$0xff]
        %v4768 = vld [vmem:[%s5 + $0x7a8] sm:$0xff]
        %v4769 = vld [vmem:[%s5 + $0x7b0] sm:$0xff]
        %v4770 = vld [vmem:[%s5 + $0x7b8] sm:$0xff]
        %v4771 = vld [vmem:[%s5 + $0x7c0] sm:$0xff]
        %v4772 = vld [vmem:[%s5 + $0x7c8] sm:$0xff]
        %v4773 = vld [vmem:[%s5 + $0x7d0] sm:$0xff]
        %v4774 = vld [vmem:[%s5 + $0x7d8] sm:$0xff]
        %v4775 = vld [vmem:[%s5 + $0x7e0] sm:$0xff]
        %v4776 = vld [vmem:[%s5 + $0x7e8] sm:$0xff]
        %v4777 = vld [vmem:[%s5 + $0x7f0] sm:$0xff]
        %v4778 = vld [vmem:[%s5 + $0x7f8] sm:$0xff]
        %v4779 = vld [vmem:[%s5 + $0x800] sm:$0xff]
        %v4780 = vld [vmem:[%s5 + $0x808] sm:$0xff]
        %v4781 = vld [vmem:[%s5 + $0x810] sm:$0xff]
        %v4782 = vld [vmem:[%s5 + $0x818] sm:$0xff]
        %v4783 = vld [vmem:[%s5 + $0x820] sm:$0xff]
        %v4784 = vld [vmem:[%s5 + $0x828] sm:$0xff]
        %v4785 = vld [vmem:[%s5 + $0x830] sm:$0xff]
        %v4786 = vld [vmem:[%s5 + $0x838] sm:$0xff]
        %v4787 = vld [vmem:[%s5 + $0x840] sm:$0xff]
        %v4788 = vld [vmem:[%s5 + $0x848] sm:$0xff]
        %v4789 = vld [vmem:[%s5 + $0x850] sm:$0xff]
        %v4790 = vld [vmem:[%s5 + $0x858] sm:$0xff]
        %v4791 = vld [vmem:[%s5 + $0x860] sm:$0xff]
        %v4792 = vld [vmem:[%s5 + $0x868] sm:$0xff]
        %v4793 = vld [vmem:[%s5 + $0x870] sm:$0xff]
        %v4794 = vld [vmem:[%s5 + $0x878] sm:$0xff]
        %v4795 = vld [vmem:[%s5 + $0x880] sm:$0xff]
        %v4796 = vld [vmem:[%s5 + $0x888] sm:$0xff]
        %v4797 = vld [vmem:[%s5 + $0x890] sm:$0xff]
        %v4798 = vld [vmem:[%s5 + $0x898] sm:$0xff]
        %v4799 = vld [vmem:[%s5 + $0x8a0] sm:$0xff]
        %v4800 = vld [vmem:[%s5 + $0x8a8] sm:$0xff]
        %v4801 = vld [vmem:[%s5 + $0x8b0] sm:$0xff]
        %v4802 = vld [vmem:[%s5 + $0x8b8] sm:$0xff]
        %v4803 = vld [vmem:[%s5 + $0x8c0] sm:$0xff]
        %v4804 = vld [vmem:[%s5 + $0x8c8] sm:$0xff]
        %v4805 = vld [vmem:[%s5 + $0x8d0] sm:$0xff]
        %v4806 = vld [vmem:[%s5 + $0x8d8] sm:$0xff]
        %v4807 = vld [vmem:[%s5 + $0x8e0] sm:$0xff]
        %v4808 = vld [vmem:[%s5 + $0x8e8] sm:$0xff]
        %v4809 = vld [vmem:[%s5 + $0x8f0] sm:$0xff]
        %v4810 = vld [vmem:[%s5 + $0x8f8] sm:$0xff]
        %v4812 = vsel %vm1206, %v4762, 0
        %4814 = vmatprep.subr.mxu0 %v4764
        %4815 = vmatpush1.msra.mxu0 %v4763
        %4816 = vmatprep.subr.mxu0 %v4766
        %4817 = vmatpush1.msra.mxu0 %v4765
        %4818 = vmatprep.subr.mxu0 %v4768
        %4819 = vmatpush1.msra.mxu0 %v4767
        %4820 = vmatprep.subr.mxu0 %v4770
        %4821 = vmatpush1.msra.mxu0 %v4769
        %4822 = vmatprep.subr.mxu0 %v4772
        %4823 = vmatpush1.msra.mxu0 %v4771
        %4824 = vmatprep.subr.mxu0 %v4774
        %4825 = vmatpush1.msra.mxu0 %v4773
        %4826 = vmatprep.subr.mxu0 %v4776
        %4827 = vmatpush1.msra.mxu0 %v4775
        %4828 = vmatprep.subr.mxu0 %v4778
        %4829 = vmatpush1.msra.mxu0 %v4777
        %4830 = vmatprep.subr.mxu0 %v4780
        %4831 = vmatpush1.msra.mxu0 %v4779
        %4832 = vmatprep.subr.mxu0 %v4782
        %4833 = vmatpush1.msra.mxu0 %v4781
        %4834 = vmatprep.subr.mxu0 %v4784
        %4835 = vmatpush1.msra.mxu0 %v4783
        %4836 = vmatprep.subr.mxu0 %v4786
        %4837 = vmatpush1.msra.mxu0 %v4785
        %4838 = vmatprep.subr.mxu0 %v4788
        %4839 = vmatpush1.msra.mxu0 %v4787
        %4840 = vmatprep.subr.mxu0 %v4790
        %4841 = vmatpush1.msra.mxu0 %v4789
        %4842 = vmatprep.subr.mxu0 %v4792
        %4843 = vmatpush1.msra.mxu0 %v4791
        %4844 = vmatprep.subr.mxu0 %v4794
        %4845 = vmatpush1.msra.mxu0 %v4793
        %4846 = vmatprep.subr.mxu0 %v4796
        %4847 = vmatpush1.msra.mxu0 %v4795
        %4848 = vmatprep.subr.mxu0 %v4798
        %4849 = vmatpush1.msra.mxu0 %v4797
        %4850 = vmatprep.subr.mxu0 %v4800
        %4851 = vmatpush1.msra.mxu0 %v4799
        %4852 = vmatprep.subr.mxu0 %v4802
        %4853 = vmatpush1.msra.mxu0 %v4801
        %4854 = vmatprep.subr.mxu0 %v4804
        %4855 = vmatpush1.msra.mxu0 %v4803
        %4856 = vmatprep.subr.mxu0 %v4806
        %4857 = vmatpush1.msra.mxu0 %v4805
        %4858 = vmatprep.subr.mxu0 %v4808
        %4859 = vmatpush1.msra.mxu0 %v4807
        %4860 = vmatprep.subr.mxu0 %v4810
        %4861 = vmatpush1.msra.mxu0 %v4809
        %4862 = vmatprep.subr.mxu0 0.0
        %4863 = vmatpush1.msra.mxu0 0.0
        %4864 = vmatprep.subr.mxu0 0.0
        %4865 = vmatpush1.msra.mxu0 0.0
        %4866 = vmatprep.subr.mxu0 0.0
        %4867 = vmatpush1.msra.mxu0 0.0
        %4868 = vmatprep.subr.mxu0 0.0
        %4869 = vmatpush1.msra.mxu0 0.0
        %4870 = vmatprep.subr.mxu0 0.0
        %4871 = vmatpush1.msra.mxu0 0.0
        %4872 = vmatprep.subr.mxu0 0.0
        %4873 = vmatpush1.msra.mxu0 0.0
        %4874 = vmatprep.subr.mxu0 0.0
        %4875 = vmatpush1.msra.mxu0 0.0
        %4876 = vmatprep.subr.mxu0 0.0
        %4877 = vmatpush1.msra.mxu0 0.0
        %4878 = vmatprep.mubr.f32.mxu0 %v4812
        %4879 = vmatmul.mubr.f32.gmra.mrb[0].mxu0 %v4761
        %v4880 = vpop.f32.mrb[0].mxu0
        %v4881 = vadd.f32 0.0003, %v4880
        %v4882 = vpop.f32.mrb[0].mxu0
        %v4883 = vadd.f32 0.0003, %v4882
        %4884 = vdwg.mxu0
        %v4885 = vmax.f32 %v4881, 0.0
        %v4886 = vmax.f32 %v4883, 0.0
        %v4887 = vld [vmem:[%s5 + $0x900] sm:$0xff]
        %v4888 = vld [vmem:[%s5 + $0x908] sm:$0xff]
        %v4889 = vld [vmem:[%s5 + $0x910] sm:$0xff]
        %v4890 = vld [vmem:[%s5 + $0x918] sm:$0xff]
        %v4891 = vld [vmem:[%s5 + $0x920] sm:$0xff]
        %v4892 = vld [vmem:[%s5 + $0x928] sm:$0xff]
        %v4893 = vld [vmem:[%s5 + $0x930] sm:$0xff]
        %v4894 = vld [vmem:[%s5 + $0x938] sm:$0xff]
        %v4895 = vld [vmem:[%s5 + $0x940] sm:$0xff]
        %v4896 = vld [vmem:[%s5 + $0x948] sm:$0xff]
        %v4897 = vld [vmem:[%s5 + $0x950] sm:$0xff]
        %v4898 = vld [vmem:[%s5 + $0x958] sm:$0xff]
        %v4899 = vld [vmem:[%s5 + $0x960] sm:$0xff]
        %v4900 = vld [vmem:[%s5 + $0x968] sm:$0xff]
        %v4901 = vld [vmem:[%s5 + $0x970] sm:$0xff]
        %v4902 = vld [vmem:[%s5 + $0x978] sm:$0xff]
        %v4903 = vld [vmem:[%s5 + $0x980] sm:$0xff]
        %v4904 = vld [vmem:[%s5 + $0x988] sm:$0xff]
        %v4905 = vld [vmem:[%s5 + $0x990] sm:$0xff]
        %v4906 = vld [vmem:[%s5 + $0x998] sm:$0xff]
        %v4907 = vld [vmem:[%s5 + $0x9a0] sm:$0xff]
        %v4908 = vld [vmem:[%s5 + $0x9a8] sm:$0xff]
        %v4909 = vld [vmem:[%s5 + $0x9b0] sm:$0xff]
        %v4910 = vld [vmem:[%s5 + $0x9b8] sm:$0xff]
        %v4911 = vld [vmem:[%s5 + $0x9c0] sm:$0xff]
        %v4912 = vld [vmem:[%s5 + $0x9c8] sm:$0xff]
        %v4913 = vld [vmem:[%s5 + $0x9d0] sm:$0xff]
        %v4914 = vld [vmem:[%s5 + $0x9d8] sm:$0xff]
        %v4915 = vld [vmem:[%s5 + $0x9e0] sm:$0xff]
        %v4916 = vld [vmem:[%s5 + $0x9e8] sm:$0xff]
        %v4917 = vld [vmem:[%s5 + $0x9f0] sm:$0xff]
        %v4918 = vld [vmem:[%s5 + $0x9f8] sm:$0xff]
        %v4919 = vld [vmem:[%s5 + $0xa00] sm:$0xff]
        %v4920 = vld [vmem:[%s5 + $0xa08] sm:$0xff]
        %v4921 = vld [vmem:[%s5 + $0xa10] sm:$0xff]
        %v4922 = vld [vmem:[%s5 + $0xa18] sm:$0xff]
        %v4923 = vld [vmem:[%s5 + $0xa20] sm:$0xff]
        %v4924 = vld [vmem:[%s5 + $0xa28] sm:$0xff]
        %v4925 = vld [vmem:[%s5 + $0xa30] sm:$0xff]
        %v4926 = vld [vmem:[%s5 + $0xa38] sm:$0xff]
        %v4927 = vld [vmem:[%s5 + $0xa40] sm:$0xff]
        %v4928 = vld [vmem:[%s5 + $0xa48] sm:$0xff]
        %v4929 = vld [vmem:[%s5 + $0xa50] sm:$0xff]
        %v4930 = vld [vmem:[%s5 + $0xa58] sm:$0xff]
        %v4931 = vld [vmem:[%s5 + $0xa60] sm:$0xff]
        %v4932 = vld [vmem:[%s5 + $0xa68] sm:$0xff]
        %v4933 = vld [vmem:[%s5 + $0xa70] sm:$0xff]
        %v4934 = vld [vmem:[%s5 + $0xa78] sm:$0xff]
        %v4936 = vsel %vm1206, %v4886, 0
        %4938 = vmatprep.subr.mxu0 %v4888
        %4939 = vmatpush1.msra.mxu0 %v4887
        %4940 = vmatprep.subr.mxu0 %v4890
        %4941 = vmatpush1.msra.mxu0 %v4889
        %4942 = vmatprep.subr.mxu0 %v4892
        %4943 = vmatpush1.msra.mxu0 %v4891
        %4944 = vmatprep.subr.mxu0 %v4894
        %4945 = vmatpush1.msra.mxu0 %v4893
        %4946 = vmatprep.subr.mxu0 %v4896
        %4947 = vmatpush1.msra.mxu0 %v4895
        %4948 = vmatprep.subr.mxu0 %v4898
        %4949 = vmatpush1.msra.mxu0 %v4897
        %4950 = vmatprep.subr.mxu0 %v4900
        %4951 = vmatpush1.msra.mxu0 %v4899
        %4952 = vmatprep.subr.mxu0 %v4902
        %4953 = vmatpush1.msra.mxu0 %v4901
        %4954 = vmatprep.subr.mxu0 %v4904
        %4955 = vmatpush1.msra.mxu0 %v4903
        %4956 = vmatprep.subr.mxu0 %v4906
        %4957 = vmatpush1.msra.mxu0 %v4905
        %4958 = vmatprep.subr.mxu0 %v4908
        %4959 = vmatpush1.msra.mxu0 %v4907
        %4960 = vmatprep.subr.mxu0 %v4910
        %4961 = vmatpush1.msra.mxu0 %v4909
        %4962 = vmatprep.subr.mxu0 %v4912
        %4963 = vmatpush1.msra.mxu0 %v4911
        %4964 = vmatprep.subr.mxu0 %v4914
        %4965 = vmatpush1.msra.mxu0 %v4913
        %4966 = vmatprep.subr.mxu0 %v4916
        %4967 = vmatpush1.msra.mxu0 %v4915
        %4968 = vmatprep.subr.mxu0 %v4918
        %4969 = vmatpush1.msra.mxu0 %v4917
        %4970 = vmatprep.subr.mxu0 %v4920
        %4971 = vmatpush1.msra.mxu0 %v4919
        %4972 = vmatprep.subr.mxu0 %v4922
        %4973 = vmatpush1.msra.mxu0 %v4921
        %4974 = vmatprep.subr.mxu0 %v4924
        %4975 = vmatpush1.msra.mxu0 %v4923
        %4976 = vmatprep.subr.mxu0 %v4926
        %4977 = vmatpush1.msra.mxu0 %v4925
        %4978 = vmatprep.subr.mxu0 %v4928
        %4979 = vmatpush1.msra.mxu0 %v4927
        %4980 = vmatprep.subr.mxu0 %v4930
        %4981 = vmatpush1.msra.mxu0 %v4929
        %4982 = vmatprep.subr.mxu0 %v4932
        %4983 = vmatpush1.msra.mxu0 %v4931
        %4984 = vmatprep.subr.mxu0 %v4934
        %4985 = vmatpush1.msra.mxu0 %v4933
        %4986 = vmatprep.subr.mxu0 0.0
        %4987 = vmatpush1.msra.mxu0 0.0
        %4988 = vmatprep.subr.mxu0 0.0
        %4989 = vmatpush1.msra.mxu0 0.0
        %4990 = vmatprep.subr.mxu0 0.0
        %4991 = vmatpush1.msra.mxu0 0.0
        %4992 = vmatprep.subr.mxu0 0.0
        %4993 = vmatpush1.msra.mxu0 0.0
        %4994 = vmatprep.subr.mxu0 0.0
        %4995 = vmatpush1.msra.mxu0 0.0
        %4996 = vmatprep.subr.mxu0 0.0
        %4997 = vmatpush1.msra.mxu0 0.0
        %4998 = vmatprep.subr.mxu0 0.0
        %4999 = vmatpush1.msra.mxu0 0.0
        %5000 = vmatprep.subr.mxu0 0.0
        %5001 = vmatpush1.msra.mxu0 0.0
        %5002 = vmatprep.mubr.f32.mxu0 %v4936
        %5003 = vmatmul.mubr.f32.gmra.mrb[0].mxu0 %v4885
        %v5004 = vpop.f32.mrb[0].mxu0
        %v5005 = vadd.f32 0.0003, %v5004
        %v5006 = vpop.f32.mrb[0].mxu0
        %v5007 = vadd.f32 0.0003, %v5006
        %5008 = vdwg.mxu0
        %v5009 = vmax.f32 %v5005, 0.0
        %v5010 = vmax.f32 %v5007, 0.0
        %v5011 = vld [vmem:[%s5 + $0xa80] sm:$0xff]
        %v5012 = vld [vmem:[%s5 + $0xa88] sm:$0xff]
        %v5013 = vld [vmem:[%s5 + $0xa90] sm:$0xff]
        %v5014 = vld [vmem:[%s5 + $0xa98] sm:$0xff]
        %v5015 = vld [vmem:[%s5 + $0xaa0] sm:$0xff]
        %v5016 = vld [vmem:[%s5 + $0xaa8] sm:$0xff]
        %v5017 = vld [vmem:[%s5 + $0xab0] sm:$0xff]
        %v5018 = vld [vmem:[%s5 + $0xab8] sm:$0xff]
        %v5019 = vld [vmem:[%s5 + $0xac0] sm:$0xff]
        %v5020 = vld [vmem:[%s5 + $0xac8] sm:$0xff]
        %v5021 = vld [vmem:[%s5 + $0xad0] sm:$0xff]
        %v5022 = vld [vmem:[%s5 + $0xad8] sm:$0xff]
        %v5023 = vld [vmem:[%s5 + $0xae0] sm:$0xff]
        %v5024 = vld [vmem:[%s5 + $0xae8] sm:$0xff]
        %v5025 = vld [vmem:[%s5 + $0xaf0] sm:$0xff]
        %v5026 = vld [vmem:[%s5 + $0xaf8] sm:$0xff]
        %v5027 = vld [vmem:[%s5 + $0xb00] sm:$0xff]
        %v5028 = vld [vmem:[%s5 + $0xb08] sm:$0xff]
        %v5029 = vld [vmem:[%s5 + $0xb10] sm:$0xff]
        %v5030 = vld [vmem:[%s5 + $0xb18] sm:$0xff]
        %v5031 = vld [vmem:[%s5 + $0xb20] sm:$0xff]
        %v5032 = vld [vmem:[%s5 + $0xb28] sm:$0xff]
        %v5033 = vld [vmem:[%s5 + $0xb30] sm:$0xff]
        %v5034 = vld [vmem:[%s5 + $0xb38] sm:$0xff]
        %v5035 = vld [vmem:[%s5 + $0xb40] sm:$0xff]
        %v5036 = vld [vmem:[%s5 + $0xb48] sm:$0xff]
        %v5037 = vld [vmem:[%s5 + $0xb50] sm:$0xff]
        %v5038 = vld [vmem:[%s5 + $0xb58] sm:$0xff]
        %v5039 = vld [vmem:[%s5 + $0xb60] sm:$0xff]
        %v5040 = vld [vmem:[%s5 + $0xb68] sm:$0xff]
        %v5041 = vld [vmem:[%s5 + $0xb70] sm:$0xff]
        %v5042 = vld [vmem:[%s5 + $0xb78] sm:$0xff]
        %v5043 = vld [vmem:[%s5 + $0xb80] sm:$0xff]
        %v5044 = vld [vmem:[%s5 + $0xb88] sm:$0xff]
        %v5045 = vld [vmem:[%s5 + $0xb90] sm:$0xff]
        %v5046 = vld [vmem:[%s5 + $0xb98] sm:$0xff]
        %v5047 = vld [vmem:[%s5 + $0xba0] sm:$0xff]
        %v5048 = vld [vmem:[%s5 + $0xba8] sm:$0xff]
        %v5049 = vld [vmem:[%s5 + $0xbb0] sm:$0xff]
        %v5050 = vld [vmem:[%s5 + $0xbb8] sm:$0xff]
        %v5051 = vld [vmem:[%s5 + $0xbc0] sm:$0xff]
        %v5052 = vld [vmem:[%s5 + $0xbc8] sm:$0xff]
        %v5053 = vld [vmem:[%s5 + $0xbd0] sm:$0xff]
        %v5054 = vld [vmem:[%s5 + $0xbd8] sm:$0xff]
        %v5055 = vld [vmem:[%s5 + $0xbe0] sm:$0xff]
        %v5056 = vld [vmem:[%s5 + $0xbe8] sm:$0xff]
        %v5057 = vld [vmem:[%s5 + $0xbf0] sm:$0xff]
        %v5058 = vld [vmem:[%s5 + $0xbf8] sm:$0xff]
        %v5060 = vsel %vm1206, %v5010, 0
        %5062 = vmatprep.subr.mxu0 %v5012
        %5063 = vmatpush1.msra.mxu0 %v5011
        %5064 = vmatprep.subr.mxu0 %v5014
        %5065 = vmatpush1.msra.mxu0 %v5013
        %5066 = vmatprep.subr.mxu0 %v5016
        %5067 = vmatpush1.msra.mxu0 %v5015
        %5068 = vmatprep.subr.mxu0 %v5018
        %5069 = vmatpush1.msra.mxu0 %v5017
        %5070 = vmatprep.subr.mxu0 %v5020
        %5071 = vmatpush1.msra.mxu0 %v5019
        %5072 = vmatprep.subr.mxu0 %v5022
        %5073 = vmatpush1.msra.mxu0 %v5021
        %5074 = vmatprep.subr.mxu0 %v5024
        %5075 = vmatpush1.msra.mxu0 %v5023
        %5076 = vmatprep.subr.mxu0 %v5026
        %5077 = vmatpush1.msra.mxu0 %v5025
        %5078 = vmatprep.subr.mxu0 %v5028
        %5079 = vmatpush1.msra.mxu0 %v5027
        %5080 = vmatprep.subr.mxu0 %v5030
        %5081 = vmatpush1.msra.mxu0 %v5029
        %5082 = vmatprep.subr.mxu0 %v5032
        %5083 = vmatpush1.msra.mxu0 %v5031
        %5084 = vmatprep.subr.mxu0 %v5034
        %5085 = vmatpush1.msra.mxu0 %v5033
        %5086 = vmatprep.subr.mxu0 %v5036
        %5087 = vmatpush1.msra.mxu0 %v5035
        %5088 = vmatprep.subr.mxu0 %v5038
        %5089 = vmatpush1.msra.mxu0 %v5037
        %5090 = vmatprep.subr.mxu0 %v5040
        %5091 = vmatpush1.msra.mxu0 %v5039
        %5092 = vmatprep.subr.mxu0 %v5042
        %5093 = vmatpush1.msra.mxu0 %v5041
        %5094 = vmatprep.subr.mxu0 %v5044
        %5095 = vmatpush1.msra.mxu0 %v5043
        %5096 = vmatprep.subr.mxu0 %v5046
        %5097 = vmatpush1.msra.mxu0 %v5045
        %5098 = vmatprep.subr.mxu0 %v5048
        %5099 = vmatpush1.msra.mxu0 %v5047
        %5100 = vmatprep.subr.mxu0 %v5050
        %5101 = vmatpush1.msra.mxu0 %v5049
        %5102 = vmatprep.subr.mxu0 %v5052
        %5103 = vmatpush1.msra.mxu0 %v5051
        %5104 = vmatprep.subr.mxu0 %v5054
        %5105 = vmatpush1.msra.mxu0 %v5053
        %5106 = vmatprep.subr.mxu0 %v5056
        %5107 = vmatpush1.msra.mxu0 %v5055
        %5108 = vmatprep.subr.mxu0 %v5058
        %5109 = vmatpush1.msra.mxu0 %v5057
        %5110 = vmatprep.subr.mxu0 0.0
        %5111 = vmatpush1.msra.mxu0 0.0
        %5112 = vmatprep.subr.mxu0 0.0
        %5113 = vmatpush1.msra.mxu0 0.0
        %5114 = vmatprep.subr.mxu0 0.0
        %5115 = vmatpush1.msra.mxu0 0.0
        %5116 = vmatprep.subr.mxu0 0.0
        %5117 = vmatpush1.msra.mxu0 0.0
        %5118 = vmatprep.subr.mxu0 0.0
        %5119 = vmatpush1.msra.mxu0 0.0
        %5120 = vmatprep.subr.mxu0 0.0
        %5121 = vmatpush1.msra.mxu0 0.0
        %5122 = vmatprep.subr.mxu0 0.0
        %5123 = vmatpush1.msra.mxu0 0.0
        %5124 = vmatprep.subr.mxu0 0.0
        %5125 = vmatpush1.msra.mxu0 0.0
        %5126 = vmatprep.mubr.f32.mxu0 %v5060
        %5127 = vmatmul.mubr.f32.gmra.mrb[0].mxu0 %v5009
        %v5128 = vpop.f32.mrb[0].mxu0
        %v5129 = vadd.f32 0.0003, %v5128
        %v5130 = vpop.f32.mrb[0].mxu0
        %v5131 = vadd.f32 0.0003, %v5130
        %5132 = vdwg.mxu0
        %v5133 = vmax.f32 %v5129, 0.0
        %v5134 = vmax.f32 %v5131, 0.0
        %v5135 = vld [vmem:[%s5 + $0xc00] sm:$0xff]
        %v5136 = vld [vmem:[%s5 + $0xc08] sm:$0xff]
        %v5137 = vld [vmem:[%s5 + $0xc10] sm:$0xff]
        %v5138 = vld [vmem:[%s5 + $0xc18] sm:$0xff]
        %v5139 = vld [vmem:[%s5 + $0xc20] sm:$0xff]
        %v5140 = vld [vmem:[%s5 + $0xc28] sm:$0xff]
        %v5141 = vld [vmem:[%s5 + $0xc30] sm:$0xff]
        %v5142 = vld [vmem:[%s5 + $0xc38] sm:$0xff]
        %v5143 = vld [vmem:[%s5 + $0xc40] sm:$0xff]
        %v5144 = vld [vmem:[%s5 + $0xc48] sm:$0xff]
        %v5145 = vld [vmem:[%s5 + $0xc50] sm:$0xff]
        %v5146 = vld [vmem:[%s5 + $0xc58] sm:$0xff]
        %v5147 = vld [vmem:[%s5 + $0xc60] sm:$0xff]
        %v5148 = vld [vmem:[%s5 + $0xc68] sm:$0xff]
        %v5149 = vld [vmem:[%s5 + $0xc70] sm:$0xff]
        %v5150 = vld [vmem:[%s5 + $0xc78] sm:$0xff]
        %v5151 = vld [vmem:[%s5 + $0xc80] sm:$0xff]
        %v5152 = vld [vmem:[%s5 + $0xc88] sm:$0xff]
        %v5153 = vld [vmem:[%s5 + $0xc90] sm:$0xff]
        %v5154 = vld [vmem:[%s5 + $0xc98] sm:$0xff]
        %v5155 = vld [vmem:[%s5 + $0xca0] sm:$0xff]
        %v5156 = vld [vmem:[%s5 + $0xca8] sm:$0xff]
        %v5157 = vld [vmem:[%s5 + $0xcb0] sm:$0xff]
        %v5158 = vld [vmem:[%s5 + $0xcb8] sm:$0xff]
        %v5159 = vld [vmem:[%s5 + $0xcc0] sm:$0xff]
        %v5160 = vld [vmem:[%s5 + $0xcc8] sm:$0xff]
        %v5161 = vld [vmem:[%s5 + $0xcd0] sm:$0xff]
        %v5162 = vld [vmem:[%s5 + $0xcd8] sm:$0xff]
        %v5163 = vld [vmem:[%s5 + $0xce0] sm:$0xff]
        %v5164 = vld [vmem:[%s5 + $0xce8] sm:$0xff]
        %v5165 = vld [vmem:[%s5 + $0xcf0] sm:$0xff]
        %v5166 = vld [vmem:[%s5 + $0xcf8] sm:$0xff]
        %v5167 = vld [vmem:[%s5 + $0xd00] sm:$0xff]
        %v5168 = vld [vmem:[%s5 + $0xd08] sm:$0xff]
        %v5169 = vld [vmem:[%s5 + $0xd10] sm:$0xff]
        %v5170 = vld [vmem:[%s5 + $0xd18] sm:$0xff]
        %v5171 = vld [vmem:[%s5 + $0xd20] sm:$0xff]
        %v5172 = vld [vmem:[%s5 + $0xd28] sm:$0xff]
        %v5173 = vld [vmem:[%s5 + $0xd30] sm:$0xff]
        %v5174 = vld [vmem:[%s5 + $0xd38] sm:$0xff]
        %v5175 = vld [vmem:[%s5 + $0xd40] sm:$0xff]
        %v5176 = vld [vmem:[%s5 + $0xd48] sm:$0xff]
        %v5177 = vld [vmem:[%s5 + $0xd50] sm:$0xff]
        %v5178 = vld [vmem:[%s5 + $0xd58] sm:$0xff]
        %v5179 = vld [vmem:[%s5 + $0xd60] sm:$0xff]
        %v5180 = vld [vmem:[%s5 + $0xd68] sm:$0xff]
        %v5181 = vld [vmem:[%s5 + $0xd70] sm:$0xff]
        %v5182 = vld [vmem:[%s5 + $0xd78] sm:$0xff]
        %v5184 = vsel %vm1206, %v5134, 0
        %5186 = vmatprep.subr.mxu0 %v5136
        %5187 = vmatpush1.msra.mxu0 %v5135
        %5188 = vmatprep.subr.mxu0 %v5138
        %5189 = vmatpush1.msra.mxu0 %v5137
        %5190 = vmatprep.subr.mxu0 %v5140
        %5191 = vmatpush1.msra.mxu0 %v5139
        %5192 = vmatprep.subr.mxu0 %v5142
        %5193 = vmatpush1.msra.mxu0 %v5141
        %5194 = vmatprep.subr.mxu0 %v5144
        %5195 = vmatpush1.msra.mxu0 %v5143
        %5196 = vmatprep.subr.mxu0 %v5146
        %5197 = vmatpush1.msra.mxu0 %v5145
        %5198 = vmatprep.subr.mxu0 %v5148
        %5199 = vmatpush1.msra.mxu0 %v5147
        %5200 = vmatprep.subr.mxu0 %v5150
        %5201 = vmatpush1.msra.mxu0 %v5149
        %5202 = vmatprep.subr.mxu0 %v5152
        %5203 = vmatpush1.msra.mxu0 %v5151
        %5204 = vmatprep.subr.mxu0 %v5154
        %5205 = vmatpush1.msra.mxu0 %v5153
        %5206 = vmatprep.subr.mxu0 %v5156
        %5207 = vmatpush1.msra.mxu0 %v5155
        %5208 = vmatprep.subr.mxu0 %v5158
        %5209 = vmatpush1.msra.mxu0 %v5157
        %5210 = vmatprep.subr.mxu0 %v5160
        %5211 = vmatpush1.msra.mxu0 %v5159
        %5212 = vmatprep.subr.mxu0 %v5162
        %5213 = vmatpush1.msra.mxu0 %v5161
        %5214 = vmatprep.subr.mxu0 %v5164
        %5215 = vmatpush1.msra.mxu0 %v5163
        %5216 = vmatprep.subr.mxu0 %v5166
        %5217 = vmatpush1.msra.mxu0 %v5165
        %5218 = vmatprep.subr.mxu0 %v5168
        %5219 = vmatpush1.msra.mxu0 %v5167
        %5220 = vmatprep.subr.mxu0 %v5170
        %5221 = vmatpush1.msra.mxu0 %v5169
        %5222 = vmatprep.subr.mxu0 %v5172
        %5223 = vmatpush1.msra.mxu0 %v5171
        %5224 = vmatprep.subr.mxu0 %v5174
        %5225 = vmatpush1.msra.mxu0 %v5173
        %5226 = vmatprep.subr.mxu0 %v5176
        %5227 = vmatpush1.msra.mxu0 %v5175
        %5228 = vmatprep.subr.mxu0 %v5178
        %5229 = vmatpush1.msra.mxu0 %v5177
        %5230 = vmatprep.subr.mxu0 %v5180
        %5231 = vmatpush1.msra.mxu0 %v5179
        %5232 = vmatprep.subr.mxu0 %v5182
        %5233 = vmatpush1.msra.mxu0 %v5181
        %5234 = vmatprep.subr.mxu0 0.0
        %5235 = vmatpush1.msra.mxu0 0.0
        %5236 = vmatprep.subr.mxu0 0.0
        %5237 = vmatpush1.msra.mxu0 0.0
        %5238 = vmatprep.subr.mxu0 0.0
        %5239 = vmatpush1.msra.mxu0 0.0
        %5240 = vmatprep.subr.mxu0 0.0
        %5241 = vmatpush1.msra.mxu0 0.0
        %5242 = vmatprep.subr.mxu0 0.0
        %5243 = vmatpush1.msra.mxu0 0.0
        %5244 = vmatprep.subr.mxu0 0.0
        %5245 = vmatpush1.msra.mxu0 0.0
        %5246 = vmatprep.subr.mxu0 0.0
        %5247 = vmatpush1.msra.mxu0 0.0
        %5248 = vmatprep.subr.mxu0 0.0
        %5249 = vmatpush1.msra.mxu0 0.0
        %5250 = vmatprep.mubr.f32.mxu0 %v5184
        %5251 = vmatmul.mubr.f32.gmra.mrb[0].mxu0 %v5133
        %v5252 = vpop.f32.mrb[0].mxu0
        %v5253 = vadd.f32 0.0003, %v5252
        %v5254 = vpop.f32.mrb[0].mxu0
        %v5255 = vadd.f32 0.0003, %v5254
        %5256 = vdwg.mxu0
        %v5257 = vmax.f32 %v5253, 0.0
        %v5258 = vmax.f32 %v5255, 0.0
        %v5259 = vld [vmem:[%s5 + $0xd80] sm:$0xff]
        %v5260 = vld [vmem:[%s5 + $0xd88] sm:$0xff]
        %v5261 = vld [vmem:[%s5 + $0xd90] sm:$0xff]
        %v5262 = vld [vmem:[%s5 + $0xd98] sm:$0xff]
        %v5263 = vld [vmem:[%s5 + $0xda0] sm:$0xff]
        %v5264 = vld [vmem:[%s5 + $0xda8] sm:$0xff]
        %v5265 = vld [vmem:[%s5 + $0xdb0] sm:$0xff]
        %v5266 = vld [vmem:[%s5 + $0xdb8] sm:$0xff]
        %v5267 = vld [vmem:[%s5 + $0xdc0] sm:$0xff]
        %v5268 = vld [vmem:[%s5 + $0xdc8] sm:$0xff]
        %v5269 = vld [vmem:[%s5 + $0xdd0] sm:$0xff]
        %v5270 = vld [vmem:[%s5 + $0xdd8] sm:$0xff]
        %v5271 = vld [vmem:[%s5 + $0xde0] sm:$0xff]
        %v5272 = vld [vmem:[%s5 + $0xde8] sm:$0xff]
        %v5273 = vld [vmem:[%s5 + $0xdf0] sm:$0xff]
        %v5274 = vld [vmem:[%s5 + $0xdf8] sm:$0xff]
        %v5275 = vld [vmem:[%s5 + $0xe00] sm:$0xff]
        %v5276 = vld [vmem:[%s5 + $0xe08] sm:$0xff]
        %v5277 = vld [vmem:[%s5 + $0xe10] sm:$0xff]
        %v5278 = vld [vmem:[%s5 + $0xe18] sm:$0xff]
        %v5279 = vld [vmem:[%s5 + $0xe20] sm:$0xff]
        %v5280 = vld [vmem:[%s5 + $0xe28] sm:$0xff]
        %v5281 = vld [vmem:[%s5 + $0xe30] sm:$0xff]
        %v5282 = vld [vmem:[%s5 + $0xe38] sm:$0xff]
        %v5283 = vld [vmem:[%s5 + $0xe40] sm:$0xff]
        %v5284 = vld [vmem:[%s5 + $0xe48] sm:$0xff]
        %v5285 = vld [vmem:[%s5 + $0xe50] sm:$0xff]
        %v5286 = vld [vmem:[%s5 + $0xe58] sm:$0xff]
        %v5287 = vld [vmem:[%s5 + $0xe60] sm:$0xff]
        %v5288 = vld [vmem:[%s5 + $0xe68] sm:$0xff]
        %v5289 = vld [vmem:[%s5 + $0xe70] sm:$0xff]
        %v5290 = vld [vmem:[%s5 + $0xe78] sm:$0xff]
        %v5291 = vld [vmem:[%s5 + $0xe80] sm:$0xff]
        %v5292 = vld [vmem:[%s5 + $0xe88] sm:$0xff]
        %v5293 = vld [vmem:[%s5 + $0xe90] sm:$0xff]
        %v5294 = vld [vmem:[%s5 + $0xe98] sm:$0xff]
        %v5295 = vld [vmem:[%s5 + $0xea0] sm:$0xff]
        %v5296 = vld [vmem:[%s5 + $0xea8] sm:$0xff]
        %v5297 = vld [vmem:[%s5 + $0xeb0] sm:$0xff]
        %v5298 = vld [vmem:[%s5 + $0xeb8] sm:$0xff]
        %v5299 = vld [vmem:[%s5 + $0xec0] sm:$0xff]
        %v5300 = vld [vmem:[%s5 + $0xec8] sm:$0xff]
        %v5301 = vld [vmem:[%s5 + $0xed0] sm:$0xff]
        %v5302 = vld [vmem:[%s5 + $0xed8] sm:$0xff]
        %v5303 = vld [vmem:[%s5 + $0xee0] sm:$0xff]
        %v5304 = vld [vmem:[%s5 + $0xee8] sm:$0xff]
        %v5305 = vld [vmem:[%s5 + $0xef0] sm:$0xff]
        %v5306 = vld [vmem:[%s5 + $0xef8] sm:$0xff]
        %v5308 = vsel %vm1206, %v5258, 0
        %5310 = vmatprep.subr.mxu0 %v5260
        %5311 = vmatpush1.msra.mxu0 %v5259
        %5312 = vmatprep.subr.mxu0 %v5262
        %5313 = vmatpush1.msra.mxu0 %v5261
        %5314 = vmatprep.subr.mxu0 %v5264
        %5315 = vmatpush1.msra.mxu0 %v5263
        %5316 = vmatprep.subr.mxu0 %v5266
        %5317 = vmatpush1.msra.mxu0 %v5265
        %5318 = vmatprep.subr.mxu0 %v5268
        %5319 = vmatpush1.msra.mxu0 %v5267
        %5320 = vmatprep.subr.mxu0 %v5270
        %5321 = vmatpush1.msra.mxu0 %v5269
        %5322 = vmatprep.subr.mxu0 %v5272
        %5323 = vmatpush1.msra.mxu0 %v5271
        %5324 = vmatprep.subr.mxu0 %v5274
        %5325 = vmatpush1.msra.mxu0 %v5273
        %5326 = vmatprep.subr.mxu0 %v5276
        %5327 = vmatpush1.msra.mxu0 %v5275
        %5328 = vmatprep.subr.mxu0 %v5278
        %5329 = vmatpush1.msra.mxu0 %v5277
        %5330 = vmatprep.subr.mxu0 %v5280
        %5331 = vmatpush1.msra.mxu0 %v5279
        %5332 = vmatprep.subr.mxu0 %v5282
        %5333 = vmatpush1.msra.mxu0 %v5281
        %5334 = vmatprep.subr.mxu0 %v5284
        %5335 = vmatpush1.msra.mxu0 %v5283
        %5336 = vmatprep.subr.mxu0 %v5286
        %5337 = vmatpush1.msra.mxu0 %v5285
        %5338 = vmatprep.subr.mxu0 %v5288
        %5339 = vmatpush1.msra.mxu0 %v5287
        %5340 = vmatprep.subr.mxu0 %v5290
        %5341 = vmatpush1.msra.mxu0 %v5289
        %5342 = vmatprep.subr.mxu0 %v5292
        %5343 = vmatpush1.msra.mxu0 %v5291
        %5344 = vmatprep.subr.mxu0 %v5294
        %5345 = vmatpush1.msra.mxu0 %v5293
        %5346 = vmatprep.subr.mxu0 %v5296
        %5347 = vmatpush1.msra.mxu0 %v5295
        %5348 = vmatprep.subr.mxu0 %v5298
        %5349 = vmatpush1.msra.mxu0 %v5297
        %5350 = vmatprep.subr.mxu0 %v5300
        %5351 = vmatpush1.msra.mxu0 %v5299
        %5352 = vmatprep.subr.mxu0 %v5302
        %5353 = vmatpush1.msra.mxu0 %v5301
        %5354 = vmatprep.subr.mxu0 %v5304
        %5355 = vmatpush1.msra.mxu0 %v5303
        %5356 = vmatprep.subr.mxu0 %v5306
        %5357 = vmatpush1.msra.mxu0 %v5305
        %5358 = vmatprep.subr.mxu0 0.0
        %5359 = vmatpush1.msra.mxu0 0.0
        %5360 = vmatprep.subr.mxu0 0.0
        %5361 = vmatpush1.msra.mxu0 0.0
        %5362 = vmatprep.subr.mxu0 0.0
        %5363 = vmatpush1.msra.mxu0 0.0
        %5364 = vmatprep.subr.mxu0 0.0
        %5365 = vmatpush1.msra.mxu0 0.0
        %5366 = vmatprep.subr.mxu0 0.0
        %5367 = vmatpush1.msra.mxu0 0.0
        %5368 = vmatprep.subr.mxu0 0.0
        %5369 = vmatpush1.msra.mxu0 0.0
        %5370 = vmatprep.subr.mxu0 0.0
        %5371 = vmatpush1.msra.mxu0 0.0
        %5372 = vmatprep.subr.mxu0 0.0
        %5373 = vmatpush1.msra.mxu0 0.0
        %5374 = vmatprep.mubr.f32.mxu0 %v5308
        %5375 = vmatmul.mubr.f32.gmra.mrb[0].mxu0 %v5257
        %v5376 = vpop.f32.mrb[0].mxu0
        %v5377 = vadd.f32 0.0003, %v5376
        %v5378 = vpop.f32.mrb[0].mxu0
        %v5379 = vadd.f32 0.0003, %v5378
        %5380 = vdwg.mxu0
        %v5381 = vmax.f32 %v5377, 0.0
        %v5382 = vmax.f32 %v5379, 0.0
        %v5383 = vld [vmem:[%s5 + $0xf00] sm:$0xff]
        %v5384 = vld [vmem:[%s5 + $0xf08] sm:$0xff]
        %v5385 = vld [vmem:[%s5 + $0xf10] sm:$0xff]
        %v5386 = vld [vmem:[%s5 + $0xf18] sm:$0xff]
        %v5387 = vld [vmem:[%s5 + $0xf20] sm:$0xff]
        %v5388 = vld [vmem:[%s5 + $0xf28] sm:$0xff]
        %v5389 = vld [vmem:[%s5 + $0xf30] sm:$0xff]
        %v5390 = vld [vmem:[%s5 + $0xf38] sm:$0xff]
        %v5391 = vld [vmem:[%s5 + $0xf40] sm:$0xff]
        %v5392 = vld [vmem:[%s5 + $0xf48] sm:$0xff]
        %v5393 = vld [vmem:[%s5 + $0xf50] sm:$0xff]
        %v5394 = vld [vmem:[%s5 + $0xf58] sm:$0xff]
        %v5395 = vld [vmem:[%s5 + $0xf60] sm:$0xff]
        %v5396 = vld [vmem:[%s5 + $0xf68] sm:$0xff]
        %v5397 = vld [vmem:[%s5 + $0xf70] sm:$0xff]
        %v5398 = vld [vmem:[%s5 + $0xf78] sm:$0xff]
        %v5399 = vld [vmem:[%s5 + $0xf80] sm:$0xff]
        %v5400 = vld [vmem:[%s5 + $0xf88] sm:$0xff]
        %v5401 = vld [vmem:[%s5 + $0xf90] sm:$0xff]
        %v5402 = vld [vmem:[%s5 + $0xf98] sm:$0xff]
        %v5403 = vld [vmem:[%s5 + $0xfa0] sm:$0xff]
        %v5404 = vld [vmem:[%s5 + $0xfa8] sm:$0xff]
        %v5405 = vld [vmem:[%s5 + $0xfb0] sm:$0xff]
        %v5406 = vld [vmem:[%s5 + $0xfb8] sm:$0xff]
        %v5407 = vld [vmem:[%s5 + $0xfc0] sm:$0xff]
        %v5408 = vld [vmem:[%s5 + $0xfc8] sm:$0xff]
        %v5409 = vld [vmem:[%s5 + $0xfd0] sm:$0xff]
        %v5410 = vld [vmem:[%s5 + $0xfd8] sm:$0xff]
        %v5411 = vld [vmem:[%s5 + $0xfe0] sm:$0xff]
        %v5412 = vld [vmem:[%s5 + $0xfe8] sm:$0xff]
        %v5413 = vld [vmem:[%s5 + $0xff0] sm:$0xff]
        %v5414 = vld [vmem:[%s5 + $0xff8] sm:$0xff]
        %v5415 = vld [vmem:[%s5 + $0x1000] sm:$0xff]
        %v5416 = vld [vmem:[%s5 + $0x1008] sm:$0xff]
        %v5417 = vld [vmem:[%s5 + $0x1010] sm:$0xff]
        %v5418 = vld [vmem:[%s5 + $0x1018] sm:$0xff]
        %v5419 = vld [vmem:[%s5 + $0x1020] sm:$0xff]
        %v5420 = vld [vmem:[%s5 + $0x1028] sm:$0xff]
        %v5421 = vld [vmem:[%s5 + $0x1030] sm:$0xff]
        %v5422 = vld [vmem:[%s5 + $0x1038] sm:$0xff]
        %v5423 = vld [vmem:[%s5 + $0x1040] sm:$0xff]
        %v5424 = vld [vmem:[%s5 + $0x1048] sm:$0xff]
        %v5425 = vld [vmem:[%s5 + $0x1050] sm:$0xff]
        %v5426 = vld [vmem:[%s5 + $0x1058] sm:$0xff]
        %v5427 = vld [vmem:[%s5 + $0x1060] sm:$0xff]
        %v5428 = vld [vmem:[%s5 + $0x1068] sm:$0xff]
        %v5429 = vld [vmem:[%s5 + $0x1070] sm:$0xff]
        %v5430 = vld [vmem:[%s5 + $0x1078] sm:$0xff]
        %v5432 = vsel %vm1206, %v5382, 0
        %5434 = vmatprep.subr.mxu0 %v5384
        %5435 = vmatpush1.msra.mxu0 %v5383
        %5436 = vmatprep.subr.mxu0 %v5386
        %5437 = vmatpush1.msra.mxu0 %v5385
        %5438 = vmatprep.subr.mxu0 %v5388
        %5439 = vmatpush1.msra.mxu0 %v5387
        %5440 = vmatprep.subr.mxu0 %v5390
        %5441 = vmatpush1.msra.mxu0 %v5389
        %5442 = vmatprep.subr.mxu0 %v5392
        %5443 = vmatpush1.msra.mxu0 %v5391
        %5444 = vmatprep.subr.mxu0 %v5394
        %5445 = vmatpush1.msra.mxu0 %v5393
        %5446 = vmatprep.subr.mxu0 %v5396
        %5447 = vmatpush1.msra.mxu0 %v5395
        %5448 = vmatprep.subr.mxu0 %v5398
        %5449 = vmatpush1.msra.mxu0 %v5397
        %5450 = vmatprep.subr.mxu0 %v5400
        %5451 = vmatpush1.msra.mxu0 %v5399
        %5452 = vmatprep.subr.mxu0 %v5402
        %5453 = vmatpush1.msra.mxu0 %v5401
        %5454 = vmatprep.subr.mxu0 %v5404
        %5455 = vmatpush1.msra.mxu0 %v5403
        %5456 = vmatprep.subr.mxu0 %v5406
        %5457 = vmatpush1.msra.mxu0 %v5405
        %5458 = vmatprep.subr.mxu0 %v5408
        %5459 = vmatpush1.msra.mxu0 %v5407
        %5460 = vmatprep.subr.mxu0 %v5410
        %5461 = vmatpush1.msra.mxu0 %v5409
        %5462 = vmatprep.subr.mxu0 %v5412
        %5463 = vmatpush1.msra.mxu0 %v5411
        %5464 = vmatprep.subr.mxu0 %v5414
        %5465 = vmatpush1.msra.mxu0 %v5413
        %5466 = vmatprep.subr.mxu0 %v5416
        %5467 = vmatpush1.msra.mxu0 %v5415
        %5468 = vmatprep.subr.mxu0 %v5418
        %5469 = vmatpush1.msra.mxu0 %v5417
        %5470 = vmatprep.subr.mxu0 %v5420
        %5471 = vmatpush1.msra.mxu0 %v5419
        %5472 = vmatprep.subr.mxu0 %v5422
        %5473 = vmatpush1.msra.mxu0 %v5421
        %5474 = vmatprep.subr.mxu0 %v5424
        %5475 = vmatpush1.msra.mxu0 %v5423
        %5476 = vmatprep.subr.mxu0 %v5426
        %5477 = vmatpush1.msra.mxu0 %v5425
        %5478 = vmatprep.subr.mxu0 %v5428
        %5479 = vmatpush1.msra.mxu0 %v5427
        %5480 = vmatprep.subr.mxu0 %v5430
        %5481 = vmatpush1.msra.mxu0 %v5429
        %5482 = vmatprep.subr.mxu0 0.0
        %5483 = vmatpush1.msra.mxu0 0.0
        %5484 = vmatprep.subr.mxu0 0.0
        %5485 = vmatpush1.msra.mxu0 0.0
        %5486 = vmatprep.subr.mxu0 0.0
        %5487 = vmatpush1.msra.mxu0 0.0
        %5488 = vmatprep.subr.mxu0 0.0
        %5489 = vmatpush1.msra.mxu0 0.0
        %5490 = vmatprep.subr.mxu0 0.0
        %5491 = vmatpush1.msra.mxu0 0.0
        %5492 = vmatprep.subr.mxu0 0.0
        %5493 = vmatpush1.msra.mxu0 0.0
        %5494 = vmatprep.subr.mxu0 0.0
        %5495 = vmatpush1.msra.mxu0 0.0
        %5496 = vmatprep.subr.mxu0 0.0
        %5497 = vmatpush1.msra.mxu0 0.0
        %5498 = vmatprep.mubr.f32.mxu0 %v5432
        %5499 = vmatmul.mubr.f32.gmra.mrb[0].mxu0 %v5381
        %v5500 = vpop.f32.mrb[0].mxu0
        %v5501 = vadd.f32 0.0003, %v5500
        %v5502 = vpop.f32.mrb[0].mxu0
        %v5503 = vadd.f32 0.0003, %v5502
        %5504 = vdwg.mxu0
        %v5505 = vmax.f32 %v5501, 0.0
        %v5506 = vmax.f32 %v5503, 0.0
        %v5507 = vld [vmem:[%s5 + $0x1080] sm:$0xff]
        %v5508 = vld [vmem:[%s5 + $0x1088] sm:$0xff]
        %v5509 = vld [vmem:[%s5 + $0x1090] sm:$0xff]
        %v5510 = vld [vmem:[%s5 + $0x1098] sm:$0xff]
        %v5511 = vld [vmem:[%s5 + $0x10a0] sm:$0xff]
        %v5512 = vld [vmem:[%s5 + $0x10a8] sm:$0xff]
        %v5513 = vld [vmem:[%s5 + $0x10b0] sm:$0xff]
        %v5514 = vld [vmem:[%s5 + $0x10b8] sm:$0xff]
        %v5515 = vld [vmem:[%s5 + $0x10c0] sm:$0xff]
        %v5516 = vld [vmem:[%s5 + $0x10c8] sm:$0xff]
        %v5517 = vld [vmem:[%s5 + $0x10d0] sm:$0xff]
        %v5518 = vld [vmem:[%s5 + $0x10d8] sm:$0xff]
        %v5519 = vld [vmem:[%s5 + $0x10e0] sm:$0xff]
        %v5520 = vld [vmem:[%s5 + $0x10e8] sm:$0xff]
        %v5521 = vld [vmem:[%s5 + $0x10f0] sm:$0xff]
        %v5522 = vld [vmem:[%s5 + $0x10f8] sm:$0xff]
        %v5523 = vld [vmem:[%s5 + $0x1100] sm:$0xff]
        %v5524 = vld [vmem:[%s5 + $0x1108] sm:$0xff]
        %v5525 = vld [vmem:[%s5 + $0x1110] sm:$0xff]
        %v5526 = vld [vmem:[%s5 + $0x1118] sm:$0xff]
        %v5527 = vld [vmem:[%s5 + $0x1120] sm:$0xff]
        %v5528 = vld [vmem:[%s5 + $0x1128] sm:$0xff]
        %v5529 = vld [vmem:[%s5 + $0x1130] sm:$0xff]
        %v5530 = vld [vmem:[%s5 + $0x1138] sm:$0xff]
        %v5531 = vld [vmem:[%s5 + $0x1140] sm:$0xff]
        %v5532 = vld [vmem:[%s5 + $0x1148] sm:$0xff]
        %v5533 = vld [vmem:[%s5 + $0x1150] sm:$0xff]
        %v5534 = vld [vmem:[%s5 + $0x1158] sm:$0xff]
        %v5535 = vld [vmem:[%s5 + $0x1160] sm:$0xff]
        %v5536 = vld [vmem:[%s5 + $0x1168] sm:$0xff]
        %v5537 = vld [vmem:[%s5 + $0x1170] sm:$0xff]
        %v5538 = vld [vmem:[%s5 + $0x1178] sm:$0xff]
        %v5539 = vld [vmem:[%s5 + $0x1180] sm:$0xff]
        %v5540 = vld [vmem:[%s5 + $0x1188] sm:$0xff]
        %v5541 = vld [vmem:[%s5 + $0x1190] sm:$0xff]
        %v5542 = vld [vmem:[%s5 + $0x1198] sm:$0xff]
        %v5543 = vld [vmem:[%s5 + $0x11a0] sm:$0xff]
        %v5544 = vld [vmem:[%s5 + $0x11a8] sm:$0xff]
        %v5545 = vld [vmem:[%s5 + $0x11b0] sm:$0xff]
        %v5546 = vld [vmem:[%s5 + $0x11b8] sm:$0xff]
        %v5547 = vld [vmem:[%s5 + $0x11c0] sm:$0xff]
        %v5548 = vld [vmem:[%s5 + $0x11c8] sm:$0xff]
        %v5549 = vld [vmem:[%s5 + $0x11d0] sm:$0xff]
        %v5550 = vld [vmem:[%s5 + $0x11d8] sm:$0xff]
        %v5551 = vld [vmem:[%s5 + $0x11e0] sm:$0xff]
        %v5552 = vld [vmem:[%s5 + $0x11e8] sm:$0xff]
        %v5553 = vld [vmem:[%s5 + $0x11f0] sm:$0xff]
        %v5554 = vld [vmem:[%s5 + $0x11f8] sm:$0xff]
        %v5556 = vsel %vm1206, %v5506, 0
        %5558 = vmatprep.subr.mxu0 %v5508
        %5559 = vmatpush1.msra.mxu0 %v5507
        %5560 = vmatprep.subr.mxu0 %v5510
        %5561 = vmatpush1.msra.mxu0 %v5509
        %5562 = vmatprep.subr.mxu0 %v5512
        %5563 = vmatpush1.msra.mxu0 %v5511
        %5564 = vmatprep.subr.mxu0 %v5514
        %5565 = vmatpush1.msra.mxu0 %v5513
        %5566 = vmatprep.subr.mxu0 %v5516
        %5567 = vmatpush1.msra.mxu0 %v5515
        %5568 = vmatprep.subr.mxu0 %v5518
        %5569 = vmatpush1.msra.mxu0 %v5517
        %5570 = vmatprep.subr.mxu0 %v5520
        %5571 = vmatpush1.msra.mxu0 %v5519
        %5572 = vmatprep.subr.mxu0 %v5522
        %5573 = vmatpush1.msra.mxu0 %v5521
        %5574 = vmatprep.subr.mxu0 %v5524
        %5575 = vmatpush1.msra.mxu0 %v5523
        %5576 = vmatprep.subr.mxu0 %v5526
        %5577 = vmatpush1.msra.mxu0 %v5525
        %5578 = vmatprep.subr.mxu0 %v5528
        %5579 = vmatpush1.msra.mxu0 %v5527
        %5580 = vmatprep.subr.mxu0 %v5530
        %5581 = vmatpush1.msra.mxu0 %v5529
        %5582 = vmatprep.subr.mxu0 %v5532
        %5583 = vmatpush1.msra.mxu0 %v5531
        %5584 = vmatprep.subr.mxu0 %v5534
        %5585 = vmatpush1.msra.mxu0 %v5533
        %5586 = vmatprep.subr.mxu0 %v5536
        %5587 = vmatpush1.msra.mxu0 %v5535
        %5588 = vmatprep.subr.mxu0 %v5538
        %5589 = vmatpush1.msra.mxu0 %v5537
        %5590 = vmatprep.subr.mxu0 %v5540
        %5591 = vmatpush1.msra.mxu0 %v5539
        %5592 = vmatprep.subr.mxu0 %v5542
        %5593 = vmatpush1.msra.mxu0 %v5541
        %5594 = vmatprep.subr.mxu0 %v5544
        %5595 = vmatpush1.msra.mxu0 %v5543
        %5596 = vmatprep.subr.mxu0 %v5546
        %5597 = vmatpush1.msra.mxu0 %v5545
        %5598 = vmatprep.subr.mxu0 %v5548
        %5599 = vmatpush1.msra.mxu0 %v5547
        %5600 = vmatprep.subr.mxu0 %v5550
        %5601 = vmatpush1.msra.mxu0 %v5549
        %5602 = vmatprep.subr.mxu0 %v5552
        %5603 = vmatpush1.msra.mxu0 %v5551
        %5604 = vmatprep.subr.mxu0 %v5554
        %5605 = vmatpush1.msra.mxu0 %v5553
        %5606 = vmatprep.subr.mxu0 0.0
        %5607 = vmatpush1.msra.mxu0 0.0
        %5608 = vmatprep.subr.mxu0 0.0
        %5609 = vmatpush1.msra.mxu0 0.0
        %5610 = vmatprep.subr.mxu0 0.0
        %5611 = vmatpush1.msra.mxu0 0.0
        %5612 = vmatprep.subr.mxu0 0.0
        %5613 = vmatpush1.msra.mxu0 0.0
        %5614 = vmatprep.subr.mxu0 0.0
        %5615 = vmatpush1.msra.mxu0 0.0
        %5616 = vmatprep.subr.mxu0 0.0
        %5617 = vmatpush1.msra.mxu0 0.0
        %5618 = vmatprep.subr.mxu0 0.0
        %5619 = vmatpush1.msra.mxu0 0.0
        %5620 = vmatprep.subr.mxu0 0.0
        %5621 = vmatpush1.msra.mxu0 0.0
        %5622 = vmatprep.mubr.f32.mxu0 %v5556
        %5623 = vmatmul.mubr.f32.gmra.mrb[0].mxu0 %v5505
        %v5624 = vpop.f32.mrb[0].mxu0
        %v5625 = vadd.f32 0.0003, %v5624
        %v5626 = vpop.f32.mrb[0].mxu0
        %v5627 = vadd.f32 0.0003, %v5626
        %5628 = vdwg.mxu0
        %v5629 = vmax.f32 %v5625, 0.0
        %v5630 = vmax.f32 %v5627, 0.0
        %v5631 = vld [vmem:[%s5 + $0x1200] sm:$0xff]
        %v5632 = vld [vmem:[%s5 + $0x1208] sm:$0xff]
        %v5633 = vld [vmem:[%s5 + $0x1210] sm:$0xff]
        %v5634 = vld [vmem:[%s5 + $0x1218] sm:$0xff]
        %v5635 = vld [vmem:[%s5 + $0x1220] sm:$0xff]
        %v5636 = vld [vmem:[%s5 + $0x1228] sm:$0xff]
        %v5637 = vld [vmem:[%s5 + $0x1230] sm:$0xff]
        %v5638 = vld [vmem:[%s5 + $0x1238] sm:$0xff]
        %v5639 = vld [vmem:[%s5 + $0x1240] sm:$0xff]
        %v5640 = vld [vmem:[%s5 + $0x1248] sm:$0xff]
        %v5641 = vld [vmem:[%s5 + $0x1250] sm:$0xff]
        %v5642 = vld [vmem:[%s5 + $0x1258] sm:$0xff]
        %v5643 = vld [vmem:[%s5 + $0x1260] sm:$0xff]
        %v5644 = vld [vmem:[%s5 + $0x1268] sm:$0xff]
        %v5645 = vld [vmem:[%s5 + $0x1270] sm:$0xff]
        %v5646 = vld [vmem:[%s5 + $0x1278] sm:$0xff]
        %v5647 = vld [vmem:[%s5 + $0x1280] sm:$0xff]
        %v5648 = vld [vmem:[%s5 + $0x1288] sm:$0xff]
        %v5649 = vld [vmem:[%s5 + $0x1290] sm:$0xff]
        %v5650 = vld [vmem:[%s5 + $0x1298] sm:$0xff]
        %v5651 = vld [vmem:[%s5 + $0x12a0] sm:$0xff]
        %v5652 = vld [vmem:[%s5 + $0x12a8] sm:$0xff]
        %v5653 = vld [vmem:[%s5 + $0x12b0] sm:$0xff]
        %v5654 = vld [vmem:[%s5 + $0x12b8] sm:$0xff]
        %v5655 = vld [vmem:[%s5 + $0x12c0] sm:$0xff]
        %v5656 = vld [vmem:[%s5 + $0x12c8] sm:$0xff]
        %v5657 = vld [vmem:[%s5 + $0x12d0] sm:$0xff]
        %v5658 = vld [vmem:[%s5 + $0x12d8] sm:$0xff]
        %v5659 = vld [vmem:[%s5 + $0x12e0] sm:$0xff]
        %v5660 = vld [vmem:[%s5 + $0x12e8] sm:$0xff]
        %v5661 = vld [vmem:[%s5 + $0x12f0] sm:$0xff]
        %v5662 = vld [vmem:[%s5 + $0x12f8] sm:$0xff]
        %v5663 = vld [vmem:[%s5 + $0x1300] sm:$0xff]
        %v5664 = vld [vmem:[%s5 + $0x1308] sm:$0xff]
        %v5665 = vld [vmem:[%s5 + $0x1310] sm:$0xff]
        %v5666 = vld [vmem:[%s5 + $0x1318] sm:$0xff]
        %v5667 = vld [vmem:[%s5 + $0x1320] sm:$0xff]
        %v5668 = vld [vmem:[%s5 + $0x1328] sm:$0xff]
        %v5669 = vld [vmem:[%s5 + $0x1330] sm:$0xff]
        %v5670 = vld [vmem:[%s5 + $0x1338] sm:$0xff]
        %v5671 = vld [vmem:[%s5 + $0x1340] sm:$0xff]
        %v5672 = vld [vmem:[%s5 + $0x1348] sm:$0xff]
        %v5673 = vld [vmem:[%s5 + $0x1350] sm:$0xff]
        %v5674 = vld [vmem:[%s5 + $0x1358] sm:$0xff]
        %v5675 = vld [vmem:[%s5 + $0x1360] sm:$0xff]
        %v5676 = vld [vmem:[%s5 + $0x1368] sm:$0xff]
        %v5677 = vld [vmem:[%s5 + $0x1370] sm:$0xff]
        %v5678 = vld [vmem:[%s5 + $0x1378] sm:$0xff]
        %v5680 = vsel %vm1206, %v5630, 0
        %5682 = vmatprep.subr.mxu0 %v5632
        %5683 = vmatpush1.msra.mxu0 %v5631
        %5684 = vmatprep.subr.mxu0 %v5634
        %5685 = vmatpush1.msra.mxu0 %v5633
        %5686 = vmatprep.subr.mxu0 %v5636
        %5687 = vmatpush1.msra.mxu0 %v5635
        %5688 = vmatprep.subr.mxu0 %v5638
        %5689 = vmatpush1.msra.mxu0 %v5637
        %5690 = vmatprep.subr.mxu0 %v5640
        %5691 = vmatpush1.msra.mxu0 %v5639
        %5692 = vmatprep.subr.mxu0 %v5642
        %5693 = vmatpush1.msra.mxu0 %v5641
        %5694 = vmatprep.subr.mxu0 %v5644
        %5695 = vmatpush1.msra.mxu0 %v5643
        %5696 = vmatprep.subr.mxu0 %v5646
        %5697 = vmatpush1.msra.mxu0 %v5645
        %5698 = vmatprep.subr.mxu0 %v5648
        %5699 = vmatpush1.msra.mxu0 %v5647
        %5700 = vmatprep.subr.mxu0 %v5650
        %5701 = vmatpush1.msra.mxu0 %v5649
        %5702 = vmatprep.subr.mxu0 %v5652
        %5703 = vmatpush1.msra.mxu0 %v5651
        %5704 = vmatprep.subr.mxu0 %v5654
        %5705 = vmatpush1.msra.mxu0 %v5653
        %5706 = vmatprep.subr.mxu0 %v5656
        %5707 = vmatpush1.msra.mxu0 %v5655
        %5708 = vmatprep.subr.mxu0 %v5658
        %5709 = vmatpush1.msra.mxu0 %v5657
        %5710 = vmatprep.subr.mxu0 %v5660
        %5711 = vmatpush1.msra.mxu0 %v5659
        %5712 = vmatprep.subr.mxu0 %v5662
        %5713 = vmatpush1.msra.mxu0 %v5661
        %5714 = vmatprep.subr.mxu0 %v5664
        %5715 = vmatpush1.msra.mxu0 %v5663
        %5716 = vmatprep.subr.mxu0 %v5666
        %5717 = vmatpush1.msra.mxu0 %v5665
        %5718 = vmatprep.subr.mxu0 %v5668
        %5719 = vmatpush1.msra.mxu0 %v5667
        %5720 = vmatprep.subr.mxu0 %v5670
        %5721 = vmatpush1.msra.mxu0 %v5669
        %5722 = vmatprep.subr.mxu0 %v5672
        %5723 = vmatpush1.msra.mxu0 %v5671
        %5724 = vmatprep.subr.mxu0 %v5674
        %5725 = vmatpush1.msra.mxu0 %v5673
        %5726 = vmatprep.subr.mxu0 %v5676
        %5727 = vmatpush1.msra.mxu0 %v5675
        %5728 = vmatprep.subr.mxu0 %v5678
        %5729 = vmatpush1.msra.mxu0 %v5677
        %5730 = vmatprep.subr.mxu0 0.0
        %5731 = vmatpush1.msra.mxu0 0.0
        %5732 = vmatprep.subr.mxu0 0.0
        %5733 = vmatpush1.msra.mxu0 0.0
        %5734 = vmatprep.subr.mxu0 0.0
        %5735 = vmatpush1.msra.mxu0 0.0
        %5736 = vmatprep.subr.mxu0 0.0
        %5737 = vmatpush1.msra.mxu0 0.0
        %5738 = vmatprep.subr.mxu0 0.0
        %5739 = vmatpush1.msra.mxu0 0.0
        %5740 = vmatprep.subr.mxu0 0.0
        %5741 = vmatpush1.msra.mxu0 0.0
        %5742 = vmatprep.subr.mxu0 0.0
        %5743 = vmatpush1.msra.mxu0 0.0
        %5744 = vmatprep.subr.mxu0 0.0
        %5745 = vmatpush1.msra.mxu0 0.0
        %5746 = vmatprep.mubr.f32.mxu0 %v5680
        %5747 = vmatmul.mubr.f32.gmra.mrb[0].mxu0 %v5629
        %v5748 = vpop.f32.mrb[0].mxu0
        %v5749 = vadd.f32 0.0003, %v5748
        %v5750 = vpop.f32.mrb[0].mxu0
        %v5751 = vadd.f32 0.0003, %v5750
        %5752 = vdwg.mxu0
        %v5753 = vmax.f32 %v5749, 0.0
        %v5754 = vmax.f32 %v5751, 0.0
        %v5757 = vcombine.low %v5753, %v5754
        %v5759 = vunpack.c.l.s4 1966171168
        %v5760 = vunpack.c.0.s8 %v5759
        %v5761 = vlaneseq
        %v5762 = vshrl.u32 %v5761, 7
        %v5763 = vsub.s32 %v5760, %v5762
        %v5764 = vrot.slane %v5757, %v5763
        %v5766 = vunpack.c.l.s4 1966171168
        %v5767 = vunpack.c.0.s8 %v5766
        %v5768 = vlaneseq
        %v5769 = vshrl.u32 %v5768, 7
        %v5770 = vsub.s32 %v5767, %v5769
        %v5771 = vrot.slane %v5764, %v5770
        %v5773 = vlaneseq
        %vm5774 = vcmp.ge.s32.totalorder %v5773, 0
        %vm5775 = vcmp.lt.s32.totalorder %v5773, 192
        %vm5776 = vmand %vm5774, %vm5775
        %5777 = vst.msk [vmem:[%s517] sm:$0x3] %vm5776, %v5771
        %v5778 = vld [vmem:[%s7] sm:$0xff]
        %v5779 = vld [vmem:[%s7 + $0x8] sm:$0xff]
        %v5780 = vld [vmem:[%s7 + $0x10] sm:$0xff]
        %v5781 = vld [vmem:[%s7 + $0x18] sm:$0xff]
        %v5782 = vld [vmem:[%s7 + $0x20] sm:$0xff]
        %v5783 = vld [vmem:[%s7 + $0x28] sm:$0xff]
        %v5784 = vld [vmem:[%s7 + $0x30] sm:$0xff]
        %v5785 = vld [vmem:[%s7 + $0x38] sm:$0xff]
        %v5786 = vld [vmem:[%s7 + $0x40] sm:$0xff]
        %v5787 = vld [vmem:[%s7 + $0x48] sm:$0xff]
        %v5788 = vld [vmem:[%s7 + $0x50] sm:$0xff]
        %v5789 = vld [vmem:[%s7 + $0x58] sm:$0xff]
        %v5790 = vld [vmem:[%s7 + $0x60] sm:$0xff]
        %v5791 = vld [vmem:[%s7 + $0x68] sm:$0xff]
        %v5792 = vld [vmem:[%s7 + $0x70] sm:$0xff]
        %v5793 = vld [vmem:[%s7 + $0x78] sm:$0xff]
        %v5794 = vld [vmem:[%s7 + $0x80] sm:$0xff]
        %v5795 = vld [vmem:[%s7 + $0x88] sm:$0xff]
        %v5796 = vld [vmem:[%s7 + $0x90] sm:$0xff]
        %v5797 = vld [vmem:[%s7 + $0x98] sm:$0xff]
        %v5798 = vld [vmem:[%s7 + $0xa0] sm:$0xff]
        %v5799 = vld [vmem:[%s7 + $0xa8] sm:$0xff]
        %v5800 = vld [vmem:[%s7 + $0xb0] sm:$0xff]
        %v5801 = vld [vmem:[%s7 + $0xb8] sm:$0xff]
        %v5802 = vld [vmem:[%s7 + $0xc0] sm:$0xff]
        %v5803 = vld [vmem:[%s7 + $0xc8] sm:$0xff]
        %v5804 = vld [vmem:[%s7 + $0xd0] sm:$0xff]
        %v5805 = vld [vmem:[%s7 + $0xd8] sm:$0xff]
        %v5806 = vld [vmem:[%s7 + $0xe0] sm:$0xff]
        %v5807 = vld [vmem:[%s7 + $0xe8] sm:$0xff]
        %v5808 = vld [vmem:[%s7 + $0xf0] sm:$0xff]
        %v5809 = vld [vmem:[%s7 + $0xf8] sm:$0xff]
        %v5810 = vld [vmem:[%s7 + $0x100] sm:$0xff]
        %v5811 = vld [vmem:[%s7 + $0x108] sm:$0xff]
        %v5812 = vld [vmem:[%s7 + $0x110] sm:$0xff]
        %v5813 = vld [vmem:[%s7 + $0x118] sm:$0xff]
        %v5814 = vld [vmem:[%s7 + $0x120] sm:$0xff]
        %v5815 = vld [vmem:[%s7 + $0x128] sm:$0xff]
        %v5816 = vld [vmem:[%s7 + $0x130] sm:$0xff]
        %v5817 = vld [vmem:[%s7 + $0x138] sm:$0xff]
        %v5818 = vld [vmem:[%s7 + $0x140] sm:$0xff]
        %v5819 = vld [vmem:[%s7 + $0x148] sm:$0xff]
        %v5820 = vld [vmem:[%s7 + $0x150] sm:$0xff]
        %v5821 = vld [vmem:[%s7 + $0x158] sm:$0xff]
        %v5822 = vld [vmem:[%s7 + $0x160] sm:$0xff]
        %v5823 = vld [vmem:[%s7 + $0x168] sm:$0xff]
        %v5824 = vld [vmem:[%s7 + $0x170] sm:$0xff]
        %v5825 = vld [vmem:[%s7 + $0x178] sm:$0xff]
        %v5826 = vld [vmem:[%s7 + $0x180] sm:$0xff]
        %v5827 = vld [vmem:[%s7 + $0x188] sm:$0xff]
        %v5828 = vld [vmem:[%s7 + $0x190] sm:$0xff]
        %v5829 = vld [vmem:[%s7 + $0x198] sm:$0xff]
        %v5830 = vld [vmem:[%s7 + $0x1a0] sm:$0xff]
        %v5831 = vld [vmem:[%s7 + $0x1a8] sm:$0xff]
        %v5832 = vld [vmem:[%s7 + $0x1b0] sm:$0xff]
        %v5833 = vld [vmem:[%s7 + $0x1b8] sm:$0xff]
        %v5834 = vld [vmem:[%s7 + $0x1c0] sm:$0xff]
        %v5835 = vld [vmem:[%s7 + $0x1c8] sm:$0xff]
        %v5836 = vld [vmem:[%s7 + $0x1d0] sm:$0xff]
        %v5837 = vld [vmem:[%s7 + $0x1d8] sm:$0xff]
        %v5838 = vld [vmem:[%s7 + $0x1e0] sm:$0xff]
        %v5839 = vld [vmem:[%s7 + $0x1e8] sm:$0xff]
        %v5840 = vld [vmem:[%s7 + $0x1f0] sm:$0xff]
        %v5841 = vld [vmem:[%s7 + $0x1f8] sm:$0xff]
        %v5842 = vld [vmem:[%s7 + $0x200] sm:$0xff]
        %v5843 = vld [vmem:[%s7 + $0x208] sm:$0xff]
        %v5844 = vld [vmem:[%s7 + $0x210] sm:$0xff]
        %v5845 = vld [vmem:[%s7 + $0x218] sm:$0xff]
        %v5846 = vld [vmem:[%s7 + $0x220] sm:$0xff]
        %v5847 = vld [vmem:[%s7 + $0x228] sm:$0xff]
        %v5848 = vld [vmem:[%s7 + $0x230] sm:$0xff]
        %v5849 = vld [vmem:[%s7 + $0x238] sm:$0xff]
        %v5850 = vld [vmem:[%s7 + $0x240] sm:$0xff]
        %v5851 = vld [vmem:[%s7 + $0x248] sm:$0xff]
        %v5852 = vld [vmem:[%s7 + $0x250] sm:$0xff]
        %v5853 = vld [vmem:[%s7 + $0x258] sm:$0xff]
        %v5854 = vld [vmem:[%s7 + $0x260] sm:$0xff]
        %v5855 = vld [vmem:[%s7 + $0x268] sm:$0xff]
        %v5856 = vld [vmem:[%s7 + $0x270] sm:$0xff]
        %v5857 = vld [vmem:[%s7 + $0x278] sm:$0xff]
        %v5858 = vld [vmem:[%s7 + $0x280] sm:$0xff]
        %v5859 = vld [vmem:[%s7 + $0x288] sm:$0xff]
        %v5860 = vld [vmem:[%s7 + $0x290] sm:$0xff]
        %v5861 = vld [vmem:[%s7 + $0x298] sm:$0xff]
        %v5862 = vld [vmem:[%s7 + $0x2a0] sm:$0xff]
        %v5863 = vld [vmem:[%s7 + $0x2a8] sm:$0xff]
        %v5864 = vld [vmem:[%s7 + $0x2b0] sm:$0xff]
        %v5865 = vld [vmem:[%s7 + $0x2b8] sm:$0xff]
        %v5866 = vld [vmem:[%s7 + $0x2c0] sm:$0xff]
        %v5867 = vld [vmem:[%s7 + $0x2c8] sm:$0xff]
        %v5868 = vld [vmem:[%s7 + $0x2d0] sm:$0xff]
        %v5869 = vld [vmem:[%s7 + $0x2d8] sm:$0xff]
        %v5870 = vld [vmem:[%s7 + $0x2e0] sm:$0xff]
        %v5871 = vld [vmem:[%s7 + $0x2e8] sm:$0xff]
        %v5872 = vld [vmem:[%s7 + $0x2f0] sm:$0xff]
        %v5873 = vld [vmem:[%s7 + $0x2f8] sm:$0xff]
        %v5874 = vsel %vm1206, %v5754, 0
        %5876 = vmatprep.subr.mxu0 %v5779
        %5877 = vmatpush1.msra.mxu0 %v5778
        %5878 = vmatprep.subr.mxu0 %v5783
        %5879 = vmatpush1.msra.mxu0 %v5782
        %5880 = vmatprep.subr.mxu0 %v5787
        %5881 = vmatpush1.msra.mxu0 %v5786
        %5882 = vmatprep.subr.mxu0 %v5791
        %5883 = vmatpush1.msra.mxu0 %v5790
        %5884 = vmatprep.subr.mxu0 %v5795
        %5885 = vmatpush1.msra.mxu0 %v5794
        %5886 = vmatprep.subr.mxu0 %v5799
        %5887 = vmatpush1.msra.mxu0 %v5798
        %5888 = vmatprep.subr.mxu0 %v5803
        %5889 = vmatpush1.msra.mxu0 %v5802
        %5890 = vmatprep.subr.mxu0 %v5807
        %5891 = vmatpush1.msra.mxu0 %v5806
        %5892 = vmatprep.subr.mxu0 %v5811
        %5893 = vmatpush1.msra.mxu0 %v5810
        %5894 = vmatprep.subr.mxu0 %v5815
        %5895 = vmatpush1.msra.mxu0 %v5814
        %5896 = vmatprep.subr.mxu0 %v5819
        %5897 = vmatpush1.msra.mxu0 %v5818
        %5898 = vmatprep.subr.mxu0 %v5823
        %5899 = vmatpush1.msra.mxu0 %v5822
        %5900 = vmatprep.subr.mxu0 %v5827
        %5901 = vmatpush1.msra.mxu0 %v5826
        %5902 = vmatprep.subr.mxu0 %v5831
        %5903 = vmatpush1.msra.mxu0 %v5830
        %5904 = vmatprep.subr.mxu0 %v5835
        %5905 = vmatpush1.msra.mxu0 %v5834
        %5906 = vmatprep.subr.mxu0 %v5839
        %5907 = vmatpush1.msra.mxu0 %v5838
        %5908 = vmatprep.subr.mxu0 %v5843
        %5909 = vmatpush1.msra.mxu0 %v5842
        %5910 = vmatprep.subr.mxu0 %v5847
        %5911 = vmatpush1.msra.mxu0 %v5846
        %5912 = vmatprep.subr.mxu0 %v5851
        %5913 = vmatpush1.msra.mxu0 %v5850
        %5914 = vmatprep.subr.mxu0 %v5855
        %5915 = vmatpush1.msra.mxu0 %v5854
        %5916 = vmatprep.subr.mxu0 %v5859
        %5917 = vmatpush1.msra.mxu0 %v5858
        %5918 = vmatprep.subr.mxu0 %v5863
        %5919 = vmatpush1.msra.mxu0 %v5862
        %5920 = vmatprep.subr.mxu0 %v5867
        %5921 = vmatpush1.msra.mxu0 %v5866
        %5922 = vmatprep.subr.mxu0 %v5871
        %5923 = vmatpush1.msra.mxu0 %v5870
        %5924 = vmatprep.subr.mxu0 0.0
        %5925 = vmatpush1.msra.mxu0 0.0
        %5926 = vmatprep.subr.mxu0 0.0
        %5927 = vmatpush1.msra.mxu0 0.0
        %5928 = vmatprep.subr.mxu0 0.0
        %5929 = vmatpush1.msra.mxu0 0.0
        %5930 = vmatprep.subr.mxu0 0.0
        %5931 = vmatpush1.msra.mxu0 0.0
        %5932 = vmatprep.subr.mxu0 0.0
        %5933 = vmatpush1.msra.mxu0 0.0
        %5934 = vmatprep.subr.mxu0 0.0
        %5935 = vmatpush1.msra.mxu0 0.0
        %5936 = vmatprep.subr.mxu0 0.0
        %5937 = vmatpush1.msra.mxu0 0.0
        %5938 = vmatprep.subr.mxu0 0.0
        %5939 = vmatpush1.msra.mxu0 0.0
        %5940 = vmatprep.mubr.f32.mxu0 %v5874
        %5941 = vmatmul.mubr.f32.gmra.mrb[0].mxu0 %v5753
        %v5942 = vpop.f32.mrb[0].mxu0
        %v5943 = vadd.f32 0.0002, %v5942
        %v5944 = vpop.f32.mrb[0].mxu0
        %v5945 = vadd.f32 0.0002, %v5944
        %5946 = vdwg.mxu0
        %5947 = vmatprep.subr.mxu0 %v5781
        %5948 = vmatpush1.msra.mxu0 %v5780
        %5949 = vmatprep.subr.mxu0 %v5785
        %5950 = vmatpush1.msra.mxu0 %v5784
        %5951 = vmatprep.subr.mxu0 %v5789
        %5952 = vmatpush1.msra.mxu0 %v5788
        %5953 = vmatprep.subr.mxu0 %v5793
        %5954 = vmatpush1.msra.mxu0 %v5792
        %5955 = vmatprep.subr.mxu0 %v5797
        %5956 = vmatpush1.msra.mxu0 %v5796
        %5957 = vmatprep.subr.mxu0 %v5801
        %5958 = vmatpush1.msra.mxu0 %v5800
        %5959 = vmatprep.subr.mxu0 %v5805
        %5960 = vmatpush1.msra.mxu0 %v5804
        %5961 = vmatprep.subr.mxu0 %v5809
        %5962 = vmatpush1.msra.mxu0 %v5808
        %5963 = vmatprep.subr.mxu0 %v5813
        %5964 = vmatpush1.msra.mxu0 %v5812
        %5965 = vmatprep.subr.mxu0 %v5817
        %5966 = vmatpush1.msra.mxu0 %v5816
        %5967 = vmatprep.subr.mxu0 %v5821
        %5968 = vmatpush1.msra.mxu0 %v5820
        %5969 = vmatprep.subr.mxu0 %v5825
        %5970 = vmatpush1.msra.mxu0 %v5824
        %5971 = vmatprep.subr.mxu0 %v5829
        %5972 = vmatpush1.msra.mxu0 %v5828
        %5973 = vmatprep.subr.mxu0 %v5833
        %5974 = vmatpush1.msra.mxu0 %v5832
        %5975 = vmatprep.subr.mxu0 %v5837
        %5976 = vmatpush1.msra.mxu0 %v5836
        %5977 = vmatprep.subr.mxu0 %v5841
        %5978 = vmatpush1.msra.mxu0 %v5840
        %5979 = vmatprep.subr.mxu0 %v5845
        %5980 = vmatpush1.msra.mxu0 %v5844
        %5981 = vmatprep.subr.mxu0 %v5849
        %5982 = vmatpush1.msra.mxu0 %v5848
        %5983 = vmatprep.subr.mxu0 %v5853
        %5984 = vmatpush1.msra.mxu0 %v5852
        %5985 = vmatprep.subr.mxu0 %v5857
        %5986 = vmatpush1.msra.mxu0 %v5856
        %5987 = vmatprep.subr.mxu0 %v5861
        %5988 = vmatpush1.msra.mxu0 %v5860
        %5989 = vmatprep.subr.mxu0 %v5865
        %5990 = vmatpush1.msra.mxu0 %v5864
        %5991 = vmatprep.subr.mxu0 %v5869
        %5992 = vmatpush1.msra.mxu0 %v5868
        %5993 = vmatprep.subr.mxu0 %v5873
        %5994 = vmatpush1.msra.mxu0 %v5872
        %5995 = vmatprep.subr.mxu0 0.0
        %5996 = vmatpush1.msra.mxu0 0.0
        %5997 = vmatprep.subr.mxu0 0.0
        %5998 = vmatpush1.msra.mxu0 0.0
        %5999 = vmatprep.subr.mxu0 0.0
        %6000 = vmatpush1.msra.mxu0 0.0
        %6001 = vmatprep.subr.mxu0 0.0
        %6002 = vmatpush1.msra.mxu0 0.0
        %6003 = vmatprep.subr.mxu0 0.0
        %6004 = vmatpush1.msra.mxu0 0.0
        %6005 = vmatprep.subr.mxu0 0.0
        %6006 = vmatpush1.msra.mxu0 0.0
        %6007 = vmatprep.subr.mxu0 0.0
        %6008 = vmatpush1.msra.mxu0 0.0
        %6009 = vmatprep.subr.mxu0 0.0
        %6010 = vmatpush1.msra.mxu0 0.0
        %6011 = vmatprep.mubr.f32.mxu0 %v5874
        %6012 = vmatmul.mubr.f32.gmra.mrb[0].mxu0 %v5753
        %v6013 = vpop.f32.mrb[0].mxu0
        %v6014 = vadd.f32 0.0002, %v6013
        %v6015 = vpop.f32.mrb[0].mxu0
        %v6016 = vadd.f32 0.0002, %v6015
        %6017 = vdwg.mxu0
        %v6018 = vmax.f32 %v5943, 0.0
        %v6019 = vmax.f32 %v5945, 0.0
        %v6020 = vmax.f32 %v6014, 0.0
        %v6021 = vmax.f32 %v6016, 0.0
        %v6026 = vcombine.low %v6018, %v6019
        %v6027 = vcombine.low %v6020, %v6021
        %v6029 = vunpack.c.l.s4 1966171168
        %v6030 = vunpack.c.0.s8 %v6029
        %v6031 = vlaneseq
        %v6032 = vshrl.u32 %v6031, 7
        %v6033 = vsub.s32 %v6030, %v6032
        %v6034 = vrot.slane %v6026, %v6033
        %v6036 = vunpack.c.l.s4 1966171168
        %v6037 = vunpack.c.0.s8 %v6036
        %v6038 = vlaneseq
        %v6039 = vshrl.u32 %v6038, 7
        %v6040 = vsub.s32 %v6037, %v6039
        %v6041 = vrot.slane %v6027, %v6040
        %v6042 = vcombine.low %v6034, %v6041
        %v6044 = vunpack.c.l.s4 1966171168
        %v6045 = vunpack.c.0.s8 %v6044
        %v6046 = vlaneseq
        %v6047 = vshrl.u32 %v6046, 7
        %v6048 = vsub.s32 %v6045, %v6047
        %v6049 = vrot.slane %v6042, %v6048
        %vm6051 = vcmp.lt.s32.totalorder %v5773, 512
        %vm6052 = vmand %vm5774, %vm6051
        %6053 = vst.msk [vmem:[%s524] sm:$0xf] %vm6052, %v6049
        %s6054 = sand.u32 %s278, 1
        %s6055 = scalar_lea.sflag [#allocation4], %s6054
        %s6056 = sand.u32 %s278, 1
        %s6057 = smul.addr %s6056, 4
        %s6058 = scalar_lea.vmem [#allocation11], %s6057
        %s6059 = sand.u32 %s34, 1
        %s6060 = scalar_lea.sflag [#allocation13], %s6059
        %s6061 = sand.u32 %s304, 1
        %s6062 = smul.addr %s6061, 2
        %s6063 = scalar_lea.vmem [#allocation12], %s6062
        %s6064 = sand.u32 %s34, 1
        %s6065 = scalar_lea.sflag [#allocation13], %s6064
        %s6066 = sand.u32 %s330, 1
        %s6067 = smul.addr %s6066, 4
        %s6068 = scalar_lea.vmem [#allocation14], %s6067
        // Predicated region
        $region85: #{forward.1} parent=63 // pred_check
          %p6069 = pneg %p288
        $region86: #{forward.1} parent=63 // pred_check_branch
          %6071 = sbr.rel (%p6069) target = $region88
        $region87: #{forward.1} parent=63 // pred_region
          %s6073 = ssub.s32 64, 64
          %6074 = vsyncadd %s6055, %s6073
          %s6075 = smul.addr %s34, 64
          %s6076 = scalar_lea.hbm %s11, %s6075
          %s6078 = sshll.u32 %s6058, 4
          %s6079 = int_to_ptr.vmem [resolvable:$true] %s6078
          %6081 = dma.vmem_to_hbm [thread:$0]  %s6079, 64, %s6076, %s6055
        $region88: #{forward.1} parent=63 // pred_fallthru
          _
        // Predicated region
        $region89: #{forward.1} parent=63 // pred_check
          %p6082 = pneg %p314
        $region90: #{forward.1} parent=63 // pred_check_branch
          %6084 = sbr.rel (%p6082) target = $region92
        $region91: #{forward.1} parent=63 // pred_region
          %s6086 = ssub.s32 32, 32
          %6087 = vsyncadd %s6060, %s6086
          %s6088 = smul.addr %s34, 2
          %s6089 = smul.addr %s6088, 16
          %s6090 = scalar_lea.hbm %s12, %s6089
          %s6092 = sshll.u32 %s6063, 4
          %s6093 = int_to_ptr.vmem [resolvable:$true] %s6092
          %6095 = dma.vmem_to_hbm [thread:$0]  %s6093, 32, %s6090, %s6060
        $region92: #{forward.1} parent=63 // pred_fallthru
          _
        // Predicated region
        $region93: #{forward.1} parent=63 // pred_check
          %p6096 = pneg %p340
        $region94: #{forward.1} parent=63 // pred_check_branch
          %6098 = sbr.rel (%p6096) target = $region96
        $region95: #{forward.1} parent=63 // pred_region
          %s6100 = ssub.s32 64, 64
          %6101 = vsyncadd %s6065, %s6100
          %s6102 = smul.addr %s34, 4
          %s6103 = smul.addr %s6102, 16
          %s6104 = scalar_lea.hbm %s13, %s6103
          %s6106 = sshll.u32 %s6068, 4
          %s6107 = int_to_ptr.vmem [resolvable:$true] %s6106
          %6109 = dma.vmem_to_hbm [thread:$0]  %s6107, 64, %s6104, %s6065
        $region96: #{forward.1} parent=63 // pred_fallthru
          _
      $region64: #{forward.1} parent=5 // pred_fallthru
        _
      %p6110 = scmp.le.s32.totalorder 2, %s29
      // Predicated region
      $region97: #{forward.1} parent=5 // pred_check
        %p6111 = pneg %p6110
      $region98: #{forward.1} parent=5 // pred_check_branch
        %6113 = sbr.rel (%p6111) target = $region100
      $region99: #{forward.1} parent=5 // pred_region
        %s6114 = ssub.s32 %s29, 2
        // Predicated region
        $region101: #{forward.1} parent=99 // pred_check
          %p6115 = pneg %p294
        $region102: #{forward.1} parent=99 // pred_check_branch
          %6117 = sbr.rel (%p6115) target = $region104
        $region103: #{forward.1} parent=99 // pred_region
          %s6118 = sand.u32 %s279, 1
          %s6119 = scalar_lea.sflag [#allocation4], %s6118
          %s6120 = sand.u32 %s279, 1
          %s6121 = smul.addr %s6120, 4
          %s6122 = scalar_lea.vmem [#allocation11], %s6121
          %6123 = dma.done %s6119, 64
        $region104: #{forward.1} parent=99 // pred_fallthru
          _
        // Predicated region
        $region105: #{forward.1} parent=99 // pred_check
          %p6124 = pneg %p320
        $region106: #{forward.1} parent=99 // pred_check_branch
          %6126 = sbr.rel (%p6124) target = $region108
        $region107: #{forward.1} parent=99 // pred_region
          %s6127 = sand.u32 %s35, 1
          %s6128 = scalar_lea.sflag [#allocation13], %s6127
          %s6129 = sand.u32 %s305, 1
          %s6130 = smul.addr %s6129, 2
          %s6131 = scalar_lea.vmem [#allocation12], %s6130
          %6132 = dma.done %s6128, 32
        $region108: #{forward.1} parent=99 // pred_fallthru
          _
        // Predicated region
        $region109: #{forward.1} parent=99 // pred_check
          %p6133 = pneg %p346
        $region110: #{forward.1} parent=99 // pred_check_branch
          %6135 = sbr.rel (%p6133) target = $region112
        $region111: #{forward.1} parent=99 // pred_region
          %s6136 = sand.u32 %s35, 1
          %s6137 = scalar_lea.sflag [#allocation13], %s6136
          %s6138 = sand.u32 %s331, 1
          %s6139 = smul.addr %s6138, 4
          %s6140 = scalar_lea.vmem [#allocation14], %s6139
          %6141 = dma.done %s6137, 64
        $region112: #{forward.1} parent=99 // pred_fallthru
          _
      $region100: #{forward.1} parent=5 // pred_fallthru
        _
    $region6: #{forward.1} parent=1 // loop_footer
      %s33 = sadd.s32 1, %s29
    $region7: #{forward.1} parent=1 // loop_footer_branch
      %28 = sbr.rel target = $region3
    $region8: #{forward.1} parent=1 // loop_exit
      _
    %6142 = vsyncpa [#allocation3], 1
    %s6143 = scalar_lea.sflag [#allocation3], 1
    %6144 = vsyncpa %s6143, 1
    %6145 = vsyncpa [#allocation6], 1
    %6146 = vsyncpa [#allocation9], 1
    %6147 = vsyncpa [#allocation4], 1
    %s6148 = scalar_lea.sflag [#allocation4], 1
    %6149 = vsyncpa %s6148, 1
    %6150 = vsyncpa [#allocation13], 1
    %s6151 = scalar_lea.sflag [#allocation13], 1
    %6152 = vsyncpa %s6151, 1

</llo_original>
